<compile_context>
chip_gen: v7x
topology: tpu7x:2x2x1
jax: 0.10.0
libtpu: 0.0.40
codegen_flags: <defaults>
</compile_context>

<pallas_src>
import numpy as np
import jax
import jax.numpy as jnp
from jax.experimental import pallas as pl
from jax.experimental.pallas import tpu as pltpu

EPS = 1e-5


# ----------------------------------------------------------------------------
# Kernel factory (H, W, B, C, num_res baked in as Python constants)
# ----------------------------------------------------------------------------
def make_kernel(H, W, B, C, num_res):
    HW = H * W
    f32 = jnp.float32
    bf16 = jnp.bfloat16
    # Row layout of all trunk activations: row = (i*W + j)*B + b.  Tap k = dy*3+dx of
    # a 3x3 conv reads input row r + offs[k].
    offs = [((dy - 1) * W + (dx - 1)) * B for dy in range(3) for dx in range(3)]

    def kernel(xc_ref, xf_ref,
               w_stem_ref, s_in_ref, b_in_ref, mask_ref,
               rw1_ref, rw2_ref, raff_ref,
               fc1w_ref, fc1b_ref, fc2w_ref, fc2b_ref,
               q1wc_hbm, q1wf_ref, q1b_ref, q2w_ref, q2b_ref,
               out_ref,
               q1wc_vmem, dma_sem):
        # Start the (biggest) q-head weight DMA now; it is only needed at the very
        # end, so it fully overlaps with the conv trunk + fc branch compute.
        q1wc_cp = pltpu.make_async_copy(q1wc_hbm, q1wc_vmem, dma_sem)
        q1wc_cp.start()

        mask = mask_ref[...]             # (HWB, 9*C) f32 0/1 edge-validity mask

        def conv(x, w):
            # Input-side im2col 3x3 conv: 9 static row shifts of x (XLU rolls) ->
            # lane concat -> one wide mask multiply -> ONE (HWB,9C)@(9C,C) MXU matmul
            # (unpadded bf16 weight, f32 accumulation).
            # NOTE: any roll wrap-around along the (i*W+j)*B+b row axis always lands
            # on a row whose (ii, jj) is out of range and is therefore zeroed by
            # `mask`; this invariant requires rows to be exactly H*W*B (no padding).
            taps = [x if off == 0 else jnp.roll(x, -off, axis=0) for off in offs]
            xcat = jnp.concatenate(taps, axis=1) * mask
            return jnp.dot(xcat.astype(bf16), w, preferred_element_type=f32)

        # ---- stem: host-side im2col'd input @ stacked stem weight, folded BN + relu
        hs = jnp.dot(xc_ref[...], w_stem_ref[...], preferred_element_type=f32)
        h = jnp.maximum(hs * s_in_ref[...] + b_in_ref[...], 0.0)

        # ---- residual tower, fully unrolled (all block weights resident in VMEM)
        for blk in range(num_res):
            aff = raff_ref[blk]          # (4, C): [s1; b1; s2; b2] (folded eval BN)
            o = conv(h, rw1_ref[blk])
            o = jnp.maximum(o * aff[0:1, :] + aff[1:2, :], 0.0)
            o = conv(o, rw2_ref[blk])
            o = o * aff[2:3, :] + aff[3:4, :]
            h = jnp.maximum(o + h, 0.0)

        # ---- fc branch
        f = jnp.maximum(jnp.dot(xf_ref[...], fc1w_ref[...],
                                preferred_element_type=f32) + fc1b_ref[...], 0.0)
        f = jnp.maximum(jnp.dot(f.astype(bf16), fc2w_ref[...],
                                preferred_element_type=f32) + fc2b_ref[...], 0.0)

        # ---- q head: (HWB, C) -> (B, HW*C), columns in (h, w, c) order, via lane concat
        hB = jnp.concatenate([h[p * B:(p + 1) * B, :] for p in range(HW)], axis=1)

        q1wc_cp.wait()                   # q-head conv weight is in VMEM by now
        q = (jnp.dot(hB.astype(bf16), q1wc_vmem[...], preferred_element_type=f32)
             + jnp.dot(f.astype(bf16), q1wf_ref[...], preferred_element_type=f32)
             + q1b_ref[...])
        q = jnp.maximum(q, 0.0)
        out = (jnp.dot(q.astype(bf16), q2w_ref[...], preferred_element_type=f32)
               + q2b_ref[...])
        out_ref[...] = out.astype(out_ref.dtype)

    return kernel


# ----------------------------------------------------------------------------
# Host-side packing helpers
# ----------------------------------------------------------------------------
def _bn_fold(p):
    scale = p['gamma'] / jnp.sqrt(p['var'] + EPS)
    bias = p['beta'] - p['mean'] * scale
    return scale.reshape(1, -1), bias.reshape(1, -1)


def _conv_w_im2col(w_oihw, dtype=jnp.bfloat16):
    # OIHW -> (9*Cin, Cout): row = (dy*3+dx)*Cin + cin.  No lane padding.
    cout, cin = w_oihw.shape[0], w_oihw.shape[1]
    return jnp.transpose(w_oihw, (2, 3, 1, 0)).reshape(9 * cin, cout).astype(dtype)


def _im2col(x_conv):
    # NCHW -> (H*W*B, 9*Cin): row = (i*W + j)*B + b, col = k*Cin + cin, k = dy*3+dx.
    B, Cin, H, W = x_conv.shape
    xpad = jnp.pad(x_conv, ((0, 0), (0, 0), (1, 1), (1, 1)))
    cols = []
    for dy in range(3):
        for dx in range(3):
            patch = xpad[:, :, dy:dy + H, dx:dx + W]                 # (B, Cin, H, W)
            cols.append(jnp.transpose(patch, (2, 3, 0, 1)).reshape(H * W * B, Cin))
    return jnp.concatenate(cols, axis=1)


def _conv_mask(H, W, B, C):
    # (H*W*B, 9*C) 0/1 mask: mask[(i*W+j)*B+b, k*C+c] = 1 iff tap k at (i, j) is
    # inside the padded 3x3 window (same row/col layout as the in-kernel im2col).
    i_idx = np.repeat(np.arange(H), W * B)
    j_idx = np.tile(np.repeat(np.arange(W), B), H)
    cols = []
    for dy in range(3):
        for dx in range(3):
            ii, jj = i_idx + dy - 1, j_idx + dx - 1
            valid = ((ii >= 0) & (ii < H) & (jj >= 0) & (jj < W)).astype(np.float32)
            cols.append(np.repeat(valid[:, None], C, axis=1))
    return jnp.asarray(np.concatenate(cols, axis=1))


# ----------------------------------------------------------------------------
# pallas_call wrapper
# ----------------------------------------------------------------------------
def pallas_forward(x_conv, x_fc, P):
    B, Cin, H, W = x_conv.shape
    HW = H * W
    C = P['w_in'].shape[0]
    action = P['q2_w'].shape[1]
    n1 = P['q1_w_conv'].shape[1]
    num_res = len(P['res'])
    bf16 = jnp.bfloat16

    xc = _im2col(x_conv).astype(bf16)                          # (HWB, 9*Cin) bf16
    w_stem = _conv_w_im2col(P['w_in'])                         # (9*Cin, C) bf16
    s_in, b_in = _bn_fold(P['bn_in'])
    mask = _conv_mask(H, W, B, C)                              # (HWB, 9*C) f32

    rw1 = jnp.stack([_conv_w_im2col(blk['w1']) for blk in P['res']])   # (nres,9C,C)
    rw2 = jnp.stack([_conv_w_im2col(blk['w2']) for blk in P['res']])
    raff = jnp.stack([
        jnp.concatenate(list(_bn_fold(blk['bn1'])) + list(_bn_fold(blk['bn2'])), axis=0)
        for blk in P['res']])                                          # (nres, 4, C)

    # q-head conv-part weight arrives with rows in PyTorch flatten order (c, h, w);
    # permute to the kernel's (h, w, c) column order.
    q1wc = jnp.transpose(P['q1_w_conv'].reshape(C, H, W, n1),
                         (1, 2, 0, 3)).reshape(HW * C, n1).astype(bf16)

    args = (xc, x_fc.astype(bf16),
            w_stem, s_in, b_in, mask,
            rw1, rw2, raff,
            P['fc1_w'].astype(bf16), P['fc1_b'].reshape(1, -1),
            P['fc2_w'].astype(bf16), P['fc2_b'].reshape(1, -1),
            q1wc, P['q1_w_fc'].astype(bf16), P['q1_b'].reshape(1, -1),
            P['q2_w'].astype(bf16), P['q2_b'].reshape(1, -1))

    def vspec(a):      # whole array resident in VMEM (single grid step)
        nd = a.ndim
        return pl.BlockSpec(a.shape, lambda i, nd=nd: (0,) * nd)

    in_specs = [vspec(a) for a in args]
    in_specs[13] = pl.BlockSpec(memory_space=pl.ANY)   # q1wc stays in HBM, manual DMA

    kernel = make_kernel(H, W, B, C, num_res)
    return pl.pallas_call(
        kernel,
        out_shape=jax.ShapeDtypeStruct((B, action), jnp.float32),
        grid=(1,),
        in_specs=in_specs,
        out_specs=pl.BlockSpec((B, action), lambda i: (0, 0)),
        scratch_shapes=[pltpu.VMEM((HW * C, n1), bf16),
                        pltpu.SemaphoreType.DMA],
        compiler_params=pltpu.CompilerParams(
            dimension_semantics=("arbitrary",)),
    )(*args)


# ----------------------------------------------------------------------------
# Deterministic synthetic parameters (shapes follow NeuralNetwork.__init__)
# ----------------------------------------------------------------------------
def init_params(key, cin=9, H=2, W=4, fc_in=11, action=40, num_res=5, ch=64):
    ks = iter(jax.random.split(key, 80))

    def unif(shape, fan_in):
        bnd = 1.0 / np.sqrt(fan_in)
        return jax.random.uniform(next(ks), shape, jnp.float32, -bnd, bnd)

    def bn(c):
        return dict(
            gamma=jax.random.uniform(next(ks), (c,), jnp.float32, 0.5, 1.5),
            beta=jax.random.uniform(next(ks), (c,), jnp.float32, -0.1, 0.1),
            mean=jax.random.uniform(next(ks), (c,), jnp.float32, -0.1, 0.1),
            var=jax.random.uniform(next(ks), (c,), jnp.float32, 0.5, 1.5))

    P = {}
    P['w_in'] = unif((ch, cin, 3, 3), cin * 9)                # OIHW
    P['bn_in'] = bn(ch)
    P['res'] = [dict(w1=unif((ch, ch, 3, 3), ch * 9), bn1=bn(ch),
                     w2=unif((ch, ch, 3, 3), ch * 9), bn2=bn(ch))
                for _ in range(num_res)]
    P['fc1_w'] = unif((fc_in, 64), fc_in)
    P['fc1_b'] = unif((64,), fc_in)
    P['fc2_w'] = unif((64, 64), 64)
    P['fc2_b'] = unif((64,), 64)
    flat = ch * H * W
    comb = flat + 64
    # q1_w_conv rows are in PyTorch x.view(B, -1) order on NCHW, i.e. (c, h, w).
    P['q1_w_conv'] = unif((flat, 256), comb)
    P['q1_w_fc'] = unif((64, 256), comb)
    P['q1_b'] = unif((256,), comb)
    P['q2_w'] = unif((256, action), 256)
    P['q2_b'] = unif((action,), 256)
    return P


# ----------------------------------------------------------------------------
# Pure-JAX f32 reference (same math, eval-mode BN, PyTorch flatten order)
# ----------------------------------------------------------------------------
def reference_forward(x_conv, x_fc, P):
    def conv(x, w):
        return jax.lax.conv_general_dilated(
            x, w, (1, 1), ((1, 1), (1, 1)),
            dimension_numbers=('NCHW', 'OIHW', 'NCHW'))

    def bn(x, p):
        scale = p['gamma'] / jnp.sqrt(p['var'] + EPS)
        bias = p['beta'] - p['mean'] * scale
        return x * scale[None, :, None, None] + bias[None, :, None, None]

    h = jax.nn.relu(bn(conv(x_conv, P['w_in']), P['bn_in']))
    for blk in P['res']:
        r = h
        o = jax.nn.relu(bn(conv(h, blk['w1']), blk['bn1']))
        o = bn(conv(o, blk['w2']), blk['bn2'])
        h = jax.nn.relu(o + r)
    B = x_conv.shape[0]
    conv_flat = h.reshape(B, -1)            # PyTorch x.view(B, -1): (c, h, w) order
    f = jax.nn.relu(x_fc @ P['fc1_w'] + P['fc1_b'])
    f = jax.nn.relu(f @ P['fc2_w'] + P['fc2_b'])
    q = jax.nn.relu(conv_flat @ P['q1_w_conv'] + f @ P['q1_w_fc'] + P['q1_b'])
    return q @ P['q2_w'] + P['q2_b']


if __name__ == "__main__":
    key = jax.random.PRNGKey(0)
    kp, kx1, kx2 = jax.random.split(key, 3)
    P = init_params(kp)

    B = 2
    x_conv = jax.random.normal(kx1, (B, 9, 2, 4), jnp.float32)   # NCHW, as in PyTorch
    x_fc = jax.random.normal(kx2, (B, 11), jnp.float32)

    fwd = jax.jit(lambda a, b: pallas_forward(a, b, P))
    out = jax.block_until_ready(fwd(x_conv, x_fc))

    # bf16 weights / bf16 MXU operands (f32 accumulation) vs f32 reference:
    # expected deviation ~1e-3..1e-2 relative over ~15 matmul layers.
    ref = reference_forward(x_conv, x_fc, P)
    np.testing.assert_allclose(np.asarray(out), np.asarray(ref), rtol=2e-2, atol=2e-2)
    print("KERNEL_OK")
</pallas_src>

<mosaic_0001>
module attributes {stable_mosaic.version = 11 : i64} {
  func.func @kernel(%arg0: i32, %arg1: memref<16x81xbf16, #tpu.memory_space<vmem>>, %arg2: memref<2x11xbf16, #tpu.memory_space<vmem>>, %arg3: memref<81x64xbf16, #tpu.memory_space<vmem>>, %arg4: memref<1x64xf32, #tpu.memory_space<vmem>>, %arg5: memref<1x64xf32, #tpu.memory_space<vmem>>, %arg6: memref<16x576xf32, #tpu.memory_space<vmem>>, %arg7: memref<5x576x64xbf16, #tpu.memory_space<vmem>>, %arg8: memref<5x576x64xbf16, #tpu.memory_space<vmem>>, %arg9: memref<5x4x64xf32, #tpu.memory_space<vmem>>, %arg10: memref<11x64xbf16, #tpu.memory_space<vmem>>, %arg11: memref<1x64xf32, #tpu.memory_space<vmem>>, %arg12: memref<64x64xbf16, #tpu.memory_space<vmem>>, %arg13: memref<1x64xf32, #tpu.memory_space<vmem>>, %arg14: memref<512x256xbf16, #tpu.memory_space<any>>, %arg15: memref<64x256xbf16, #tpu.memory_space<vmem>>, %arg16: memref<1x256xf32, #tpu.memory_space<vmem>>, %arg17: memref<256x40xbf16, #tpu.memory_space<vmem>>, %arg18: memref<1x40xf32, #tpu.memory_space<vmem>>, %arg19: memref<2x40xf32, #tpu.memory_space<vmem>>, %arg20: memref<512x256xbf16, #tpu.memory_space<vmem>>, %arg21: memref<!tpu.dma_semaphore, #tpu.memory_space<semaphore_mem>>) attributes {dimension_semantics = [#tpu.dimension_semantics<arbitrary>], iteration_bounds = array<i64: 1>, scalar_prefetch = 0 : i64, scratch_operands = 2 : i64, tpu.core_type = #tpu.core_type<tc>, window_params = [{pipeline_mode = #tpu.pipeline_mode<synchronous>, transform_indices = @transform_0, window_bounds = array<i64: 16, 81>}, {pipeline_mode = #tpu.pipeline_mode<synchronous>, transform_indices = @transform_1, window_bounds = array<i64: 2, 11>}, {pipeline_mode = #tpu.pipeline_mode<synchronous>, transform_indices = @transform_2, window_bounds = array<i64: 81, 64>}, {pipeline_mode = #tpu.pipeline_mode<synchronous>, transform_indices = @transform_3, window_bounds = array<i64: 1, 64>}, {pipeline_mode = #tpu.pipeline_mode<synchronous>, transform_indices = @transform_4, window_bounds = array<i64: 1, 64>}, {pipeline_mode = #tpu.pipeline_mode<synchronous>, transform_indices = @transform_5, window_bounds = array<i64: 16, 576>}, {pipeline_mode = #tpu.pipeline_mode<synchronous>, transform_indices = @transform_6, window_bounds = array<i64: 5, 576, 64>}, {pipeline_mode = #tpu.pipeline_mode<synchronous>, transform_indices = @transform_7, window_bounds = array<i64: 5, 576, 64>}, {pipeline_mode = #tpu.pipeline_mode<synchronous>, transform_indices = @transform_8, window_bounds = array<i64: 5, 4, 64>}, {pipeline_mode = #tpu.pipeline_mode<synchronous>, transform_indices = @transform_9, window_bounds = array<i64: 11, 64>}, {pipeline_mode = #tpu.pipeline_mode<synchronous>, transform_indices = @transform_10, window_bounds = array<i64: 1, 64>}, {pipeline_mode = #tpu.pipeline_mode<synchronous>, transform_indices = @transform_11, window_bounds = array<i64: 64, 64>}, {pipeline_mode = #tpu.pipeline_mode<synchronous>, transform_indices = @transform_12, window_bounds = array<i64: 1, 64>}, {}, {pipeline_mode = #tpu.pipeline_mode<synchronous>, transform_indices = @transform_14, window_bounds = array<i64: 64, 256>}, {pipeline_mode = #tpu.pipeline_mode<synchronous>, transform_indices = @transform_15, window_bounds = array<i64: 1, 256>}, {pipeline_mode = #tpu.pipeline_mode<synchronous>, transform_indices = @transform_16, window_bounds = array<i64: 256, 40>}, {pipeline_mode = #tpu.pipeline_mode<synchronous>, transform_indices = @transform_17, window_bounds = array<i64: 1, 40>}, {pipeline_mode = #tpu.pipeline_mode<synchronous>, transform_indices = @transform_18, window_bounds = array<i64: 2, 40>}]} {
    tpu.enqueue_dma source(%arg14 : memref<512x256xbf16, #tpu.memory_space<any>>) target(%arg20 : memref<512x256xbf16, #tpu.memory_space<vmem>>) target_semaphore(%arg21 : memref<!tpu.dma_semaphore, #tpu.memory_space<semaphore_mem>>)
    %c0 = arith.constant 0 : index
    %c0_0 = arith.constant 0 : index
    %0 = vector.load %arg6[%c0, %c0_0] : memref<16x576xf32, #tpu.memory_space<vmem>>, vector<16x576xf32>
    %c0_1 = arith.constant 0 : index
    %c0_2 = arith.constant 0 : index
    %1 = vector.load %arg1[%c0_1, %c0_2] : memref<16x81xbf16, #tpu.memory_space<vmem>>, vector<16x81xbf16>
    %c0_3 = arith.constant 0 : index
    %c0_4 = arith.constant 0 : index
    %2 = vector.load %arg3[%c0_3, %c0_4] : memref<81x64xbf16, #tpu.memory_space<vmem>>, vector<81x64xbf16>
    %cst = arith.constant dense<0.000000e+00> : vector<16x64xf32>
    %3 = tpu.matmul %1, %2, %cst {dimension_numbers = #tpu.dot_dimension_numbers<[1], [0], [0], [1], [0, 0, 1, 1], [], []>} : vector<16x81xbf16>, vector<81x64xbf16>, vector<16x64xf32> -> vector<16x64xf32>
    %c0_5 = arith.constant 0 : index
    %c0_6 = arith.constant 0 : index
    %4 = vector.load %arg4[%c0_5, %c0_6] : memref<1x64xf32, #tpu.memory_space<vmem>>, vector<1x64xf32>
    %5 = vector.broadcast %4 : vector<1x64xf32> to vector<16x64xf32>
    %6 = arith.mulf %3, %5 : vector<16x64xf32>
    %c0_7 = arith.constant 0 : index
    %c0_8 = arith.constant 0 : index
    %7 = vector.load %arg5[%c0_7, %c0_8] : memref<1x64xf32, #tpu.memory_space<vmem>>, vector<1x64xf32>
    %8 = vector.broadcast %7 : vector<1x64xf32> to vector<16x64xf32>
    %9 = arith.addf %6, %8 : vector<16x64xf32>
    %cst_9 = arith.constant 0.000000e+00 : f32
    %10 = vector.broadcast %cst_9 : f32 to vector<16x64xf32>
    %11 = arith.maximumf %9, %10 : vector<16x64xf32>
    %c0_10 = arith.constant 0 : index
    %c0_11 = arith.constant 0 : index
    %c0_12 = arith.constant 0 : index
    %12 = vector.load %arg9[%c0_10, %c0_11, %c0_12] : memref<5x4x64xf32, #tpu.memory_space<vmem>>, vector<1x4x64xf32>
    %13 = vector.shape_cast %12 : vector<1x4x64xf32> to vector<4x64xf32>
    %c0_13 = arith.constant 0 : index
    %c0_14 = arith.constant 0 : index
    %c0_15 = arith.constant 0 : index
    %14 = vector.load %arg7[%c0_13, %c0_14, %c0_15] : memref<5x576x64xbf16, #tpu.memory_space<vmem>>, vector<1x576x64xbf16>
    %15 = vector.shape_cast %14 : vector<1x576x64xbf16> to vector<576x64xbf16>
    %16 = vector.extract_strided_slice %11 {offsets = [6, 0], sizes = [10, 64], strides = [1, 1]} : vector<16x64xf32> to vector<10x64xf32>
    %17 = vector.extract_strided_slice %11 {offsets = [0, 0], sizes = [6, 64], strides = [1, 1]} : vector<16x64xf32> to vector<6x64xf32>
    %18 = tpu.concatenate %16, %17 in 0 : vector<10x64xf32>, vector<6x64xf32> -> vector<16x64xf32>
    %19 = vector.extract_strided_slice %11 {offsets = [8, 0], sizes = [8, 64], strides = [1, 1]} : vector<16x64xf32> to vector<8x64xf32>
    %20 = vector.extract_strided_slice %11 {offsets = [0, 0], sizes = [8, 64], strides = [1, 1]} : vector<16x64xf32> to vector<8x64xf32>
    %21 = tpu.concatenate %19, %20 in 0 : vector<8x64xf32>, vector<8x64xf32> -> vector<16x64xf32>
    %22 = vector.extract_strided_slice %11 {offsets = [10, 0], sizes = [6, 64], strides = [1, 1]} : vector<16x64xf32> to vector<6x64xf32>
    %23 = vector.extract_strided_slice %11 {offsets = [0, 0], sizes = [10, 64], strides = [1, 1]} : vector<16x64xf32> to vector<10x64xf32>
    %24 = tpu.concatenate %22, %23 in 0 : vector<6x64xf32>, vector<10x64xf32> -> vector<16x64xf32>
    %25 = vector.extract_strided_slice %11 {offsets = [14, 0], sizes = [2, 64], strides = [1, 1]} : vector<16x64xf32> to vector<2x64xf32>
    %26 = vector.extract_strided_slice %11 {offsets = [0, 0], sizes = [14, 64], strides = [1, 1]} : vector<16x64xf32> to vector<14x64xf32>
    %27 = tpu.concatenate %25, %26 in 0 : vector<2x64xf32>, vector<14x64xf32> -> vector<16x64xf32>
    %28 = vector.extract_strided_slice %11 {offsets = [2, 0], sizes = [14, 64], strides = [1, 1]} : vector<16x64xf32> to vector<14x64xf32>
    %29 = vector.extract_strided_slice %11 {offsets = [0, 0], sizes = [2, 64], strides = [1, 1]} : vector<16x64xf32> to vector<2x64xf32>
    %30 = tpu.concatenate %28, %29 in 0 : vector<14x64xf32>, vector<2x64xf32> -> vector<16x64xf32>
    %31 = vector.extract_strided_slice %11 {offsets = [6, 0], sizes = [10, 64], strides = [1, 1]} : vector<16x64xf32> to vector<10x64xf32>
    %32 = vector.extract_strided_slice %11 {offsets = [0, 0], sizes = [6, 64], strides = [1, 1]} : vector<16x64xf32> to vector<6x64xf32>
    %33 = tpu.concatenate %31, %32 in 0 : vector<10x64xf32>, vector<6x64xf32> -> vector<16x64xf32>
    %34 = vector.extract_strided_slice %11 {offsets = [8, 0], sizes = [8, 64], strides = [1, 1]} : vector<16x64xf32> to vector<8x64xf32>
    %35 = vector.extract_strided_slice %11 {offsets = [0, 0], sizes = [8, 64], strides = [1, 1]} : vector<16x64xf32> to vector<8x64xf32>
    %36 = tpu.concatenate %34, %35 in 0 : vector<8x64xf32>, vector<8x64xf32> -> vector<16x64xf32>
    %37 = vector.extract_strided_slice %11 {offsets = [10, 0], sizes = [6, 64], strides = [1, 1]} : vector<16x64xf32> to vector<6x64xf32>
    %38 = vector.extract_strided_slice %11 {offsets = [0, 0], sizes = [10, 64], strides = [1, 1]} : vector<16x64xf32> to vector<10x64xf32>
    %39 = tpu.concatenate %37, %38 in 0 : vector<6x64xf32>, vector<10x64xf32> -> vector<16x64xf32>
    %40 = tpu.concatenate %18, %21, %24, %27, %11, %30, %33, %36, %39 in 1 : vector<16x64xf32>, vector<16x64xf32>, vector<16x64xf32>, vector<16x64xf32>, vector<16x64xf32>, vector<16x64xf32>, vector<16x64xf32>, vector<16x64xf32>, vector<16x64xf32> -> vector<16x576xf32>
    %41 = arith.mulf %40, %0 : vector<16x576xf32>
    %42 = arith.truncf %41 : vector<16x576xf32> to vector<16x576xbf16>
    %cst_16 = arith.constant dense<0.000000e+00> : vector<16x64xf32>
    %43 = tpu.matmul %42, %15, %cst_16 {dimension_numbers = #tpu.dot_dimension_numbers<[1], [0], [0], [1], [0, 0, 1, 1], [], []>} : vector<16x576xbf16>, vector<576x64xbf16>, vector<16x64xf32> -> vector<16x64xf32>
    %44 = vector.extract_strided_slice %13 {offsets = [0, 0], sizes = [1, 64], strides = [1, 1]} : vector<4x64xf32> to vector<1x64xf32>
    %45 = vector.broadcast %44 : vector<1x64xf32> to vector<16x64xf32>
    %46 = arith.mulf %43, %45 : vector<16x64xf32>
    %47 = vector.extract_strided_slice %13 {offsets = [1, 0], sizes = [1, 64], strides = [1, 1]} : vector<4x64xf32> to vector<1x64xf32>
    %48 = vector.broadcast %47 : vector<1x64xf32> to vector<16x64xf32>
    %49 = arith.addf %46, %48 : vector<16x64xf32>
    %cst_17 = arith.constant 0.000000e+00 : f32
    %50 = vector.broadcast %cst_17 : f32 to vector<16x64xf32>
    %51 = arith.maximumf %49, %50 : vector<16x64xf32>
    %c0_18 = arith.constant 0 : index
    %c0_19 = arith.constant 0 : index
    %c0_20 = arith.constant 0 : index
    %52 = vector.load %arg8[%c0_18, %c0_19, %c0_20] : memref<5x576x64xbf16, #tpu.memory_space<vmem>>, vector<1x576x64xbf16>
    %53 = vector.shape_cast %52 : vector<1x576x64xbf16> to vector<576x64xbf16>
    %54 = vector.extract_strided_slice %51 {offsets = [6, 0], sizes = [10, 64], strides = [1, 1]} : vector<16x64xf32> to vector<10x64xf32>
    %55 = vector.extract_strided_slice %51 {offsets = [0, 0], sizes = [6, 64], strides = [1, 1]} : vector<16x64xf32> to vector<6x64xf32>
    %56 = tpu.concatenate %54, %55 in 0 : vector<10x64xf32>, vector<6x64xf32> -> vector<16x64xf32>
    %57 = vector.extract_strided_slice %51 {offsets = [8, 0], sizes = [8, 64], strides = [1, 1]} : vector<16x64xf32> to vector<8x64xf32>
    %58 = vector.extract_strided_slice %51 {offsets = [0, 0], sizes = [8, 64], strides = [1, 1]} : vector<16x64xf32> to vector<8x64xf32>
    %59 = tpu.concatenate %57, %58 in 0 : vector<8x64xf32>, vector<8x64xf32> -> vector<16x64xf32>
    %60 = vector.extract_strided_slice %51 {offsets = [10, 0], sizes = [6, 64], strides = [1, 1]} : vector<16x64xf32> to vector<6x64xf32>
    %61 = vector.extract_strided_slice %51 {offsets = [0, 0], sizes = [10, 64], strides = [1, 1]} : vector<16x64xf32> to vector<10x64xf32>
    %62 = tpu.concatenate %60, %61 in 0 : vector<6x64xf32>, vector<10x64xf32> -> vector<16x64xf32>
    %63 = vector.extract_strided_slice %51 {offsets = [14, 0], sizes = [2, 64], strides = [1, 1]} : vector<16x64xf32> to vector<2x64xf32>
    %64 = vector.extract_strided_slice %51 {offsets = [0, 0], sizes = [14, 64], strides = [1, 1]} : vector<16x64xf32> to vector<14x64xf32>
    %65 = tpu.concatenate %63, %64 in 0 : vector<2x64xf32>, vector<14x64xf32> -> vector<16x64xf32>
    %66 = vector.extract_strided_slice %51 {offsets = [2, 0], sizes = [14, 64], strides = [1, 1]} : vector<16x64xf32> to vector<14x64xf32>
    %67 = vector.extract_strided_slice %51 {offsets = [0, 0], sizes = [2, 64], strides = [1, 1]} : vector<16x64xf32> to vector<2x64xf32>
    %68 = tpu.concatenate %66, %67 in 0 : vector<14x64xf32>, vector<2x64xf32> -> vector<16x64xf32>
    %69 = vector.extract_strided_slice %51 {offsets = [6, 0], sizes = [10, 64], strides = [1, 1]} : vector<16x64xf32> to vector<10x64xf32>
    %70 = vector.extract_strided_slice %51 {offsets = [0, 0], sizes = [6, 64], strides = [1, 1]} : vector<16x64xf32> to vector<6x64xf32>
    %71 = tpu.concatenate %69, %70 in 0 : vector<10x64xf32>, vector<6x64xf32> -> vector<16x64xf32>
    %72 = vector.extract_strided_slice %51 {offsets = [8, 0], sizes = [8, 64], strides = [1, 1]} : vector<16x64xf32> to vector<8x64xf32>
    %73 = vector.extract_strided_slice %51 {offsets = [0, 0], sizes = [8, 64], strides = [1, 1]} : vector<16x64xf32> to vector<8x64xf32>
    %74 = tpu.concatenate %72, %73 in 0 : vector<8x64xf32>, vector<8x64xf32> -> vector<16x64xf32>
    %75 = vector.extract_strided_slice %51 {offsets = [10, 0], sizes = [6, 64], strides = [1, 1]} : vector<16x64xf32> to vector<6x64xf32>
    %76 = vector.extract_strided_slice %51 {offsets = [0, 0], sizes = [10, 64], strides = [1, 1]} : vector<16x64xf32> to vector<10x64xf32>
    %77 = tpu.concatenate %75, %76 in 0 : vector<6x64xf32>, vector<10x64xf32> -> vector<16x64xf32>
    %78 = tpu.concatenate %56, %59, %62, %65, %51, %68, %71, %74, %77 in 1 : vector<16x64xf32>, vector<16x64xf32>, vector<16x64xf32>, vector<16x64xf32>, vector<16x64xf32>, vector<16x64xf32>, vector<16x64xf32>, vector<16x64xf32>, vector<16x64xf32> -> vector<16x576xf32>
    %79 = arith.mulf %78, %0 : vector<16x576xf32>
    %80 = arith.truncf %79 : vector<16x576xf32> to vector<16x576xbf16>
    %cst_21 = arith.constant dense<0.000000e+00> : vector<16x64xf32>
    %81 = tpu.matmul %80, %53, %cst_21 {dimension_numbers = #tpu.dot_dimension_numbers<[1], [0], [0], [1], [0, 0, 1, 1], [], []>} : vector<16x576xbf16>, vector<576x64xbf16>, vector<16x64xf32> -> vector<16x64xf32>
    %82 = vector.extract_strided_slice %13 {offsets = [2, 0], sizes = [1, 64], strides = [1, 1]} : vector<4x64xf32> to vector<1x64xf32>
    %83 = vector.broadcast %82 : vector<1x64xf32> to vector<16x64xf32>
    %84 = arith.mulf %81, %83 : vector<16x64xf32>
    %85 = vector.extract_strided_slice %13 {offsets = [3, 0], sizes = [1, 64], strides = [1, 1]} : vector<4x64xf32> to vector<1x64xf32>
    %86 = vector.broadcast %85 : vector<1x64xf32> to vector<16x64xf32>
    %87 = arith.addf %84, %86 : vector<16x64xf32>
    %88 = arith.addf %87, %11 : vector<16x64xf32>
    %cst_22 = arith.constant 0.000000e+00 : f32
    %89 = vector.broadcast %cst_22 : f32 to vector<16x64xf32>
    %90 = arith.maximumf %88, %89 : vector<16x64xf32>
    %c1 = arith.constant 1 : index
    %c0_23 = arith.constant 0 : index
    %c0_24 = arith.constant 0 : index
    %91 = vector.load %arg9[%c1, %c0_23, %c0_24] : memref<5x4x64xf32, #tpu.memory_space<vmem>>, vector<1x4x64xf32>
    %92 = vector.shape_cast %91 : vector<1x4x64xf32> to vector<4x64xf32>
    %c1_25 = arith.constant 1 : index
    %c0_26 = arith.constant 0 : index
    %c0_27 = arith.constant 0 : index
    %93 = vector.load %arg7[%c1_25, %c0_26, %c0_27] : memref<5x576x64xbf16, #tpu.memory_space<vmem>>, vector<1x576x64xbf16>
    %94 = vector.shape_cast %93 : vector<1x576x64xbf16> to vector<576x64xbf16>
    %95 = vector.extract_strided_slice %90 {offsets = [6, 0], sizes = [10, 64], strides = [1, 1]} : vector<16x64xf32> to vector<10x64xf32>
    %96 = vector.extract_strided_slice %90 {offsets = [0, 0], sizes = [6, 64], strides = [1, 1]} : vector<16x64xf32> to vector<6x64xf32>
    %97 = tpu.concatenate %95, %96 in 0 : vector<10x64xf32>, vector<6x64xf32> -> vector<16x64xf32>
    %98 = vector.extract_strided_slice %90 {offsets = [8, 0], sizes = [8, 64], strides = [1, 1]} : vector<16x64xf32> to vector<8x64xf32>
    %99 = vector.extract_strided_slice %90 {offsets = [0, 0], sizes = [8, 64], strides = [1, 1]} : vector<16x64xf32> to vector<8x64xf32>
    %100 = tpu.concatenate %98, %99 in 0 : vector<8x64xf32>, vector<8x64xf32> -> vector<16x64xf32>
    %101 = vector.extract_strided_slice %90 {offsets = [10, 0], sizes = [6, 64], strides = [1, 1]} : vector<16x64xf32> to vector<6x64xf32>
    %102 = vector.extract_strided_slice %90 {offsets = [0, 0], sizes = [10, 64], strides = [1, 1]} : vector<16x64xf32> to vector<10x64xf32>
    %103 = tpu.concatenate %101, %102 in 0 : vector<6x64xf32>, vector<10x64xf32> -> vector<16x64xf32>
    %104 = vector.extract_strided_slice %90 {offsets = [14, 0], sizes = [2, 64], strides = [1, 1]} : vector<16x64xf32> to vector<2x64xf32>
    %105 = vector.extract_strided_slice %90 {offsets = [0, 0], sizes = [14, 64], strides = [1, 1]} : vector<16x64xf32> to vector<14x64xf32>
    %106 = tpu.concatenate %104, %105 in 0 : vector<2x64xf32>, vector<14x64xf32> -> vector<16x64xf32>
    %107 = vector.extract_strided_slice %90 {offsets = [2, 0], sizes = [14, 64], strides = [1, 1]} : vector<16x64xf32> to vector<14x64xf32>
    %108 = vector.extract_strided_slice %90 {offsets = [0, 0], sizes = [2, 64], strides = [1, 1]} : vector<16x64xf32> to vector<2x64xf32>
    %109 = tpu.concatenate %107, %108 in 0 : vector<14x64xf32>, vector<2x64xf32> -> vector<16x64xf32>
    %110 = vector.extract_strided_slice %90 {offsets = [6, 0], sizes = [10, 64], strides = [1, 1]} : vector<16x64xf32> to vector<10x64xf32>
    %111 = vector.extract_strided_slice %90 {offsets = [0, 0], sizes = [6, 64], strides = [1, 1]} : vector<16x64xf32> to vector<6x64xf32>
    %112 = tpu.concatenate %110, %111 in 0 : vector<10x64xf32>, vector<6x64xf32> -> vector<16x64xf32>
    %113 = vector.extract_strided_slice %90 {offsets = [8, 0], sizes = [8, 64], strides = [1, 1]} : vector<16x64xf32> to vector<8x64xf32>
    %114 = vector.extract_strided_slice %90 {offsets = [0, 0], sizes = [8, 64], strides = [1, 1]} : vector<16x64xf32> to vector<8x64xf32>
    %115 = tpu.concatenate %113, %114 in 0 : vector<8x64xf32>, vector<8x64xf32> -> vector<16x64xf32>
    %116 = vector.extract_strided_slice %90 {offsets = [10, 0], sizes = [6, 64], strides = [1, 1]} : vector<16x64xf32> to vector<6x64xf32>
    %117 = vector.extract_strided_slice %90 {offsets = [0, 0], sizes = [10, 64], strides = [1, 1]} : vector<16x64xf32> to vector<10x64xf32>
    %118 = tpu.concatenate %116, %117 in 0 : vector<6x64xf32>, vector<10x64xf32> -> vector<16x64xf32>
    %119 = tpu.concatenate %97, %100, %103, %106, %90, %109, %112, %115, %118 in 1 : vector<16x64xf32>, vector<16x64xf32>, vector<16x64xf32>, vector<16x64xf32>, vector<16x64xf32>, vector<16x64xf32>, vector<16x64xf32>, vector<16x64xf32>, vector<16x64xf32> -> vector<16x576xf32>
    %120 = arith.mulf %119, %0 : vector<16x576xf32>
    %121 = arith.truncf %120 : vector<16x576xf32> to vector<16x576xbf16>
    %cst_28 = arith.constant dense<0.000000e+00> : vector<16x64xf32>
    %122 = tpu.matmul %121, %94, %cst_28 {dimension_numbers = #tpu.dot_dimension_numbers<[1], [0], [0], [1], [0, 0, 1, 1], [], []>} : vector<16x576xbf16>, vector<576x64xbf16>, vector<16x64xf32> -> vector<16x64xf32>
    %123 = vector.extract_strided_slice %92 {offsets = [0, 0], sizes = [1, 64], strides = [1, 1]} : vector<4x64xf32> to vector<1x64xf32>
    %124 = vector.broadcast %123 : vector<1x64xf32> to vector<16x64xf32>
    %125 = arith.mulf %122, %124 : vector<16x64xf32>
    %126 = vector.extract_strided_slice %92 {offsets = [1, 0], sizes = [1, 64], strides = [1, 1]} : vector<4x64xf32> to vector<1x64xf32>
    %127 = vector.broadcast %126 : vector<1x64xf32> to vector<16x64xf32>
    %128 = arith.addf %125, %127 : vector<16x64xf32>
    %cst_29 = arith.constant 0.000000e+00 : f32
    %129 = vector.broadcast %cst_29 : f32 to vector<16x64xf32>
    %130 = arith.maximumf %128, %129 : vector<16x64xf32>
    %c1_30 = arith.constant 1 : index
    %c0_31 = arith.constant 0 : index
    %c0_32 = arith.constant 0 : index
    %131 = vector.load %arg8[%c1_30, %c0_31, %c0_32] : memref<5x576x64xbf16, #tpu.memory_space<vmem>>, vector<1x576x64xbf16>
    %132 = vector.shape_cast %131 : vector<1x576x64xbf16> to vector<576x64xbf16>
    %133 = vector.extract_strided_slice %130 {offsets = [6, 0], sizes = [10, 64], strides = [1, 1]} : vector<16x64xf32> to vector<10x64xf32>
    %134 = vector.extract_strided_slice %130 {offsets = [0, 0], sizes = [6, 64], strides = [1, 1]} : vector<16x64xf32> to vector<6x64xf32>
    %135 = tpu.concatenate %133, %134 in 0 : vector<10x64xf32>, vector<6x64xf32> -> vector<16x64xf32>
    %136 = vector.extract_strided_slice %130 {offsets = [8, 0], sizes = [8, 64], strides = [1, 1]} : vector<16x64xf32> to vector<8x64xf32>
    %137 = vector.extract_strided_slice %130 {offsets = [0, 0], sizes = [8, 64], strides = [1, 1]} : vector<16x64xf32> to vector<8x64xf32>
    %138 = tpu.concatenate %136, %137 in 0 : vector<8x64xf32>, vector<8x64xf32> -> vector<16x64xf32>
    %139 = vector.extract_strided_slice %130 {offsets = [10, 0], sizes = [6, 64], strides = [1, 1]} : vector<16x64xf32> to vector<6x64xf32>
    %140 = vector.extract_strided_slice %130 {offsets = [0, 0], sizes = [10, 64], strides = [1, 1]} : vector<16x64xf32> to vector<10x64xf32>
    %141 = tpu.concatenate %139, %140 in 0 : vector<6x64xf32>, vector<10x64xf32> -> vector<16x64xf32>
    %142 = vector.extract_strided_slice %130 {offsets = [14, 0], sizes = [2, 64], strides = [1, 1]} : vector<16x64xf32> to vector<2x64xf32>
    %143 = vector.extract_strided_slice %130 {offsets = [0, 0], sizes = [14, 64], strides = [1, 1]} : vector<16x64xf32> to vector<14x64xf32>
    %144 = tpu.concatenate %142, %143 in 0 : vector<2x64xf32>, vector<14x64xf32> -> vector<16x64xf32>
    %145 = vector.extract_strided_slice %130 {offsets = [2, 0], sizes = [14, 64], strides = [1, 1]} : vector<16x64xf32> to vector<14x64xf32>
    %146 = vector.extract_strided_slice %130 {offsets = [0, 0], sizes = [2, 64], strides = [1, 1]} : vector<16x64xf32> to vector<2x64xf32>
    %147 = tpu.concatenate %145, %146 in 0 : vector<14x64xf32>, vector<2x64xf32> -> vector<16x64xf32>
    %148 = vector.extract_strided_slice %130 {offsets = [6, 0], sizes = [10, 64], strides = [1, 1]} : vector<16x64xf32> to vector<10x64xf32>
    %149 = vector.extract_strided_slice %130 {offsets = [0, 0], sizes = [6, 64], strides = [1, 1]} : vector<16x64xf32> to vector<6x64xf32>
    %150 = tpu.concatenate %148, %149 in 0 : vector<10x64xf32>, vector<6x64xf32> -> vector<16x64xf32>
    %151 = vector.extract_strided_slice %130 {offsets = [8, 0], sizes = [8, 64], strides = [1, 1]} : vector<16x64xf32> to vector<8x64xf32>
    %152 = vector.extract_strided_slice %130 {offsets = [0, 0], sizes = [8, 64], strides = [1, 1]} : vector<16x64xf32> to vector<8x64xf32>
    %153 = tpu.concatenate %151, %152 in 0 : vector<8x64xf32>, vector<8x64xf32> -> vector<16x64xf32>
    %154 = vector.extract_strided_slice %130 {offsets = [10, 0], sizes = [6, 64], strides = [1, 1]} : vector<16x64xf32> to vector<6x64xf32>
    %155 = vector.extract_strided_slice %130 {offsets = [0, 0], sizes = [10, 64], strides = [1, 1]} : vector<16x64xf32> to vector<10x64xf32>
    %156 = tpu.concatenate %154, %155 in 0 : vector<6x64xf32>, vector<10x64xf32> -> vector<16x64xf32>
    %157 = tpu.concatenate %135, %138, %141, %144, %130, %147, %150, %153, %156 in 1 : vector<16x64xf32>, vector<16x64xf32>, vector<16x64xf32>, vector<16x64xf32>, vector<16x64xf32>, vector<16x64xf32>, vector<16x64xf32>, vector<16x64xf32>, vector<16x64xf32> -> vector<16x576xf32>
    %158 = arith.mulf %157, %0 : vector<16x576xf32>
    %159 = arith.truncf %158 : vector<16x576xf32> to vector<16x576xbf16>
    %cst_33 = arith.constant dense<0.000000e+00> : vector<16x64xf32>
    %160 = tpu.matmul %159, %132, %cst_33 {dimension_numbers = #tpu.dot_dimension_numbers<[1], [0], [0], [1], [0, 0, 1, 1], [], []>} : vector<16x576xbf16>, vector<576x64xbf16>, vector<16x64xf32> -> vector<16x64xf32>
    %161 = vector.extract_strided_slice %92 {offsets = [2, 0], sizes = [1, 64], strides = [1, 1]} : vector<4x64xf32> to vector<1x64xf32>
    %162 = vector.broadcast %161 : vector<1x64xf32> to vector<16x64xf32>
    %163 = arith.mulf %160, %162 : vector<16x64xf32>
    %164 = vector.extract_strided_slice %92 {offsets = [3, 0], sizes = [1, 64], strides = [1, 1]} : vector<4x64xf32> to vector<1x64xf32>
    %165 = vector.broadcast %164 : vector<1x64xf32> to vector<16x64xf32>
    %166 = arith.addf %163, %165 : vector<16x64xf32>
    %167 = arith.addf %166, %90 : vector<16x64xf32>
    %cst_34 = arith.constant 0.000000e+00 : f32
    %168 = vector.broadcast %cst_34 : f32 to vector<16x64xf32>
    %169 = arith.maximumf %167, %168 : vector<16x64xf32>
    %c2 = arith.constant 2 : index
    %c0_35 = arith.constant 0 : index
    %c0_36 = arith.constant 0 : index
    %170 = vector.load %arg9[%c2, %c0_35, %c0_36] : memref<5x4x64xf32, #tpu.memory_space<vmem>>, vector<1x4x64xf32>
    %171 = vector.shape_cast %170 : vector<1x4x64xf32> to vector<4x64xf32>
    %c2_37 = arith.constant 2 : index
    %c0_38 = arith.constant 0 : index
    %c0_39 = arith.constant 0 : index
    %172 = vector.load %arg7[%c2_37, %c0_38, %c0_39] : memref<5x576x64xbf16, #tpu.memory_space<vmem>>, vector<1x576x64xbf16>
    %173 = vector.shape_cast %172 : vector<1x576x64xbf16> to vector<576x64xbf16>
    %174 = vector.extract_strided_slice %169 {offsets = [6, 0], sizes = [10, 64], strides = [1, 1]} : vector<16x64xf32> to vector<10x64xf32>
    %175 = vector.extract_strided_slice %169 {offsets = [0, 0], sizes = [6, 64], strides = [1, 1]} : vector<16x64xf32> to vector<6x64xf32>
    %176 = tpu.concatenate %174, %175 in 0 : vector<10x64xf32>, vector<6x64xf32> -> vector<16x64xf32>
    %177 = vector.extract_strided_slice %169 {offsets = [8, 0], sizes = [8, 64], strides = [1, 1]} : vector<16x64xf32> to vector<8x64xf32>
    %178 = vector.extract_strided_slice %169 {offsets = [0, 0], sizes = [8, 64], strides = [1, 1]} : vector<16x64xf32> to vector<8x64xf32>
    %179 = tpu.concatenate %177, %178 in 0 : vector<8x64xf32>, vector<8x64xf32> -> vector<16x64xf32>
    %180 = vector.extract_strided_slice %169 {offsets = [10, 0], sizes = [6, 64], strides = [1, 1]} : vector<16x64xf32> to vector<6x64xf32>
    %181 = vector.extract_strided_slice %169 {offsets = [0, 0], sizes = [10, 64], strides = [1, 1]} : vector<16x64xf32> to vector<10x64xf32>
    %182 = tpu.concatenate %180, %181 in 0 : vector<6x64xf32>, vector<10x64xf32> -> vector<16x64xf32>
    %183 = vector.extract_strided_slice %169 {offsets = [14, 0], sizes = [2, 64], strides = [1, 1]} : vector<16x64xf32> to vector<2x64xf32>
    %184 = vector.extract_strided_slice %169 {offsets = [0, 0], sizes = [14, 64], strides = [1, 1]} : vector<16x64xf32> to vector<14x64xf32>
    %185 = tpu.concatenate %183, %184 in 0 : vector<2x64xf32>, vector<14x64xf32> -> vector<16x64xf32>
    %186 = vector.extract_strided_slice %169 {offsets = [2, 0], sizes = [14, 64], strides = [1, 1]} : vector<16x64xf32> to vector<14x64xf32>
    %187 = vector.extract_strided_slice %169 {offsets = [0, 0], sizes = [2, 64], strides = [1, 1]} : vector<16x64xf32> to vector<2x64xf32>
    %188 = tpu.concatenate %186, %187 in 0 : vector<14x64xf32>, vector<2x64xf32> -> vector<16x64xf32>
    %189 = vector.extract_strided_slice %169 {offsets = [6, 0], sizes = [10, 64], strides = [1, 1]} : vector<16x64xf32> to vector<10x64xf32>
    %190 = vector.extract_strided_slice %169 {offsets = [0, 0], sizes = [6, 64], strides = [1, 1]} : vector<16x64xf32> to vector<6x64xf32>
    %191 = tpu.concatenate %189, %190 in 0 : vector<10x64xf32>, vector<6x64xf32> -> vector<16x64xf32>
    %192 = vector.extract_strided_slice %169 {offsets = [8, 0], sizes = [8, 64], strides = [1, 1]} : vector<16x64xf32> to vector<8x64xf32>
    %193 = vector.extract_strided_slice %169 {offsets = [0, 0], sizes = [8, 64], strides = [1, 1]} : vector<16x64xf32> to vector<8x64xf32>
    %194 = tpu.concatenate %192, %193 in 0 : vector<8x64xf32>, vector<8x64xf32> -> vector<16x64xf32>
    %195 = vector.extract_strided_slice %169 {offsets = [10, 0], sizes = [6, 64], strides = [1, 1]} : vector<16x64xf32> to vector<6x64xf32>
    %196 = vector.extract_strided_slice %169 {offsets = [0, 0], sizes = [10, 64], strides = [1, 1]} : vector<16x64xf32> to vector<10x64xf32>
    %197 = tpu.concatenate %195, %196 in 0 : vector<6x64xf32>, vector<10x64xf32> -> vector<16x64xf32>
    %198 = tpu.concatenate %176, %179, %182, %185, %169, %188, %191, %194, %197 in 1 : vector<16x64xf32>, vector<16x64xf32>, vector<16x64xf32>, vector<16x64xf32>, vector<16x64xf32>, vector<16x64xf32>, vector<16x64xf32>, vector<16x64xf32>, vector<16x64xf32> -> vector<16x576xf32>
    %199 = arith.mulf %198, %0 : vector<16x576xf32>
    %200 = arith.truncf %199 : vector<16x576xf32> to vector<16x576xbf16>
    %cst_40 = arith.constant dense<0.000000e+00> : vector<16x64xf32>
    %201 = tpu.matmul %200, %173, %cst_40 {dimension_numbers = #tpu.dot_dimension_numbers<[1], [0], [0], [1], [0, 0, 1, 1], [], []>} : vector<16x576xbf16>, vector<576x64xbf16>, vector<16x64xf32> -> vector<16x64xf32>
    %202 = vector.extract_strided_slice %171 {offsets = [0, 0], sizes = [1, 64], strides = [1, 1]} : vector<4x64xf32> to vector<1x64xf32>
    %203 = vector.broadcast %202 : vector<1x64xf32> to vector<16x64xf32>
    %204 = arith.mulf %201, %203 : vector<16x64xf32>
    %205 = vector.extract_strided_slice %171 {offsets = [1, 0], sizes = [1, 64], strides = [1, 1]} : vector<4x64xf32> to vector<1x64xf32>
    %206 = vector.broadcast %205 : vector<1x64xf32> to vector<16x64xf32>
    %207 = arith.addf %204, %206 : vector<16x64xf32>
    %cst_41 = arith.constant 0.000000e+00 : f32
    %208 = vector.broadcast %cst_41 : f32 to vector<16x64xf32>
    %209 = arith.maximumf %207, %208 : vector<16x64xf32>
    %c2_42 = arith.constant 2 : index
    %c0_43 = arith.constant 0 : index
    %c0_44 = arith.constant 0 : index
    %210 = vector.load %arg8[%c2_42, %c0_43, %c0_44] : memref<5x576x64xbf16, #tpu.memory_space<vmem>>, vector<1x576x64xbf16>
    %211 = vector.shape_cast %210 : vector<1x576x64xbf16> to vector<576x64xbf16>
    %212 = vector.extract_strided_slice %209 {offsets = [6, 0], sizes = [10, 64], strides = [1, 1]} : vector<16x64xf32> to vector<10x64xf32>
    %213 = vector.extract_strided_slice %209 {offsets = [0, 0], sizes = [6, 64], strides = [1, 1]} : vector<16x64xf32> to vector<6x64xf32>
    %214 = tpu.concatenate %212, %213 in 0 : vector<10x64xf32>, vector<6x64xf32> -> vector<16x64xf32>
    %215 = vector.extract_strided_slice %209 {offsets = [8, 0], sizes = [8, 64], strides = [1, 1]} : vector<16x64xf32> to vector<8x64xf32>
    %216 = vector.extract_strided_slice %209 {offsets = [0, 0], sizes = [8, 64], strides = [1, 1]} : vector<16x64xf32> to vector<8x64xf32>
    %217 = tpu.concatenate %215, %216 in 0 : vector<8x64xf32>, vector<8x64xf32> -> vector<16x64xf32>
    %218 = vector.extract_strided_slice %209 {offsets = [10, 0], sizes = [6, 64], strides = [1, 1]} : vector<16x64xf32> to vector<6x64xf32>
    %219 = vector.extract_strided_slice %209 {offsets = [0, 0], sizes = [10, 64], strides = [1, 1]} : vector<16x64xf32> to vector<10x64xf32>
    %220 = tpu.concatenate %218, %219 in 0 : vector<6x64xf32>, vector<10x64xf32> -> vector<16x64xf32>
    %221 = vector.extract_strided_slice %209 {offsets = [14, 0], sizes = [2, 64], strides = [1, 1]} : vector<16x64xf32> to vector<2x64xf32>
    %222 = vector.extract_strided_slice %209 {offsets = [0, 0], sizes = [14, 64], strides = [1, 1]} : vector<16x64xf32> to vector<14x64xf32>
    %223 = tpu.concatenate %221, %222 in 0 : vector<2x64xf32>, vector<14x64xf32> -> vector<16x64xf32>
    %224 = vector.extract_strided_slice %209 {offsets = [2, 0], sizes = [14, 64], strides = [1, 1]} : vector<16x64xf32> to vector<14x64xf32>
    %225 = vector.extract_strided_slice %209 {offsets = [0, 0], sizes = [2, 64], strides = [1, 1]} : vector<16x64xf32> to vector<2x64xf32>
    %226 = tpu.concatenate %224, %225 in 0 : vector<14x64xf32>, vector<2x64xf32> -> vector<16x64xf32>
    %227 = vector.extract_strided_slice %209 {offsets = [6, 0], sizes = [10, 64], strides = [1, 1]} : vector<16x64xf32> to vector<10x64xf32>
    %228 = vector.extract_strided_slice %209 {offsets = [0, 0], sizes = [6, 64], strides = [1, 1]} : vector<16x64xf32> to vector<6x64xf32>
    %229 = tpu.concatenate %227, %228 in 0 : vector<10x64xf32>, vector<6x64xf32> -> vector<16x64xf32>
    %230 = vector.extract_strided_slice %209 {offsets = [8, 0], sizes = [8, 64], strides = [1, 1]} : vector<16x64xf32> to vector<8x64xf32>
    %231 = vector.extract_strided_slice %209 {offsets = [0, 0], sizes = [8, 64], strides = [1, 1]} : vector<16x64xf32> to vector<8x64xf32>
    %232 = tpu.concatenate %230, %231 in 0 : vector<8x64xf32>, vector<8x64xf32> -> vector<16x64xf32>
    %233 = vector.extract_strided_slice %209 {offsets = [10, 0], sizes = [6, 64], strides = [1, 1]} : vector<16x64xf32> to vector<6x64xf32>
    %234 = vector.extract_strided_slice %209 {offsets = [0, 0], sizes = [10, 64], strides = [1, 1]} : vector<16x64xf32> to vector<10x64xf32>
    %235 = tpu.concatenate %233, %234 in 0 : vector<6x64xf32>, vector<10x64xf32> -> vector<16x64xf32>
    %236 = tpu.concatenate %214, %217, %220, %223, %209, %226, %229, %232, %235 in 1 : vector<16x64xf32>, vector<16x64xf32>, vector<16x64xf32>, vector<16x64xf32>, vector<16x64xf32>, vector<16x64xf32>, vector<16x64xf32>, vector<16x64xf32>, vector<16x64xf32> -> vector<16x576xf32>
    %237 = arith.mulf %236, %0 : vector<16x576xf32>
    %238 = arith.truncf %237 : vector<16x576xf32> to vector<16x576xbf16>
    %cst_45 = arith.constant dense<0.000000e+00> : vector<16x64xf32>
    %239 = tpu.matmul %238, %211, %cst_45 {dimension_numbers = #tpu.dot_dimension_numbers<[1], [0], [0], [1], [0, 0, 1, 1], [], []>} : vector<16x576xbf16>, vector<576x64xbf16>, vector<16x64xf32> -> vector<16x64xf32>
    %240 = vector.extract_strided_slice %171 {offsets = [2, 0], sizes = [1, 64], strides = [1, 1]} : vector<4x64xf32> to vector<1x64xf32>
    %241 = vector.broadcast %240 : vector<1x64xf32> to vector<16x64xf32>
    %242 = arith.mulf %239, %241 : vector<16x64xf32>
    %243 = vector.extract_strided_slice %171 {offsets = [3, 0], sizes = [1, 64], strides = [1, 1]} : vector<4x64xf32> to vector<1x64xf32>
    %244 = vector.broadcast %243 : vector<1x64xf32> to vector<16x64xf32>
    %245 = arith.addf %242, %244 : vector<16x64xf32>
    %246 = arith.addf %245, %169 : vector<16x64xf32>
    %cst_46 = arith.constant 0.000000e+00 : f32
    %247 = vector.broadcast %cst_46 : f32 to vector<16x64xf32>
    %248 = arith.maximumf %246, %247 : vector<16x64xf32>
    %c3 = arith.constant 3 : index
    %c0_47 = arith.constant 0 : index
    %c0_48 = arith.constant 0 : index
    %249 = vector.load %arg9[%c3, %c0_47, %c0_48] : memref<5x4x64xf32, #tpu.memory_space<vmem>>, vector<1x4x64xf32>
    %250 = vector.shape_cast %249 : vector<1x4x64xf32> to vector<4x64xf32>
    %c3_49 = arith.constant 3 : index
    %c0_50 = arith.constant 0 : index
    %c0_51 = arith.constant 0 : index
    %251 = vector.load %arg7[%c3_49, %c0_50, %c0_51] : memref<5x576x64xbf16, #tpu.memory_space<vmem>>, vector<1x576x64xbf16>
    %252 = vector.shape_cast %251 : vector<1x576x64xbf16> to vector<576x64xbf16>
    %253 = vector.extract_strided_slice %248 {offsets = [6, 0], sizes = [10, 64], strides = [1, 1]} : vector<16x64xf32> to vector<10x64xf32>
    %254 = vector.extract_strided_slice %248 {offsets = [0, 0], sizes = [6, 64], strides = [1, 1]} : vector<16x64xf32> to vector<6x64xf32>
    %255 = tpu.concatenate %253, %254 in 0 : vector<10x64xf32>, vector<6x64xf32> -> vector<16x64xf32>
    %256 = vector.extract_strided_slice %248 {offsets = [8, 0], sizes = [8, 64], strides = [1, 1]} : vector<16x64xf32> to vector<8x64xf32>
    %257 = vector.extract_strided_slice %248 {offsets = [0, 0], sizes = [8, 64], strides = [1, 1]} : vector<16x64xf32> to vector<8x64xf32>
    %258 = tpu.concatenate %256, %257 in 0 : vector<8x64xf32>, vector<8x64xf32> -> vector<16x64xf32>
    %259 = vector.extract_strided_slice %248 {offsets = [10, 0], sizes = [6, 64], strides = [1, 1]} : vector<16x64xf32> to vector<6x64xf32>
    %260 = vector.extract_strided_slice %248 {offsets = [0, 0], sizes = [10, 64], strides = [1, 1]} : vector<16x64xf32> to vector<10x64xf32>
    %261 = tpu.concatenate %259, %260 in 0 : vector<6x64xf32>, vector<10x64xf32> -> vector<16x64xf32>
    %262 = vector.extract_strided_slice %248 {offsets = [14, 0], sizes = [2, 64], strides = [1, 1]} : vector<16x64xf32> to vector<2x64xf32>
    %263 = vector.extract_strided_slice %248 {offsets = [0, 0], sizes = [14, 64], strides = [1, 1]} : vector<16x64xf32> to vector<14x64xf32>
    %264 = tpu.concatenate %262, %263 in 0 : vector<2x64xf32>, vector<14x64xf32> -> vector<16x64xf32>
    %265 = vector.extract_strided_slice %248 {offsets = [2, 0], sizes = [14, 64], strides = [1, 1]} : vector<16x64xf32> to vector<14x64xf32>
    %266 = vector.extract_strided_slice %248 {offsets = [0, 0], sizes = [2, 64], strides = [1, 1]} : vector<16x64xf32> to vector<2x64xf32>
    %267 = tpu.concatenate %265, %266 in 0 : vector<14x64xf32>, vector<2x64xf32> -> vector<16x64xf32>
    %268 = vector.extract_strided_slice %248 {offsets = [6, 0], sizes = [10, 64], strides = [1, 1]} : vector<16x64xf32> to vector<10x64xf32>
    %269 = vector.extract_strided_slice %248 {offsets = [0, 0], sizes = [6, 64], strides = [1, 1]} : vector<16x64xf32> to vector<6x64xf32>
    %270 = tpu.concatenate %268, %269 in 0 : vector<10x64xf32>, vector<6x64xf32> -> vector<16x64xf32>
    %271 = vector.extract_strided_slice %248 {offsets = [8, 0], sizes = [8, 64], strides = [1, 1]} : vector<16x64xf32> to vector<8x64xf32>
    %272 = vector.extract_strided_slice %248 {offsets = [0, 0], sizes = [8, 64], strides = [1, 1]} : vector<16x64xf32> to vector<8x64xf32>
    %273 = tpu.concatenate %271, %272 in 0 : vector<8x64xf32>, vector<8x64xf32> -> vector<16x64xf32>
    %274 = vector.extract_strided_slice %248 {offsets = [10, 0], sizes = [6, 64], strides = [1, 1]} : vector<16x64xf32> to vector<6x64xf32>
    %275 = vector.extract_strided_slice %248 {offsets = [0, 0], sizes = [10, 64], strides = [1, 1]} : vector<16x64xf32> to vector<10x64xf32>
    %276 = tpu.concatenate %274, %275 in 0 : vector<6x64xf32>, vector<10x64xf32> -> vector<16x64xf32>
    %277 = tpu.concatenate %255, %258, %261, %264, %248, %267, %270, %273, %276 in 1 : vector<16x64xf32>, vector<16x64xf32>, vector<16x64xf32>, vector<16x64xf32>, vector<16x64xf32>, vector<16x64xf32>, vector<16x64xf32>, vector<16x64xf32>, vector<16x64xf32> -> vector<16x576xf32>
    %278 = arith.mulf %277, %0 : vector<16x576xf32>
    %279 = arith.truncf %278 : vector<16x576xf32> to vector<16x576xbf16>
    %cst_52 = arith.constant dense<0.000000e+00> : vector<16x64xf32>
    %280 = tpu.matmul %279, %252, %cst_52 {dimension_numbers = #tpu.dot_dimension_numbers<[1], [0], [0], [1], [0, 0, 1, 1], [], []>} : vector<16x576xbf16>, vector<576x64xbf16>, vector<16x64xf32> -> vector<16x64xf32>
    %281 = vector.extract_strided_slice %250 {offsets = [0, 0], sizes = [1, 64], strides = [1, 1]} : vector<4x64xf32> to vector<1x64xf32>
    %282 = vector.broadcast %281 : vector<1x64xf32> to vector<16x64xf32>
    %283 = arith.mulf %280, %282 : vector<16x64xf32>
    %284 = vector.extract_strided_slice %250 {offsets = [1, 0], sizes = [1, 64], strides = [1, 1]} : vector<4x64xf32> to vector<1x64xf32>
    %285 = vector.broadcast %284 : vector<1x64xf32> to vector<16x64xf32>
    %286 = arith.addf %283, %285 : vector<16x64xf32>
    %cst_53 = arith.constant 0.000000e+00 : f32
    %287 = vector.broadcast %cst_53 : f32 to vector<16x64xf32>
    %288 = arith.maximumf %286, %287 : vector<16x64xf32>
    %c3_54 = arith.constant 3 : index
    %c0_55 = arith.constant 0 : index
    %c0_56 = arith.constant 0 : index
    %289 = vector.load %arg8[%c3_54, %c0_55, %c0_56] : memref<5x576x64xbf16, #tpu.memory_space<vmem>>, vector<1x576x64xbf16>
    %290 = vector.shape_cast %289 : vector<1x576x64xbf16> to vector<576x64xbf16>
    %291 = vector.extract_strided_slice %288 {offsets = [6, 0], sizes = [10, 64], strides = [1, 1]} : vector<16x64xf32> to vector<10x64xf32>
    %292 = vector.extract_strided_slice %288 {offsets = [0, 0], sizes = [6, 64], strides = [1, 1]} : vector<16x64xf32> to vector<6x64xf32>
    %293 = tpu.concatenate %291, %292 in 0 : vector<10x64xf32>, vector<6x64xf32> -> vector<16x64xf32>
    %294 = vector.extract_strided_slice %288 {offsets = [8, 0], sizes = [8, 64], strides = [1, 1]} : vector<16x64xf32> to vector<8x64xf32>
    %295 = vector.extract_strided_slice %288 {offsets = [0, 0], sizes = [8, 64], strides = [1, 1]} : vector<16x64xf32> to vector<8x64xf32>
    %296 = tpu.concatenate %294, %295 in 0 : vector<8x64xf32>, vector<8x64xf32> -> vector<16x64xf32>
    %297 = vector.extract_strided_slice %288 {offsets = [10, 0], sizes = [6, 64], strides = [1, 1]} : vector<16x64xf32> to vector<6x64xf32>
    %298 = vector.extract_strided_slice %288 {offsets = [0, 0], sizes = [10, 64], strides = [1, 1]} : vector<16x64xf32> to vector<10x64xf32>
    %299 = tpu.concatenate %297, %298 in 0 : vector<6x64xf32>, vector<10x64xf32> -> vector<16x64xf32>
    %300 = vector.extract_strided_slice %288 {offsets = [14, 0], sizes = [2, 64], strides = [1, 1]} : vector<16x64xf32> to vector<2x64xf32>
    %301 = vector.extract_strided_slice %288 {offsets = [0, 0], sizes = [14, 64], strides = [1, 1]} : vector<16x64xf32> to vector<14x64xf32>
    %302 = tpu.concatenate %300, %301 in 0 : vector<2x64xf32>, vector<14x64xf32> -> vector<16x64xf32>
    %303 = vector.extract_strided_slice %288 {offsets = [2, 0], sizes = [14, 64], strides = [1, 1]} : vector<16x64xf32> to vector<14x64xf32>
    %304 = vector.extract_strided_slice %288 {offsets = [0, 0], sizes = [2, 64], strides = [1, 1]} : vector<16x64xf32> to vector<2x64xf32>
    %305 = tpu.concatenate %303, %304 in 0 : vector<14x64xf32>, vector<2x64xf32> -> vector<16x64xf32>
    %306 = vector.extract_strided_slice %288 {offsets = [6, 0], sizes = [10, 64], strides = [1, 1]} : vector<16x64xf32> to vector<10x64xf32>
    %307 = vector.extract_strided_slice %288 {offsets = [0, 0], sizes = [6, 64], strides = [1, 1]} : vector<16x64xf32> to vector<6x64xf32>
    %308 = tpu.concatenate %306, %307 in 0 : vector<10x64xf32>, vector<6x64xf32> -> vector<16x64xf32>
    %309 = vector.extract_strided_slice %288 {offsets = [8, 0], sizes = [8, 64], strides = [1, 1]} : vector<16x64xf32> to vector<8x64xf32>
    %310 = vector.extract_strided_slice %288 {offsets = [0, 0], sizes = [8, 64], strides = [1, 1]} : vector<16x64xf32> to vector<8x64xf32>
    %311 = tpu.concatenate %309, %310 in 0 : vector<8x64xf32>, vector<8x64xf32> -> vector<16x64xf32>
    %312 = vector.extract_strided_slice %288 {offsets = [10, 0], sizes = [6, 64], strides = [1, 1]} : vector<16x64xf32> to vector<6x64xf32>
    %313 = vector.extract_strided_slice %288 {offsets = [0, 0], sizes = [10, 64], strides = [1, 1]} : vector<16x64xf32> to vector<10x64xf32>
    %314 = tpu.concatenate %312, %313 in 0 : vector<6x64xf32>, vector<10x64xf32> -> vector<16x64xf32>
    %315 = tpu.concatenate %293, %296, %299, %302, %288, %305, %308, %311, %314 in 1 : vector<16x64xf32>, vector<16x64xf32>, vector<16x64xf32>, vector<16x64xf32>, vector<16x64xf32>, vector<16x64xf32>, vector<16x64xf32>, vector<16x64xf32>, vector<16x64xf32> -> vector<16x576xf32>
    %316 = arith.mulf %315, %0 : vector<16x576xf32>
    %317 = arith.truncf %316 : vector<16x576xf32> to vector<16x576xbf16>
    %cst_57 = arith.constant dense<0.000000e+00> : vector<16x64xf32>
    %318 = tpu.matmul %317, %290, %cst_57 {dimension_numbers = #tpu.dot_dimension_numbers<[1], [0], [0], [1], [0, 0, 1, 1], [], []>} : vector<16x576xbf16>, vector<576x64xbf16>, vector<16x64xf32> -> vector<16x64xf32>
    %319 = vector.extract_strided_slice %250 {offsets = [2, 0], sizes = [1, 64], strides = [1, 1]} : vector<4x64xf32> to vector<1x64xf32>
    %320 = vector.broadcast %319 : vector<1x64xf32> to vector<16x64xf32>
    %321 = arith.mulf %318, %320 : vector<16x64xf32>
    %322 = vector.extract_strided_slice %250 {offsets = [3, 0], sizes = [1, 64], strides = [1, 1]} : vector<4x64xf32> to vector<1x64xf32>
    %323 = vector.broadcast %322 : vector<1x64xf32> to vector<16x64xf32>
    %324 = arith.addf %321, %323 : vector<16x64xf32>
    %325 = arith.addf %324, %248 : vector<16x64xf32>
    %cst_58 = arith.constant 0.000000e+00 : f32
    %326 = vector.broadcast %cst_58 : f32 to vector<16x64xf32>
    %327 = arith.maximumf %325, %326 : vector<16x64xf32>
    %c4 = arith.constant 4 : index
    %c0_59 = arith.constant 0 : index
    %c0_60 = arith.constant 0 : index
    %328 = vector.load %arg9[%c4, %c0_59, %c0_60] : memref<5x4x64xf32, #tpu.memory_space<vmem>>, vector<1x4x64xf32>
    %329 = vector.shape_cast %328 : vector<1x4x64xf32> to vector<4x64xf32>
    %c4_61 = arith.constant 4 : index
    %c0_62 = arith.constant 0 : index
    %c0_63 = arith.constant 0 : index
    %330 = vector.load %arg7[%c4_61, %c0_62, %c0_63] : memref<5x576x64xbf16, #tpu.memory_space<vmem>>, vector<1x576x64xbf16>
    %331 = vector.shape_cast %330 : vector<1x576x64xbf16> to vector<576x64xbf16>
    %332 = vector.extract_strided_slice %327 {offsets = [6, 0], sizes = [10, 64], strides = [1, 1]} : vector<16x64xf32> to vector<10x64xf32>
    %333 = vector.extract_strided_slice %327 {offsets = [0, 0], sizes = [6, 64], strides = [1, 1]} : vector<16x64xf32> to vector<6x64xf32>
    %334 = tpu.concatenate %332, %333 in 0 : vector<10x64xf32>, vector<6x64xf32> -> vector<16x64xf32>
    %335 = vector.extract_strided_slice %327 {offsets = [8, 0], sizes = [8, 64], strides = [1, 1]} : vector<16x64xf32> to vector<8x64xf32>
    %336 = vector.extract_strided_slice %327 {offsets = [0, 0], sizes = [8, 64], strides = [1, 1]} : vector<16x64xf32> to vector<8x64xf32>
    %337 = tpu.concatenate %335, %336 in 0 : vector<8x64xf32>, vector<8x64xf32> -> vector<16x64xf32>
    %338 = vector.extract_strided_slice %327 {offsets = [10, 0], sizes = [6, 64], strides = [1, 1]} : vector<16x64xf32> to vector<6x64xf32>
    %339 = vector.extract_strided_slice %327 {offsets = [0, 0], sizes = [10, 64], strides = [1, 1]} : vector<16x64xf32> to vector<10x64xf32>
    %340 = tpu.concatenate %338, %339 in 0 : vector<6x64xf32>, vector<10x64xf32> -> vector<16x64xf32>
    %341 = vector.extract_strided_slice %327 {offsets = [14, 0], sizes = [2, 64], strides = [1, 1]} : vector<16x64xf32> to vector<2x64xf32>
    %342 = vector.extract_strided_slice %327 {offsets = [0, 0], sizes = [14, 64], strides = [1, 1]} : vector<16x64xf32> to vector<14x64xf32>
    %343 = tpu.concatenate %341, %342 in 0 : vector<2x64xf32>, vector<14x64xf32> -> vector<16x64xf32>
    %344 = vector.extract_strided_slice %327 {offsets = [2, 0], sizes = [14, 64], strides = [1, 1]} : vector<16x64xf32> to vector<14x64xf32>
    %345 = vector.extract_strided_slice %327 {offsets = [0, 0], sizes = [2, 64], strides = [1, 1]} : vector<16x64xf32> to vector<2x64xf32>
    %346 = tpu.concatenate %344, %345 in 0 : vector<14x64xf32>, vector<2x64xf32> -> vector<16x64xf32>
    %347 = vector.extract_strided_slice %327 {offsets = [6, 0], sizes = [10, 64], strides = [1, 1]} : vector<16x64xf32> to vector<10x64xf32>
    %348 = vector.extract_strided_slice %327 {offsets = [0, 0], sizes = [6, 64], strides = [1, 1]} : vector<16x64xf32> to vector<6x64xf32>
    %349 = tpu.concatenate %347, %348 in 0 : vector<10x64xf32>, vector<6x64xf32> -> vector<16x64xf32>
    %350 = vector.extract_strided_slice %327 {offsets = [8, 0], sizes = [8, 64], strides = [1, 1]} : vector<16x64xf32> to vector<8x64xf32>
    %351 = vector.extract_strided_slice %327 {offsets = [0, 0], sizes = [8, 64], strides = [1, 1]} : vector<16x64xf32> to vector<8x64xf32>
    %352 = tpu.concatenate %350, %351 in 0 : vector<8x64xf32>, vector<8x64xf32> -> vector<16x64xf32>
    %353 = vector.extract_strided_slice %327 {offsets = [10, 0], sizes = [6, 64], strides = [1, 1]} : vector<16x64xf32> to vector<6x64xf32>
    %354 = vector.extract_strided_slice %327 {offsets = [0, 0], sizes = [10, 64], strides = [1, 1]} : vector<16x64xf32> to vector<10x64xf32>
    %355 = tpu.concatenate %353, %354 in 0 : vector<6x64xf32>, vector<10x64xf32> -> vector<16x64xf32>
    %356 = tpu.concatenate %334, %337, %340, %343, %327, %346, %349, %352, %355 in 1 : vector<16x64xf32>, vector<16x64xf32>, vector<16x64xf32>, vector<16x64xf32>, vector<16x64xf32>, vector<16x64xf32>, vector<16x64xf32>, vector<16x64xf32>, vector<16x64xf32> -> vector<16x576xf32>
    %357 = arith.mulf %356, %0 : vector<16x576xf32>
    %358 = arith.truncf %357 : vector<16x576xf32> to vector<16x576xbf16>
    %cst_64 = arith.constant dense<0.000000e+00> : vector<16x64xf32>
    %359 = tpu.matmul %358, %331, %cst_64 {dimension_numbers = #tpu.dot_dimension_numbers<[1], [0], [0], [1], [0, 0, 1, 1], [], []>} : vector<16x576xbf16>, vector<576x64xbf16>, vector<16x64xf32> -> vector<16x64xf32>
    %360 = vector.extract_strided_slice %329 {offsets = [0, 0], sizes = [1, 64], strides = [1, 1]} : vector<4x64xf32> to vector<1x64xf32>
    %361 = vector.broadcast %360 : vector<1x64xf32> to vector<16x64xf32>
    %362 = arith.mulf %359, %361 : vector<16x64xf32>
    %363 = vector.extract_strided_slice %329 {offsets = [1, 0], sizes = [1, 64], strides = [1, 1]} : vector<4x64xf32> to vector<1x64xf32>
    %364 = vector.broadcast %363 : vector<1x64xf32> to vector<16x64xf32>
    %365 = arith.addf %362, %364 : vector<16x64xf32>
    %cst_65 = arith.constant 0.000000e+00 : f32
    %366 = vector.broadcast %cst_65 : f32 to vector<16x64xf32>
    %367 = arith.maximumf %365, %366 : vector<16x64xf32>
    %c4_66 = arith.constant 4 : index
    %c0_67 = arith.constant 0 : index
    %c0_68 = arith.constant 0 : index
    %368 = vector.load %arg8[%c4_66, %c0_67, %c0_68] : memref<5x576x64xbf16, #tpu.memory_space<vmem>>, vector<1x576x64xbf16>
    %369 = vector.shape_cast %368 : vector<1x576x64xbf16> to vector<576x64xbf16>
    %370 = vector.extract_strided_slice %367 {offsets = [6, 0], sizes = [10, 64], strides = [1, 1]} : vector<16x64xf32> to vector<10x64xf32>
    %371 = vector.extract_strided_slice %367 {offsets = [0, 0], sizes = [6, 64], strides = [1, 1]} : vector<16x64xf32> to vector<6x64xf32>
    %372 = tpu.concatenate %370, %371 in 0 : vector<10x64xf32>, vector<6x64xf32> -> vector<16x64xf32>
    %373 = vector.extract_strided_slice %367 {offsets = [8, 0], sizes = [8, 64], strides = [1, 1]} : vector<16x64xf32> to vector<8x64xf32>
    %374 = vector.extract_strided_slice %367 {offsets = [0, 0], sizes = [8, 64], strides = [1, 1]} : vector<16x64xf32> to vector<8x64xf32>
    %375 = tpu.concatenate %373, %374 in 0 : vector<8x64xf32>, vector<8x64xf32> -> vector<16x64xf32>
    %376 = vector.extract_strided_slice %367 {offsets = [10, 0], sizes = [6, 64], strides = [1, 1]} : vector<16x64xf32> to vector<6x64xf32>
    %377 = vector.extract_strided_slice %367 {offsets = [0, 0], sizes = [10, 64], strides = [1, 1]} : vector<16x64xf32> to vector<10x64xf32>
    %378 = tpu.concatenate %376, %377 in 0 : vector<6x64xf32>, vector<10x64xf32> -> vector<16x64xf32>
    %379 = vector.extract_strided_slice %367 {offsets = [14, 0], sizes = [2, 64], strides = [1, 1]} : vector<16x64xf32> to vector<2x64xf32>
    %380 = vector.extract_strided_slice %367 {offsets = [0, 0], sizes = [14, 64], strides = [1, 1]} : vector<16x64xf32> to vector<14x64xf32>
    %381 = tpu.concatenate %379, %380 in 0 : vector<2x64xf32>, vector<14x64xf32> -> vector<16x64xf32>
    %382 = vector.extract_strided_slice %367 {offsets = [2, 0], sizes = [14, 64], strides = [1, 1]} : vector<16x64xf32> to vector<14x64xf32>
    %383 = vector.extract_strided_slice %367 {offsets = [0, 0], sizes = [2, 64], strides = [1, 1]} : vector<16x64xf32> to vector<2x64xf32>
    %384 = tpu.concatenate %382, %383 in 0 : vector<14x64xf32>, vector<2x64xf32> -> vector<16x64xf32>
    %385 = vector.extract_strided_slice %367 {offsets = [6, 0], sizes = [10, 64], strides = [1, 1]} : vector<16x64xf32> to vector<10x64xf32>
    %386 = vector.extract_strided_slice %367 {offsets = [0, 0], sizes = [6, 64], strides = [1, 1]} : vector<16x64xf32> to vector<6x64xf32>
    %387 = tpu.concatenate %385, %386 in 0 : vector<10x64xf32>, vector<6x64xf32> -> vector<16x64xf32>
    %388 = vector.extract_strided_slice %367 {offsets = [8, 0], sizes = [8, 64], strides = [1, 1]} : vector<16x64xf32> to vector<8x64xf32>
    %389 = vector.extract_strided_slice %367 {offsets = [0, 0], sizes = [8, 64], strides = [1, 1]} : vector<16x64xf32> to vector<8x64xf32>
    %390 = tpu.concatenate %388, %389 in 0 : vector<8x64xf32>, vector<8x64xf32> -> vector<16x64xf32>
    %391 = vector.extract_strided_slice %367 {offsets = [10, 0], sizes = [6, 64], strides = [1, 1]} : vector<16x64xf32> to vector<6x64xf32>
    %392 = vector.extract_strided_slice %367 {offsets = [0, 0], sizes = [10, 64], strides = [1, 1]} : vector<16x64xf32> to vector<10x64xf32>
    %393 = tpu.concatenate %391, %392 in 0 : vector<6x64xf32>, vector<10x64xf32> -> vector<16x64xf32>
    %394 = tpu.concatenate %372, %375, %378, %381, %367, %384, %387, %390, %393 in 1 : vector<16x64xf32>, vector<16x64xf32>, vector<16x64xf32>, vector<16x64xf32>, vector<16x64xf32>, vector<16x64xf32>, vector<16x64xf32>, vector<16x64xf32>, vector<16x64xf32> -> vector<16x576xf32>
    %395 = arith.mulf %394, %0 : vector<16x576xf32>
    %396 = arith.truncf %395 : vector<16x576xf32> to vector<16x576xbf16>
    %cst_69 = arith.constant dense<0.000000e+00> : vector<16x64xf32>
    %397 = tpu.matmul %396, %369, %cst_69 {dimension_numbers = #tpu.dot_dimension_numbers<[1], [0], [0], [1], [0, 0, 1, 1], [], []>} : vector<16x576xbf16>, vector<576x64xbf16>, vector<16x64xf32> -> vector<16x64xf32>
    %398 = vector.extract_strided_slice %329 {offsets = [2, 0], sizes = [1, 64], strides = [1, 1]} : vector<4x64xf32> to vector<1x64xf32>
    %399 = vector.broadcast %398 : vector<1x64xf32> to vector<16x64xf32>
    %400 = arith.mulf %397, %399 : vector<16x64xf32>
    %401 = vector.extract_strided_slice %329 {offsets = [3, 0], sizes = [1, 64], strides = [1, 1]} : vector<4x64xf32> to vector<1x64xf32>
    %402 = vector.broadcast %401 : vector<1x64xf32> to vector<16x64xf32>
    %403 = arith.addf %400, %402 : vector<16x64xf32>
    %404 = arith.addf %403, %327 : vector<16x64xf32>
    %cst_70 = arith.constant 0.000000e+00 : f32
    %405 = vector.broadcast %cst_70 : f32 to vector<16x64xf32>
    %406 = arith.maximumf %404, %405 : vector<16x64xf32>
    %c0_71 = arith.constant 0 : index
    %c0_72 = arith.constant 0 : index
    %407 = vector.load %arg2[%c0_71, %c0_72] : memref<2x11xbf16, #tpu.memory_space<vmem>>, vector<2x11xbf16>
    %c0_73 = arith.constant 0 : index
    %c0_74 = arith.constant 0 : index
    %408 = vector.load %arg10[%c0_73, %c0_74] : memref<11x64xbf16, #tpu.memory_space<vmem>>, vector<11x64xbf16>
    %cst_75 = arith.constant dense<0.000000e+00> : vector<2x64xf32>
    %409 = tpu.matmul %407, %408, %cst_75 {dimension_numbers = #tpu.dot_dimension_numbers<[1], [0], [0], [1], [0, 0, 1, 1], [], []>} : vector<2x11xbf16>, vector<11x64xbf16>, vector<2x64xf32> -> vector<2x64xf32>
    %c0_76 = arith.constant 0 : index
    %c0_77 = arith.constant 0 : index
    %410 = vector.load %arg11[%c0_76, %c0_77] : memref<1x64xf32, #tpu.memory_space<vmem>>, vector<1x64xf32>
    %411 = vector.broadcast %410 : vector<1x64xf32> to vector<2x64xf32>
    %412 = arith.addf %409, %411 : vector<2x64xf32>
    %cst_78 = arith.constant 0.000000e+00 : f32
    %413 = vector.broadcast %cst_78 : f32 to vector<2x64xf32>
    %414 = arith.maximumf %412, %413 : vector<2x64xf32>
    %415 = arith.truncf %414 : vector<2x64xf32> to vector<2x64xbf16>
    %c0_79 = arith.constant 0 : index
    %c0_80 = arith.constant 0 : index
    %416 = vector.load %arg12[%c0_79, %c0_80] : memref<64x64xbf16, #tpu.memory_space<vmem>>, vector<64x64xbf16>
    %cst_81 = arith.constant dense<0.000000e+00> : vector<2x64xf32>
    %417 = tpu.matmul %415, %416, %cst_81 {dimension_numbers = #tpu.dot_dimension_numbers<[1], [0], [0], [1], [0, 0, 1, 1], [], []>} : vector<2x64xbf16>, vector<64x64xbf16>, vector<2x64xf32> -> vector<2x64xf32>
    %c0_82 = arith.constant 0 : index
    %c0_83 = arith.constant 0 : index
    %418 = vector.load %arg13[%c0_82, %c0_83] : memref<1x64xf32, #tpu.memory_space<vmem>>, vector<1x64xf32>
    %419 = vector.broadcast %418 : vector<1x64xf32> to vector<2x64xf32>
    %420 = arith.addf %417, %419 : vector<2x64xf32>
    %cst_84 = arith.constant 0.000000e+00 : f32
    %421 = vector.broadcast %cst_84 : f32 to vector<2x64xf32>
    %422 = arith.maximumf %420, %421 : vector<2x64xf32>
    %423 = vector.extract_strided_slice %406 {offsets = [0, 0], sizes = [2, 64], strides = [1, 1]} : vector<16x64xf32> to vector<2x64xf32>
    %424 = vector.extract_strided_slice %406 {offsets = [2, 0], sizes = [2, 64], strides = [1, 1]} : vector<16x64xf32> to vector<2x64xf32>
    %425 = vector.extract_strided_slice %406 {offsets = [4, 0], sizes = [2, 64], strides = [1, 1]} : vector<16x64xf32> to vector<2x64xf32>
    %426 = vector.extract_strided_slice %406 {offsets = [6, 0], sizes = [2, 64], strides = [1, 1]} : vector<16x64xf32> to vector<2x64xf32>
    %427 = vector.extract_strided_slice %406 {offsets = [8, 0], sizes = [2, 64], strides = [1, 1]} : vector<16x64xf32> to vector<2x64xf32>
    %428 = vector.extract_strided_slice %406 {offsets = [10, 0], sizes = [2, 64], strides = [1, 1]} : vector<16x64xf32> to vector<2x64xf32>
    %429 = vector.extract_strided_slice %406 {offsets = [12, 0], sizes = [2, 64], strides = [1, 1]} : vector<16x64xf32> to vector<2x64xf32>
    %430 = vector.extract_strided_slice %406 {offsets = [14, 0], sizes = [2, 64], strides = [1, 1]} : vector<16x64xf32> to vector<2x64xf32>
    %431 = tpu.concatenate %423, %424, %425, %426, %427, %428, %429, %430 in 1 : vector<2x64xf32>, vector<2x64xf32>, vector<2x64xf32>, vector<2x64xf32>, vector<2x64xf32>, vector<2x64xf32>, vector<2x64xf32>, vector<2x64xf32> -> vector<2x512xf32>
    tpu.wait_dma2 semaphore(%arg21 : memref<!tpu.dma_semaphore, #tpu.memory_space<semaphore_mem>>) src(%arg14 : memref<512x256xbf16, #tpu.memory_space<any>>) dst(%arg20 : memref<512x256xbf16, #tpu.memory_space<vmem>>)
    %432 = arith.truncf %431 : vector<2x512xf32> to vector<2x512xbf16>
    %c0_85 = arith.constant 0 : index
    %c0_86 = arith.constant 0 : index
    %433 = vector.load %arg20[%c0_85, %c0_86] : memref<512x256xbf16, #tpu.memory_space<vmem>>, vector<512x256xbf16>
    %cst_87 = arith.constant dense<0.000000e+00> : vector<2x256xf32>
    %434 = tpu.matmul %432, %433, %cst_87 {dimension_numbers = #tpu.dot_dimension_numbers<[1], [0], [0], [1], [0, 0, 1, 1], [], []>} : vector<2x512xbf16>, vector<512x256xbf16>, vector<2x256xf32> -> vector<2x256xf32>
    %435 = arith.truncf %422 : vector<2x64xf32> to vector<2x64xbf16>
    %c0_88 = arith.constant 0 : index
    %c0_89 = arith.constant 0 : index
    %436 = vector.load %arg15[%c0_88, %c0_89] : memref<64x256xbf16, #tpu.memory_space<vmem>>, vector<64x256xbf16>
    %cst_90 = arith.constant dense<0.000000e+00> : vector<2x256xf32>
    %437 = tpu.matmul %435, %436, %cst_90 {dimension_numbers = #tpu.dot_dimension_numbers<[1], [0], [0], [1], [0, 0, 1, 1], [], []>} : vector<2x64xbf16>, vector<64x256xbf16>, vector<2x256xf32> -> vector<2x256xf32>
    %438 = arith.addf %434, %437 : vector<2x256xf32>
    %c0_91 = arith.constant 0 : index
    %c0_92 = arith.constant 0 : index
    %439 = vector.load %arg16[%c0_91, %c0_92] : memref<1x256xf32, #tpu.memory_space<vmem>>, vector<1x256xf32>
    %440 = vector.broadcast %439 : vector<1x256xf32> to vector<2x256xf32>
    %441 = arith.addf %438, %440 : vector<2x256xf32>
    %cst_93 = arith.constant 0.000000e+00 : f32
    %442 = vector.broadcast %cst_93 : f32 to vector<2x256xf32>
    %443 = arith.maximumf %441, %442 : vector<2x256xf32>
    %444 = arith.truncf %443 : vector<2x256xf32> to vector<2x256xbf16>
    %c0_94 = arith.constant 0 : index
    %c0_95 = arith.constant 0 : index
    %445 = vector.load %arg17[%c0_94, %c0_95] : memref<256x40xbf16, #tpu.memory_space<vmem>>, vector<256x40xbf16>
    %cst_96 = arith.constant dense<0.000000e+00> : vector<2x40xf32>
    %446 = tpu.matmul %444, %445, %cst_96 {dimension_numbers = #tpu.dot_dimension_numbers<[1], [0], [0], [1], [0, 0, 1, 1], [], []>} : vector<2x256xbf16>, vector<256x40xbf16>, vector<2x40xf32> -> vector<2x40xf32>
    %c0_97 = arith.constant 0 : index
    %c0_98 = arith.constant 0 : index
    %447 = vector.load %arg18[%c0_97, %c0_98] : memref<1x40xf32, #tpu.memory_space<vmem>>, vector<1x40xf32>
    %448 = vector.broadcast %447 : vector<1x40xf32> to vector<2x40xf32>
    %449 = arith.addf %446, %448 : vector<2x40xf32>
    %c0_99 = arith.constant 0 : index
    %c0_100 = arith.constant 0 : index
    %450 = vector.load %arg19[%c0_99, %c0_100] : memref<2x40xf32, #tpu.memory_space<vmem>>, vector<2x40xf32>
    tpu.vector_store %arg19[%c0_99, %c0_100], %449 {strides = array<i32>} : memref<2x40xf32, #tpu.memory_space<vmem>>, vector<2x40xf32>,
    return
  }
  func.func @transform_0(%arg0: i32) -> (i32, i32) {
    %c0_i32 = arith.constant 0 : i32
    %c0_i32_0 = arith.constant 0 : i32
    %c0_i32_1 = arith.constant 0 : i32
    return %c0_i32, %c0_i32_0 : i32, i32
  }
  func.func @transform_1(%arg0: i32) -> (i32, i32) {
    %c0_i32 = arith.constant 0 : i32
    %c0_i32_0 = arith.constant 0 : i32
    %c0_i32_1 = arith.constant 0 : i32
    return %c0_i32, %c0_i32_0 : i32, i32
  }
  func.func @transform_2(%arg0: i32) -> (i32, i32) {
    %c0_i32 = arith.constant 0 : i32
    %c0_i32_0 = arith.constant 0 : i32
    %c0_i32_1 = arith.constant 0 : i32
    return %c0_i32, %c0_i32_0 : i32, i32
  }
  func.func @transform_3(%arg0: i32) -> (i32, i32) {
    %c0_i32 = arith.constant 0 : i32
    %c0_i32_0 = arith.constant 0 : i32
    %c0_i32_1 = arith.constant 0 : i32
    return %c0_i32, %c0_i32_0 : i32, i32
  }
  func.func @transform_4(%arg0: i32) -> (i32, i32) {
    %c0_i32 = arith.constant 0 : i32
    %c0_i32_0 = arith.constant 0 : i32
    %c0_i32_1 = arith.constant 0 : i32
    return %c0_i32, %c0_i32_0 : i32, i32
  }
  func.func @transform_5(%arg0: i32) -> (i32, i32) {
    %c0_i32 = arith.constant 0 : i32
    %c0_i32_0 = arith.constant 0 : i32
    %c0_i32_1 = arith.constant 0 : i32
    return %c0_i32, %c0_i32_0 : i32, i32
  }
  func.func @transform_6(%arg0: i32) -> (i32, i32, i32) {
    %c0_i32 = arith.constant 0 : i32
    %c0_i32_0 = arith.constant 0 : i32
    %c0_i32_1 = arith.constant 0 : i32
    %c0_i32_2 = arith.constant 0 : i32
    return %c0_i32, %c0_i32_0, %c0_i32_1 : i32, i32, i32
  }
  func.func @transform_7(%arg0: i32) -> (i32, i32, i32) {
    %c0_i32 = arith.constant 0 : i32
    %c0_i32_0 = arith.constant 0 : i32
    %c0_i32_1 = arith.constant 0 : i32
    %c0_i32_2 = arith.constant 0 : i32
    return %c0_i32, %c0_i32_0, %c0_i32_1 : i32, i32, i32
  }
  func.func @transform_8(%arg0: i32) -> (i32, i32, i32) {
    %c0_i32 = arith.constant 0 : i32
    %c0_i32_0 = arith.constant 0 : i32
    %c0_i32_1 = arith.constant 0 : i32
    %c0_i32_2 = arith.constant 0 : i32
    return %c0_i32, %c0_i32_0, %c0_i32_1 : i32, i32, i32
  }
  func.func @transform_9(%arg0: i32) -> (i32, i32) {
    %c0_i32 = arith.constant 0 : i32
    %c0_i32_0 = arith.constant 0 : i32
    %c0_i32_1 = arith.constant 0 : i32
    return %c0_i32, %c0_i32_0 : i32, i32
  }
  func.func @transform_10(%arg0: i32) -> (i32, i32) {
    %c0_i32 = arith.constant 0 : i32
    %c0_i32_0 = arith.constant 0 : i32
    %c0_i32_1 = arith.constant 0 : i32
    return %c0_i32, %c0_i32_0 : i32, i32
  }
  func.func @transform_11(%arg0: i32) -> (i32, i32) {
    %c0_i32 = arith.constant 0 : i32
    %c0_i32_0 = arith.constant 0 : i32
    %c0_i32_1 = arith.constant 0 : i32
    return %c0_i32, %c0_i32_0 : i32, i32
  }
  func.func @transform_12(%arg0: i32) -> (i32, i32) {
    %c0_i32 = arith.constant 0 : i32
    %c0_i32_0 = arith.constant 0 : i32
    %c0_i32_1 = arith.constant 0 : i32
    return %c0_i32, %c0_i32_0 : i32, i32
  }
  func.func @transform_14(%arg0: i32) -> (i32, i32) {
    %c0_i32 = arith.constant 0 : i32
    %c0_i32_0 = arith.constant 0 : i32
    %c0_i32_1 = arith.constant 0 : i32
    return %c0_i32, %c0_i32_0 : i32, i32
  }
  func.func @transform_15(%arg0: i32) -> (i32, i32) {
    %c0_i32 = arith.constant 0 : i32
    %c0_i32_0 = arith.constant 0 : i32
    %c0_i32_1 = arith.constant 0 : i32
    return %c0_i32, %c0_i32_0 : i32, i32
  }
  func.func @transform_16(%arg0: i32) -> (i32, i32) {
    %c0_i32 = arith.constant 0 : i32
    %c0_i32_0 = arith.constant 0 : i32
    %c0_i32_1 = arith.constant 0 : i32
    return %c0_i32, %c0_i32_0 : i32, i32
  }
  func.func @transform_17(%arg0: i32) -> (i32, i32) {
    %c0_i32 = arith.constant 0 : i32
    %c0_i32_0 = arith.constant 0 : i32
    %c0_i32_1 = arith.constant 0 : i32
    return %c0_i32, %c0_i32_0 : i32, i32
  }
  func.func @transform_18(%arg0: i32) -> (i32, i32) {
    %c0_i32 = arith.constant 0 : i32
    %c0_i32_0 = arith.constant 0 : i32
    %c0_i32_1 = arith.constant 0 : i32
    return %c0_i32, %c0_i32_0 : i32, i32
  }
}

</mosaic_0001>

<llo_original>
// kernel: _lambda_.1
$region0: #{_lambda_.1}
  #allocation0 [shape = 'u32[]', space=smem, size = 0x4, offset = 0x4, fixed_abs, tag = 'smem constant byte address 0x4 - core index']
  #allocation1 [shape = 'u32[144,128]{1,0:T(1,128)}', space=vmem, size = 0x12000, scoped, tag = 'internal scratch']
  #allocation2 [shape = 'bf16[512,256]{1,0:T(16,128)(2,1)}', space=vmem, size = 0x40000, scoped, tag = 'scratch operand']
  #allocation3 [shape = 's32[1]{0}', space=sflag, size = 0x4, scoped, tag = 'scratch operand']
  #allocation16 [shape = 's32[]', space=sflag, size = 0x4, offset = 0, fixed_abs, tag = 'sflag constant byte address 0x0 - dummy sync flag']
  %s0 = inlined_call_operand.vmem [shape: bf16[16,81], index: 0, kind: input, shape index: {}]
  %s1 = inlined_call_operand.vmem [shape: bf16[2,11], index: 1, kind: input, shape index: {}]
  %s2 = inlined_call_operand.vmem [shape: bf16[81,64], index: 2, kind: input, shape index: {}]
  %s3 = inlined_call_operand.vmem [shape: f32[1,64], index: 3, kind: input, shape index: {}]
  %s4 = inlined_call_operand.hbm [shape: f32[1,64], index: 4, kind: input, shape index: {}]
  %s5 = inlined_call_operand.vmem [shape: f32[16,576], index: 5, kind: input, shape index: {}]
  %s6 = inlined_call_operand.hbm [shape: bf16[5,576,64], index: 6, kind: input, shape index: {}]
  %s7 = inlined_call_operand.vmem [shape: bf16[5,576,64], index: 7, kind: input, shape index: {}]
  %s8 = inlined_call_operand.vmem [shape: f32[5,4,64], index: 8, kind: input, shape index: {}]
  %s9 = inlined_call_operand.vmem [shape: bf16[11,64], index: 9, kind: input, shape index: {}]
  %s10 = inlined_call_operand.hbm [shape: f32[1,64], index: 10, kind: input, shape index: {}]
  %s11 = inlined_call_operand.hbm [shape: bf16[64,64], index: 11, kind: input, shape index: {}]
  %s12 = inlined_call_operand.hbm [shape: f32[1,64], index: 12, kind: input, shape index: {}]
  %s13 = inlined_call_operand.vmem [shape: bf16[512,256], index: 13, kind: input, shape index: {}]
  %s14 = inlined_call_operand.vmem [shape: bf16[64,256], index: 14, kind: input, shape index: {}]
  %s15 = inlined_call_operand.vmem [shape: f32[1,256], index: 15, kind: input, shape index: {}]
  %s16 = inlined_call_operand.vmem [shape: bf16[256,40], index: 16, kind: input, shape index: {}]
  %s17 = inlined_call_operand.hbm [shape: f32[1,40], index: 17, kind: input, shape index: {}]
  %s18 = inlined_call_operand.hbm [shape: f32[2,40], index: 18, kind: output, shape index: {}]
  %s19 = sld [smem:[#allocation0]]
  $region139: #{_lambda_.1} parent=0
    _
  %s21 = ssub.s32 1, %s19
  %s22 = scalar_select 0, %s21, %s19
  $region1: #{_lambda_.1} parent=0
    #allocation4 [shape = 'u8[512]{0}', space=vmem, size = 0x400, scoped, tag = 'input window, operand 4, single buffered']
    #allocation5 [shape = 's32[1]{0}', space=sflag, size = 0x4, scoped, tag = 'scoped memory for _lambda_.1']
    #allocation6 [shape = 's32[1]{0}', space=sflag, size = 0x4, scoped, tag = 'scoped memory for _lambda_.1']
    #allocation7 [shape = 'u8[737280]{0}', space=vmem, size = 0xb4000, scoped, tag = 'input window, operand 6, single buffered']
    #allocation8 [shape = 's32[1]{0}', space=sflag, size = 0x4, scoped, tag = 'scoped memory for _lambda_.1']
    #allocation9 [shape = 'u8[512]{0}', space=vmem, size = 0x400, scoped, tag = 'input window, operand 10, single buffered']
    #allocation10 [shape = 'u8[16384]{0}', space=vmem, size = 0x4000, scoped, tag = 'input window, operand 11, single buffered']
    #allocation11 [shape = 's32[1]{0}', space=sflag, size = 0x4, scoped, tag = 'scoped memory for _lambda_.1']
    #allocation12 [shape = 'u8[512]{0}', space=vmem, size = 0x400, scoped, tag = 'input window, operand 12, single buffered']
    #allocation13 [shape = 'u8[512]{0}', space=vmem, size = 0x400, scoped, tag = 'input window, operand 17, single buffered']
    #allocation14 [shape = 's32[1]{0}', space=sflag, size = 0x4, scoped, tag = 'scoped memory for _lambda_.1']
    #allocation15 [shape = 'u8[1024]{0}', space=vmem, size = 0x400, scoped, tag = 'output window, operand 0, single buffered']
    %23 = vsyncpa [#allocation5], 0
    %24 = vsyncpa [#allocation8], 0
    %25 = vsyncpa [#allocation11], 0
    %26 = vsyncpa [#allocation14], 0
    %27 = vsyncpa [#allocation6], 0
    // Predicated region
    $region2: #{_lambda_.1} parent=1 // pred_check
      _
    $region3: #{_lambda_.1} parent=1 // pred_check_branch
      %29 = sbr.rel (0) target = $region5
    $region4: #{_lambda_.1} parent=1 // pred_region
      _
    $region5: #{_lambda_.1} parent=1 // pred_fallthru
      _
    // Predicated region
    $region6: #{_lambda_.1} parent=1 // pred_check
      _
    $region7: #{_lambda_.1} parent=1 // pred_check_branch
      %31 = sbr.rel (0) target = $region9
    $region8: #{_lambda_.1} parent=1 // pred_region
      _
    $region9: #{_lambda_.1} parent=1 // pred_fallthru
      _
    // Predicated region
    $region10: #{_lambda_.1} parent=1 // pred_check
      _
    $region11: #{_lambda_.1} parent=1 // pred_check_branch
      %33 = sbr.rel (0) target = $region13
    $region12: #{_lambda_.1} parent=1 // pred_region
      _
    $region13: #{_lambda_.1} parent=1 // pred_fallthru
      _
    // Predicated region
    $region14: #{_lambda_.1} parent=1 // pred_check
      _
    $region15: #{_lambda_.1} parent=1 // pred_check_branch
      %35 = sbr.rel (0) target = $region17
    $region16: #{_lambda_.1} parent=1 // pred_region
      _
    $region17: #{_lambda_.1} parent=1 // pred_fallthru
      _
    // Predicated region
    $region18: #{_lambda_.1} parent=1 // pred_check
      _
    $region19: #{_lambda_.1} parent=1 // pred_check_branch
      %37 = sbr.rel (0) target = $region21
    $region20: #{_lambda_.1} parent=1 // pred_region
      %s39 = ssub.s32 16, 16
      %40 = vsyncadd [#allocation5], %s39
      %s42 = sshll.u32 [#allocation4], 4
      %s43 = int_to_ptr.vmem [resolvable:$true] %s42
      %45 = dma.hbm_to_vmem [thread:$0]  %s4, 16, %s43, [#allocation5]
    $region21: #{_lambda_.1} parent=1 // pred_fallthru
      _
    // Predicated region
    $region22: #{_lambda_.1} parent=1 // pred_check
      _
    $region23: #{_lambda_.1} parent=1 // pred_check_branch
      %47 = sbr.rel (0) target = $region25
    $region24: #{_lambda_.1} parent=1 // pred_region
      _
    $region25: #{_lambda_.1} parent=1 // pred_fallthru
      _
    // Predicated region
    $region26: #{_lambda_.1} parent=1 // pred_check
      _
    $region27: #{_lambda_.1} parent=1 // pred_check_branch
      %49 = sbr.rel (0) target = $region29
    $region28: #{_lambda_.1} parent=1 // pred_region
      %s51 = ssub.s32 23040, 23040
      %52 = vsyncadd [#allocation8], %s51
      %s53 = sshll.u32 [#allocation7], 4
      %s54 = int_to_ptr.vmem [resolvable:$true] %s53
      %59 = dma.hbm_to_vmem [thread:$0]  %s6, 23040, %s54, [#allocation8], 64, 64, 4
    $region29: #{_lambda_.1} parent=1 // pred_fallthru
      _
    // Predicated region
    $region30: #{_lambda_.1} parent=1 // pred_check
      _
    $region31: #{_lambda_.1} parent=1 // pred_check_branch
      %61 = sbr.rel (0) target = $region33
    $region32: #{_lambda_.1} parent=1 // pred_region
      _
    $region33: #{_lambda_.1} parent=1 // pred_fallthru
      _
    // Predicated region
    $region34: #{_lambda_.1} parent=1 // pred_check
      _
    $region35: #{_lambda_.1} parent=1 // pred_check_branch
      %63 = sbr.rel (0) target = $region37
    $region36: #{_lambda_.1} parent=1 // pred_region
      _
    $region37: #{_lambda_.1} parent=1 // pred_fallthru
      _
    // Predicated region
    $region38: #{_lambda_.1} parent=1 // pred_check
      _
    $region39: #{_lambda_.1} parent=1 // pred_check_branch
      %65 = sbr.rel (0) target = $region41
    $region40: #{_lambda_.1} parent=1 // pred_region
      _
    $region41: #{_lambda_.1} parent=1 // pred_fallthru
      _
    // Predicated region
    $region42: #{_lambda_.1} parent=1 // pred_check
      _
    $region43: #{_lambda_.1} parent=1 // pred_check_branch
      %67 = sbr.rel (0) target = $region45
    $region44: #{_lambda_.1} parent=1 // pred_region
      %s69 = ssub.s32 16, 16
      %70 = vsyncadd [#allocation8], %s69
      %s72 = sshll.u32 [#allocation9], 4
      %s73 = int_to_ptr.vmem [resolvable:$true] %s72
      %75 = dma.hbm_to_vmem [thread:$0]  %s10, 16, %s73, [#allocation8]
    $region45: #{_lambda_.1} parent=1 // pred_fallthru
      _
    // Predicated region
    $region46: #{_lambda_.1} parent=1 // pred_check
      _
    $region47: #{_lambda_.1} parent=1 // pred_check_branch
      %77 = sbr.rel (0) target = $region49
    $region48: #{_lambda_.1} parent=1 // pred_region
      %s79 = ssub.s32 512, 512
      %80 = vsyncadd [#allocation11], %s79
      %s81 = sshll.u32 [#allocation10], 4
      %s82 = int_to_ptr.vmem [resolvable:$true] %s81
      %87 = dma.hbm_to_vmem [thread:$0]  %s11, 512, %s82, [#allocation11], 64, 64, 4
    $region49: #{_lambda_.1} parent=1 // pred_fallthru
      _
    // Predicated region
    $region50: #{_lambda_.1} parent=1 // pred_check
      _
    $region51: #{_lambda_.1} parent=1 // pred_check_branch
      %89 = sbr.rel (0) target = $region53
    $region52: #{_lambda_.1} parent=1 // pred_region
      %s91 = ssub.s32 16, 16
      %92 = vsyncadd [#allocation11], %s91
      %s94 = sshll.u32 [#allocation12], 4
      %s95 = int_to_ptr.vmem [resolvable:$true] %s94
      %97 = dma.hbm_to_vmem [thread:$0]  %s12, 16, %s95, [#allocation11]
    $region53: #{_lambda_.1} parent=1 // pred_fallthru
      _
    // Predicated region
    $region54: #{_lambda_.1} parent=1 // pred_check
      _
    $region55: #{_lambda_.1} parent=1 // pred_check_branch
      %99 = sbr.rel (0) target = $region57
    $region56: #{_lambda_.1} parent=1 // pred_region
      _
    $region57: #{_lambda_.1} parent=1 // pred_fallthru
      _
    // Predicated region
    $region58: #{_lambda_.1} parent=1 // pred_check
      _
    $region59: #{_lambda_.1} parent=1 // pred_check_branch
      %101 = sbr.rel (0) target = $region61
    $region60: #{_lambda_.1} parent=1 // pred_region
      _
    $region61: #{_lambda_.1} parent=1 // pred_fallthru
      _
    // Predicated region
    $region62: #{_lambda_.1} parent=1 // pred_check
      _
    $region63: #{_lambda_.1} parent=1 // pred_check_branch
      %103 = sbr.rel (0) target = $region65
    $region64: #{_lambda_.1} parent=1 // pred_region
      _
    $region65: #{_lambda_.1} parent=1 // pred_fallthru
      _
    // Predicated region
    $region66: #{_lambda_.1} parent=1 // pred_check
      _
    $region67: #{_lambda_.1} parent=1 // pred_check_branch
      %105 = sbr.rel (0) target = $region69
    $region68: #{_lambda_.1} parent=1 // pred_region
      %s107 = ssub.s32 16, 16
      %108 = vsyncadd [#allocation14], %s107
      %s110 = sshll.u32 [#allocation13], 4
      %s111 = int_to_ptr.vmem [resolvable:$true] %s110
      %113 = dma.hbm_to_vmem [thread:$0]  %s17, 16, %s111, [#allocation14]
    $region69: #{_lambda_.1} parent=1 // pred_fallthru
      _
    // Predicated region
    $region70: #{_lambda_.1} parent=1 // pred_check
      _
    $region71: #{_lambda_.1} parent=1 // pred_check_branch
      %115 = sbr.rel (0) target = $region73
    $region72: #{_lambda_.1} parent=1 // pred_region
      %116 = dma.done [#allocation5], 16
    $region73: #{_lambda_.1} parent=1 // pred_fallthru
      _
    // Predicated region
    $region74: #{_lambda_.1} parent=1 // pred_check
      _
    $region75: #{_lambda_.1} parent=1 // pred_check_branch
      %118 = sbr.rel (0) target = $region77
    $region76: #{_lambda_.1} parent=1 // pred_region
      %119 = dma.done [#allocation8], 23040
    $region77: #{_lambda_.1} parent=1 // pred_fallthru
      _
    // Predicated region
    $region78: #{_lambda_.1} parent=1 // pred_check
      _
    $region79: #{_lambda_.1} parent=1 // pred_check_branch
      %121 = sbr.rel (0) target = $region81
    $region80: #{_lambda_.1} parent=1 // pred_region
      %122 = dma.done [#allocation8], 16
    $region81: #{_lambda_.1} parent=1 // pred_fallthru
      _
    // Predicated region
    $region82: #{_lambda_.1} parent=1 // pred_check
      _
    $region83: #{_lambda_.1} parent=1 // pred_check_branch
      %124 = sbr.rel (0) target = $region85
    $region84: #{_lambda_.1} parent=1 // pred_region
      %125 = dma.done [#allocation11], 512
    $region85: #{_lambda_.1} parent=1 // pred_fallthru
      _
    // Predicated region
    $region86: #{_lambda_.1} parent=1 // pred_check
      _
    $region87: #{_lambda_.1} parent=1 // pred_check_branch
      %127 = sbr.rel (0) target = $region89
    $region88: #{_lambda_.1} parent=1 // pred_region
      %128 = dma.done [#allocation11], 16
    $region89: #{_lambda_.1} parent=1 // pred_fallthru
      _
    // Predicated region
    $region90: #{_lambda_.1} parent=1 // pred_check
      _
    $region91: #{_lambda_.1} parent=1 // pred_check_branch
      %130 = sbr.rel (0) target = $region93
    $region92: #{_lambda_.1} parent=1 // pred_region
      %131 = dma.done [#allocation14], 16
    $region93: #{_lambda_.1} parent=1 // pred_fallthru
      _
    %p134 = scmp.lt.u32.totalorder 4, 8
    %p135 = pneg %p134
    // Predicated region
    $region94: #{_lambda_.1} parent=1 // pred_check
      _
    $region95: #{_lambda_.1} parent=1 // pred_check_branch
      %137 = sbr.rel (%p134) target = $region97
    $region96: #{_lambda_.1} parent=1 // pred_region
      %s406 = sand.u32 4, 7
      %p407 = scmp.eq.s32.totalorder %s406, 0
      %p408 = pneg %p407
      // Predicated region
      $region109: #{_lambda_.1} parent=96 // pred_check
        _
      $region110: #{_lambda_.1} parent=96 // pred_check_branch
        %410 = sbr.rel (%p407) target = $region112
      $region111: #{_lambda_.1} parent=96 // pred_region
        %s411 = sand.u32 4, 7
        %s412 = ssub.s32 4, %s411
        %s413 = scalar_lea.vmem %s13, %s412
        %s414 = ssub.s32 4, %s411
        %s415 = scalar_lea.vmem [#allocation2], %s414
        loop: start=0, step=1, limit=1
        $region113: #{_lambda_.1} parent=111 // loop_pre_header
          _
        $region114: #{_lambda_.1} parent=111 // loop_header
          %s417 = sphi 0, %s421
          %p418 = scmp.ge.s32.totalorder %s417, 1
          %s422 = sphi %s13, %s13
          %s423 = sphi [#allocation2], [#allocation2]
        $region115: #{_lambda_.1} parent=111 // loop_header_branch
          %420 = sbr.rel (%p418) target = $region119
        $region116: #{_lambda_.1} parent=111 // loop_body
          _
        $region117: #{_lambda_.1} parent=111 // loop_footer
          %s421 = sadd.s32 1, %s417
        $region118: #{_lambda_.1} parent=111 // loop_footer_branch
          %416 = sbr.rel target = $region114
        $region119: #{_lambda_.1} parent=111 // loop_exit
          _
        %s424 = sshllo.u32 0, %s411
        loop: start=0, step=1, limit=1
        $region120: #{_lambda_.1} parent=111 // loop_pre_header
          _
        $region121: #{_lambda_.1} parent=111 // loop_header
          %s426 = sphi 0, %s430
          %p427 = scmp.ge.s32.totalorder %s426, 1
          %s431 = sphi %s413, %s413
          %s432 = sphi %s415, %s415
        $region122: #{_lambda_.1} parent=111 // loop_header_branch
          %429 = sbr.rel (%p427) target = $region126
        $region123: #{_lambda_.1} parent=111 // loop_body
          %v433 = vld [vmem:[%s431] sm:%s424]
          %434 = vst [vmem:[%s432] sm:%s424] %v433
          %v435 = vld [vmem:[%s431 + $0x8] sm:%s424]
          %436 = vst [vmem:[%s432 + $0x4] sm:%s424] %v435
          %v437 = vld [vmem:[%s431 + $0x4] sm:%s424]
          %438 = vst [vmem:[%s432 + $0x8] sm:%s424] %v437
          %v439 = vld [vmem:[%s431 + $0xc] sm:%s424]
          %440 = vst [vmem:[%s432 + $0xc] sm:%s424] %v439
          %v441 = vld [vmem:[%s431 + $0x10] sm:%s424]
          %442 = vst [vmem:[%s432 + $0x10] sm:%s424] %v441
          %v443 = vld [vmem:[%s431 + $0x18] sm:%s424]
          %444 = vst [vmem:[%s432 + $0x14] sm:%s424] %v443
          %v445 = vld [vmem:[%s431 + $0x14] sm:%s424]
          %446 = vst [vmem:[%s432 + $0x18] sm:%s424] %v445
          %v447 = vld [vmem:[%s431 + $0x1c] sm:%s424]
          %448 = vst [vmem:[%s432 + $0x1c] sm:%s424] %v447
          %v449 = vld [vmem:[%s431 + $0x20] sm:%s424]
          %450 = vst [vmem:[%s432 + $0x20] sm:%s424] %v449
          %v451 = vld [vmem:[%s431 + $0x28] sm:%s424]
          %452 = vst [vmem:[%s432 + $0x24] sm:%s424] %v451
          %v453 = vld [vmem:[%s431 + $0x24] sm:%s424]
          %454 = vst [vmem:[%s432 + $0x28] sm:%s424] %v453
          %v455 = vld [vmem:[%s431 + $0x2c] sm:%s424]
          %456 = vst [vmem:[%s432 + $0x2c] sm:%s424] %v455
          %v457 = vld [vmem:[%s431 + $0x30] sm:%s424]
          %458 = vst [vmem:[%s432 + $0x30] sm:%s424] %v457
          %v459 = vld [vmem:[%s431 + $0x38] sm:%s424]
          %460 = vst [vmem:[%s432 + $0x34] sm:%s424] %v459
          %v461 = vld [vmem:[%s431 + $0x34] sm:%s424]
          %462 = vst [vmem:[%s432 + $0x38] sm:%s424] %v461
          %v463 = vld [vmem:[%s431 + $0x3c] sm:%s424]
          %464 = vst [vmem:[%s432 + $0x3c] sm:%s424] %v463
          %v465 = vld [vmem:[%s431 + $0x40] sm:%s424]
          %466 = vst [vmem:[%s432 + $0x40] sm:%s424] %v465
          %v467 = vld [vmem:[%s431 + $0x48] sm:%s424]
          %468 = vst [vmem:[%s432 + $0x44] sm:%s424] %v467
          %v469 = vld [vmem:[%s431 + $0x44] sm:%s424]
          %470 = vst [vmem:[%s432 + $0x48] sm:%s424] %v469
          %v471 = vld [vmem:[%s431 + $0x4c] sm:%s424]
          %472 = vst [vmem:[%s432 + $0x4c] sm:%s424] %v471
          %v473 = vld [vmem:[%s431 + $0x50] sm:%s424]
          %474 = vst [vmem:[%s432 + $0x50] sm:%s424] %v473
          %v475 = vld [vmem:[%s431 + $0x58] sm:%s424]
          %476 = vst [vmem:[%s432 + $0x54] sm:%s424] %v475
          %v477 = vld [vmem:[%s431 + $0x54] sm:%s424]
          %478 = vst [vmem:[%s432 + $0x58] sm:%s424] %v477
          %v479 = vld [vmem:[%s431 + $0x5c] sm:%s424]
          %480 = vst [vmem:[%s432 + $0x5c] sm:%s424] %v479
          %v481 = vld [vmem:[%s431 + $0x60] sm:%s424]
          %482 = vst [vmem:[%s432 + $0x60] sm:%s424] %v481
          %v483 = vld [vmem:[%s431 + $0x68] sm:%s424]
          %484 = vst [vmem:[%s432 + $0x64] sm:%s424] %v483
          %v485 = vld [vmem:[%s431 + $0x64] sm:%s424]
          %486 = vst [vmem:[%s432 + $0x68] sm:%s424] %v485
          %v487 = vld [vmem:[%s431 + $0x6c] sm:%s424]
          %488 = vst [vmem:[%s432 + $0x6c] sm:%s424] %v487
          %v489 = vld [vmem:[%s431 + $0x70] sm:%s424]
          %490 = vst [vmem:[%s432 + $0x70] sm:%s424] %v489
          %v491 = vld [vmem:[%s431 + $0x78] sm:%s424]
          %492 = vst [vmem:[%s432 + $0x74] sm:%s424] %v491
          %v493 = vld [vmem:[%s431 + $0x74] sm:%s424]
          %494 = vst [vmem:[%s432 + $0x78] sm:%s424] %v493
          %v495 = vld [vmem:[%s431 + $0x7c] sm:%s424]
          %496 = vst [vmem:[%s432 + $0x7c] sm:%s424] %v495
          %v497 = vld [vmem:[%s431 + $0x80] sm:%s424]
          %498 = vst [vmem:[%s432 + $0x80] sm:%s424] %v497
          %v499 = vld [vmem:[%s431 + $0x88] sm:%s424]
          %500 = vst [vmem:[%s432 + $0x84] sm:%s424] %v499
          %v501 = vld [vmem:[%s431 + $0x84] sm:%s424]
          %502 = vst [vmem:[%s432 + $0x88] sm:%s424] %v501
          %v503 = vld [vmem:[%s431 + $0x8c] sm:%s424]
          %504 = vst [vmem:[%s432 + $0x8c] sm:%s424] %v503
          %v505 = vld [vmem:[%s431 + $0x90] sm:%s424]
          %506 = vst [vmem:[%s432 + $0x90] sm:%s424] %v505
          %v507 = vld [vmem:[%s431 + $0x98] sm:%s424]
          %508 = vst [vmem:[%s432 + $0x94] sm:%s424] %v507
          %v509 = vld [vmem:[%s431 + $0x94] sm:%s424]
          %510 = vst [vmem:[%s432 + $0x98] sm:%s424] %v509
          %v511 = vld [vmem:[%s431 + $0x9c] sm:%s424]
          %512 = vst [vmem:[%s432 + $0x9c] sm:%s424] %v511
          %v513 = vld [vmem:[%s431 + $0xa0] sm:%s424]
          %514 = vst [vmem:[%s432 + $0xa0] sm:%s424] %v513
          %v515 = vld [vmem:[%s431 + $0xa8] sm:%s424]
          %516 = vst [vmem:[%s432 + $0xa4] sm:%s424] %v515
          %v517 = vld [vmem:[%s431 + $0xa4] sm:%s424]
          %518 = vst [vmem:[%s432 + $0xa8] sm:%s424] %v517
          %v519 = vld [vmem:[%s431 + $0xac] sm:%s424]
          %520 = vst [vmem:[%s432 + $0xac] sm:%s424] %v519
          %v521 = vld [vmem:[%s431 + $0xb0] sm:%s424]
          %522 = vst [vmem:[%s432 + $0xb0] sm:%s424] %v521
          %v523 = vld [vmem:[%s431 + $0xb8] sm:%s424]
          %524 = vst [vmem:[%s432 + $0xb4] sm:%s424] %v523
          %v525 = vld [vmem:[%s431 + $0xb4] sm:%s424]
          %526 = vst [vmem:[%s432 + $0xb8] sm:%s424] %v525
          %v527 = vld [vmem:[%s431 + $0xbc] sm:%s424]
          %528 = vst [vmem:[%s432 + $0xbc] sm:%s424] %v527
          %v529 = vld [vmem:[%s431 + $0xc0] sm:%s424]
          %530 = vst [vmem:[%s432 + $0xc0] sm:%s424] %v529
          %v531 = vld [vmem:[%s431 + $0xc8] sm:%s424]
          %532 = vst [vmem:[%s432 + $0xc4] sm:%s424] %v531
          %v533 = vld [vmem:[%s431 + $0xc4] sm:%s424]
          %534 = vst [vmem:[%s432 + $0xc8] sm:%s424] %v533
          %v535 = vld [vmem:[%s431 + $0xcc] sm:%s424]
          %536 = vst [vmem:[%s432 + $0xcc] sm:%s424] %v535
          %v537 = vld [vmem:[%s431 + $0xd0] sm:%s424]
          %538 = vst [vmem:[%s432 + $0xd0] sm:%s424] %v537
          %v539 = vld [vmem:[%s431 + $0xd8] sm:%s424]
          %540 = vst [vmem:[%s432 + $0xd4] sm:%s424] %v539
          %v541 = vld [vmem:[%s431 + $0xd4] sm:%s424]
          %542 = vst [vmem:[%s432 + $0xd8] sm:%s424] %v541
          %v543 = vld [vmem:[%s431 + $0xdc] sm:%s424]
          %544 = vst [vmem:[%s432 + $0xdc] sm:%s424] %v543
          %v545 = vld [vmem:[%s431 + $0xe0] sm:%s424]
          %546 = vst [vmem:[%s432 + $0xe0] sm:%s424] %v545
          %v547 = vld [vmem:[%s431 + $0xe8] sm:%s424]
          %548 = vst [vmem:[%s432 + $0xe4] sm:%s424] %v547
          %v549 = vld [vmem:[%s431 + $0xe4] sm:%s424]
          %550 = vst [vmem:[%s432 + $0xe8] sm:%s424] %v549
          %v551 = vld [vmem:[%s431 + $0xec] sm:%s424]
          %552 = vst [vmem:[%s432 + $0xec] sm:%s424] %v551
          %v553 = vld [vmem:[%s431 + $0xf0] sm:%s424]
          %554 = vst [vmem:[%s432 + $0xf0] sm:%s424] %v553
          %v555 = vld [vmem:[%s431 + $0xf8] sm:%s424]
          %556 = vst [vmem:[%s432 + $0xf4] sm:%s424] %v555
          %v557 = vld [vmem:[%s431 + $0xf4] sm:%s424]
          %558 = vst [vmem:[%s432 + $0xf8] sm:%s424] %v557
          %v559 = vld [vmem:[%s431 + $0xfc] sm:%s424]
          %560 = vst [vmem:[%s432 + $0xfc] sm:%s424] %v559
          %v561 = vld [vmem:[%s431 + $0x100] sm:%s424]
          %562 = vst [vmem:[%s432 + $0x100] sm:%s424] %v561
          %v563 = vld [vmem:[%s431 + $0x108] sm:%s424]
          %564 = vst [vmem:[%s432 + $0x104] sm:%s424] %v563
          %v565 = vld [vmem:[%s431 + $0x104] sm:%s424]
          %566 = vst [vmem:[%s432 + $0x108] sm:%s424] %v565
          %v567 = vld [vmem:[%s431 + $0x10c] sm:%s424]
          %568 = vst [vmem:[%s432 + $0x10c] sm:%s424] %v567
          %v569 = vld [vmem:[%s431 + $0x110] sm:%s424]
          %570 = vst [vmem:[%s432 + $0x110] sm:%s424] %v569
          %v571 = vld [vmem:[%s431 + $0x118] sm:%s424]
          %572 = vst [vmem:[%s432 + $0x114] sm:%s424] %v571
          %v573 = vld [vmem:[%s431 + $0x114] sm:%s424]
          %574 = vst [vmem:[%s432 + $0x118] sm:%s424] %v573
          %v575 = vld [vmem:[%s431 + $0x11c] sm:%s424]
          %576 = vst [vmem:[%s432 + $0x11c] sm:%s424] %v575
          %v577 = vld [vmem:[%s431 + $0x120] sm:%s424]
          %578 = vst [vmem:[%s432 + $0x120] sm:%s424] %v577
          %v579 = vld [vmem:[%s431 + $0x128] sm:%s424]
          %580 = vst [vmem:[%s432 + $0x124] sm:%s424] %v579
          %v581 = vld [vmem:[%s431 + $0x124] sm:%s424]
          %582 = vst [vmem:[%s432 + $0x128] sm:%s424] %v581
          %v583 = vld [vmem:[%s431 + $0x12c] sm:%s424]
          %584 = vst [vmem:[%s432 + $0x12c] sm:%s424] %v583
          %v585 = vld [vmem:[%s431 + $0x130] sm:%s424]
          %586 = vst [vmem:[%s432 + $0x130] sm:%s424] %v585
          %v587 = vld [vmem:[%s431 + $0x138] sm:%s424]
          %588 = vst [vmem:[%s432 + $0x134] sm:%s424] %v587
          %v589 = vld [vmem:[%s431 + $0x134] sm:%s424]
          %590 = vst [vmem:[%s432 + $0x138] sm:%s424] %v589
          %v591 = vld [vmem:[%s431 + $0x13c] sm:%s424]
          %592 = vst [vmem:[%s432 + $0x13c] sm:%s424] %v591
          %v593 = vld [vmem:[%s431 + $0x140] sm:%s424]
          %594 = vst [vmem:[%s432 + $0x140] sm:%s424] %v593
          %v595 = vld [vmem:[%s431 + $0x148] sm:%s424]
          %596 = vst [vmem:[%s432 + $0x144] sm:%s424] %v595
          %v597 = vld [vmem:[%s431 + $0x144] sm:%s424]
          %598 = vst [vmem:[%s432 + $0x148] sm:%s424] %v597
          %v599 = vld [vmem:[%s431 + $0x14c] sm:%s424]
          %600 = vst [vmem:[%s432 + $0x14c] sm:%s424] %v599
          %v601 = vld [vmem:[%s431 + $0x150] sm:%s424]
          %602 = vst [vmem:[%s432 + $0x150] sm:%s424] %v601
          %v603 = vld [vmem:[%s431 + $0x158] sm:%s424]
          %604 = vst [vmem:[%s432 + $0x154] sm:%s424] %v603
          %v605 = vld [vmem:[%s431 + $0x154] sm:%s424]
          %606 = vst [vmem:[%s432 + $0x158] sm:%s424] %v605
          %v607 = vld [vmem:[%s431 + $0x15c] sm:%s424]
          %608 = vst [vmem:[%s432 + $0x15c] sm:%s424] %v607
          %v609 = vld [vmem:[%s431 + $0x160] sm:%s424]
          %610 = vst [vmem:[%s432 + $0x160] sm:%s424] %v609
          %v611 = vld [vmem:[%s431 + $0x168] sm:%s424]
          %612 = vst [vmem:[%s432 + $0x164] sm:%s424] %v611
          %v613 = vld [vmem:[%s431 + $0x164] sm:%s424]
          %614 = vst [vmem:[%s432 + $0x168] sm:%s424] %v613
          %v615 = vld [vmem:[%s431 + $0x16c] sm:%s424]
          %616 = vst [vmem:[%s432 + $0x16c] sm:%s424] %v615
          %v617 = vld [vmem:[%s431 + $0x170] sm:%s424]
          %618 = vst [vmem:[%s432 + $0x170] sm:%s424] %v617
          %v619 = vld [vmem:[%s431 + $0x178] sm:%s424]
          %620 = vst [vmem:[%s432 + $0x174] sm:%s424] %v619
          %v621 = vld [vmem:[%s431 + $0x174] sm:%s424]
          %622 = vst [vmem:[%s432 + $0x178] sm:%s424] %v621
          %v623 = vld [vmem:[%s431 + $0x17c] sm:%s424]
          %624 = vst [vmem:[%s432 + $0x17c] sm:%s424] %v623
          %v625 = vld [vmem:[%s431 + $0x180] sm:%s424]
          %626 = vst [vmem:[%s432 + $0x180] sm:%s424] %v625
          %v627 = vld [vmem:[%s431 + $0x188] sm:%s424]
          %628 = vst [vmem:[%s432 + $0x184] sm:%s424] %v627
          %v629 = vld [vmem:[%s431 + $0x184] sm:%s424]
          %630 = vst [vmem:[%s432 + $0x188] sm:%s424] %v629
          %v631 = vld [vmem:[%s431 + $0x18c] sm:%s424]
          %632 = vst [vmem:[%s432 + $0x18c] sm:%s424] %v631
          %v633 = vld [vmem:[%s431 + $0x190] sm:%s424]
          %634 = vst [vmem:[%s432 + $0x190] sm:%s424] %v633
          %v635 = vld [vmem:[%s431 + $0x198] sm:%s424]
          %636 = vst [vmem:[%s432 + $0x194] sm:%s424] %v635
          %v637 = vld [vmem:[%s431 + $0x194] sm:%s424]
          %638 = vst [vmem:[%s432 + $0x198] sm:%s424] %v637
          %v639 = vld [vmem:[%s431 + $0x19c] sm:%s424]
          %640 = vst [vmem:[%s432 + $0x19c] sm:%s424] %v639
          %v641 = vld [vmem:[%s431 + $0x1a0] sm:%s424]
          %642 = vst [vmem:[%s432 + $0x1a0] sm:%s424] %v641
          %v643 = vld [vmem:[%s431 + $0x1a8] sm:%s424]
          %644 = vst [vmem:[%s432 + $0x1a4] sm:%s424] %v643
          %v645 = vld [vmem:[%s431 + $0x1a4] sm:%s424]
          %646 = vst [vmem:[%s432 + $0x1a8] sm:%s424] %v645
          %v647 = vld [vmem:[%s431 + $0x1ac] sm:%s424]
          %648 = vst [vmem:[%s432 + $0x1ac] sm:%s424] %v647
          %v649 = vld [vmem:[%s431 + $0x1b0] sm:%s424]
          %650 = vst [vmem:[%s432 + $0x1b0] sm:%s424] %v649
          %v651 = vld [vmem:[%s431 + $0x1b8] sm:%s424]
          %652 = vst [vmem:[%s432 + $0x1b4] sm:%s424] %v651
          %v653 = vld [vmem:[%s431 + $0x1b4] sm:%s424]
          %654 = vst [vmem:[%s432 + $0x1b8] sm:%s424] %v653
          %v655 = vld [vmem:[%s431 + $0x1bc] sm:%s424]
          %656 = vst [vmem:[%s432 + $0x1bc] sm:%s424] %v655
          %v657 = vld [vmem:[%s431 + $0x1c0] sm:%s424]
          %658 = vst [vmem:[%s432 + $0x1c0] sm:%s424] %v657
          %v659 = vld [vmem:[%s431 + $0x1c8] sm:%s424]
          %660 = vst [vmem:[%s432 + $0x1c4] sm:%s424] %v659
          %v661 = vld [vmem:[%s431 + $0x1c4] sm:%s424]
          %662 = vst [vmem:[%s432 + $0x1c8] sm:%s424] %v661
          %v663 = vld [vmem:[%s431 + $0x1cc] sm:%s424]
          %664 = vst [vmem:[%s432 + $0x1cc] sm:%s424] %v663
          %v665 = vld [vmem:[%s431 + $0x1d0] sm:%s424]
          %666 = vst [vmem:[%s432 + $0x1d0] sm:%s424] %v665
          %v667 = vld [vmem:[%s431 + $0x1d8] sm:%s424]
          %668 = vst [vmem:[%s432 + $0x1d4] sm:%s424] %v667
          %v669 = vld [vmem:[%s431 + $0x1d4] sm:%s424]
          %670 = vst [vmem:[%s432 + $0x1d8] sm:%s424] %v669
          %v671 = vld [vmem:[%s431 + $0x1dc] sm:%s424]
          %672 = vst [vmem:[%s432 + $0x1dc] sm:%s424] %v671
          %v673 = vld [vmem:[%s431 + $0x1e0] sm:%s424]
          %674 = vst [vmem:[%s432 + $0x1e0] sm:%s424] %v673
          %v675 = vld [vmem:[%s431 + $0x1e8] sm:%s424]
          %676 = vst [vmem:[%s432 + $0x1e4] sm:%s424] %v675
          %v677 = vld [vmem:[%s431 + $0x1e4] sm:%s424]
          %678 = vst [vmem:[%s432 + $0x1e8] sm:%s424] %v677
          %v679 = vld [vmem:[%s431 + $0x1ec] sm:%s424]
          %680 = vst [vmem:[%s432 + $0x1ec] sm:%s424] %v679
          %v681 = vld [vmem:[%s431 + $0x1f0] sm:%s424]
          %682 = vst [vmem:[%s432 + $0x1f0] sm:%s424] %v681
          %v683 = vld [vmem:[%s431 + $0x1f8] sm:%s424]
          %684 = vst [vmem:[%s432 + $0x1f4] sm:%s424] %v683
          %v685 = vld [vmem:[%s431 + $0x1f4] sm:%s424]
          %686 = vst [vmem:[%s432 + $0x1f8] sm:%s424] %v685
          %v687 = vld [vmem:[%s431 + $0x1fc] sm:%s424]
          %688 = vst [vmem:[%s432 + $0x1fc] sm:%s424] %v687
        $region124: #{_lambda_.1} parent=111 // loop_footer
          %s430 = sadd.s32 1, %s426
        $region125: #{_lambda_.1} parent=111 // loop_footer_branch
          %425 = sbr.rel target = $region121
        $region126: #{_lambda_.1} parent=111 // loop_exit
          _
      $region112: #{_lambda_.1} parent=96 // pred_fallthru
        _
    $region97: #{_lambda_.1} parent=1 // pred_fallthru
      _
    // Predicated region
    $region98: #{_lambda_.1} parent=1 // pred_check
      %p138 = pneg %p134
    $region99: #{_lambda_.1} parent=1 // pred_check_branch
      %140 = sbr.rel (%p138) target = $region101
    $region100: #{_lambda_.1} parent=1 // pred_region
      %s141 = sshllo.u32 0, 4
      loop: start=0, step=1, limit=1
      $region102: #{_lambda_.1} parent=100 // loop_pre_header
        _
      $region103: #{_lambda_.1} parent=100 // loop_header
        %s143 = sphi 0, %s147
        %p144 = scmp.ge.s32.totalorder %s143, 1
        %s148 = sphi %s13, %s13
        %s149 = sphi [#allocation2], [#allocation2]
      $region104: #{_lambda_.1} parent=100 // loop_header_branch
        %146 = sbr.rel (%p144) target = $region108
      $region105: #{_lambda_.1} parent=100 // loop_body
        %v150 = vld [vmem:[%s148] sm:%s141]
        %151 = vst [vmem:[%s149] sm:%s141] %v150
        %v152 = vld [vmem:[%s148 + $0x8] sm:%s141]
        %153 = vst [vmem:[%s149 + $0x4] sm:%s141] %v152
        %v154 = vld [vmem:[%s148 + $0x4] sm:%s141]
        %155 = vst [vmem:[%s149 + $0x8] sm:%s141] %v154
        %v156 = vld [vmem:[%s148 + $0xc] sm:%s141]
        %157 = vst [vmem:[%s149 + $0xc] sm:%s141] %v156
        %v158 = vld [vmem:[%s148 + $0x10] sm:%s141]
        %159 = vst [vmem:[%s149 + $0x10] sm:%s141] %v158
        %v160 = vld [vmem:[%s148 + $0x18] sm:%s141]
        %161 = vst [vmem:[%s149 + $0x14] sm:%s141] %v160
        %v162 = vld [vmem:[%s148 + $0x14] sm:%s141]
        %163 = vst [vmem:[%s149 + $0x18] sm:%s141] %v162
        %v164 = vld [vmem:[%s148 + $0x1c] sm:%s141]
        %165 = vst [vmem:[%s149 + $0x1c] sm:%s141] %v164
        %v166 = vld [vmem:[%s148 + $0x20] sm:%s141]
        %167 = vst [vmem:[%s149 + $0x20] sm:%s141] %v166
        %v168 = vld [vmem:[%s148 + $0x28] sm:%s141]
        %169 = vst [vmem:[%s149 + $0x24] sm:%s141] %v168
        %v170 = vld [vmem:[%s148 + $0x24] sm:%s141]
        %171 = vst [vmem:[%s149 + $0x28] sm:%s141] %v170
        %v172 = vld [vmem:[%s148 + $0x2c] sm:%s141]
        %173 = vst [vmem:[%s149 + $0x2c] sm:%s141] %v172
        %v174 = vld [vmem:[%s148 + $0x30] sm:%s141]
        %175 = vst [vmem:[%s149 + $0x30] sm:%s141] %v174
        %v176 = vld [vmem:[%s148 + $0x38] sm:%s141]
        %177 = vst [vmem:[%s149 + $0x34] sm:%s141] %v176
        %v178 = vld [vmem:[%s148 + $0x34] sm:%s141]
        %179 = vst [vmem:[%s149 + $0x38] sm:%s141] %v178
        %v180 = vld [vmem:[%s148 + $0x3c] sm:%s141]
        %181 = vst [vmem:[%s149 + $0x3c] sm:%s141] %v180
        %v182 = vld [vmem:[%s148 + $0x40] sm:%s141]
        %183 = vst [vmem:[%s149 + $0x40] sm:%s141] %v182
        %v184 = vld [vmem:[%s148 + $0x48] sm:%s141]
        %185 = vst [vmem:[%s149 + $0x44] sm:%s141] %v184
        %v186 = vld [vmem:[%s148 + $0x44] sm:%s141]
        %187 = vst [vmem:[%s149 + $0x48] sm:%s141] %v186
        %v188 = vld [vmem:[%s148 + $0x4c] sm:%s141]
        %189 = vst [vmem:[%s149 + $0x4c] sm:%s141] %v188
        %v190 = vld [vmem:[%s148 + $0x50] sm:%s141]
        %191 = vst [vmem:[%s149 + $0x50] sm:%s141] %v190
        %v192 = vld [vmem:[%s148 + $0x58] sm:%s141]
        %193 = vst [vmem:[%s149 + $0x54] sm:%s141] %v192
        %v194 = vld [vmem:[%s148 + $0x54] sm:%s141]
        %195 = vst [vmem:[%s149 + $0x58] sm:%s141] %v194
        %v196 = vld [vmem:[%s148 + $0x5c] sm:%s141]
        %197 = vst [vmem:[%s149 + $0x5c] sm:%s141] %v196
        %v198 = vld [vmem:[%s148 + $0x60] sm:%s141]
        %199 = vst [vmem:[%s149 + $0x60] sm:%s141] %v198
        %v200 = vld [vmem:[%s148 + $0x68] sm:%s141]
        %201 = vst [vmem:[%s149 + $0x64] sm:%s141] %v200
        %v202 = vld [vmem:[%s148 + $0x64] sm:%s141]
        %203 = vst [vmem:[%s149 + $0x68] sm:%s141] %v202
        %v204 = vld [vmem:[%s148 + $0x6c] sm:%s141]
        %205 = vst [vmem:[%s149 + $0x6c] sm:%s141] %v204
        %v206 = vld [vmem:[%s148 + $0x70] sm:%s141]
        %207 = vst [vmem:[%s149 + $0x70] sm:%s141] %v206
        %v208 = vld [vmem:[%s148 + $0x78] sm:%s141]
        %209 = vst [vmem:[%s149 + $0x74] sm:%s141] %v208
        %v210 = vld [vmem:[%s148 + $0x74] sm:%s141]
        %211 = vst [vmem:[%s149 + $0x78] sm:%s141] %v210
        %v212 = vld [vmem:[%s148 + $0x7c] sm:%s141]
        %213 = vst [vmem:[%s149 + $0x7c] sm:%s141] %v212
        %v214 = vld [vmem:[%s148 + $0x80] sm:%s141]
        %215 = vst [vmem:[%s149 + $0x80] sm:%s141] %v214
        %v216 = vld [vmem:[%s148 + $0x88] sm:%s141]
        %217 = vst [vmem:[%s149 + $0x84] sm:%s141] %v216
        %v218 = vld [vmem:[%s148 + $0x84] sm:%s141]
        %219 = vst [vmem:[%s149 + $0x88] sm:%s141] %v218
        %v220 = vld [vmem:[%s148 + $0x8c] sm:%s141]
        %221 = vst [vmem:[%s149 + $0x8c] sm:%s141] %v220
        %v222 = vld [vmem:[%s148 + $0x90] sm:%s141]
        %223 = vst [vmem:[%s149 + $0x90] sm:%s141] %v222
        %v224 = vld [vmem:[%s148 + $0x98] sm:%s141]
        %225 = vst [vmem:[%s149 + $0x94] sm:%s141] %v224
        %v226 = vld [vmem:[%s148 + $0x94] sm:%s141]
        %227 = vst [vmem:[%s149 + $0x98] sm:%s141] %v226
        %v228 = vld [vmem:[%s148 + $0x9c] sm:%s141]
        %229 = vst [vmem:[%s149 + $0x9c] sm:%s141] %v228
        %v230 = vld [vmem:[%s148 + $0xa0] sm:%s141]
        %231 = vst [vmem:[%s149 + $0xa0] sm:%s141] %v230
        %v232 = vld [vmem:[%s148 + $0xa8] sm:%s141]
        %233 = vst [vmem:[%s149 + $0xa4] sm:%s141] %v232
        %v234 = vld [vmem:[%s148 + $0xa4] sm:%s141]
        %235 = vst [vmem:[%s149 + $0xa8] sm:%s141] %v234
        %v236 = vld [vmem:[%s148 + $0xac] sm:%s141]
        %237 = vst [vmem:[%s149 + $0xac] sm:%s141] %v236
        %v238 = vld [vmem:[%s148 + $0xb0] sm:%s141]
        %239 = vst [vmem:[%s149 + $0xb0] sm:%s141] %v238
        %v240 = vld [vmem:[%s148 + $0xb8] sm:%s141]
        %241 = vst [vmem:[%s149 + $0xb4] sm:%s141] %v240
        %v242 = vld [vmem:[%s148 + $0xb4] sm:%s141]
        %243 = vst [vmem:[%s149 + $0xb8] sm:%s141] %v242
        %v244 = vld [vmem:[%s148 + $0xbc] sm:%s141]
        %245 = vst [vmem:[%s149 + $0xbc] sm:%s141] %v244
        %v246 = vld [vmem:[%s148 + $0xc0] sm:%s141]
        %247 = vst [vmem:[%s149 + $0xc0] sm:%s141] %v246
        %v248 = vld [vmem:[%s148 + $0xc8] sm:%s141]
        %249 = vst [vmem:[%s149 + $0xc4] sm:%s141] %v248
        %v250 = vld [vmem:[%s148 + $0xc4] sm:%s141]
        %251 = vst [vmem:[%s149 + $0xc8] sm:%s141] %v250
        %v252 = vld [vmem:[%s148 + $0xcc] sm:%s141]
        %253 = vst [vmem:[%s149 + $0xcc] sm:%s141] %v252
        %v254 = vld [vmem:[%s148 + $0xd0] sm:%s141]
        %255 = vst [vmem:[%s149 + $0xd0] sm:%s141] %v254
        %v256 = vld [vmem:[%s148 + $0xd8] sm:%s141]
        %257 = vst [vmem:[%s149 + $0xd4] sm:%s141] %v256
        %v258 = vld [vmem:[%s148 + $0xd4] sm:%s141]
        %259 = vst [vmem:[%s149 + $0xd8] sm:%s141] %v258
        %v260 = vld [vmem:[%s148 + $0xdc] sm:%s141]
        %261 = vst [vmem:[%s149 + $0xdc] sm:%s141] %v260
        %v262 = vld [vmem:[%s148 + $0xe0] sm:%s141]
        %263 = vst [vmem:[%s149 + $0xe0] sm:%s141] %v262
        %v264 = vld [vmem:[%s148 + $0xe8] sm:%s141]
        %265 = vst [vmem:[%s149 + $0xe4] sm:%s141] %v264
        %v266 = vld [vmem:[%s148 + $0xe4] sm:%s141]
        %267 = vst [vmem:[%s149 + $0xe8] sm:%s141] %v266
        %v268 = vld [vmem:[%s148 + $0xec] sm:%s141]
        %269 = vst [vmem:[%s149 + $0xec] sm:%s141] %v268
        %v270 = vld [vmem:[%s148 + $0xf0] sm:%s141]
        %271 = vst [vmem:[%s149 + $0xf0] sm:%s141] %v270
        %v272 = vld [vmem:[%s148 + $0xf8] sm:%s141]
        %273 = vst [vmem:[%s149 + $0xf4] sm:%s141] %v272
        %v274 = vld [vmem:[%s148 + $0xf4] sm:%s141]
        %275 = vst [vmem:[%s149 + $0xf8] sm:%s141] %v274
        %v276 = vld [vmem:[%s148 + $0xfc] sm:%s141]
        %277 = vst [vmem:[%s149 + $0xfc] sm:%s141] %v276
        %v278 = vld [vmem:[%s148 + $0x100] sm:%s141]
        %279 = vst [vmem:[%s149 + $0x100] sm:%s141] %v278
        %v280 = vld [vmem:[%s148 + $0x108] sm:%s141]
        %281 = vst [vmem:[%s149 + $0x104] sm:%s141] %v280
        %v282 = vld [vmem:[%s148 + $0x104] sm:%s141]
        %283 = vst [vmem:[%s149 + $0x108] sm:%s141] %v282
        %v284 = vld [vmem:[%s148 + $0x10c] sm:%s141]
        %285 = vst [vmem:[%s149 + $0x10c] sm:%s141] %v284
        %v286 = vld [vmem:[%s148 + $0x110] sm:%s141]
        %287 = vst [vmem:[%s149 + $0x110] sm:%s141] %v286
        %v288 = vld [vmem:[%s148 + $0x118] sm:%s141]
        %289 = vst [vmem:[%s149 + $0x114] sm:%s141] %v288
        %v290 = vld [vmem:[%s148 + $0x114] sm:%s141]
        %291 = vst [vmem:[%s149 + $0x118] sm:%s141] %v290
        %v292 = vld [vmem:[%s148 + $0x11c] sm:%s141]
        %293 = vst [vmem:[%s149 + $0x11c] sm:%s141] %v292
        %v294 = vld [vmem:[%s148 + $0x120] sm:%s141]
        %295 = vst [vmem:[%s149 + $0x120] sm:%s141] %v294
        %v296 = vld [vmem:[%s148 + $0x128] sm:%s141]
        %297 = vst [vmem:[%s149 + $0x124] sm:%s141] %v296
        %v298 = vld [vmem:[%s148 + $0x124] sm:%s141]
        %299 = vst [vmem:[%s149 + $0x128] sm:%s141] %v298
        %v300 = vld [vmem:[%s148 + $0x12c] sm:%s141]
        %301 = vst [vmem:[%s149 + $0x12c] sm:%s141] %v300
        %v302 = vld [vmem:[%s148 + $0x130] sm:%s141]
        %303 = vst [vmem:[%s149 + $0x130] sm:%s141] %v302
        %v304 = vld [vmem:[%s148 + $0x138] sm:%s141]
        %305 = vst [vmem:[%s149 + $0x134] sm:%s141] %v304
        %v306 = vld [vmem:[%s148 + $0x134] sm:%s141]
        %307 = vst [vmem:[%s149 + $0x138] sm:%s141] %v306
        %v308 = vld [vmem:[%s148 + $0x13c] sm:%s141]
        %309 = vst [vmem:[%s149 + $0x13c] sm:%s141] %v308
        %v310 = vld [vmem:[%s148 + $0x140] sm:%s141]
        %311 = vst [vmem:[%s149 + $0x140] sm:%s141] %v310
        %v312 = vld [vmem:[%s148 + $0x148] sm:%s141]
        %313 = vst [vmem:[%s149 + $0x144] sm:%s141] %v312
        %v314 = vld [vmem:[%s148 + $0x144] sm:%s141]
        %315 = vst [vmem:[%s149 + $0x148] sm:%s141] %v314
        %v316 = vld [vmem:[%s148 + $0x14c] sm:%s141]
        %317 = vst [vmem:[%s149 + $0x14c] sm:%s141] %v316
        %v318 = vld [vmem:[%s148 + $0x150] sm:%s141]
        %319 = vst [vmem:[%s149 + $0x150] sm:%s141] %v318
        %v320 = vld [vmem:[%s148 + $0x158] sm:%s141]
        %321 = vst [vmem:[%s149 + $0x154] sm:%s141] %v320
        %v322 = vld [vmem:[%s148 + $0x154] sm:%s141]
        %323 = vst [vmem:[%s149 + $0x158] sm:%s141] %v322
        %v324 = vld [vmem:[%s148 + $0x15c] sm:%s141]
        %325 = vst [vmem:[%s149 + $0x15c] sm:%s141] %v324
        %v326 = vld [vmem:[%s148 + $0x160] sm:%s141]
        %327 = vst [vmem:[%s149 + $0x160] sm:%s141] %v326
        %v328 = vld [vmem:[%s148 + $0x168] sm:%s141]
        %329 = vst [vmem:[%s149 + $0x164] sm:%s141] %v328
        %v330 = vld [vmem:[%s148 + $0x164] sm:%s141]
        %331 = vst [vmem:[%s149 + $0x168] sm:%s141] %v330
        %v332 = vld [vmem:[%s148 + $0x16c] sm:%s141]
        %333 = vst [vmem:[%s149 + $0x16c] sm:%s141] %v332
        %v334 = vld [vmem:[%s148 + $0x170] sm:%s141]
        %335 = vst [vmem:[%s149 + $0x170] sm:%s141] %v334
        %v336 = vld [vmem:[%s148 + $0x178] sm:%s141]
        %337 = vst [vmem:[%s149 + $0x174] sm:%s141] %v336
        %v338 = vld [vmem:[%s148 + $0x174] sm:%s141]
        %339 = vst [vmem:[%s149 + $0x178] sm:%s141] %v338
        %v340 = vld [vmem:[%s148 + $0x17c] sm:%s141]
        %341 = vst [vmem:[%s149 + $0x17c] sm:%s141] %v340
        %v342 = vld [vmem:[%s148 + $0x180] sm:%s141]
        %343 = vst [vmem:[%s149 + $0x180] sm:%s141] %v342
        %v344 = vld [vmem:[%s148 + $0x188] sm:%s141]
        %345 = vst [vmem:[%s149 + $0x184] sm:%s141] %v344
        %v346 = vld [vmem:[%s148 + $0x184] sm:%s141]
        %347 = vst [vmem:[%s149 + $0x188] sm:%s141] %v346
        %v348 = vld [vmem:[%s148 + $0x18c] sm:%s141]
        %349 = vst [vmem:[%s149 + $0x18c] sm:%s141] %v348
        %v350 = vld [vmem:[%s148 + $0x190] sm:%s141]
        %351 = vst [vmem:[%s149 + $0x190] sm:%s141] %v350
        %v352 = vld [vmem:[%s148 + $0x198] sm:%s141]
        %353 = vst [vmem:[%s149 + $0x194] sm:%s141] %v352
        %v354 = vld [vmem:[%s148 + $0x194] sm:%s141]
        %355 = vst [vmem:[%s149 + $0x198] sm:%s141] %v354
        %v356 = vld [vmem:[%s148 + $0x19c] sm:%s141]
        %357 = vst [vmem:[%s149 + $0x19c] sm:%s141] %v356
        %v358 = vld [vmem:[%s148 + $0x1a0] sm:%s141]
        %359 = vst [vmem:[%s149 + $0x1a0] sm:%s141] %v358
        %v360 = vld [vmem:[%s148 + $0x1a8] sm:%s141]
        %361 = vst [vmem:[%s149 + $0x1a4] sm:%s141] %v360
        %v362 = vld [vmem:[%s148 + $0x1a4] sm:%s141]
        %363 = vst [vmem:[%s149 + $0x1a8] sm:%s141] %v362
        %v364 = vld [vmem:[%s148 + $0x1ac] sm:%s141]
        %365 = vst [vmem:[%s149 + $0x1ac] sm:%s141] %v364
        %v366 = vld [vmem:[%s148 + $0x1b0] sm:%s141]
        %367 = vst [vmem:[%s149 + $0x1b0] sm:%s141] %v366
        %v368 = vld [vmem:[%s148 + $0x1b8] sm:%s141]
        %369 = vst [vmem:[%s149 + $0x1b4] sm:%s141] %v368
        %v370 = vld [vmem:[%s148 + $0x1b4] sm:%s141]
        %371 = vst [vmem:[%s149 + $0x1b8] sm:%s141] %v370
        %v372 = vld [vmem:[%s148 + $0x1bc] sm:%s141]
        %373 = vst [vmem:[%s149 + $0x1bc] sm:%s141] %v372
        %v374 = vld [vmem:[%s148 + $0x1c0] sm:%s141]
        %375 = vst [vmem:[%s149 + $0x1c0] sm:%s141] %v374
        %v376 = vld [vmem:[%s148 + $0x1c8] sm:%s141]
        %377 = vst [vmem:[%s149 + $0x1c4] sm:%s141] %v376
        %v378 = vld [vmem:[%s148 + $0x1c4] sm:%s141]
        %379 = vst [vmem:[%s149 + $0x1c8] sm:%s141] %v378
        %v380 = vld [vmem:[%s148 + $0x1cc] sm:%s141]
        %381 = vst [vmem:[%s149 + $0x1cc] sm:%s141] %v380
        %v382 = vld [vmem:[%s148 + $0x1d0] sm:%s141]
        %383 = vst [vmem:[%s149 + $0x1d0] sm:%s141] %v382
        %v384 = vld [vmem:[%s148 + $0x1d8] sm:%s141]
        %385 = vst [vmem:[%s149 + $0x1d4] sm:%s141] %v384
        %v386 = vld [vmem:[%s148 + $0x1d4] sm:%s141]
        %387 = vst [vmem:[%s149 + $0x1d8] sm:%s141] %v386
        %v388 = vld [vmem:[%s148 + $0x1dc] sm:%s141]
        %389 = vst [vmem:[%s149 + $0x1dc] sm:%s141] %v388
        %v390 = vld [vmem:[%s148 + $0x1e0] sm:%s141]
        %391 = vst [vmem:[%s149 + $0x1e0] sm:%s141] %v390
        %v392 = vld [vmem:[%s148 + $0x1e8] sm:%s141]
        %393 = vst [vmem:[%s149 + $0x1e4] sm:%s141] %v392
        %v394 = vld [vmem:[%s148 + $0x1e4] sm:%s141]
        %395 = vst [vmem:[%s149 + $0x1e8] sm:%s141] %v394
        %v396 = vld [vmem:[%s148 + $0x1ec] sm:%s141]
        %397 = vst [vmem:[%s149 + $0x1ec] sm:%s141] %v396
        %v398 = vld [vmem:[%s148 + $0x1f0] sm:%s141]
        %399 = vst [vmem:[%s149 + $0x1f0] sm:%s141] %v398
        %v400 = vld [vmem:[%s148 + $0x1f8] sm:%s141]
        %401 = vst [vmem:[%s149 + $0x1f4] sm:%s141] %v400
        %v402 = vld [vmem:[%s148 + $0x1f4] sm:%s141]
        %403 = vst [vmem:[%s149 + $0x1f8] sm:%s141] %v402
        %v404 = vld [vmem:[%s148 + $0x1fc] sm:%s141]
        %405 = vst [vmem:[%s149 + $0x1fc] sm:%s141] %v404
      $region106: #{_lambda_.1} parent=100 // loop_footer
        %s147 = sadd.s32 1, %s143
      $region107: #{_lambda_.1} parent=100 // loop_footer_branch
        %142 = sbr.rel target = $region103
      $region108: #{_lambda_.1} parent=100 // loop_exit
        _
    $region101: #{_lambda_.1} parent=1 // pred_fallthru
      _
    // Predicated region
    $region127: #{_lambda_.1} parent=1 // pred_check
      _
    $region128: #{_lambda_.1} parent=1 // pred_check_branch
      %691 = sbr.rel (0) target = $region130
    $region129: #{_lambda_.1} parent=1 // pred_region
      %692 = vsyncadd [#allocation3], 8192
    $region130: #{_lambda_.1} parent=1 // pred_fallthru
      _
    %v693 = vld [vmem:[%s5] sm:$0xff]
    %v694 = vld [vmem:[%s5 + $0x8] sm:$0xff]
    %v695 = vld [vmem:[%s5 + $0x10] sm:$0xff]
    %v696 = vld [vmem:[%s5 + $0x18] sm:$0xff]
    %v697 = vld [vmem:[%s5 + $0x20] sm:$0xff]
    %v698 = vld [vmem:[%s5 + $0x28] sm:$0xff]
    %v699 = vld [vmem:[%s5 + $0x30] sm:$0xff]
    %v700 = vld [vmem:[%s5 + $0x38] sm:$0xff]
    %v701 = vld [vmem:[%s5 + $0x40] sm:$0xff]
    %v702 = vld [vmem:[%s5 + $0x48] sm:$0xff]
    %v703 = vld [vmem:[%s0] sm:$0xf]
    %v704 = vld [vmem:[%s0 + $0x4] sm:$0xf]
    %v705 = vld [vmem:[%s2] sm:$0xf]
    %v706 = vld [vmem:[%s2 + $0x4] sm:$0xf]
    %v707 = vld [vmem:[%s2 + $0x8] sm:$0xf]
    %v708 = vld [vmem:[%s2 + $0xc] sm:$0xf]
    %v709 = vld [vmem:[%s2 + $0x10] sm:$0xf]
    %v710 = vld [vmem:[%s2 + $0x14] sm:$0xf]
    %v711 = vld [vmem:[%s2 + $0x18] sm:$0xf]
    %v712 = vld [vmem:[%s2 + $0x1c] sm:$0xf]
    %v713 = vld [vmem:[%s2 + $0x20] sm:$0xf]
    %v714 = vld [vmem:[%s2 + $0x24] sm:$0xf]
    %v715 = vld [vmem:[%s2 + $0x28] sm:$0x1]
    %v718 = vunpack.c.l.b16 %v703
    %v719 = vunpack.c.l.b16 %v704
    %v720 = vpack.c.b16 %v719, %v718
    %v732 = vunpack.c.l.b16 %v705
    %v733 = vunpack.c.l.b16 %v706
    %v734 = vunpack.c.l.b16 %v707
    %v735 = vunpack.c.l.b16 %v708
    %v736 = vunpack.c.l.b16 %v709
    %v737 = vunpack.c.l.b16 %v710
    %v738 = vunpack.c.l.b16 %v711
    %v739 = vunpack.c.l.b16 %v712
    %v740 = vunpack.c.l.b16 %v713
    %v741 = vunpack.c.l.b16 %v714
    %v742 = vunpack.c.l.b16 %v715
    %v743 = vpack.c.b16 %v733, %v732
    %v744 = vpack.c.b16 %v735, %v734
    %v745 = vpack.c.b16 %v737, %v736
    %v746 = vpack.c.b16 %v739, %v738
    %v747 = vpack.c.b16 %v741, %v740
    %v748 = vpack.c.b16 %v742, %v742
    %vm754 = vcmask 662528
    %v756 = vsel %vm754, %v720, 0
    %vm758 = vcmask 1040384
    %v759 = vsel 0, 4294967295, 65535
    %v760 = vsel %vm758, %v759, 0
    %v762 = vand.u32 %v748, %v760
    %764 = vmatprep.subr.bf16.mxu0 0
    %765 = vmatpush1.bf16.msra.mxu0 %v743
    %766 = vmatprep.subr.bf16.mxu0 0
    %767 = vmatpush1.bf16.msra.mxu0 %v744
    %768 = vmatprep.subr.bf16.mxu0 0
    %769 = vmatpush1.bf16.msra.mxu0 %v745
    %770 = vmatprep.subr.bf16.mxu0 0
    %771 = vmatpush1.bf16.msra.mxu0 %v746
    %772 = vmatprep.subr.bf16.mxu0 0
    %773 = vmatpush1.bf16.msra.mxu0 %v747
    %774 = vmatprep.subr.bf16.mxu0 0
    %775 = vmatpush1.bf16.msra.mxu0 %v762
    %776 = vmatprep.subr.bf16.mxu0 0
    %777 = vmatpush1.bf16.msra.mxu0 0
    %778 = vmatprep.subr.bf16.mxu0 0
    %779 = vmatpush1.bf16.msra.mxu0 0
    %780 = vmatprep.subr.bf16.mxu0 0
    %781 = vmatpush1.bf16.msra.mxu0 0
    %782 = vmatprep.subr.bf16.mxu0 0
    %783 = vmatpush1.bf16.msra.mxu0 0
    %784 = vmatprep.subr.bf16.mxu0 0
    %785 = vmatpush1.bf16.msra.mxu0 0
    %786 = vmatprep.subr.bf16.mxu0 0
    %787 = vmatpush1.bf16.msra.mxu0 0
    %788 = vmatprep.subr.bf16.mxu0 0
    %789 = vmatpush1.bf16.msra.mxu0 0
    %790 = vmatprep.subr.bf16.mxu0 0
    %791 = vmatpush1.bf16.msra.mxu0 0
    %792 = vmatprep.subr.bf16.mxu0 0
    %793 = vmatpush1.bf16.msra.mxu0 0
    %794 = vmatprep.subr.bf16.mxu0 0
    %795 = vmatpush1.bf16.msra.mxu0 0
    %796 = vmatprep.mubr.bf16.mxu0 0
    %797 = vmatmul.mubr.bf16.gmra.mrb[0].mxu0 %v756
    %v798 = vpop.f32.mrb[0].mxu0
    %v799 = vadd.f32 0.0, %v798
    %v800 = vpop.f32.mrb[0].mxu0
    %v801 = vpop.f32.mrb[0].mxu0
    %v802 = vadd.f32 0.0, %v801
    %v803 = vpop.f32.mrb[0].mxu0
    %804 = vdwg.mxu0
    %v805 = vld [vmem:[%s3] sm:$0x1]
    %v807 = vlaneseq
    %v808 = vshrl.u32 %v807, 7
    %v809 = vsub.s32 0, %v808
    %v810 = vrot.slane %v805, %v809
    %v812 = vmul.f32 %v799, %v810
    %v813 = vmul.f32 %v802, %v810
    %v814 = vld [vmem:[#allocation4] sm:$0x1]
    %v816 = vlaneseq
    %v817 = vshrl.u32 %v816, 7
    %v818 = vsub.s32 0, %v817
    %v819 = vrot.slane %v814, %v818
    %v821 = vadd.f32 %v812, %v819
    %v822 = vadd.f32 %v813, %v819
    %v823 = vmax.f32 %v821, 0.0
    %v824 = vmax.f32 %v822, 0.0
    %v825 = vld [vmem:[%s8] sm:$0xf]
    %v826 = vld [vmem:[#allocation7] sm:$0xf]
    %v827 = vld [vmem:[#allocation7 + $0x4] sm:$0xf]
    %v828 = vld [vmem:[#allocation7 + $0x8] sm:$0xf]
    %v829 = vld [vmem:[#allocation7 + $0xc] sm:$0xf]
    %v830 = vld [vmem:[#allocation7 + $0x10] sm:$0xf]
    %v831 = vld [vmem:[#allocation7 + $0x14] sm:$0xf]
    %v832 = vld [vmem:[#allocation7 + $0x18] sm:$0xf]
    %v833 = vld [vmem:[#allocation7 + $0x1c] sm:$0xf]
    %v834 = vld [vmem:[#allocation7 + $0x20] sm:$0xf]
    %v835 = vld [vmem:[#allocation7 + $0x24] sm:$0xf]
    %v836 = vld [vmem:[#allocation7 + $0x28] sm:$0xf]
    %v837 = vld [vmem:[#allocation7 + $0x2c] sm:$0xf]
    %v838 = vld [vmem:[#allocation7 + $0x30] sm:$0xf]
    %v839 = vld [vmem:[#allocation7 + $0x34] sm:$0xf]
    %v840 = vld [vmem:[#allocation7 + $0x38] sm:$0xf]
    %v841 = vld [vmem:[#allocation7 + $0x3c] sm:$0xf]
    %v842 = vld [vmem:[#allocation7 + $0x40] sm:$0xf]
    %v843 = vld [vmem:[#allocation7 + $0x44] sm:$0xf]
    %v844 = vld [vmem:[#allocation7 + $0x48] sm:$0xf]
    %v845 = vld [vmem:[#allocation7 + $0x4c] sm:$0xf]
    %v846 = vld [vmem:[#allocation7 + $0x50] sm:$0xf]
    %v847 = vld [vmem:[#allocation7 + $0x54] sm:$0xf]
    %v848 = vld [vmem:[#allocation7 + $0x58] sm:$0xf]
    %v849 = vld [vmem:[#allocation7 + $0x5c] sm:$0xf]
    %v850 = vld [vmem:[#allocation7 + $0x60] sm:$0xf]
    %v851 = vld [vmem:[#allocation7 + $0x64] sm:$0xf]
    %v852 = vld [vmem:[#allocation7 + $0x68] sm:$0xf]
    %v853 = vld [vmem:[#allocation7 + $0x6c] sm:$0xf]
    %v854 = vld [vmem:[#allocation7 + $0x70] sm:$0xf]
    %v855 = vld [vmem:[#allocation7 + $0x74] sm:$0xf]
    %v856 = vld [vmem:[#allocation7 + $0x78] sm:$0xf]
    %v857 = vld [vmem:[#allocation7 + $0x7c] sm:$0xf]
    %v858 = vld [vmem:[#allocation7 + $0x80] sm:$0xf]
    %v859 = vld [vmem:[#allocation7 + $0x84] sm:$0xf]
    %v860 = vld [vmem:[#allocation7 + $0x88] sm:$0xf]
    %v861 = vld [vmem:[#allocation7 + $0x8c] sm:$0xf]
    %v862 = vld [vmem:[#allocation7 + $0x90] sm:$0xf]
    %v863 = vld [vmem:[#allocation7 + $0x94] sm:$0xf]
    %v864 = vld [vmem:[#allocation7 + $0x98] sm:$0xf]
    %v865 = vld [vmem:[#allocation7 + $0x9c] sm:$0xf]
    %v866 = vld [vmem:[#allocation7 + $0xa0] sm:$0xf]
    %v867 = vld [vmem:[#allocation7 + $0xa4] sm:$0xf]
    %v868 = vld [vmem:[#allocation7 + $0xa8] sm:$0xf]
    %v869 = vld [vmem:[#allocation7 + $0xac] sm:$0xf]
    %v870 = vld [vmem:[#allocation7 + $0xb0] sm:$0xf]
    %v871 = vld [vmem:[#allocation7 + $0xb4] sm:$0xf]
    %v872 = vld [vmem:[#allocation7 + $0xb8] sm:$0xf]
    %v873 = vld [vmem:[#allocation7 + $0xbc] sm:$0xf]
    %v874 = vld [vmem:[#allocation7 + $0xc0] sm:$0xf]
    %v875 = vld [vmem:[#allocation7 + $0xc4] sm:$0xf]
    %v876 = vld [vmem:[#allocation7 + $0xc8] sm:$0xf]
    %v877 = vld [vmem:[#allocation7 + $0xcc] sm:$0xf]
    %v878 = vld [vmem:[#allocation7 + $0xd0] sm:$0xf]
    %v879 = vld [vmem:[#allocation7 + $0xd4] sm:$0xf]
    %v880 = vld [vmem:[#allocation7 + $0xd8] sm:$0xf]
    %v881 = vld [vmem:[#allocation7 + $0xdc] sm:$0xf]
    %v882 = vld [vmem:[#allocation7 + $0xe0] sm:$0xf]
    %v883 = vld [vmem:[#allocation7 + $0xe4] sm:$0xf]
    %v884 = vld [vmem:[#allocation7 + $0xe8] sm:$0xf]
    %v885 = vld [vmem:[#allocation7 + $0xec] sm:$0xf]
    %v886 = vld [vmem:[#allocation7 + $0xf0] sm:$0xf]
    %v887 = vld [vmem:[#allocation7 + $0xf4] sm:$0xf]
    %v888 = vld [vmem:[#allocation7 + $0xf8] sm:$0xf]
    %v889 = vld [vmem:[#allocation7 + $0xfc] sm:$0xf]
    %v890 = vld [vmem:[#allocation7 + $0x100] sm:$0xf]
    %v891 = vld [vmem:[#allocation7 + $0x104] sm:$0xf]
    %v892 = vld [vmem:[#allocation7 + $0x108] sm:$0xf]
    %v893 = vld [vmem:[#allocation7 + $0x10c] sm:$0xf]
    %v894 = vld [vmem:[#allocation7 + $0x110] sm:$0xf]
    %v895 = vld [vmem:[#allocation7 + $0x114] sm:$0xf]
    %v896 = vld [vmem:[#allocation7 + $0x118] sm:$0xf]
    %v897 = vld [vmem:[#allocation7 + $0x11c] sm:$0xf]
    %vm900 = vcmask 1041408
    %v901 = vrot.slane %v823, 6
    %v902 = vrot.slane %v824, 6
    %v903 = vsel %vm900, %v901, %v902
    %v907 = vsel %vm900, %v902, %v901
    %v908 = vrot.slane %v824, 2
    %vm910 = vcmask 1045504
    %v911 = vrot.slane %v823, 2
    %v912 = vsel %vm910, %v911, %v908
    %v915 = vsel %vm910, %v908, %v911
    %916 = vrot.lane.b32.xlu0 %v824, 64
    %v917 = vpop.permute.xlu0 %916
    %918 = vrot.lane.b32.xlu0 %v823, 64
    %v919 = vpop.permute.xlu0 %918
    %923 = vrot.lane.b32.xlu0 %v907, 64
    %v924 = vpop.permute.xlu0 %923
    %925 = vrot.lane.b32.xlu0 %v903, 64
    %v926 = vpop.permute.xlu0 %925
    %930 = vrot.lane.b32.xlu0 %v912, 64
    %v931 = vpop.permute.xlu0 %930
    %932 = vrot.lane.b32.xlu0 %v915, 64
    %v933 = vpop.permute.xlu0 %932
    %vm936 = vcmask 523264
    %v937 = vsel %vm936, %v903, %v917
    %v938 = vsel %vm936, %v907, %v919
    %v939 = vsel %vm936, %v915, %v924
    %v940 = vsel %vm936, %v912, %v926
    %v941 = vsel %vm936, %v823, %v931
    %v942 = vsel %vm936, %v824, %v933
    %v943 = vmul.f32 %v937, %v693
    %v944 = vmul.f32 %v939, %v694
    %v945 = vmul.f32 %v941, %v695
    %v946 = vmul.f32 %v937, %v696
    %v947 = vmul.f32 %v915, %v697
    %v948 = vmul.f32 %v938, %v698
    %v949 = vmul.f32 %v940, %v699
    %v950 = vmul.f32 %v942, %v700
    %v951 = vmul.f32 %v938, %v701
    %v952 = vmul.f32 %v912, %v702
    %v953 = vpack.c.bf16 %v948, %v943
    %v954 = vpack.c.bf16 %v949, %v944
    %v955 = vpack.c.bf16 %v950, %v945
    %v956 = vpack.c.bf16 %v951, %v946
    %v957 = vpack.c.bf16 %v952, %v947
    %v1030 = vunpack.c.l.b16 %v826
    %v1031 = vunpack.c.l.b16 %v827
    %v1032 = vunpack.c.l.b16 %v828
    %v1033 = vunpack.c.l.b16 %v829
    %v1034 = vunpack.c.l.b16 %v830
    %v1035 = vunpack.c.l.b16 %v831
    %v1036 = vunpack.c.l.b16 %v832
    %v1037 = vunpack.c.l.b16 %v833
    %v1038 = vunpack.c.l.b16 %v834
    %v1039 = vunpack.c.l.b16 %v835
    %v1040 = vunpack.c.l.b16 %v836
    %v1041 = vunpack.c.l.b16 %v837
    %v1042 = vunpack.c.l.b16 %v838
    %v1043 = vunpack.c.l.b16 %v839
    %v1044 = vunpack.c.l.b16 %v840
    %v1045 = vunpack.c.l.b16 %v841
    %v1046 = vunpack.c.l.b16 %v842
    %v1047 = vunpack.c.l.b16 %v843
    %v1048 = vunpack.c.l.b16 %v844
    %v1049 = vunpack.c.l.b16 %v845
    %v1050 = vunpack.c.l.b16 %v846
    %v1051 = vunpack.c.l.b16 %v847
    %v1052 = vunpack.c.l.b16 %v848
    %v1053 = vunpack.c.l.b16 %v849
    %v1054 = vunpack.c.l.b16 %v850
    %v1055 = vunpack.c.l.b16 %v851
    %v1056 = vunpack.c.l.b16 %v852
    %v1057 = vunpack.c.l.b16 %v853
    %v1058 = vunpack.c.l.b16 %v854
    %v1059 = vunpack.c.l.b16 %v855
    %v1060 = vunpack.c.l.b16 %v856
    %v1061 = vunpack.c.l.b16 %v857
    %v1062 = vunpack.c.l.b16 %v858
    %v1063 = vunpack.c.l.b16 %v859
    %v1064 = vunpack.c.l.b16 %v860
    %v1065 = vunpack.c.l.b16 %v861
    %v1066 = vunpack.c.l.b16 %v862
    %v1067 = vunpack.c.l.b16 %v863
    %v1068 = vunpack.c.l.b16 %v864
    %v1069 = vunpack.c.l.b16 %v865
    %v1070 = vunpack.c.l.b16 %v866
    %v1071 = vunpack.c.l.b16 %v867
    %v1072 = vunpack.c.l.b16 %v868
    %v1073 = vunpack.c.l.b16 %v869
    %v1074 = vunpack.c.l.b16 %v870
    %v1075 = vunpack.c.l.b16 %v871
    %v1076 = vunpack.c.l.b16 %v872
    %v1077 = vunpack.c.l.b16 %v873
    %v1078 = vunpack.c.l.b16 %v874
    %v1079 = vunpack.c.l.b16 %v875
    %v1080 = vunpack.c.l.b16 %v876
    %v1081 = vunpack.c.l.b16 %v877
    %v1082 = vunpack.c.l.b16 %v878
    %v1083 = vunpack.c.l.b16 %v879
    %v1084 = vunpack.c.l.b16 %v880
    %v1085 = vunpack.c.l.b16 %v881
    %v1086 = vunpack.c.l.b16 %v882
    %v1087 = vunpack.c.l.b16 %v883
    %v1088 = vunpack.c.l.b16 %v884
    %v1089 = vunpack.c.l.b16 %v885
    %v1090 = vunpack.c.l.b16 %v886
    %v1091 = vunpack.c.l.b16 %v887
    %v1092 = vunpack.c.l.b16 %v888
    %v1093 = vunpack.c.l.b16 %v889
    %v1094 = vunpack.c.l.b16 %v890
    %v1095 = vunpack.c.l.b16 %v891
    %v1096 = vunpack.c.l.b16 %v892
    %v1097 = vunpack.c.l.b16 %v893
    %v1098 = vunpack.c.l.b16 %v894
    %v1099 = vunpack.c.l.b16 %v895
    %v1100 = vunpack.c.l.b16 %v896
    %v1101 = vunpack.c.l.b16 %v897
    %v1102 = vpack.c.b16 %v1031, %v1030
    %v1103 = vpack.c.b16 %v1033, %v1032
    %v1104 = vpack.c.b16 %v1035, %v1034
    %v1105 = vpack.c.b16 %v1037, %v1036
    %v1106 = vpack.c.b16 %v1039, %v1038
    %v1107 = vpack.c.b16 %v1041, %v1040
    %v1108 = vpack.c.b16 %v1043, %v1042
    %v1109 = vpack.c.b16 %v1045, %v1044
    %v1110 = vpack.c.b16 %v1047, %v1046
    %v1111 = vpack.c.b16 %v1049, %v1048
    %v1112 = vpack.c.b16 %v1051, %v1050
    %v1113 = vpack.c.b16 %v1053, %v1052
    %v1114 = vpack.c.b16 %v1055, %v1054
    %v1115 = vpack.c.b16 %v1057, %v1056
    %v1116 = vpack.c.b16 %v1059, %v1058
    %v1117 = vpack.c.b16 %v1061, %v1060
    %v1118 = vpack.c.b16 %v1063, %v1062
    %v1119 = vpack.c.b16 %v1065, %v1064
    %v1120 = vpack.c.b16 %v1067, %v1066
    %v1121 = vpack.c.b16 %v1069, %v1068
    %v1122 = vpack.c.b16 %v1071, %v1070
    %v1123 = vpack.c.b16 %v1073, %v1072
    %v1124 = vpack.c.b16 %v1075, %v1074
    %v1125 = vpack.c.b16 %v1077, %v1076
    %v1126 = vpack.c.b16 %v1079, %v1078
    %v1127 = vpack.c.b16 %v1081, %v1080
    %v1128 = vpack.c.b16 %v1083, %v1082
    %v1129 = vpack.c.b16 %v1085, %v1084
    %v1130 = vpack.c.b16 %v1087, %v1086
    %v1131 = vpack.c.b16 %v1089, %v1088
    %v1132 = vpack.c.b16 %v1091, %v1090
    %v1133 = vpack.c.b16 %v1093, %v1092
    %v1134 = vpack.c.b16 %v1095, %v1094
    %v1135 = vpack.c.b16 %v1097, %v1096
    %v1136 = vpack.c.b16 %v1099, %v1098
    %v1137 = vpack.c.b16 %v1101, %v1100
    %v1175 = vsel %vm936, %v957, 0
    %1177 = vmatprep.subr.bf16.mxu0 0
    %1178 = vmatpush1.bf16.msra.mxu0 %v1102
    %1179 = vmatprep.subr.bf16.mxu0 0
    %1180 = vmatpush1.bf16.msra.mxu0 %v1103
    %1181 = vmatprep.subr.bf16.mxu0 0
    %1182 = vmatpush1.bf16.msra.mxu0 %v1104
    %1183 = vmatprep.subr.bf16.mxu0 0
    %1184 = vmatpush1.bf16.msra.mxu0 %v1105
    %1185 = vmatprep.subr.bf16.mxu0 0
    %1186 = vmatpush1.bf16.msra.mxu0 %v1106
    %1187 = vmatprep.subr.bf16.mxu0 0
    %1188 = vmatpush1.bf16.msra.mxu0 %v1107
    %1189 = vmatprep.subr.bf16.mxu0 0
    %1190 = vmatpush1.bf16.msra.mxu0 %v1108
    %1191 = vmatprep.subr.bf16.mxu0 0
    %1192 = vmatpush1.bf16.msra.mxu0 %v1109
    %1193 = vmatprep.subr.bf16.mxu0 0
    %1194 = vmatpush1.bf16.msra.mxu0 %v1110
    %1195 = vmatprep.subr.bf16.mxu0 0
    %1196 = vmatpush1.bf16.msra.mxu0 %v1111
    %1197 = vmatprep.subr.bf16.mxu0 0
    %1198 = vmatpush1.bf16.msra.mxu0 %v1112
    %1199 = vmatprep.subr.bf16.mxu0 0
    %1200 = vmatpush1.bf16.msra.mxu0 %v1113
    %1201 = vmatprep.subr.bf16.mxu0 0
    %1202 = vmatpush1.bf16.msra.mxu0 %v1114
    %1203 = vmatprep.subr.bf16.mxu0 0
    %1204 = vmatpush1.bf16.msra.mxu0 %v1115
    %1205 = vmatprep.subr.bf16.mxu0 0
    %1206 = vmatpush1.bf16.msra.mxu0 %v1116
    %1207 = vmatprep.subr.bf16.mxu0 0
    %1208 = vmatpush1.bf16.msra.mxu0 %v1117
    %1209 = vmatprep.mubr.bf16.mxu0 %v954
    %1210 = vmatmul.mubr.bf16.gmra.mrb[0].mxu0 %v953
    %v1211 = vpop.f32.mrb[0].mxu0
    %v1212 = vadd.f32 0.0, %v1211
    %v1213 = vpop.f32.mrb[0].mxu0
    %v1214 = vpop.f32.mrb[0].mxu0
    %v1215 = vadd.f32 0.0, %v1214
    %v1216 = vpop.f32.mrb[0].mxu0
    %1217 = vdwg.mxu0
    %1218 = vmatprep.subr.bf16.mxu0 0
    %1219 = vmatpush1.bf16.msra.mxu0 %v1118
    %1220 = vmatprep.subr.bf16.mxu0 0
    %1221 = vmatpush1.bf16.msra.mxu0 %v1119
    %1222 = vmatprep.subr.bf16.mxu0 0
    %1223 = vmatpush1.bf16.msra.mxu0 %v1120
    %1224 = vmatprep.subr.bf16.mxu0 0
    %1225 = vmatpush1.bf16.msra.mxu0 %v1121
    %1226 = vmatprep.subr.bf16.mxu0 0
    %1227 = vmatpush1.bf16.msra.mxu0 %v1122
    %1228 = vmatprep.subr.bf16.mxu0 0
    %1229 = vmatpush1.bf16.msra.mxu0 %v1123
    %1230 = vmatprep.subr.bf16.mxu0 0
    %1231 = vmatpush1.bf16.msra.mxu0 %v1124
    %1232 = vmatprep.subr.bf16.mxu0 0
    %1233 = vmatpush1.bf16.msra.mxu0 %v1125
    %1234 = vmatprep.subr.bf16.mxu0 0
    %1235 = vmatpush1.bf16.msra.mxu0 %v1126
    %1236 = vmatprep.subr.bf16.mxu0 0
    %1237 = vmatpush1.bf16.msra.mxu0 %v1127
    %1238 = vmatprep.subr.bf16.mxu0 0
    %1239 = vmatpush1.bf16.msra.mxu0 %v1128
    %1240 = vmatprep.subr.bf16.mxu0 0
    %1241 = vmatpush1.bf16.msra.mxu0 %v1129
    %1242 = vmatprep.subr.bf16.mxu0 0
    %1243 = vmatpush1.bf16.msra.mxu0 %v1130
    %1244 = vmatprep.subr.bf16.mxu0 0
    %1245 = vmatpush1.bf16.msra.mxu0 %v1131
    %1246 = vmatprep.subr.bf16.mxu0 0
    %1247 = vmatpush1.bf16.msra.mxu0 %v1132
    %1248 = vmatprep.subr.bf16.mxu0 0
    %1249 = vmatpush1.bf16.msra.mxu0 %v1133
    %1250 = vmatprep.mubr.bf16.mxu0 %v956
    %1251 = vmatmul.mubr.bf16.gmra.mrb[0].mxu0 %v955
    %v1252 = vpop.f32.mrb[0].mxu0
    %v1253 = vadd.f32 %v1212, %v1252
    %v1254 = vpop.f32.mrb[0].mxu0
    %v1255 = vpop.f32.mrb[0].mxu0
    %v1256 = vadd.f32 %v1215, %v1255
    %v1257 = vpop.f32.mrb[0].mxu0
    %1258 = vdwg.mxu0
    %1259 = vmatprep.subr.bf16.mxu0 0
    %1260 = vmatpush1.bf16.msra.mxu0 %v1134
    %1261 = vmatprep.subr.bf16.mxu0 0
    %1262 = vmatpush1.bf16.msra.mxu0 %v1135
    %1263 = vmatprep.subr.bf16.mxu0 0
    %1264 = vmatpush1.bf16.msra.mxu0 %v1136
    %1265 = vmatprep.subr.bf16.mxu0 0
    %1266 = vmatpush1.bf16.msra.mxu0 %v1137
    %1267 = vmatprep.subr.bf16.mxu0 0
    %1268 = vmatpush1.bf16.msra.mxu0 0
    %1269 = vmatprep.subr.bf16.mxu0 0
    %1270 = vmatpush1.bf16.msra.mxu0 0
    %1271 = vmatprep.subr.bf16.mxu0 0
    %1272 = vmatpush1.bf16.msra.mxu0 0
    %1273 = vmatprep.subr.bf16.mxu0 0
    %1274 = vmatpush1.bf16.msra.mxu0 0
    %1275 = vmatprep.subr.bf16.mxu0 0
    %1276 = vmatpush1.bf16.msra.mxu0 0
    %1277 = vmatprep.subr.bf16.mxu0 0
    %1278 = vmatpush1.bf16.msra.mxu0 0
    %1279 = vmatprep.subr.bf16.mxu0 0
    %1280 = vmatpush1.bf16.msra.mxu0 0
    %1281 = vmatprep.subr.bf16.mxu0 0
    %1282 = vmatpush1.bf16.msra.mxu0 0
    %1283 = vmatprep.subr.bf16.mxu0 0
    %1284 = vmatpush1.bf16.msra.mxu0 0
    %1285 = vmatprep.subr.bf16.mxu0 0
    %1286 = vmatpush1.bf16.msra.mxu0 0
    %1287 = vmatprep.subr.bf16.mxu0 0
    %1288 = vmatpush1.bf16.msra.mxu0 0
    %1289 = vmatprep.subr.bf16.mxu0 0
    %1290 = vmatpush1.bf16.msra.mxu0 0
    %1291 = vmatprep.mubr.bf16.mxu0 0
    %1292 = vmatmul.mubr.bf16.gmra.mrb[0].mxu0 %v1175
    %v1293 = vpop.f32.mrb[0].mxu0
    %v1294 = vadd.f32 %v1253, %v1293
    %v1295 = vpop.f32.mrb[0].mxu0
    %v1296 = vpop.f32.mrb[0].mxu0
    %v1297 = vadd.f32 %v1256, %v1296
    %v1298 = vpop.f32.mrb[0].mxu0
    %1299 = vdwg.mxu0
    %v1300 = vlaneseq
    %v1301 = vshrl.u32 %v1300, 7
    %v1302 = vsub.s32 0, %v1301
    %v1303 = vrot.slane %v825, %v1302
    %v1304 = vmul.f32 %v1294, %v1303
    %v1305 = vmul.f32 %v1297, %v1303
    %v1306 = vlaneseq
    %v1307 = vshrl.u32 %v1306, 7
    %v1308 = vsub.s32 1, %v1307
    %v1309 = vrot.slane %v825, %v1308
    %v1310 = vadd.f32 %v1304, %v1309
    %v1311 = vadd.f32 %v1305, %v1309
    %v1312 = vmax.f32 %v1310, 0.0
    %v1313 = vmax.f32 %v1311, 0.0
    %v1314 = vld [vmem:[%s7] sm:$0xf]
    %v1315 = vld [vmem:[%s7 + $0x4] sm:$0xf]
    %v1316 = vld [vmem:[%s7 + $0x8] sm:$0xf]
    %v1317 = vld [vmem:[%s7 + $0xc] sm:$0xf]
    %v1318 = vld [vmem:[%s7 + $0x10] sm:$0xf]
    %v1319 = vld [vmem:[%s7 + $0x14] sm:$0xf]
    %v1320 = vld [vmem:[%s7 + $0x18] sm:$0xf]
    %v1321 = vld [vmem:[%s7 + $0x1c] sm:$0xf]
    %v1322 = vld [vmem:[%s7 + $0x20] sm:$0xf]
    %v1323 = vld [vmem:[%s7 + $0x24] sm:$0xf]
    %v1324 = vld [vmem:[%s7 + $0x28] sm:$0xf]
    %v1325 = vld [vmem:[%s7 + $0x2c] sm:$0xf]
    %v1326 = vld [vmem:[%s7 + $0x30] sm:$0xf]
    %v1327 = vld [vmem:[%s7 + $0x34] sm:$0xf]
    %v1328 = vld [vmem:[%s7 + $0x38] sm:$0xf]
    %v1329 = vld [vmem:[%s7 + $0x3c] sm:$0xf]
    %v1330 = vld [vmem:[%s7 + $0x40] sm:$0xf]
    %v1331 = vld [vmem:[%s7 + $0x44] sm:$0xf]
    %v1332 = vld [vmem:[%s7 + $0x48] sm:$0xf]
    %v1333 = vld [vmem:[%s7 + $0x4c] sm:$0xf]
    %v1334 = vld [vmem:[%s7 + $0x50] sm:$0xf]
    %v1335 = vld [vmem:[%s7 + $0x54] sm:$0xf]
    %v1336 = vld [vmem:[%s7 + $0x58] sm:$0xf]
    %v1337 = vld [vmem:[%s7 + $0x5c] sm:$0xf]
    %v1338 = vld [vmem:[%s7 + $0x60] sm:$0xf]
    %v1339 = vld [vmem:[%s7 + $0x64] sm:$0xf]
    %v1340 = vld [vmem:[%s7 + $0x68] sm:$0xf]
    %v1341 = vld [vmem:[%s7 + $0x6c] sm:$0xf]
    %v1342 = vld [vmem:[%s7 + $0x70] sm:$0xf]
    %v1343 = vld [vmem:[%s7 + $0x74] sm:$0xf]
    %v1344 = vld [vmem:[%s7 + $0x78] sm:$0xf]
    %v1345 = vld [vmem:[%s7 + $0x7c] sm:$0xf]
    %v1346 = vld [vmem:[%s7 + $0x80] sm:$0xf]
    %v1347 = vld [vmem:[%s7 + $0x84] sm:$0xf]
    %v1348 = vld [vmem:[%s7 + $0x88] sm:$0xf]
    %v1349 = vld [vmem:[%s7 + $0x8c] sm:$0xf]
    %v1350 = vld [vmem:[%s7 + $0x90] sm:$0xf]
    %v1351 = vld [vmem:[%s7 + $0x94] sm:$0xf]
    %v1352 = vld [vmem:[%s7 + $0x98] sm:$0xf]
    %v1353 = vld [vmem:[%s7 + $0x9c] sm:$0xf]
    %v1354 = vld [vmem:[%s7 + $0xa0] sm:$0xf]
    %v1355 = vld [vmem:[%s7 + $0xa4] sm:$0xf]
    %v1356 = vld [vmem:[%s7 + $0xa8] sm:$0xf]
    %v1357 = vld [vmem:[%s7 + $0xac] sm:$0xf]
    %v1358 = vld [vmem:[%s7 + $0xb0] sm:$0xf]
    %v1359 = vld [vmem:[%s7 + $0xb4] sm:$0xf]
    %v1360 = vld [vmem:[%s7 + $0xb8] sm:$0xf]
    %v1361 = vld [vmem:[%s7 + $0xbc] sm:$0xf]
    %v1362 = vld [vmem:[%s7 + $0xc0] sm:$0xf]
    %v1363 = vld [vmem:[%s7 + $0xc4] sm:$0xf]
    %v1364 = vld [vmem:[%s7 + $0xc8] sm:$0xf]
    %v1365 = vld [vmem:[%s7 + $0xcc] sm:$0xf]
    %v1366 = vld [vmem:[%s7 + $0xd0] sm:$0xf]
    %v1367 = vld [vmem:[%s7 + $0xd4] sm:$0xf]
    %v1368 = vld [vmem:[%s7 + $0xd8] sm:$0xf]
    %v1369 = vld [vmem:[%s7 + $0xdc] sm:$0xf]
    %v1370 = vld [vmem:[%s7 + $0xe0] sm:$0xf]
    %v1371 = vld [vmem:[%s7 + $0xe4] sm:$0xf]
    %v1372 = vld [vmem:[%s7 + $0xe8] sm:$0xf]
    %v1373 = vld [vmem:[%s7 + $0xec] sm:$0xf]
    %v1374 = vld [vmem:[%s7 + $0xf0] sm:$0xf]
    %v1375 = vld [vmem:[%s7 + $0xf4] sm:$0xf]
    %v1376 = vld [vmem:[%s7 + $0xf8] sm:$0xf]
    %v1377 = vld [vmem:[%s7 + $0xfc] sm:$0xf]
    %v1378 = vld [vmem:[%s7 + $0x100] sm:$0xf]
    %v1379 = vld [vmem:[%s7 + $0x104] sm:$0xf]
    %v1380 = vld [vmem:[%s7 + $0x108] sm:$0xf]
    %v1381 = vld [vmem:[%s7 + $0x10c] sm:$0xf]
    %v1382 = vld [vmem:[%s7 + $0x110] sm:$0xf]
    %v1383 = vld [vmem:[%s7 + $0x114] sm:$0xf]
    %v1384 = vld [vmem:[%s7 + $0x118] sm:$0xf]
    %v1385 = vld [vmem:[%s7 + $0x11c] sm:$0xf]
    %v1388 = vrot.slane %v1312, 6
    %v1389 = vrot.slane %v1313, 6
    %v1390 = vsel %vm900, %v1388, %v1389
    %v1394 = vsel %vm900, %v1389, %v1388
    %v1395 = vrot.slane %v1313, 2
    %v1397 = vrot.slane %v1312, 2
    %v1398 = vsel %vm910, %v1397, %v1395
    %v1401 = vsel %vm910, %v1395, %v1397
    %1402 = vrot.lane.b32.xlu0 %v1313, 64
    %v1403 = vpop.permute.xlu0 %1402
    %1404 = vrot.lane.b32.xlu0 %v1312, 64
    %v1405 = vpop.permute.xlu0 %1404
    %1409 = vrot.lane.b32.xlu0 %v1394, 64
    %v1410 = vpop.permute.xlu0 %1409
    %1411 = vrot.lane.b32.xlu0 %v1390, 64
    %v1412 = vpop.permute.xlu0 %1411
    %1416 = vrot.lane.b32.xlu0 %v1398, 64
    %v1417 = vpop.permute.xlu0 %1416
    %1418 = vrot.lane.b32.xlu0 %v1401, 64
    %v1419 = vpop.permute.xlu0 %1418
    %v1422 = vsel %vm936, %v1390, %v1403
    %v1423 = vsel %vm936, %v1394, %v1405
    %v1424 = vsel %vm936, %v1401, %v1410
    %v1425 = vsel %vm936, %v1398, %v1412
    %v1426 = vsel %vm936, %v1312, %v1417
    %v1427 = vsel %vm936, %v1313, %v1419
    %v1428 = vmul.f32 %v1422, %v693
    %v1429 = vmul.f32 %v1424, %v694
    %v1430 = vmul.f32 %v1426, %v695
    %v1431 = vmul.f32 %v1422, %v696
    %v1432 = vmul.f32 %v1401, %v697
    %v1433 = vmul.f32 %v1423, %v698
    %v1434 = vmul.f32 %v1425, %v699
    %v1435 = vmul.f32 %v1427, %v700
    %v1436 = vmul.f32 %v1423, %v701
    %v1437 = vmul.f32 %v1398, %v702
    %v1438 = vpack.c.bf16 %v1433, %v1428
    %v1439 = vpack.c.bf16 %v1434, %v1429
    %v1440 = vpack.c.bf16 %v1435, %v1430
    %v1441 = vpack.c.bf16 %v1436, %v1431
    %v1442 = vpack.c.bf16 %v1437, %v1432
    %v1515 = vunpack.c.l.b16 %v1314
    %v1516 = vunpack.c.l.b16 %v1315
    %v1517 = vunpack.c.l.b16 %v1316
    %v1518 = vunpack.c.l.b16 %v1317
    %v1519 = vunpack.c.l.b16 %v1318
    %v1520 = vunpack.c.l.b16 %v1319
    %v1521 = vunpack.c.l.b16 %v1320
    %v1522 = vunpack.c.l.b16 %v1321
    %v1523 = vunpack.c.l.b16 %v1322
    %v1524 = vunpack.c.l.b16 %v1323
    %v1525 = vunpack.c.l.b16 %v1324
    %v1526 = vunpack.c.l.b16 %v1325
    %v1527 = vunpack.c.l.b16 %v1326
    %v1528 = vunpack.c.l.b16 %v1327
    %v1529 = vunpack.c.l.b16 %v1328
    %v1530 = vunpack.c.l.b16 %v1329
    %v1531 = vunpack.c.l.b16 %v1330
    %v1532 = vunpack.c.l.b16 %v1331
    %v1533 = vunpack.c.l.b16 %v1332
    %v1534 = vunpack.c.l.b16 %v1333
    %v1535 = vunpack.c.l.b16 %v1334
    %v1536 = vunpack.c.l.b16 %v1335
    %v1537 = vunpack.c.l.b16 %v1336
    %v1538 = vunpack.c.l.b16 %v1337
    %v1539 = vunpack.c.l.b16 %v1338
    %v1540 = vunpack.c.l.b16 %v1339
    %v1541 = vunpack.c.l.b16 %v1340
    %v1542 = vunpack.c.l.b16 %v1341
    %v1543 = vunpack.c.l.b16 %v1342
    %v1544 = vunpack.c.l.b16 %v1343
    %v1545 = vunpack.c.l.b16 %v1344
    %v1546 = vunpack.c.l.b16 %v1345
    %v1547 = vunpack.c.l.b16 %v1346
    %v1548 = vunpack.c.l.b16 %v1347
    %v1549 = vunpack.c.l.b16 %v1348
    %v1550 = vunpack.c.l.b16 %v1349
    %v1551 = vunpack.c.l.b16 %v1350
    %v1552 = vunpack.c.l.b16 %v1351
    %v1553 = vunpack.c.l.b16 %v1352
    %v1554 = vunpack.c.l.b16 %v1353
    %v1555 = vunpack.c.l.b16 %v1354
    %v1556 = vunpack.c.l.b16 %v1355
    %v1557 = vunpack.c.l.b16 %v1356
    %v1558 = vunpack.c.l.b16 %v1357
    %v1559 = vunpack.c.l.b16 %v1358
    %v1560 = vunpack.c.l.b16 %v1359
    %v1561 = vunpack.c.l.b16 %v1360
    %v1562 = vunpack.c.l.b16 %v1361
    %v1563 = vunpack.c.l.b16 %v1362
    %v1564 = vunpack.c.l.b16 %v1363
    %v1565 = vunpack.c.l.b16 %v1364
    %v1566 = vunpack.c.l.b16 %v1365
    %v1567 = vunpack.c.l.b16 %v1366
    %v1568 = vunpack.c.l.b16 %v1367
    %v1569 = vunpack.c.l.b16 %v1368
    %v1570 = vunpack.c.l.b16 %v1369
    %v1571 = vunpack.c.l.b16 %v1370
    %v1572 = vunpack.c.l.b16 %v1371
    %v1573 = vunpack.c.l.b16 %v1372
    %v1574 = vunpack.c.l.b16 %v1373
    %v1575 = vunpack.c.l.b16 %v1374
    %v1576 = vunpack.c.l.b16 %v1375
    %v1577 = vunpack.c.l.b16 %v1376
    %v1578 = vunpack.c.l.b16 %v1377
    %v1579 = vunpack.c.l.b16 %v1378
    %v1580 = vunpack.c.l.b16 %v1379
    %v1581 = vunpack.c.l.b16 %v1380
    %v1582 = vunpack.c.l.b16 %v1381
    %v1583 = vunpack.c.l.b16 %v1382
    %v1584 = vunpack.c.l.b16 %v1383
    %v1585 = vunpack.c.l.b16 %v1384
    %v1586 = vunpack.c.l.b16 %v1385
    %v1587 = vpack.c.b16 %v1516, %v1515
    %v1588 = vpack.c.b16 %v1518, %v1517
    %v1589 = vpack.c.b16 %v1520, %v1519
    %v1590 = vpack.c.b16 %v1522, %v1521
    %v1591 = vpack.c.b16 %v1524, %v1523
    %v1592 = vpack.c.b16 %v1526, %v1525
    %v1593 = vpack.c.b16 %v1528, %v1527
    %v1594 = vpack.c.b16 %v1530, %v1529
    %v1595 = vpack.c.b16 %v1532, %v1531
    %v1596 = vpack.c.b16 %v1534, %v1533
    %v1597 = vpack.c.b16 %v1536, %v1535
    %v1598 = vpack.c.b16 %v1538, %v1537
    %v1599 = vpack.c.b16 %v1540, %v1539
    %v1600 = vpack.c.b16 %v1542, %v1541
    %v1601 = vpack.c.b16 %v1544, %v1543
    %v1602 = vpack.c.b16 %v1546, %v1545
    %v1603 = vpack.c.b16 %v1548, %v1547
    %v1604 = vpack.c.b16 %v1550, %v1549
    %v1605 = vpack.c.b16 %v1552, %v1551
    %v1606 = vpack.c.b16 %v1554, %v1553
    %v1607 = vpack.c.b16 %v1556, %v1555
    %v1608 = vpack.c.b16 %v1558, %v1557
    %v1609 = vpack.c.b16 %v1560, %v1559
    %v1610 = vpack.c.b16 %v1562, %v1561
    %v1611 = vpack.c.b16 %v1564, %v1563
    %v1612 = vpack.c.b16 %v1566, %v1565
    %v1613 = vpack.c.b16 %v1568, %v1567
    %v1614 = vpack.c.b16 %v1570, %v1569
    %v1615 = vpack.c.b16 %v1572, %v1571
    %v1616 = vpack.c.b16 %v1574, %v1573
    %v1617 = vpack.c.b16 %v1576, %v1575
    %v1618 = vpack.c.b16 %v1578, %v1577
    %v1619 = vpack.c.b16 %v1580, %v1579
    %v1620 = vpack.c.b16 %v1582, %v1581
    %v1621 = vpack.c.b16 %v1584, %v1583
    %v1622 = vpack.c.b16 %v1586, %v1585
    %v1660 = vsel %vm936, %v1442, 0
    %1662 = vmatprep.subr.bf16.mxu0 0
    %1663 = vmatpush1.bf16.msra.mxu0 %v1587
    %1664 = vmatprep.subr.bf16.mxu0 0
    %1665 = vmatpush1.bf16.msra.mxu0 %v1588
    %1666 = vmatprep.subr.bf16.mxu0 0
    %1667 = vmatpush1.bf16.msra.mxu0 %v1589
    %1668 = vmatprep.subr.bf16.mxu0 0
    %1669 = vmatpush1.bf16.msra.mxu0 %v1590
    %1670 = vmatprep.subr.bf16.mxu0 0
    %1671 = vmatpush1.bf16.msra.mxu0 %v1591
    %1672 = vmatprep.subr.bf16.mxu0 0
    %1673 = vmatpush1.bf16.msra.mxu0 %v1592
    %1674 = vmatprep.subr.bf16.mxu0 0
    %1675 = vmatpush1.bf16.msra.mxu0 %v1593
    %1676 = vmatprep.subr.bf16.mxu0 0
    %1677 = vmatpush1.bf16.msra.mxu0 %v1594
    %1678 = vmatprep.subr.bf16.mxu0 0
    %1679 = vmatpush1.bf16.msra.mxu0 %v1595
    %1680 = vmatprep.subr.bf16.mxu0 0
    %1681 = vmatpush1.bf16.msra.mxu0 %v1596
    %1682 = vmatprep.subr.bf16.mxu0 0
    %1683 = vmatpush1.bf16.msra.mxu0 %v1597
    %1684 = vmatprep.subr.bf16.mxu0 0
    %1685 = vmatpush1.bf16.msra.mxu0 %v1598
    %1686 = vmatprep.subr.bf16.mxu0 0
    %1687 = vmatpush1.bf16.msra.mxu0 %v1599
    %1688 = vmatprep.subr.bf16.mxu0 0
    %1689 = vmatpush1.bf16.msra.mxu0 %v1600
    %1690 = vmatprep.subr.bf16.mxu0 0
    %1691 = vmatpush1.bf16.msra.mxu0 %v1601
    %1692 = vmatprep.subr.bf16.mxu0 0
    %1693 = vmatpush1.bf16.msra.mxu0 %v1602
    %1694 = vmatprep.mubr.bf16.mxu0 %v1439
    %1695 = vmatmul.mubr.bf16.gmra.mrb[0].mxu0 %v1438
    %v1696 = vpop.f32.mrb[0].mxu0
    %v1697 = vadd.f32 0.0, %v1696
    %v1698 = vpop.f32.mrb[0].mxu0
    %v1699 = vpop.f32.mrb[0].mxu0
    %v1700 = vadd.f32 0.0, %v1699
    %v1701 = vpop.f32.mrb[0].mxu0
    %1702 = vdwg.mxu0
    %1703 = vmatprep.subr.bf16.mxu0 0
    %1704 = vmatpush1.bf16.msra.mxu0 %v1603
    %1705 = vmatprep.subr.bf16.mxu0 0
    %1706 = vmatpush1.bf16.msra.mxu0 %v1604
    %1707 = vmatprep.subr.bf16.mxu0 0
    %1708 = vmatpush1.bf16.msra.mxu0 %v1605
    %1709 = vmatprep.subr.bf16.mxu0 0
    %1710 = vmatpush1.bf16.msra.mxu0 %v1606
    %1711 = vmatprep.subr.bf16.mxu0 0
    %1712 = vmatpush1.bf16.msra.mxu0 %v1607
    %1713 = vmatprep.subr.bf16.mxu0 0
    %1714 = vmatpush1.bf16.msra.mxu0 %v1608
    %1715 = vmatprep.subr.bf16.mxu0 0
    %1716 = vmatpush1.bf16.msra.mxu0 %v1609
    %1717 = vmatprep.subr.bf16.mxu0 0
    %1718 = vmatpush1.bf16.msra.mxu0 %v1610
    %1719 = vmatprep.subr.bf16.mxu0 0
    %1720 = vmatpush1.bf16.msra.mxu0 %v1611
    %1721 = vmatprep.subr.bf16.mxu0 0
    %1722 = vmatpush1.bf16.msra.mxu0 %v1612
    %1723 = vmatprep.subr.bf16.mxu0 0
    %1724 = vmatpush1.bf16.msra.mxu0 %v1613
    %1725 = vmatprep.subr.bf16.mxu0 0
    %1726 = vmatpush1.bf16.msra.mxu0 %v1614
    %1727 = vmatprep.subr.bf16.mxu0 0
    %1728 = vmatpush1.bf16.msra.mxu0 %v1615
    %1729 = vmatprep.subr.bf16.mxu0 0
    %1730 = vmatpush1.bf16.msra.mxu0 %v1616
    %1731 = vmatprep.subr.bf16.mxu0 0
    %1732 = vmatpush1.bf16.msra.mxu0 %v1617
    %1733 = vmatprep.subr.bf16.mxu0 0
    %1734 = vmatpush1.bf16.msra.mxu0 %v1618
    %1735 = vmatprep.mubr.bf16.mxu0 %v1441
    %1736 = vmatmul.mubr.bf16.gmra.mrb[0].mxu0 %v1440
    %v1737 = vpop.f32.mrb[0].mxu0
    %v1738 = vadd.f32 %v1697, %v1737
    %v1739 = vpop.f32.mrb[0].mxu0
    %v1740 = vpop.f32.mrb[0].mxu0
    %v1741 = vadd.f32 %v1700, %v1740
    %v1742 = vpop.f32.mrb[0].mxu0
    %1743 = vdwg.mxu0
    %1744 = vmatprep.subr.bf16.mxu0 0
    %1745 = vmatpush1.bf16.msra.mxu0 %v1619
    %1746 = vmatprep.subr.bf16.mxu0 0
    %1747 = vmatpush1.bf16.msra.mxu0 %v1620
    %1748 = vmatprep.subr.bf16.mxu0 0
    %1749 = vmatpush1.bf16.msra.mxu0 %v1621
    %1750 = vmatprep.subr.bf16.mxu0 0
    %1751 = vmatpush1.bf16.msra.mxu0 %v1622
    %1752 = vmatprep.subr.bf16.mxu0 0
    %1753 = vmatpush1.bf16.msra.mxu0 0
    %1754 = vmatprep.subr.bf16.mxu0 0
    %1755 = vmatpush1.bf16.msra.mxu0 0
    %1756 = vmatprep.subr.bf16.mxu0 0
    %1757 = vmatpush1.bf16.msra.mxu0 0
    %1758 = vmatprep.subr.bf16.mxu0 0
    %1759 = vmatpush1.bf16.msra.mxu0 0
    %1760 = vmatprep.subr.bf16.mxu0 0
    %1761 = vmatpush1.bf16.msra.mxu0 0
    %1762 = vmatprep.subr.bf16.mxu0 0
    %1763 = vmatpush1.bf16.msra.mxu0 0
    %1764 = vmatprep.subr.bf16.mxu0 0
    %1765 = vmatpush1.bf16.msra.mxu0 0
    %1766 = vmatprep.subr.bf16.mxu0 0
    %1767 = vmatpush1.bf16.msra.mxu0 0
    %1768 = vmatprep.subr.bf16.mxu0 0
    %1769 = vmatpush1.bf16.msra.mxu0 0
    %1770 = vmatprep.subr.bf16.mxu0 0
    %1771 = vmatpush1.bf16.msra.mxu0 0
    %1772 = vmatprep.subr.bf16.mxu0 0
    %1773 = vmatpush1.bf16.msra.mxu0 0
    %1774 = vmatprep.subr.bf16.mxu0 0
    %1775 = vmatpush1.bf16.msra.mxu0 0
    %1776 = vmatprep.mubr.bf16.mxu0 0
    %1777 = vmatmul.mubr.bf16.gmra.mrb[0].mxu0 %v1660
    %v1778 = vpop.f32.mrb[0].mxu0
    %v1779 = vadd.f32 %v1738, %v1778
    %v1780 = vpop.f32.mrb[0].mxu0
    %v1781 = vpop.f32.mrb[0].mxu0
    %v1782 = vadd.f32 %v1741, %v1781
    %v1783 = vpop.f32.mrb[0].mxu0
    %1784 = vdwg.mxu0
    %v1785 = vlaneseq
    %v1786 = vshrl.u32 %v1785, 7
    %v1787 = vsub.s32 2, %v1786
    %v1788 = vrot.slane %v825, %v1787
    %v1789 = vmul.f32 %v1779, %v1788
    %v1790 = vmul.f32 %v1782, %v1788
    %v1791 = vlaneseq
    %v1792 = vshrl.u32 %v1791, 7
    %v1793 = vsub.s32 3, %v1792
    %v1794 = vrot.slane %v825, %v1793
    %v1795 = vadd.f32 %v1789, %v1794
    %v1796 = vadd.f32 %v1790, %v1794
    %v1797 = vadd.f32 %v1795, %v823
    %v1798 = vadd.f32 %v1796, %v824
    %v1799 = vmax.f32 %v1797, 0.0
    %v1800 = vmax.f32 %v1798, 0.0
    %s1801 = scalar_lea.vmem %s8, 4
    %v1802 = vld [vmem:[%s1801] sm:$0xf]
    %s1803 = scalar_lea.vmem [#allocation7], 288
    %v1804 = vld [vmem:[%s1803] sm:$0xf]
    %v1805 = vld [vmem:[%s1803 + $0x4] sm:$0xf]
    %v1806 = vld [vmem:[%s1803 + $0x8] sm:$0xf]
    %v1807 = vld [vmem:[%s1803 + $0xc] sm:$0xf]
    %v1808 = vld [vmem:[%s1803 + $0x10] sm:$0xf]
    %v1809 = vld [vmem:[%s1803 + $0x14] sm:$0xf]
    %v1810 = vld [vmem:[%s1803 + $0x18] sm:$0xf]
    %v1811 = vld [vmem:[%s1803 + $0x1c] sm:$0xf]
    %v1812 = vld [vmem:[%s1803 + $0x20] sm:$0xf]
    %v1813 = vld [vmem:[%s1803 + $0x24] sm:$0xf]
    %v1814 = vld [vmem:[%s1803 + $0x28] sm:$0xf]
    %v1815 = vld [vmem:[%s1803 + $0x2c] sm:$0xf]
    %v1816 = vld [vmem:[%s1803 + $0x30] sm:$0xf]
    %v1817 = vld [vmem:[%s1803 + $0x34] sm:$0xf]
    %v1818 = vld [vmem:[%s1803 + $0x38] sm:$0xf]
    %v1819 = vld [vmem:[%s1803 + $0x3c] sm:$0xf]
    %v1820 = vld [vmem:[%s1803 + $0x40] sm:$0xf]
    %v1821 = vld [vmem:[%s1803 + $0x44] sm:$0xf]
    %v1822 = vld [vmem:[%s1803 + $0x48] sm:$0xf]
    %v1823 = vld [vmem:[%s1803 + $0x4c] sm:$0xf]
    %v1824 = vld [vmem:[%s1803 + $0x50] sm:$0xf]
    %v1825 = vld [vmem:[%s1803 + $0x54] sm:$0xf]
    %v1826 = vld [vmem:[%s1803 + $0x58] sm:$0xf]
    %v1827 = vld [vmem:[%s1803 + $0x5c] sm:$0xf]
    %v1828 = vld [vmem:[%s1803 + $0x60] sm:$0xf]
    %v1829 = vld [vmem:[%s1803 + $0x64] sm:$0xf]
    %v1830 = vld [vmem:[%s1803 + $0x68] sm:$0xf]
    %v1831 = vld [vmem:[%s1803 + $0x6c] sm:$0xf]
    %v1832 = vld [vmem:[%s1803 + $0x70] sm:$0xf]
    %v1833 = vld [vmem:[%s1803 + $0x74] sm:$0xf]
    %v1834 = vld [vmem:[%s1803 + $0x78] sm:$0xf]
    %v1835 = vld [vmem:[%s1803 + $0x7c] sm:$0xf]
    %v1836 = vld [vmem:[%s1803 + $0x80] sm:$0xf]
    %v1837 = vld [vmem:[%s1803 + $0x84] sm:$0xf]
    %v1838 = vld [vmem:[%s1803 + $0x88] sm:$0xf]
    %v1839 = vld [vmem:[%s1803 + $0x8c] sm:$0xf]
    %v1840 = vld [vmem:[%s1803 + $0x90] sm:$0xf]
    %v1841 = vld [vmem:[%s1803 + $0x94] sm:$0xf]
    %v1842 = vld [vmem:[%s1803 + $0x98] sm:$0xf]
    %v1843 = vld [vmem:[%s1803 + $0x9c] sm:$0xf]
    %v1844 = vld [vmem:[%s1803 + $0xa0] sm:$0xf]
    %v1845 = vld [vmem:[%s1803 + $0xa4] sm:$0xf]
    %v1846 = vld [vmem:[%s1803 + $0xa8] sm:$0xf]
    %v1847 = vld [vmem:[%s1803 + $0xac] sm:$0xf]
    %v1848 = vld [vmem:[%s1803 + $0xb0] sm:$0xf]
    %v1849 = vld [vmem:[%s1803 + $0xb4] sm:$0xf]
    %v1850 = vld [vmem:[%s1803 + $0xb8] sm:$0xf]
    %v1851 = vld [vmem:[%s1803 + $0xbc] sm:$0xf]
    %v1852 = vld [vmem:[%s1803 + $0xc0] sm:$0xf]
    %v1853 = vld [vmem:[%s1803 + $0xc4] sm:$0xf]
    %v1854 = vld [vmem:[%s1803 + $0xc8] sm:$0xf]
    %v1855 = vld [vmem:[%s1803 + $0xcc] sm:$0xf]
    %v1856 = vld [vmem:[%s1803 + $0xd0] sm:$0xf]
    %v1857 = vld [vmem:[%s1803 + $0xd4] sm:$0xf]
    %v1858 = vld [vmem:[%s1803 + $0xd8] sm:$0xf]
    %v1859 = vld [vmem:[%s1803 + $0xdc] sm:$0xf]
    %v1860 = vld [vmem:[%s1803 + $0xe0] sm:$0xf]
    %v1861 = vld [vmem:[%s1803 + $0xe4] sm:$0xf]
    %v1862 = vld [vmem:[%s1803 + $0xe8] sm:$0xf]
    %v1863 = vld [vmem:[%s1803 + $0xec] sm:$0xf]
    %v1864 = vld [vmem:[%s1803 + $0xf0] sm:$0xf]
    %v1865 = vld [vmem:[%s1803 + $0xf4] sm:$0xf]
    %v1866 = vld [vmem:[%s1803 + $0xf8] sm:$0xf]
    %v1867 = vld [vmem:[%s1803 + $0xfc] sm:$0xf]
    %v1868 = vld [vmem:[%s1803 + $0x100] sm:$0xf]
    %v1869 = vld [vmem:[%s1803 + $0x104] sm:$0xf]
    %v1870 = vld [vmem:[%s1803 + $0x108] sm:$0xf]
    %v1871 = vld [vmem:[%s1803 + $0x10c] sm:$0xf]
    %v1872 = vld [vmem:[%s1803 + $0x110] sm:$0xf]
    %v1873 = vld [vmem:[%s1803 + $0x114] sm:$0xf]
    %v1874 = vld [vmem:[%s1803 + $0x118] sm:$0xf]
    %v1875 = vld [vmem:[%s1803 + $0x11c] sm:$0xf]
    %v1878 = vrot.slane %v1799, 6
    %v1879 = vrot.slane %v1800, 6
    %v1880 = vsel %vm900, %v1878, %v1879
    %v1884 = vsel %vm900, %v1879, %v1878
    %v1885 = vrot.slane %v1800, 2
    %v1887 = vrot.slane %v1799, 2
    %v1888 = vsel %vm910, %v1887, %v1885
    %v1891 = vsel %vm910, %v1885, %v1887
    %1892 = vrot.lane.b32.xlu0 %v1800, 64
    %v1893 = vpop.permute.xlu0 %1892
    %1894 = vrot.lane.b32.xlu0 %v1799, 64
    %v1895 = vpop.permute.xlu0 %1894
    %1899 = vrot.lane.b32.xlu0 %v1884, 64
    %v1900 = vpop.permute.xlu0 %1899
    %1901 = vrot.lane.b32.xlu0 %v1880, 64
    %v1902 = vpop.permute.xlu0 %1901
    %1906 = vrot.lane.b32.xlu0 %v1888, 64
    %v1907 = vpop.permute.xlu0 %1906
    %1908 = vrot.lane.b32.xlu0 %v1891, 64
    %v1909 = vpop.permute.xlu0 %1908
    %v1912 = vsel %vm936, %v1880, %v1893
    %v1913 = vsel %vm936, %v1884, %v1895
    %v1914 = vsel %vm936, %v1891, %v1900
    %v1915 = vsel %vm936, %v1888, %v1902
    %v1916 = vsel %vm936, %v1799, %v1907
    %v1917 = vsel %vm936, %v1800, %v1909
    %v1918 = vmul.f32 %v1912, %v693
    %v1919 = vmul.f32 %v1914, %v694
    %v1920 = vmul.f32 %v1916, %v695
    %v1921 = vmul.f32 %v1912, %v696
    %v1922 = vmul.f32 %v1891, %v697
    %v1923 = vmul.f32 %v1913, %v698
    %v1924 = vmul.f32 %v1915, %v699
    %v1925 = vmul.f32 %v1917, %v700
    %v1926 = vmul.f32 %v1913, %v701
    %v1927 = vmul.f32 %v1888, %v702
    %v1928 = vpack.c.bf16 %v1923, %v1918
    %v1929 = vpack.c.bf16 %v1924, %v1919
    %v1930 = vpack.c.bf16 %v1925, %v1920
    %v1931 = vpack.c.bf16 %v1926, %v1921
    %v1932 = vpack.c.bf16 %v1927, %v1922
    %v2005 = vunpack.c.l.b16 %v1804
    %v2006 = vunpack.c.l.b16 %v1805
    %v2007 = vunpack.c.l.b16 %v1806
    %v2008 = vunpack.c.l.b16 %v1807
    %v2009 = vunpack.c.l.b16 %v1808
    %v2010 = vunpack.c.l.b16 %v1809
    %v2011 = vunpack.c.l.b16 %v1810
    %v2012 = vunpack.c.l.b16 %v1811
    %v2013 = vunpack.c.l.b16 %v1812
    %v2014 = vunpack.c.l.b16 %v1813
    %v2015 = vunpack.c.l.b16 %v1814
    %v2016 = vunpack.c.l.b16 %v1815
    %v2017 = vunpack.c.l.b16 %v1816
    %v2018 = vunpack.c.l.b16 %v1817
    %v2019 = vunpack.c.l.b16 %v1818
    %v2020 = vunpack.c.l.b16 %v1819
    %v2021 = vunpack.c.l.b16 %v1820
    %v2022 = vunpack.c.l.b16 %v1821
    %v2023 = vunpack.c.l.b16 %v1822
    %v2024 = vunpack.c.l.b16 %v1823
    %v2025 = vunpack.c.l.b16 %v1824
    %v2026 = vunpack.c.l.b16 %v1825
    %v2027 = vunpack.c.l.b16 %v1826
    %v2028 = vunpack.c.l.b16 %v1827
    %v2029 = vunpack.c.l.b16 %v1828
    %v2030 = vunpack.c.l.b16 %v1829
    %v2031 = vunpack.c.l.b16 %v1830
    %v2032 = vunpack.c.l.b16 %v1831
    %v2033 = vunpack.c.l.b16 %v1832
    %v2034 = vunpack.c.l.b16 %v1833
    %v2035 = vunpack.c.l.b16 %v1834
    %v2036 = vunpack.c.l.b16 %v1835
    %v2037 = vunpack.c.l.b16 %v1836
    %v2038 = vunpack.c.l.b16 %v1837
    %v2039 = vunpack.c.l.b16 %v1838
    %v2040 = vunpack.c.l.b16 %v1839
    %v2041 = vunpack.c.l.b16 %v1840
    %v2042 = vunpack.c.l.b16 %v1841
    %v2043 = vunpack.c.l.b16 %v1842
    %v2044 = vunpack.c.l.b16 %v1843
    %v2045 = vunpack.c.l.b16 %v1844
    %v2046 = vunpack.c.l.b16 %v1845
    %v2047 = vunpack.c.l.b16 %v1846
    %v2048 = vunpack.c.l.b16 %v1847
    %v2049 = vunpack.c.l.b16 %v1848
    %v2050 = vunpack.c.l.b16 %v1849
    %v2051 = vunpack.c.l.b16 %v1850
    %v2052 = vunpack.c.l.b16 %v1851
    %v2053 = vunpack.c.l.b16 %v1852
    %v2054 = vunpack.c.l.b16 %v1853
    %v2055 = vunpack.c.l.b16 %v1854
    %v2056 = vunpack.c.l.b16 %v1855
    %v2057 = vunpack.c.l.b16 %v1856
    %v2058 = vunpack.c.l.b16 %v1857
    %v2059 = vunpack.c.l.b16 %v1858
    %v2060 = vunpack.c.l.b16 %v1859
    %v2061 = vunpack.c.l.b16 %v1860
    %v2062 = vunpack.c.l.b16 %v1861
    %v2063 = vunpack.c.l.b16 %v1862
    %v2064 = vunpack.c.l.b16 %v1863
    %v2065 = vunpack.c.l.b16 %v1864
    %v2066 = vunpack.c.l.b16 %v1865
    %v2067 = vunpack.c.l.b16 %v1866
    %v2068 = vunpack.c.l.b16 %v1867
    %v2069 = vunpack.c.l.b16 %v1868
    %v2070 = vunpack.c.l.b16 %v1869
    %v2071 = vunpack.c.l.b16 %v1870
    %v2072 = vunpack.c.l.b16 %v1871
    %v2073 = vunpack.c.l.b16 %v1872
    %v2074 = vunpack.c.l.b16 %v1873
    %v2075 = vunpack.c.l.b16 %v1874
    %v2076 = vunpack.c.l.b16 %v1875
    %v2077 = vpack.c.b16 %v2006, %v2005
    %v2078 = vpack.c.b16 %v2008, %v2007
    %v2079 = vpack.c.b16 %v2010, %v2009
    %v2080 = vpack.c.b16 %v2012, %v2011
    %v2081 = vpack.c.b16 %v2014, %v2013
    %v2082 = vpack.c.b16 %v2016, %v2015
    %v2083 = vpack.c.b16 %v2018, %v2017
    %v2084 = vpack.c.b16 %v2020, %v2019
    %v2085 = vpack.c.b16 %v2022, %v2021
    %v2086 = vpack.c.b16 %v2024, %v2023
    %v2087 = vpack.c.b16 %v2026, %v2025
    %v2088 = vpack.c.b16 %v2028, %v2027
    %v2089 = vpack.c.b16 %v2030, %v2029
    %v2090 = vpack.c.b16 %v2032, %v2031
    %v2091 = vpack.c.b16 %v2034, %v2033
    %v2092 = vpack.c.b16 %v2036, %v2035
    %v2093 = vpack.c.b16 %v2038, %v2037
    %v2094 = vpack.c.b16 %v2040, %v2039
    %v2095 = vpack.c.b16 %v2042, %v2041
    %v2096 = vpack.c.b16 %v2044, %v2043
    %v2097 = vpack.c.b16 %v2046, %v2045
    %v2098 = vpack.c.b16 %v2048, %v2047
    %v2099 = vpack.c.b16 %v2050, %v2049
    %v2100 = vpack.c.b16 %v2052, %v2051
    %v2101 = vpack.c.b16 %v2054, %v2053
    %v2102 = vpack.c.b16 %v2056, %v2055
    %v2103 = vpack.c.b16 %v2058, %v2057
    %v2104 = vpack.c.b16 %v2060, %v2059
    %v2105 = vpack.c.b16 %v2062, %v2061
    %v2106 = vpack.c.b16 %v2064, %v2063
    %v2107 = vpack.c.b16 %v2066, %v2065
    %v2108 = vpack.c.b16 %v2068, %v2067
    %v2109 = vpack.c.b16 %v2070, %v2069
    %v2110 = vpack.c.b16 %v2072, %v2071
    %v2111 = vpack.c.b16 %v2074, %v2073
    %v2112 = vpack.c.b16 %v2076, %v2075
    %v2150 = vsel %vm936, %v1932, 0
    %2152 = vmatprep.subr.bf16.mxu0 0
    %2153 = vmatpush1.bf16.msra.mxu0 %v2077
    %2154 = vmatprep.subr.bf16.mxu0 0
    %2155 = vmatpush1.bf16.msra.mxu0 %v2078
    %2156 = vmatprep.subr.bf16.mxu0 0
    %2157 = vmatpush1.bf16.msra.mxu0 %v2079
    %2158 = vmatprep.subr.bf16.mxu0 0
    %2159 = vmatpush1.bf16.msra.mxu0 %v2080
    %2160 = vmatprep.subr.bf16.mxu0 0
    %2161 = vmatpush1.bf16.msra.mxu0 %v2081
    %2162 = vmatprep.subr.bf16.mxu0 0
    %2163 = vmatpush1.bf16.msra.mxu0 %v2082
    %2164 = vmatprep.subr.bf16.mxu0 0
    %2165 = vmatpush1.bf16.msra.mxu0 %v2083
    %2166 = vmatprep.subr.bf16.mxu0 0
    %2167 = vmatpush1.bf16.msra.mxu0 %v2084
    %2168 = vmatprep.subr.bf16.mxu0 0
    %2169 = vmatpush1.bf16.msra.mxu0 %v2085
    %2170 = vmatprep.subr.bf16.mxu0 0
    %2171 = vmatpush1.bf16.msra.mxu0 %v2086
    %2172 = vmatprep.subr.bf16.mxu0 0
    %2173 = vmatpush1.bf16.msra.mxu0 %v2087
    %2174 = vmatprep.subr.bf16.mxu0 0
    %2175 = vmatpush1.bf16.msra.mxu0 %v2088
    %2176 = vmatprep.subr.bf16.mxu0 0
    %2177 = vmatpush1.bf16.msra.mxu0 %v2089
    %2178 = vmatprep.subr.bf16.mxu0 0
    %2179 = vmatpush1.bf16.msra.mxu0 %v2090
    %2180 = vmatprep.subr.bf16.mxu0 0
    %2181 = vmatpush1.bf16.msra.mxu0 %v2091
    %2182 = vmatprep.subr.bf16.mxu0 0
    %2183 = vmatpush1.bf16.msra.mxu0 %v2092
    %2184 = vmatprep.mubr.bf16.mxu0 %v1929
    %2185 = vmatmul.mubr.bf16.gmra.mrb[0].mxu0 %v1928
    %v2186 = vpop.f32.mrb[0].mxu0
    %v2187 = vadd.f32 0.0, %v2186
    %v2188 = vpop.f32.mrb[0].mxu0
    %v2189 = vpop.f32.mrb[0].mxu0
    %v2190 = vadd.f32 0.0, %v2189
    %v2191 = vpop.f32.mrb[0].mxu0
    %2192 = vdwg.mxu0
    %2193 = vmatprep.subr.bf16.mxu0 0
    %2194 = vmatpush1.bf16.msra.mxu0 %v2093
    %2195 = vmatprep.subr.bf16.mxu0 0
    %2196 = vmatpush1.bf16.msra.mxu0 %v2094
    %2197 = vmatprep.subr.bf16.mxu0 0
    %2198 = vmatpush1.bf16.msra.mxu0 %v2095
    %2199 = vmatprep.subr.bf16.mxu0 0
    %2200 = vmatpush1.bf16.msra.mxu0 %v2096
    %2201 = vmatprep.subr.bf16.mxu0 0
    %2202 = vmatpush1.bf16.msra.mxu0 %v2097
    %2203 = vmatprep.subr.bf16.mxu0 0
    %2204 = vmatpush1.bf16.msra.mxu0 %v2098
    %2205 = vmatprep.subr.bf16.mxu0 0
    %2206 = vmatpush1.bf16.msra.mxu0 %v2099
    %2207 = vmatprep.subr.bf16.mxu0 0
    %2208 = vmatpush1.bf16.msra.mxu0 %v2100
    %2209 = vmatprep.subr.bf16.mxu0 0
    %2210 = vmatpush1.bf16.msra.mxu0 %v2101
    %2211 = vmatprep.subr.bf16.mxu0 0
    %2212 = vmatpush1.bf16.msra.mxu0 %v2102
    %2213 = vmatprep.subr.bf16.mxu0 0
    %2214 = vmatpush1.bf16.msra.mxu0 %v2103
    %2215 = vmatprep.subr.bf16.mxu0 0
    %2216 = vmatpush1.bf16.msra.mxu0 %v2104
    %2217 = vmatprep.subr.bf16.mxu0 0
    %2218 = vmatpush1.bf16.msra.mxu0 %v2105
    %2219 = vmatprep.subr.bf16.mxu0 0
    %2220 = vmatpush1.bf16.msra.mxu0 %v2106
    %2221 = vmatprep.subr.bf16.mxu0 0
    %2222 = vmatpush1.bf16.msra.mxu0 %v2107
    %2223 = vmatprep.subr.bf16.mxu0 0
    %2224 = vmatpush1.bf16.msra.mxu0 %v2108
    %2225 = vmatprep.mubr.bf16.mxu0 %v1931
    %2226 = vmatmul.mubr.bf16.gmra.mrb[0].mxu0 %v1930
    %v2227 = vpop.f32.mrb[0].mxu0
    %v2228 = vadd.f32 %v2187, %v2227
    %v2229 = vpop.f32.mrb[0].mxu0
    %v2230 = vpop.f32.mrb[0].mxu0
    %v2231 = vadd.f32 %v2190, %v2230
    %v2232 = vpop.f32.mrb[0].mxu0
    %2233 = vdwg.mxu0
    %2234 = vmatprep.subr.bf16.mxu0 0
    %2235 = vmatpush1.bf16.msra.mxu0 %v2109
    %2236 = vmatprep.subr.bf16.mxu0 0
    %2237 = vmatpush1.bf16.msra.mxu0 %v2110
    %2238 = vmatprep.subr.bf16.mxu0 0
    %2239 = vmatpush1.bf16.msra.mxu0 %v2111
    %2240 = vmatprep.subr.bf16.mxu0 0
    %2241 = vmatpush1.bf16.msra.mxu0 %v2112
    %2242 = vmatprep.subr.bf16.mxu0 0
    %2243 = vmatpush1.bf16.msra.mxu0 0
    %2244 = vmatprep.subr.bf16.mxu0 0
    %2245 = vmatpush1.bf16.msra.mxu0 0
    %2246 = vmatprep.subr.bf16.mxu0 0
    %2247 = vmatpush1.bf16.msra.mxu0 0
    %2248 = vmatprep.subr.bf16.mxu0 0
    %2249 = vmatpush1.bf16.msra.mxu0 0
    %2250 = vmatprep.subr.bf16.mxu0 0
    %2251 = vmatpush1.bf16.msra.mxu0 0
    %2252 = vmatprep.subr.bf16.mxu0 0
    %2253 = vmatpush1.bf16.msra.mxu0 0
    %2254 = vmatprep.subr.bf16.mxu0 0
    %2255 = vmatpush1.bf16.msra.mxu0 0
    %2256 = vmatprep.subr.bf16.mxu0 0
    %2257 = vmatpush1.bf16.msra.mxu0 0
    %2258 = vmatprep.subr.bf16.mxu0 0
    %2259 = vmatpush1.bf16.msra.mxu0 0
    %2260 = vmatprep.subr.bf16.mxu0 0
    %2261 = vmatpush1.bf16.msra.mxu0 0
    %2262 = vmatprep.subr.bf16.mxu0 0
    %2263 = vmatpush1.bf16.msra.mxu0 0
    %2264 = vmatprep.subr.bf16.mxu0 0
    %2265 = vmatpush1.bf16.msra.mxu0 0
    %2266 = vmatprep.mubr.bf16.mxu0 0
    %2267 = vmatmul.mubr.bf16.gmra.mrb[0].mxu0 %v2150
    %v2268 = vpop.f32.mrb[0].mxu0
    %v2269 = vadd.f32 %v2228, %v2268
    %v2270 = vpop.f32.mrb[0].mxu0
    %v2271 = vpop.f32.mrb[0].mxu0
    %v2272 = vadd.f32 %v2231, %v2271
    %v2273 = vpop.f32.mrb[0].mxu0
    %2274 = vdwg.mxu0
    %v2275 = vlaneseq
    %v2276 = vshrl.u32 %v2275, 7
    %v2277 = vsub.s32 0, %v2276
    %v2278 = vrot.slane %v1802, %v2277
    %v2279 = vmul.f32 %v2269, %v2278
    %v2280 = vmul.f32 %v2272, %v2278
    %v2281 = vlaneseq
    %v2282 = vshrl.u32 %v2281, 7
    %v2283 = vsub.s32 1, %v2282
    %v2284 = vrot.slane %v1802, %v2283
    %v2285 = vadd.f32 %v2279, %v2284
    %v2286 = vadd.f32 %v2280, %v2284
    %v2287 = vmax.f32 %v2285, 0.0
    %v2288 = vmax.f32 %v2286, 0.0
    %s2289 = scalar_lea.vmem %s7, 288
    %v2290 = vld [vmem:[%s2289] sm:$0xf]
    %v2291 = vld [vmem:[%s2289 + $0x4] sm:$0xf]
    %v2292 = vld [vmem:[%s2289 + $0x8] sm:$0xf]
    %v2293 = vld [vmem:[%s2289 + $0xc] sm:$0xf]
    %v2294 = vld [vmem:[%s2289 + $0x10] sm:$0xf]
    %v2295 = vld [vmem:[%s2289 + $0x14] sm:$0xf]
    %v2296 = vld [vmem:[%s2289 + $0x18] sm:$0xf]
    %v2297 = vld [vmem:[%s2289 + $0x1c] sm:$0xf]
    %v2298 = vld [vmem:[%s2289 + $0x20] sm:$0xf]
    %v2299 = vld [vmem:[%s2289 + $0x24] sm:$0xf]
    %v2300 = vld [vmem:[%s2289 + $0x28] sm:$0xf]
    %v2301 = vld [vmem:[%s2289 + $0x2c] sm:$0xf]
    %v2302 = vld [vmem:[%s2289 + $0x30] sm:$0xf]
    %v2303 = vld [vmem:[%s2289 + $0x34] sm:$0xf]
    %v2304 = vld [vmem:[%s2289 + $0x38] sm:$0xf]
    %v2305 = vld [vmem:[%s2289 + $0x3c] sm:$0xf]
    %v2306 = vld [vmem:[%s2289 + $0x40] sm:$0xf]
    %v2307 = vld [vmem:[%s2289 + $0x44] sm:$0xf]
    %v2308 = vld [vmem:[%s2289 + $0x48] sm:$0xf]
    %v2309 = vld [vmem:[%s2289 + $0x4c] sm:$0xf]
    %v2310 = vld [vmem:[%s2289 + $0x50] sm:$0xf]
    %v2311 = vld [vmem:[%s2289 + $0x54] sm:$0xf]
    %v2312 = vld [vmem:[%s2289 + $0x58] sm:$0xf]
    %v2313 = vld [vmem:[%s2289 + $0x5c] sm:$0xf]
    %v2314 = vld [vmem:[%s2289 + $0x60] sm:$0xf]
    %v2315 = vld [vmem:[%s2289 + $0x64] sm:$0xf]
    %v2316 = vld [vmem:[%s2289 + $0x68] sm:$0xf]
    %v2317 = vld [vmem:[%s2289 + $0x6c] sm:$0xf]
    %v2318 = vld [vmem:[%s2289 + $0x70] sm:$0xf]
    %v2319 = vld [vmem:[%s2289 + $0x74] sm:$0xf]
    %v2320 = vld [vmem:[%s2289 + $0x78] sm:$0xf]
    %v2321 = vld [vmem:[%s2289 + $0x7c] sm:$0xf]
    %v2322 = vld [vmem:[%s2289 + $0x80] sm:$0xf]
    %v2323 = vld [vmem:[%s2289 + $0x84] sm:$0xf]
    %v2324 = vld [vmem:[%s2289 + $0x88] sm:$0xf]
    %v2325 = vld [vmem:[%s2289 + $0x8c] sm:$0xf]
    %v2326 = vld [vmem:[%s2289 + $0x90] sm:$0xf]
    %v2327 = vld [vmem:[%s2289 + $0x94] sm:$0xf]
    %v2328 = vld [vmem:[%s2289 + $0x98] sm:$0xf]
    %v2329 = vld [vmem:[%s2289 + $0x9c] sm:$0xf]
    %v2330 = vld [vmem:[%s2289 + $0xa0] sm:$0xf]
    %v2331 = vld [vmem:[%s2289 + $0xa4] sm:$0xf]
    %v2332 = vld [vmem:[%s2289 + $0xa8] sm:$0xf]
    %v2333 = vld [vmem:[%s2289 + $0xac] sm:$0xf]
    %v2334 = vld [vmem:[%s2289 + $0xb0] sm:$0xf]
    %v2335 = vld [vmem:[%s2289 + $0xb4] sm:$0xf]
    %v2336 = vld [vmem:[%s2289 + $0xb8] sm:$0xf]
    %v2337 = vld [vmem:[%s2289 + $0xbc] sm:$0xf]
    %v2338 = vld [vmem:[%s2289 + $0xc0] sm:$0xf]
    %v2339 = vld [vmem:[%s2289 + $0xc4] sm:$0xf]
    %v2340 = vld [vmem:[%s2289 + $0xc8] sm:$0xf]
    %v2341 = vld [vmem:[%s2289 + $0xcc] sm:$0xf]
    %v2342 = vld [vmem:[%s2289 + $0xd0] sm:$0xf]
    %v2343 = vld [vmem:[%s2289 + $0xd4] sm:$0xf]
    %v2344 = vld [vmem:[%s2289 + $0xd8] sm:$0xf]
    %v2345 = vld [vmem:[%s2289 + $0xdc] sm:$0xf]
    %v2346 = vld [vmem:[%s2289 + $0xe0] sm:$0xf]
    %v2347 = vld [vmem:[%s2289 + $0xe4] sm:$0xf]
    %v2348 = vld [vmem:[%s2289 + $0xe8] sm:$0xf]
    %v2349 = vld [vmem:[%s2289 + $0xec] sm:$0xf]
    %v2350 = vld [vmem:[%s2289 + $0xf0] sm:$0xf]
    %v2351 = vld [vmem:[%s2289 + $0xf4] sm:$0xf]
    %v2352 = vld [vmem:[%s2289 + $0xf8] sm:$0xf]
    %v2353 = vld [vmem:[%s2289 + $0xfc] sm:$0xf]
    %v2354 = vld [vmem:[%s2289 + $0x100] sm:$0xf]
    %v2355 = vld [vmem:[%s2289 + $0x104] sm:$0xf]
    %v2356 = vld [vmem:[%s2289 + $0x108] sm:$0xf]
    %v2357 = vld [vmem:[%s2289 + $0x10c] sm:$0xf]
    %v2358 = vld [vmem:[%s2289 + $0x110] sm:$0xf]
    %v2359 = vld [vmem:[%s2289 + $0x114] sm:$0xf]
    %v2360 = vld [vmem:[%s2289 + $0x118] sm:$0xf]
    %v2361 = vld [vmem:[%s2289 + $0x11c] sm:$0xf]
    %v2364 = vrot.slane %v2287, 6
    %v2365 = vrot.slane %v2288, 6
    %v2366 = vsel %vm900, %v2364, %v2365
    %v2370 = vsel %vm900, %v2365, %v2364
    %v2371 = vrot.slane %v2288, 2
    %v2373 = vrot.slane %v2287, 2
    %v2374 = vsel %vm910, %v2373, %v2371
    %v2377 = vsel %vm910, %v2371, %v2373
    %2378 = vrot.lane.b32.xlu0 %v2288, 64
    %v2379 = vpop.permute.xlu0 %2378
    %2380 = vrot.lane.b32.xlu0 %v2287, 64
    %v2381 = vpop.permute.xlu0 %2380
    %2385 = vrot.lane.b32.xlu0 %v2370, 64
    %v2386 = vpop.permute.xlu0 %2385
    %2387 = vrot.lane.b32.xlu0 %v2366, 64
    %v2388 = vpop.permute.xlu0 %2387
    %2392 = vrot.lane.b32.xlu0 %v2374, 64
    %v2393 = vpop.permute.xlu0 %2392
    %2394 = vrot.lane.b32.xlu0 %v2377, 64
    %v2395 = vpop.permute.xlu0 %2394
    %v2398 = vsel %vm936, %v2366, %v2379
    %v2399 = vsel %vm936, %v2370, %v2381
    %v2400 = vsel %vm936, %v2377, %v2386
    %v2401 = vsel %vm936, %v2374, %v2388
    %v2402 = vsel %vm936, %v2287, %v2393
    %v2403 = vsel %vm936, %v2288, %v2395
    %v2404 = vmul.f32 %v2398, %v693
    %v2405 = vmul.f32 %v2400, %v694
    %v2406 = vmul.f32 %v2402, %v695
    %v2407 = vmul.f32 %v2398, %v696
    %v2408 = vmul.f32 %v2377, %v697
    %v2409 = vmul.f32 %v2399, %v698
    %v2410 = vmul.f32 %v2401, %v699
    %v2411 = vmul.f32 %v2403, %v700
    %v2412 = vmul.f32 %v2399, %v701
    %v2413 = vmul.f32 %v2374, %v702
    %v2414 = vpack.c.bf16 %v2409, %v2404
    %v2415 = vpack.c.bf16 %v2410, %v2405
    %v2416 = vpack.c.bf16 %v2411, %v2406
    %v2417 = vpack.c.bf16 %v2412, %v2407
    %v2418 = vpack.c.bf16 %v2413, %v2408
    %v2491 = vunpack.c.l.b16 %v2290
    %v2492 = vunpack.c.l.b16 %v2291
    %v2493 = vunpack.c.l.b16 %v2292
    %v2494 = vunpack.c.l.b16 %v2293
    %v2495 = vunpack.c.l.b16 %v2294
    %v2496 = vunpack.c.l.b16 %v2295
    %v2497 = vunpack.c.l.b16 %v2296
    %v2498 = vunpack.c.l.b16 %v2297
    %v2499 = vunpack.c.l.b16 %v2298
    %v2500 = vunpack.c.l.b16 %v2299
    %v2501 = vunpack.c.l.b16 %v2300
    %v2502 = vunpack.c.l.b16 %v2301
    %v2503 = vunpack.c.l.b16 %v2302
    %v2504 = vunpack.c.l.b16 %v2303
    %v2505 = vunpack.c.l.b16 %v2304
    %v2506 = vunpack.c.l.b16 %v2305
    %v2507 = vunpack.c.l.b16 %v2306
    %v2508 = vunpack.c.l.b16 %v2307
    %v2509 = vunpack.c.l.b16 %v2308
    %v2510 = vunpack.c.l.b16 %v2309
    %v2511 = vunpack.c.l.b16 %v2310
    %v2512 = vunpack.c.l.b16 %v2311
    %v2513 = vunpack.c.l.b16 %v2312
    %v2514 = vunpack.c.l.b16 %v2313
    %v2515 = vunpack.c.l.b16 %v2314
    %v2516 = vunpack.c.l.b16 %v2315
    %v2517 = vunpack.c.l.b16 %v2316
    %v2518 = vunpack.c.l.b16 %v2317
    %v2519 = vunpack.c.l.b16 %v2318
    %v2520 = vunpack.c.l.b16 %v2319
    %v2521 = vunpack.c.l.b16 %v2320
    %v2522 = vunpack.c.l.b16 %v2321
    %v2523 = vunpack.c.l.b16 %v2322
    %v2524 = vunpack.c.l.b16 %v2323
    %v2525 = vunpack.c.l.b16 %v2324
    %v2526 = vunpack.c.l.b16 %v2325
    %v2527 = vunpack.c.l.b16 %v2326
    %v2528 = vunpack.c.l.b16 %v2327
    %v2529 = vunpack.c.l.b16 %v2328
    %v2530 = vunpack.c.l.b16 %v2329
    %v2531 = vunpack.c.l.b16 %v2330
    %v2532 = vunpack.c.l.b16 %v2331
    %v2533 = vunpack.c.l.b16 %v2332
    %v2534 = vunpack.c.l.b16 %v2333
    %v2535 = vunpack.c.l.b16 %v2334
    %v2536 = vunpack.c.l.b16 %v2335
    %v2537 = vunpack.c.l.b16 %v2336
    %v2538 = vunpack.c.l.b16 %v2337
    %v2539 = vunpack.c.l.b16 %v2338
    %v2540 = vunpack.c.l.b16 %v2339
    %v2541 = vunpack.c.l.b16 %v2340
    %v2542 = vunpack.c.l.b16 %v2341
    %v2543 = vunpack.c.l.b16 %v2342
    %v2544 = vunpack.c.l.b16 %v2343
    %v2545 = vunpack.c.l.b16 %v2344
    %v2546 = vunpack.c.l.b16 %v2345
    %v2547 = vunpack.c.l.b16 %v2346
    %v2548 = vunpack.c.l.b16 %v2347
    %v2549 = vunpack.c.l.b16 %v2348
    %v2550 = vunpack.c.l.b16 %v2349
    %v2551 = vunpack.c.l.b16 %v2350
    %v2552 = vunpack.c.l.b16 %v2351
    %v2553 = vunpack.c.l.b16 %v2352
    %v2554 = vunpack.c.l.b16 %v2353
    %v2555 = vunpack.c.l.b16 %v2354
    %v2556 = vunpack.c.l.b16 %v2355
    %v2557 = vunpack.c.l.b16 %v2356
    %v2558 = vunpack.c.l.b16 %v2357
    %v2559 = vunpack.c.l.b16 %v2358
    %v2560 = vunpack.c.l.b16 %v2359
    %v2561 = vunpack.c.l.b16 %v2360
    %v2562 = vunpack.c.l.b16 %v2361
    %v2563 = vpack.c.b16 %v2492, %v2491
    %v2564 = vpack.c.b16 %v2494, %v2493
    %v2565 = vpack.c.b16 %v2496, %v2495
    %v2566 = vpack.c.b16 %v2498, %v2497
    %v2567 = vpack.c.b16 %v2500, %v2499
    %v2568 = vpack.c.b16 %v2502, %v2501
    %v2569 = vpack.c.b16 %v2504, %v2503
    %v2570 = vpack.c.b16 %v2506, %v2505
    %v2571 = vpack.c.b16 %v2508, %v2507
    %v2572 = vpack.c.b16 %v2510, %v2509
    %v2573 = vpack.c.b16 %v2512, %v2511
    %v2574 = vpack.c.b16 %v2514, %v2513
    %v2575 = vpack.c.b16 %v2516, %v2515
    %v2576 = vpack.c.b16 %v2518, %v2517
    %v2577 = vpack.c.b16 %v2520, %v2519
    %v2578 = vpack.c.b16 %v2522, %v2521
    %v2579 = vpack.c.b16 %v2524, %v2523
    %v2580 = vpack.c.b16 %v2526, %v2525
    %v2581 = vpack.c.b16 %v2528, %v2527
    %v2582 = vpack.c.b16 %v2530, %v2529
    %v2583 = vpack.c.b16 %v2532, %v2531
    %v2584 = vpack.c.b16 %v2534, %v2533
    %v2585 = vpack.c.b16 %v2536, %v2535
    %v2586 = vpack.c.b16 %v2538, %v2537
    %v2587 = vpack.c.b16 %v2540, %v2539
    %v2588 = vpack.c.b16 %v2542, %v2541
    %v2589 = vpack.c.b16 %v2544, %v2543
    %v2590 = vpack.c.b16 %v2546, %v2545
    %v2591 = vpack.c.b16 %v2548, %v2547
    %v2592 = vpack.c.b16 %v2550, %v2549
    %v2593 = vpack.c.b16 %v2552, %v2551
    %v2594 = vpack.c.b16 %v2554, %v2553
    %v2595 = vpack.c.b16 %v2556, %v2555
    %v2596 = vpack.c.b16 %v2558, %v2557
    %v2597 = vpack.c.b16 %v2560, %v2559
    %v2598 = vpack.c.b16 %v2562, %v2561
    %v2636 = vsel %vm936, %v2418, 0
    %2638 = vmatprep.subr.bf16.mxu0 0
    %2639 = vmatpush1.bf16.msra.mxu0 %v2563
    %2640 = vmatprep.subr.bf16.mxu0 0
    %2641 = vmatpush1.bf16.msra.mxu0 %v2564
    %2642 = vmatprep.subr.bf16.mxu0 0
    %2643 = vmatpush1.bf16.msra.mxu0 %v2565
    %2644 = vmatprep.subr.bf16.mxu0 0
    %2645 = vmatpush1.bf16.msra.mxu0 %v2566
    %2646 = vmatprep.subr.bf16.mxu0 0
    %2647 = vmatpush1.bf16.msra.mxu0 %v2567
    %2648 = vmatprep.subr.bf16.mxu0 0
    %2649 = vmatpush1.bf16.msra.mxu0 %v2568
    %2650 = vmatprep.subr.bf16.mxu0 0
    %2651 = vmatpush1.bf16.msra.mxu0 %v2569
    %2652 = vmatprep.subr.bf16.mxu0 0
    %2653 = vmatpush1.bf16.msra.mxu0 %v2570
    %2654 = vmatprep.subr.bf16.mxu0 0
    %2655 = vmatpush1.bf16.msra.mxu0 %v2571
    %2656 = vmatprep.subr.bf16.mxu0 0
    %2657 = vmatpush1.bf16.msra.mxu0 %v2572
    %2658 = vmatprep.subr.bf16.mxu0 0
    %2659 = vmatpush1.bf16.msra.mxu0 %v2573
    %2660 = vmatprep.subr.bf16.mxu0 0
    %2661 = vmatpush1.bf16.msra.mxu0 %v2574
    %2662 = vmatprep.subr.bf16.mxu0 0
    %2663 = vmatpush1.bf16.msra.mxu0 %v2575
    %2664 = vmatprep.subr.bf16.mxu0 0
    %2665 = vmatpush1.bf16.msra.mxu0 %v2576
    %2666 = vmatprep.subr.bf16.mxu0 0
    %2667 = vmatpush1.bf16.msra.mxu0 %v2577
    %2668 = vmatprep.subr.bf16.mxu0 0
    %2669 = vmatpush1.bf16.msra.mxu0 %v2578
    %2670 = vmatprep.mubr.bf16.mxu0 %v2415
    %2671 = vmatmul.mubr.bf16.gmra.mrb[0].mxu0 %v2414
    %v2672 = vpop.f32.mrb[0].mxu0
    %v2673 = vadd.f32 0.0, %v2672
    %v2674 = vpop.f32.mrb[0].mxu0
    %v2675 = vpop.f32.mrb[0].mxu0
    %v2676 = vadd.f32 0.0, %v2675
    %v2677 = vpop.f32.mrb[0].mxu0
    %2678 = vdwg.mxu0
    %2679 = vmatprep.subr.bf16.mxu0 0
    %2680 = vmatpush1.bf16.msra.mxu0 %v2579
    %2681 = vmatprep.subr.bf16.mxu0 0
    %2682 = vmatpush1.bf16.msra.mxu0 %v2580
    %2683 = vmatprep.subr.bf16.mxu0 0
    %2684 = vmatpush1.bf16.msra.mxu0 %v2581
    %2685 = vmatprep.subr.bf16.mxu0 0
    %2686 = vmatpush1.bf16.msra.mxu0 %v2582
    %2687 = vmatprep.subr.bf16.mxu0 0
    %2688 = vmatpush1.bf16.msra.mxu0 %v2583
    %2689 = vmatprep.subr.bf16.mxu0 0
    %2690 = vmatpush1.bf16.msra.mxu0 %v2584
    %2691 = vmatprep.subr.bf16.mxu0 0
    %2692 = vmatpush1.bf16.msra.mxu0 %v2585
    %2693 = vmatprep.subr.bf16.mxu0 0
    %2694 = vmatpush1.bf16.msra.mxu0 %v2586
    %2695 = vmatprep.subr.bf16.mxu0 0
    %2696 = vmatpush1.bf16.msra.mxu0 %v2587
    %2697 = vmatprep.subr.bf16.mxu0 0
    %2698 = vmatpush1.bf16.msra.mxu0 %v2588
    %2699 = vmatprep.subr.bf16.mxu0 0
    %2700 = vmatpush1.bf16.msra.mxu0 %v2589
    %2701 = vmatprep.subr.bf16.mxu0 0
    %2702 = vmatpush1.bf16.msra.mxu0 %v2590
    %2703 = vmatprep.subr.bf16.mxu0 0
    %2704 = vmatpush1.bf16.msra.mxu0 %v2591
    %2705 = vmatprep.subr.bf16.mxu0 0
    %2706 = vmatpush1.bf16.msra.mxu0 %v2592
    %2707 = vmatprep.subr.bf16.mxu0 0
    %2708 = vmatpush1.bf16.msra.mxu0 %v2593
    %2709 = vmatprep.subr.bf16.mxu0 0
    %2710 = vmatpush1.bf16.msra.mxu0 %v2594
    %2711 = vmatprep.mubr.bf16.mxu0 %v2417
    %2712 = vmatmul.mubr.bf16.gmra.mrb[0].mxu0 %v2416
    %v2713 = vpop.f32.mrb[0].mxu0
    %v2714 = vadd.f32 %v2673, %v2713
    %v2715 = vpop.f32.mrb[0].mxu0
    %v2716 = vpop.f32.mrb[0].mxu0
    %v2717 = vadd.f32 %v2676, %v2716
    %v2718 = vpop.f32.mrb[0].mxu0
    %2719 = vdwg.mxu0
    %2720 = vmatprep.subr.bf16.mxu0 0
    %2721 = vmatpush1.bf16.msra.mxu0 %v2595
    %2722 = vmatprep.subr.bf16.mxu0 0
    %2723 = vmatpush1.bf16.msra.mxu0 %v2596
    %2724 = vmatprep.subr.bf16.mxu0 0
    %2725 = vmatpush1.bf16.msra.mxu0 %v2597
    %2726 = vmatprep.subr.bf16.mxu0 0
    %2727 = vmatpush1.bf16.msra.mxu0 %v2598
    %2728 = vmatprep.subr.bf16.mxu0 0
    %2729 = vmatpush1.bf16.msra.mxu0 0
    %2730 = vmatprep.subr.bf16.mxu0 0
    %2731 = vmatpush1.bf16.msra.mxu0 0
    %2732 = vmatprep.subr.bf16.mxu0 0
    %2733 = vmatpush1.bf16.msra.mxu0 0
    %2734 = vmatprep.subr.bf16.mxu0 0
    %2735 = vmatpush1.bf16.msra.mxu0 0
    %2736 = vmatprep.subr.bf16.mxu0 0
    %2737 = vmatpush1.bf16.msra.mxu0 0
    %2738 = vmatprep.subr.bf16.mxu0 0
    %2739 = vmatpush1.bf16.msra.mxu0 0
    %2740 = vmatprep.subr.bf16.mxu0 0
    %2741 = vmatpush1.bf16.msra.mxu0 0
    %2742 = vmatprep.subr.bf16.mxu0 0
    %2743 = vmatpush1.bf16.msra.mxu0 0
    %2744 = vmatprep.subr.bf16.mxu0 0
    %2745 = vmatpush1.bf16.msra.mxu0 0
    %2746 = vmatprep.subr.bf16.mxu0 0
    %2747 = vmatpush1.bf16.msra.mxu0 0
    %2748 = vmatprep.subr.bf16.mxu0 0
    %2749 = vmatpush1.bf16.msra.mxu0 0
    %2750 = vmatprep.subr.bf16.mxu0 0
    %2751 = vmatpush1.bf16.msra.mxu0 0
    %2752 = vmatprep.mubr.bf16.mxu0 0
    %2753 = vmatmul.mubr.bf16.gmra.mrb[0].mxu0 %v2636
    %v2754 = vpop.f32.mrb[0].mxu0
    %v2755 = vadd.f32 %v2714, %v2754
    %v2756 = vpop.f32.mrb[0].mxu0
    %v2757 = vpop.f32.mrb[0].mxu0
    %v2758 = vadd.f32 %v2717, %v2757
    %v2759 = vpop.f32.mrb[0].mxu0
    %2760 = vdwg.mxu0
    %v2761 = vlaneseq
    %v2762 = vshrl.u32 %v2761, 7
    %v2763 = vsub.s32 2, %v2762
    %v2764 = vrot.slane %v1802, %v2763
    %v2765 = vmul.f32 %v2755, %v2764
    %v2766 = vmul.f32 %v2758, %v2764
    %v2767 = vlaneseq
    %v2768 = vshrl.u32 %v2767, 7
    %v2769 = vsub.s32 3, %v2768
    %v2770 = vrot.slane %v1802, %v2769
    %v2771 = vadd.f32 %v2765, %v2770
    %v2772 = vadd.f32 %v2766, %v2770
    %v2773 = vadd.f32 %v2771, %v1799
    %v2774 = vadd.f32 %v2772, %v1800
    %v2775 = vmax.f32 %v2773, 0.0
    %v2776 = vmax.f32 %v2774, 0.0
    %s2777 = scalar_lea.vmem %s8, 8
    %v2778 = vld [vmem:[%s2777] sm:$0xf]
    %s2779 = scalar_lea.vmem [#allocation7], 576
    %v2780 = vld [vmem:[%s2779] sm:$0xf]
    %v2781 = vld [vmem:[%s2779 + $0x4] sm:$0xf]
    %v2782 = vld [vmem:[%s2779 + $0x8] sm:$0xf]
    %v2783 = vld [vmem:[%s2779 + $0xc] sm:$0xf]
    %v2784 = vld [vmem:[%s2779 + $0x10] sm:$0xf]
    %v2785 = vld [vmem:[%s2779 + $0x14] sm:$0xf]
    %v2786 = vld [vmem:[%s2779 + $0x18] sm:$0xf]
    %v2787 = vld [vmem:[%s2779 + $0x1c] sm:$0xf]
    %v2788 = vld [vmem:[%s2779 + $0x20] sm:$0xf]
    %v2789 = vld [vmem:[%s2779 + $0x24] sm:$0xf]
    %v2790 = vld [vmem:[%s2779 + $0x28] sm:$0xf]
    %v2791 = vld [vmem:[%s2779 + $0x2c] sm:$0xf]
    %v2792 = vld [vmem:[%s2779 + $0x30] sm:$0xf]
    %v2793 = vld [vmem:[%s2779 + $0x34] sm:$0xf]
    %v2794 = vld [vmem:[%s2779 + $0x38] sm:$0xf]
    %v2795 = vld [vmem:[%s2779 + $0x3c] sm:$0xf]
    %v2796 = vld [vmem:[%s2779 + $0x40] sm:$0xf]
    %v2797 = vld [vmem:[%s2779 + $0x44] sm:$0xf]
    %v2798 = vld [vmem:[%s2779 + $0x48] sm:$0xf]
    %v2799 = vld [vmem:[%s2779 + $0x4c] sm:$0xf]
    %v2800 = vld [vmem:[%s2779 + $0x50] sm:$0xf]
    %v2801 = vld [vmem:[%s2779 + $0x54] sm:$0xf]
    %v2802 = vld [vmem:[%s2779 + $0x58] sm:$0xf]
    %v2803 = vld [vmem:[%s2779 + $0x5c] sm:$0xf]
    %v2804 = vld [vmem:[%s2779 + $0x60] sm:$0xf]
    %v2805 = vld [vmem:[%s2779 + $0x64] sm:$0xf]
    %v2806 = vld [vmem:[%s2779 + $0x68] sm:$0xf]
    %v2807 = vld [vmem:[%s2779 + $0x6c] sm:$0xf]
    %v2808 = vld [vmem:[%s2779 + $0x70] sm:$0xf]
    %v2809 = vld [vmem:[%s2779 + $0x74] sm:$0xf]
    %v2810 = vld [vmem:[%s2779 + $0x78] sm:$0xf]
    %v2811 = vld [vmem:[%s2779 + $0x7c] sm:$0xf]
    %v2812 = vld [vmem:[%s2779 + $0x80] sm:$0xf]
    %v2813 = vld [vmem:[%s2779 + $0x84] sm:$0xf]
    %v2814 = vld [vmem:[%s2779 + $0x88] sm:$0xf]
    %v2815 = vld [vmem:[%s2779 + $0x8c] sm:$0xf]
    %v2816 = vld [vmem:[%s2779 + $0x90] sm:$0xf]
    %v2817 = vld [vmem:[%s2779 + $0x94] sm:$0xf]
    %v2818 = vld [vmem:[%s2779 + $0x98] sm:$0xf]
    %v2819 = vld [vmem:[%s2779 + $0x9c] sm:$0xf]
    %v2820 = vld [vmem:[%s2779 + $0xa0] sm:$0xf]
    %v2821 = vld [vmem:[%s2779 + $0xa4] sm:$0xf]
    %v2822 = vld [vmem:[%s2779 + $0xa8] sm:$0xf]
    %v2823 = vld [vmem:[%s2779 + $0xac] sm:$0xf]
    %v2824 = vld [vmem:[%s2779 + $0xb0] sm:$0xf]
    %v2825 = vld [vmem:[%s2779 + $0xb4] sm:$0xf]
    %v2826 = vld [vmem:[%s2779 + $0xb8] sm:$0xf]
    %v2827 = vld [vmem:[%s2779 + $0xbc] sm:$0xf]
    %v2828 = vld [vmem:[%s2779 + $0xc0] sm:$0xf]
    %v2829 = vld [vmem:[%s2779 + $0xc4] sm:$0xf]
    %v2830 = vld [vmem:[%s2779 + $0xc8] sm:$0xf]
    %v2831 = vld [vmem:[%s2779 + $0xcc] sm:$0xf]
    %v2832 = vld [vmem:[%s2779 + $0xd0] sm:$0xf]
    %v2833 = vld [vmem:[%s2779 + $0xd4] sm:$0xf]
    %v2834 = vld [vmem:[%s2779 + $0xd8] sm:$0xf]
    %v2835 = vld [vmem:[%s2779 + $0xdc] sm:$0xf]
    %v2836 = vld [vmem:[%s2779 + $0xe0] sm:$0xf]
    %v2837 = vld [vmem:[%s2779 + $0xe4] sm:$0xf]
    %v2838 = vld [vmem:[%s2779 + $0xe8] sm:$0xf]
    %v2839 = vld [vmem:[%s2779 + $0xec] sm:$0xf]
    %v2840 = vld [vmem:[%s2779 + $0xf0] sm:$0xf]
    %v2841 = vld [vmem:[%s2779 + $0xf4] sm:$0xf]
    %v2842 = vld [vmem:[%s2779 + $0xf8] sm:$0xf]
    %v2843 = vld [vmem:[%s2779 + $0xfc] sm:$0xf]
    %v2844 = vld [vmem:[%s2779 + $0x100] sm:$0xf]
    %v2845 = vld [vmem:[%s2779 + $0x104] sm:$0xf]
    %v2846 = vld [vmem:[%s2779 + $0x108] sm:$0xf]
    %v2847 = vld [vmem:[%s2779 + $0x10c] sm:$0xf]
    %v2848 = vld [vmem:[%s2779 + $0x110] sm:$0xf]
    %v2849 = vld [vmem:[%s2779 + $0x114] sm:$0xf]
    %v2850 = vld [vmem:[%s2779 + $0x118] sm:$0xf]
    %v2851 = vld [vmem:[%s2779 + $0x11c] sm:$0xf]
    %v2854 = vrot.slane %v2775, 6
    %v2855 = vrot.slane %v2776, 6
    %v2856 = vsel %vm900, %v2854, %v2855
    %v2860 = vsel %vm900, %v2855, %v2854
    %v2861 = vrot.slane %v2776, 2
    %v2863 = vrot.slane %v2775, 2
    %v2864 = vsel %vm910, %v2863, %v2861
    %v2867 = vsel %vm910, %v2861, %v2863
    %2868 = vrot.lane.b32.xlu0 %v2776, 64
    %v2869 = vpop.permute.xlu0 %2868
    %2870 = vrot.lane.b32.xlu0 %v2775, 64
    %v2871 = vpop.permute.xlu0 %2870
    %2875 = vrot.lane.b32.xlu0 %v2860, 64
    %v2876 = vpop.permute.xlu0 %2875
    %2877 = vrot.lane.b32.xlu0 %v2856, 64
    %v2878 = vpop.permute.xlu0 %2877
    %2882 = vrot.lane.b32.xlu0 %v2864, 64
    %v2883 = vpop.permute.xlu0 %2882
    %2884 = vrot.lane.b32.xlu0 %v2867, 64
    %v2885 = vpop.permute.xlu0 %2884
    %v2888 = vsel %vm936, %v2856, %v2869
    %v2889 = vsel %vm936, %v2860, %v2871
    %v2890 = vsel %vm936, %v2867, %v2876
    %v2891 = vsel %vm936, %v2864, %v2878
    %v2892 = vsel %vm936, %v2775, %v2883
    %v2893 = vsel %vm936, %v2776, %v2885
    %v2894 = vmul.f32 %v2888, %v693
    %v2895 = vmul.f32 %v2890, %v694
    %v2896 = vmul.f32 %v2892, %v695
    %v2897 = vmul.f32 %v2888, %v696
    %v2898 = vmul.f32 %v2867, %v697
    %v2899 = vmul.f32 %v2889, %v698
    %v2900 = vmul.f32 %v2891, %v699
    %v2901 = vmul.f32 %v2893, %v700
    %v2902 = vmul.f32 %v2889, %v701
    %v2903 = vmul.f32 %v2864, %v702
    %v2904 = vpack.c.bf16 %v2899, %v2894
    %v2905 = vpack.c.bf16 %v2900, %v2895
    %v2906 = vpack.c.bf16 %v2901, %v2896
    %v2907 = vpack.c.bf16 %v2902, %v2897
    %v2908 = vpack.c.bf16 %v2903, %v2898
    %v2981 = vunpack.c.l.b16 %v2780
    %v2982 = vunpack.c.l.b16 %v2781
    %v2983 = vunpack.c.l.b16 %v2782
    %v2984 = vunpack.c.l.b16 %v2783
    %v2985 = vunpack.c.l.b16 %v2784
    %v2986 = vunpack.c.l.b16 %v2785
    %v2987 = vunpack.c.l.b16 %v2786
    %v2988 = vunpack.c.l.b16 %v2787
    %v2989 = vunpack.c.l.b16 %v2788
    %v2990 = vunpack.c.l.b16 %v2789
    %v2991 = vunpack.c.l.b16 %v2790
    %v2992 = vunpack.c.l.b16 %v2791
    %v2993 = vunpack.c.l.b16 %v2792
    %v2994 = vunpack.c.l.b16 %v2793
    %v2995 = vunpack.c.l.b16 %v2794
    %v2996 = vunpack.c.l.b16 %v2795
    %v2997 = vunpack.c.l.b16 %v2796
    %v2998 = vunpack.c.l.b16 %v2797
    %v2999 = vunpack.c.l.b16 %v2798
    %v3000 = vunpack.c.l.b16 %v2799
    %v3001 = vunpack.c.l.b16 %v2800
    %v3002 = vunpack.c.l.b16 %v2801
    %v3003 = vunpack.c.l.b16 %v2802
    %v3004 = vunpack.c.l.b16 %v2803
    %v3005 = vunpack.c.l.b16 %v2804
    %v3006 = vunpack.c.l.b16 %v2805
    %v3007 = vunpack.c.l.b16 %v2806
    %v3008 = vunpack.c.l.b16 %v2807
    %v3009 = vunpack.c.l.b16 %v2808
    %v3010 = vunpack.c.l.b16 %v2809
    %v3011 = vunpack.c.l.b16 %v2810
    %v3012 = vunpack.c.l.b16 %v2811
    %v3013 = vunpack.c.l.b16 %v2812
    %v3014 = vunpack.c.l.b16 %v2813
    %v3015 = vunpack.c.l.b16 %v2814
    %v3016 = vunpack.c.l.b16 %v2815
    %v3017 = vunpack.c.l.b16 %v2816
    %v3018 = vunpack.c.l.b16 %v2817
    %v3019 = vunpack.c.l.b16 %v2818
    %v3020 = vunpack.c.l.b16 %v2819
    %v3021 = vunpack.c.l.b16 %v2820
    %v3022 = vunpack.c.l.b16 %v2821
    %v3023 = vunpack.c.l.b16 %v2822
    %v3024 = vunpack.c.l.b16 %v2823
    %v3025 = vunpack.c.l.b16 %v2824
    %v3026 = vunpack.c.l.b16 %v2825
    %v3027 = vunpack.c.l.b16 %v2826
    %v3028 = vunpack.c.l.b16 %v2827
    %v3029 = vunpack.c.l.b16 %v2828
    %v3030 = vunpack.c.l.b16 %v2829
    %v3031 = vunpack.c.l.b16 %v2830
    %v3032 = vunpack.c.l.b16 %v2831
    %v3033 = vunpack.c.l.b16 %v2832
    %v3034 = vunpack.c.l.b16 %v2833
    %v3035 = vunpack.c.l.b16 %v2834
    %v3036 = vunpack.c.l.b16 %v2835
    %v3037 = vunpack.c.l.b16 %v2836
    %v3038 = vunpack.c.l.b16 %v2837
    %v3039 = vunpack.c.l.b16 %v2838
    %v3040 = vunpack.c.l.b16 %v2839
    %v3041 = vunpack.c.l.b16 %v2840
    %v3042 = vunpack.c.l.b16 %v2841
    %v3043 = vunpack.c.l.b16 %v2842
    %v3044 = vunpack.c.l.b16 %v2843
    %v3045 = vunpack.c.l.b16 %v2844
    %v3046 = vunpack.c.l.b16 %v2845
    %v3047 = vunpack.c.l.b16 %v2846
    %v3048 = vunpack.c.l.b16 %v2847
    %v3049 = vunpack.c.l.b16 %v2848
    %v3050 = vunpack.c.l.b16 %v2849
    %v3051 = vunpack.c.l.b16 %v2850
    %v3052 = vunpack.c.l.b16 %v2851
    %v3053 = vpack.c.b16 %v2982, %v2981
    %v3054 = vpack.c.b16 %v2984, %v2983
    %v3055 = vpack.c.b16 %v2986, %v2985
    %v3056 = vpack.c.b16 %v2988, %v2987
    %v3057 = vpack.c.b16 %v2990, %v2989
    %v3058 = vpack.c.b16 %v2992, %v2991
    %v3059 = vpack.c.b16 %v2994, %v2993
    %v3060 = vpack.c.b16 %v2996, %v2995
    %v3061 = vpack.c.b16 %v2998, %v2997
    %v3062 = vpack.c.b16 %v3000, %v2999
    %v3063 = vpack.c.b16 %v3002, %v3001
    %v3064 = vpack.c.b16 %v3004, %v3003
    %v3065 = vpack.c.b16 %v3006, %v3005
    %v3066 = vpack.c.b16 %v3008, %v3007
    %v3067 = vpack.c.b16 %v3010, %v3009
    %v3068 = vpack.c.b16 %v3012, %v3011
    %v3069 = vpack.c.b16 %v3014, %v3013
    %v3070 = vpack.c.b16 %v3016, %v3015
    %v3071 = vpack.c.b16 %v3018, %v3017
    %v3072 = vpack.c.b16 %v3020, %v3019
    %v3073 = vpack.c.b16 %v3022, %v3021
    %v3074 = vpack.c.b16 %v3024, %v3023
    %v3075 = vpack.c.b16 %v3026, %v3025
    %v3076 = vpack.c.b16 %v3028, %v3027
    %v3077 = vpack.c.b16 %v3030, %v3029
    %v3078 = vpack.c.b16 %v3032, %v3031
    %v3079 = vpack.c.b16 %v3034, %v3033
    %v3080 = vpack.c.b16 %v3036, %v3035
    %v3081 = vpack.c.b16 %v3038, %v3037
    %v3082 = vpack.c.b16 %v3040, %v3039
    %v3083 = vpack.c.b16 %v3042, %v3041
    %v3084 = vpack.c.b16 %v3044, %v3043
    %v3085 = vpack.c.b16 %v3046, %v3045
    %v3086 = vpack.c.b16 %v3048, %v3047
    %v3087 = vpack.c.b16 %v3050, %v3049
    %v3088 = vpack.c.b16 %v3052, %v3051
    %v3126 = vsel %vm936, %v2908, 0
    %3128 = vmatprep.subr.bf16.mxu0 0
    %3129 = vmatpush1.bf16.msra.mxu0 %v3053
    %3130 = vmatprep.subr.bf16.mxu0 0
    %3131 = vmatpush1.bf16.msra.mxu0 %v3054
    %3132 = vmatprep.subr.bf16.mxu0 0
    %3133 = vmatpush1.bf16.msra.mxu0 %v3055
    %3134 = vmatprep.subr.bf16.mxu0 0
    %3135 = vmatpush1.bf16.msra.mxu0 %v3056
    %3136 = vmatprep.subr.bf16.mxu0 0
    %3137 = vmatpush1.bf16.msra.mxu0 %v3057
    %3138 = vmatprep.subr.bf16.mxu0 0
    %3139 = vmatpush1.bf16.msra.mxu0 %v3058
    %3140 = vmatprep.subr.bf16.mxu0 0
    %3141 = vmatpush1.bf16.msra.mxu0 %v3059
    %3142 = vmatprep.subr.bf16.mxu0 0
    %3143 = vmatpush1.bf16.msra.mxu0 %v3060
    %3144 = vmatprep.subr.bf16.mxu0 0
    %3145 = vmatpush1.bf16.msra.mxu0 %v3061
    %3146 = vmatprep.subr.bf16.mxu0 0
    %3147 = vmatpush1.bf16.msra.mxu0 %v3062
    %3148 = vmatprep.subr.bf16.mxu0 0
    %3149 = vmatpush1.bf16.msra.mxu0 %v3063
    %3150 = vmatprep.subr.bf16.mxu0 0
    %3151 = vmatpush1.bf16.msra.mxu0 %v3064
    %3152 = vmatprep.subr.bf16.mxu0 0
    %3153 = vmatpush1.bf16.msra.mxu0 %v3065
    %3154 = vmatprep.subr.bf16.mxu0 0
    %3155 = vmatpush1.bf16.msra.mxu0 %v3066
    %3156 = vmatprep.subr.bf16.mxu0 0
    %3157 = vmatpush1.bf16.msra.mxu0 %v3067
    %3158 = vmatprep.subr.bf16.mxu0 0
    %3159 = vmatpush1.bf16.msra.mxu0 %v3068
    %3160 = vmatprep.mubr.bf16.mxu0 %v2905
    %3161 = vmatmul.mubr.bf16.gmra.mrb[0].mxu0 %v2904
    %v3162 = vpop.f32.mrb[0].mxu0
    %v3163 = vadd.f32 0.0, %v3162
    %v3164 = vpop.f32.mrb[0].mxu0
    %v3165 = vpop.f32.mrb[0].mxu0
    %v3166 = vadd.f32 0.0, %v3165
    %v3167 = vpop.f32.mrb[0].mxu0
    %3168 = vdwg.mxu0
    %3169 = vmatprep.subr.bf16.mxu0 0
    %3170 = vmatpush1.bf16.msra.mxu0 %v3069
    %3171 = vmatprep.subr.bf16.mxu0 0
    %3172 = vmatpush1.bf16.msra.mxu0 %v3070
    %3173 = vmatprep.subr.bf16.mxu0 0
    %3174 = vmatpush1.bf16.msra.mxu0 %v3071
    %3175 = vmatprep.subr.bf16.mxu0 0
    %3176 = vmatpush1.bf16.msra.mxu0 %v3072
    %3177 = vmatprep.subr.bf16.mxu0 0
    %3178 = vmatpush1.bf16.msra.mxu0 %v3073
    %3179 = vmatprep.subr.bf16.mxu0 0
    %3180 = vmatpush1.bf16.msra.mxu0 %v3074
    %3181 = vmatprep.subr.bf16.mxu0 0
    %3182 = vmatpush1.bf16.msra.mxu0 %v3075
    %3183 = vmatprep.subr.bf16.mxu0 0
    %3184 = vmatpush1.bf16.msra.mxu0 %v3076
    %3185 = vmatprep.subr.bf16.mxu0 0
    %3186 = vmatpush1.bf16.msra.mxu0 %v3077
    %3187 = vmatprep.subr.bf16.mxu0 0
    %3188 = vmatpush1.bf16.msra.mxu0 %v3078
    %3189 = vmatprep.subr.bf16.mxu0 0
    %3190 = vmatpush1.bf16.msra.mxu0 %v3079
    %3191 = vmatprep.subr.bf16.mxu0 0
    %3192 = vmatpush1.bf16.msra.mxu0 %v3080
    %3193 = vmatprep.subr.bf16.mxu0 0
    %3194 = vmatpush1.bf16.msra.mxu0 %v3081
    %3195 = vmatprep.subr.bf16.mxu0 0
    %3196 = vmatpush1.bf16.msra.mxu0 %v3082
    %3197 = vmatprep.subr.bf16.mxu0 0
    %3198 = vmatpush1.bf16.msra.mxu0 %v3083
    %3199 = vmatprep.subr.bf16.mxu0 0
    %3200 = vmatpush1.bf16.msra.mxu0 %v3084
    %3201 = vmatprep.mubr.bf16.mxu0 %v2907
    %3202 = vmatmul.mubr.bf16.gmra.mrb[0].mxu0 %v2906
    %v3203 = vpop.f32.mrb[0].mxu0
    %v3204 = vadd.f32 %v3163, %v3203
    %v3205 = vpop.f32.mrb[0].mxu0
    %v3206 = vpop.f32.mrb[0].mxu0
    %v3207 = vadd.f32 %v3166, %v3206
    %v3208 = vpop.f32.mrb[0].mxu0
    %3209 = vdwg.mxu0
    %3210 = vmatprep.subr.bf16.mxu0 0
    %3211 = vmatpush1.bf16.msra.mxu0 %v3085
    %3212 = vmatprep.subr.bf16.mxu0 0
    %3213 = vmatpush1.bf16.msra.mxu0 %v3086
    %3214 = vmatprep.subr.bf16.mxu0 0
    %3215 = vmatpush1.bf16.msra.mxu0 %v3087
    %3216 = vmatprep.subr.bf16.mxu0 0
    %3217 = vmatpush1.bf16.msra.mxu0 %v3088
    %3218 = vmatprep.subr.bf16.mxu0 0
    %3219 = vmatpush1.bf16.msra.mxu0 0
    %3220 = vmatprep.subr.bf16.mxu0 0
    %3221 = vmatpush1.bf16.msra.mxu0 0
    %3222 = vmatprep.subr.bf16.mxu0 0
    %3223 = vmatpush1.bf16.msra.mxu0 0
    %3224 = vmatprep.subr.bf16.mxu0 0
    %3225 = vmatpush1.bf16.msra.mxu0 0
    %3226 = vmatprep.subr.bf16.mxu0 0
    %3227 = vmatpush1.bf16.msra.mxu0 0
    %3228 = vmatprep.subr.bf16.mxu0 0
    %3229 = vmatpush1.bf16.msra.mxu0 0
    %3230 = vmatprep.subr.bf16.mxu0 0
    %3231 = vmatpush1.bf16.msra.mxu0 0
    %3232 = vmatprep.subr.bf16.mxu0 0
    %3233 = vmatpush1.bf16.msra.mxu0 0
    %3234 = vmatprep.subr.bf16.mxu0 0
    %3235 = vmatpush1.bf16.msra.mxu0 0
    %3236 = vmatprep.subr.bf16.mxu0 0
    %3237 = vmatpush1.bf16.msra.mxu0 0
    %3238 = vmatprep.subr.bf16.mxu0 0
    %3239 = vmatpush1.bf16.msra.mxu0 0
    %3240 = vmatprep.subr.bf16.mxu0 0
    %3241 = vmatpush1.bf16.msra.mxu0 0
    %3242 = vmatprep.mubr.bf16.mxu0 0
    %3243 = vmatmul.mubr.bf16.gmra.mrb[0].mxu0 %v3126
    %v3244 = vpop.f32.mrb[0].mxu0
    %v3245 = vadd.f32 %v3204, %v3244
    %v3246 = vpop.f32.mrb[0].mxu0
    %v3247 = vpop.f32.mrb[0].mxu0
    %v3248 = vadd.f32 %v3207, %v3247
    %v3249 = vpop.f32.mrb[0].mxu0
    %3250 = vdwg.mxu0
    %v3251 = vlaneseq
    %v3252 = vshrl.u32 %v3251, 7
    %v3253 = vsub.s32 0, %v3252
    %v3254 = vrot.slane %v2778, %v3253
    %v3255 = vmul.f32 %v3245, %v3254
    %v3256 = vmul.f32 %v3248, %v3254
    %v3257 = vlaneseq
    %v3258 = vshrl.u32 %v3257, 7
    %v3259 = vsub.s32 1, %v3258
    %v3260 = vrot.slane %v2778, %v3259
    %v3261 = vadd.f32 %v3255, %v3260
    %v3262 = vadd.f32 %v3256, %v3260
    %v3263 = vmax.f32 %v3261, 0.0
    %v3264 = vmax.f32 %v3262, 0.0
    %s3265 = scalar_lea.vmem %s7, 576
    %v3266 = vld [vmem:[%s3265] sm:$0xf]
    %v3267 = vld [vmem:[%s3265 + $0x4] sm:$0xf]
    %v3268 = vld [vmem:[%s3265 + $0x8] sm:$0xf]
    %v3269 = vld [vmem:[%s3265 + $0xc] sm:$0xf]
    %v3270 = vld [vmem:[%s3265 + $0x10] sm:$0xf]
    %v3271 = vld [vmem:[%s3265 + $0x14] sm:$0xf]
    %v3272 = vld [vmem:[%s3265 + $0x18] sm:$0xf]
    %v3273 = vld [vmem:[%s3265 + $0x1c] sm:$0xf]
    %v3274 = vld [vmem:[%s3265 + $0x20] sm:$0xf]
    %v3275 = vld [vmem:[%s3265 + $0x24] sm:$0xf]
    %v3276 = vld [vmem:[%s3265 + $0x28] sm:$0xf]
    %v3277 = vld [vmem:[%s3265 + $0x2c] sm:$0xf]
    %v3278 = vld [vmem:[%s3265 + $0x30] sm:$0xf]
    %v3279 = vld [vmem:[%s3265 + $0x34] sm:$0xf]
    %v3280 = vld [vmem:[%s3265 + $0x38] sm:$0xf]
    %v3281 = vld [vmem:[%s3265 + $0x3c] sm:$0xf]
    %v3282 = vld [vmem:[%s3265 + $0x40] sm:$0xf]
    %v3283 = vld [vmem:[%s3265 + $0x44] sm:$0xf]
    %v3284 = vld [vmem:[%s3265 + $0x48] sm:$0xf]
    %v3285 = vld [vmem:[%s3265 + $0x4c] sm:$0xf]
    %v3286 = vld [vmem:[%s3265 + $0x50] sm:$0xf]
    %v3287 = vld [vmem:[%s3265 + $0x54] sm:$0xf]
    %v3288 = vld [vmem:[%s3265 + $0x58] sm:$0xf]
    %v3289 = vld [vmem:[%s3265 + $0x5c] sm:$0xf]
    %v3290 = vld [vmem:[%s3265 + $0x60] sm:$0xf]
    %v3291 = vld [vmem:[%s3265 + $0x64] sm:$0xf]
    %v3292 = vld [vmem:[%s3265 + $0x68] sm:$0xf]
    %v3293 = vld [vmem:[%s3265 + $0x6c] sm:$0xf]
    %v3294 = vld [vmem:[%s3265 + $0x70] sm:$0xf]
    %v3295 = vld [vmem:[%s3265 + $0x74] sm:$0xf]
    %v3296 = vld [vmem:[%s3265 + $0x78] sm:$0xf]
    %v3297 = vld [vmem:[%s3265 + $0x7c] sm:$0xf]
    %v3298 = vld [vmem:[%s3265 + $0x80] sm:$0xf]
    %v3299 = vld [vmem:[%s3265 + $0x84] sm:$0xf]
    %v3300 = vld [vmem:[%s3265 + $0x88] sm:$0xf]
    %v3301 = vld [vmem:[%s3265 + $0x8c] sm:$0xf]
    %v3302 = vld [vmem:[%s3265 + $0x90] sm:$0xf]
    %v3303 = vld [vmem:[%s3265 + $0x94] sm:$0xf]
    %v3304 = vld [vmem:[%s3265 + $0x98] sm:$0xf]
    %v3305 = vld [vmem:[%s3265 + $0x9c] sm:$0xf]
    %v3306 = vld [vmem:[%s3265 + $0xa0] sm:$0xf]
    %v3307 = vld [vmem:[%s3265 + $0xa4] sm:$0xf]
    %v3308 = vld [vmem:[%s3265 + $0xa8] sm:$0xf]
    %v3309 = vld [vmem:[%s3265 + $0xac] sm:$0xf]
    %v3310 = vld [vmem:[%s3265 + $0xb0] sm:$0xf]
    %v3311 = vld [vmem:[%s3265 + $0xb4] sm:$0xf]
    %v3312 = vld [vmem:[%s3265 + $0xb8] sm:$0xf]
    %v3313 = vld [vmem:[%s3265 + $0xbc] sm:$0xf]
    %v3314 = vld [vmem:[%s3265 + $0xc0] sm:$0xf]
    %v3315 = vld [vmem:[%s3265 + $0xc4] sm:$0xf]
    %v3316 = vld [vmem:[%s3265 + $0xc8] sm:$0xf]
    %v3317 = vld [vmem:[%s3265 + $0xcc] sm:$0xf]
    %v3318 = vld [vmem:[%s3265 + $0xd0] sm:$0xf]
    %v3319 = vld [vmem:[%s3265 + $0xd4] sm:$0xf]
    %v3320 = vld [vmem:[%s3265 + $0xd8] sm:$0xf]
    %v3321 = vld [vmem:[%s3265 + $0xdc] sm:$0xf]
    %v3322 = vld [vmem:[%s3265 + $0xe0] sm:$0xf]
    %v3323 = vld [vmem:[%s3265 + $0xe4] sm:$0xf]
    %v3324 = vld [vmem:[%s3265 + $0xe8] sm:$0xf]
    %v3325 = vld [vmem:[%s3265 + $0xec] sm:$0xf]
    %v3326 = vld [vmem:[%s3265 + $0xf0] sm:$0xf]
    %v3327 = vld [vmem:[%s3265 + $0xf4] sm:$0xf]
    %v3328 = vld [vmem:[%s3265 + $0xf8] sm:$0xf]
    %v3329 = vld [vmem:[%s3265 + $0xfc] sm:$0xf]
    %v3330 = vld [vmem:[%s3265 + $0x100] sm:$0xf]
    %v3331 = vld [vmem:[%s3265 + $0x104] sm:$0xf]
    %v3332 = vld [vmem:[%s3265 + $0x108] sm:$0xf]
    %v3333 = vld [vmem:[%s3265 + $0x10c] sm:$0xf]
    %v3334 = vld [vmem:[%s3265 + $0x110] sm:$0xf]
    %v3335 = vld [vmem:[%s3265 + $0x114] sm:$0xf]
    %v3336 = vld [vmem:[%s3265 + $0x118] sm:$0xf]
    %v3337 = vld [vmem:[%s3265 + $0x11c] sm:$0xf]
    %v3340 = vrot.slane %v3263, 6
    %v3341 = vrot.slane %v3264, 6
    %v3342 = vsel %vm900, %v3340, %v3341
    %v3346 = vsel %vm900, %v3341, %v3340
    %v3347 = vrot.slane %v3264, 2
    %v3349 = vrot.slane %v3263, 2
    %v3350 = vsel %vm910, %v3349, %v3347
    %v3353 = vsel %vm910, %v3347, %v3349
    %3354 = vrot.lane.b32.xlu0 %v3264, 64
    %v3355 = vpop.permute.xlu0 %3354
    %3356 = vrot.lane.b32.xlu0 %v3263, 64
    %v3357 = vpop.permute.xlu0 %3356
    %3361 = vrot.lane.b32.xlu0 %v3346, 64
    %v3362 = vpop.permute.xlu0 %3361
    %3363 = vrot.lane.b32.xlu0 %v3342, 64
    %v3364 = vpop.permute.xlu0 %3363
    %3368 = vrot.lane.b32.xlu0 %v3350, 64
    %v3369 = vpop.permute.xlu0 %3368
    %3370 = vrot.lane.b32.xlu0 %v3353, 64
    %v3371 = vpop.permute.xlu0 %3370
    %v3374 = vsel %vm936, %v3342, %v3355
    %v3375 = vsel %vm936, %v3346, %v3357
    %v3376 = vsel %vm936, %v3353, %v3362
    %v3377 = vsel %vm936, %v3350, %v3364
    %v3378 = vsel %vm936, %v3263, %v3369
    %v3379 = vsel %vm936, %v3264, %v3371
    %v3380 = vmul.f32 %v3374, %v693
    %v3381 = vmul.f32 %v3376, %v694
    %v3382 = vmul.f32 %v3378, %v695
    %v3383 = vmul.f32 %v3374, %v696
    %v3384 = vmul.f32 %v3353, %v697
    %v3385 = vmul.f32 %v3375, %v698
    %v3386 = vmul.f32 %v3377, %v699
    %v3387 = vmul.f32 %v3379, %v700
    %v3388 = vmul.f32 %v3375, %v701
    %v3389 = vmul.f32 %v3350, %v702
    %v3390 = vpack.c.bf16 %v3385, %v3380
    %v3391 = vpack.c.bf16 %v3386, %v3381
    %v3392 = vpack.c.bf16 %v3387, %v3382
    %v3393 = vpack.c.bf16 %v3388, %v3383
    %v3394 = vpack.c.bf16 %v3389, %v3384
    %v3467 = vunpack.c.l.b16 %v3266
    %v3468 = vunpack.c.l.b16 %v3267
    %v3469 = vunpack.c.l.b16 %v3268
    %v3470 = vunpack.c.l.b16 %v3269
    %v3471 = vunpack.c.l.b16 %v3270
    %v3472 = vunpack.c.l.b16 %v3271
    %v3473 = vunpack.c.l.b16 %v3272
    %v3474 = vunpack.c.l.b16 %v3273
    %v3475 = vunpack.c.l.b16 %v3274
    %v3476 = vunpack.c.l.b16 %v3275
    %v3477 = vunpack.c.l.b16 %v3276
    %v3478 = vunpack.c.l.b16 %v3277
    %v3479 = vunpack.c.l.b16 %v3278
    %v3480 = vunpack.c.l.b16 %v3279
    %v3481 = vunpack.c.l.b16 %v3280
    %v3482 = vunpack.c.l.b16 %v3281
    %v3483 = vunpack.c.l.b16 %v3282
    %v3484 = vunpack.c.l.b16 %v3283
    %v3485 = vunpack.c.l.b16 %v3284
    %v3486 = vunpack.c.l.b16 %v3285
    %v3487 = vunpack.c.l.b16 %v3286
    %v3488 = vunpack.c.l.b16 %v3287
    %v3489 = vunpack.c.l.b16 %v3288
    %v3490 = vunpack.c.l.b16 %v3289
    %v3491 = vunpack.c.l.b16 %v3290
    %v3492 = vunpack.c.l.b16 %v3291
    %v3493 = vunpack.c.l.b16 %v3292
    %v3494 = vunpack.c.l.b16 %v3293
    %v3495 = vunpack.c.l.b16 %v3294
    %v3496 = vunpack.c.l.b16 %v3295
    %v3497 = vunpack.c.l.b16 %v3296
    %v3498 = vunpack.c.l.b16 %v3297
    %v3499 = vunpack.c.l.b16 %v3298
    %v3500 = vunpack.c.l.b16 %v3299
    %v3501 = vunpack.c.l.b16 %v3300
    %v3502 = vunpack.c.l.b16 %v3301
    %v3503 = vunpack.c.l.b16 %v3302
    %v3504 = vunpack.c.l.b16 %v3303
    %v3505 = vunpack.c.l.b16 %v3304
    %v3506 = vunpack.c.l.b16 %v3305
    %v3507 = vunpack.c.l.b16 %v3306
    %v3508 = vunpack.c.l.b16 %v3307
    %v3509 = vunpack.c.l.b16 %v3308
    %v3510 = vunpack.c.l.b16 %v3309
    %v3511 = vunpack.c.l.b16 %v3310
    %v3512 = vunpack.c.l.b16 %v3311
    %v3513 = vunpack.c.l.b16 %v3312
    %v3514 = vunpack.c.l.b16 %v3313
    %v3515 = vunpack.c.l.b16 %v3314
    %v3516 = vunpack.c.l.b16 %v3315
    %v3517 = vunpack.c.l.b16 %v3316
    %v3518 = vunpack.c.l.b16 %v3317
    %v3519 = vunpack.c.l.b16 %v3318
    %v3520 = vunpack.c.l.b16 %v3319
    %v3521 = vunpack.c.l.b16 %v3320
    %v3522 = vunpack.c.l.b16 %v3321
    %v3523 = vunpack.c.l.b16 %v3322
    %v3524 = vunpack.c.l.b16 %v3323
    %v3525 = vunpack.c.l.b16 %v3324
    %v3526 = vunpack.c.l.b16 %v3325
    %v3527 = vunpack.c.l.b16 %v3326
    %v3528 = vunpack.c.l.b16 %v3327
    %v3529 = vunpack.c.l.b16 %v3328
    %v3530 = vunpack.c.l.b16 %v3329
    %v3531 = vunpack.c.l.b16 %v3330
    %v3532 = vunpack.c.l.b16 %v3331
    %v3533 = vunpack.c.l.b16 %v3332
    %v3534 = vunpack.c.l.b16 %v3333
    %v3535 = vunpack.c.l.b16 %v3334
    %v3536 = vunpack.c.l.b16 %v3335
    %v3537 = vunpack.c.l.b16 %v3336
    %v3538 = vunpack.c.l.b16 %v3337
    %v3539 = vpack.c.b16 %v3468, %v3467
    %v3540 = vpack.c.b16 %v3470, %v3469
    %v3541 = vpack.c.b16 %v3472, %v3471
    %v3542 = vpack.c.b16 %v3474, %v3473
    %v3543 = vpack.c.b16 %v3476, %v3475
    %v3544 = vpack.c.b16 %v3478, %v3477
    %v3545 = vpack.c.b16 %v3480, %v3479
    %v3546 = vpack.c.b16 %v3482, %v3481
    %v3547 = vpack.c.b16 %v3484, %v3483
    %v3548 = vpack.c.b16 %v3486, %v3485
    %v3549 = vpack.c.b16 %v3488, %v3487
    %v3550 = vpack.c.b16 %v3490, %v3489
    %v3551 = vpack.c.b16 %v3492, %v3491
    %v3552 = vpack.c.b16 %v3494, %v3493
    %v3553 = vpack.c.b16 %v3496, %v3495
    %v3554 = vpack.c.b16 %v3498, %v3497
    %v3555 = vpack.c.b16 %v3500, %v3499
    %v3556 = vpack.c.b16 %v3502, %v3501
    %v3557 = vpack.c.b16 %v3504, %v3503
    %v3558 = vpack.c.b16 %v3506, %v3505
    %v3559 = vpack.c.b16 %v3508, %v3507
    %v3560 = vpack.c.b16 %v3510, %v3509
    %v3561 = vpack.c.b16 %v3512, %v3511
    %v3562 = vpack.c.b16 %v3514, %v3513
    %v3563 = vpack.c.b16 %v3516, %v3515
    %v3564 = vpack.c.b16 %v3518, %v3517
    %v3565 = vpack.c.b16 %v3520, %v3519
    %v3566 = vpack.c.b16 %v3522, %v3521
    %v3567 = vpack.c.b16 %v3524, %v3523
    %v3568 = vpack.c.b16 %v3526, %v3525
    %v3569 = vpack.c.b16 %v3528, %v3527
    %v3570 = vpack.c.b16 %v3530, %v3529
    %v3571 = vpack.c.b16 %v3532, %v3531
    %v3572 = vpack.c.b16 %v3534, %v3533
    %v3573 = vpack.c.b16 %v3536, %v3535
    %v3574 = vpack.c.b16 %v3538, %v3537
    %v3612 = vsel %vm936, %v3394, 0
    %3614 = vmatprep.subr.bf16.mxu0 0
    %3615 = vmatpush1.bf16.msra.mxu0 %v3539
    %3616 = vmatprep.subr.bf16.mxu0 0
    %3617 = vmatpush1.bf16.msra.mxu0 %v3540
    %3618 = vmatprep.subr.bf16.mxu0 0
    %3619 = vmatpush1.bf16.msra.mxu0 %v3541
    %3620 = vmatprep.subr.bf16.mxu0 0
    %3621 = vmatpush1.bf16.msra.mxu0 %v3542
    %3622 = vmatprep.subr.bf16.mxu0 0
    %3623 = vmatpush1.bf16.msra.mxu0 %v3543
    %3624 = vmatprep.subr.bf16.mxu0 0
    %3625 = vmatpush1.bf16.msra.mxu0 %v3544
    %3626 = vmatprep.subr.bf16.mxu0 0
    %3627 = vmatpush1.bf16.msra.mxu0 %v3545
    %3628 = vmatprep.subr.bf16.mxu0 0
    %3629 = vmatpush1.bf16.msra.mxu0 %v3546
    %3630 = vmatprep.subr.bf16.mxu0 0
    %3631 = vmatpush1.bf16.msra.mxu0 %v3547
    %3632 = vmatprep.subr.bf16.mxu0 0
    %3633 = vmatpush1.bf16.msra.mxu0 %v3548
    %3634 = vmatprep.subr.bf16.mxu0 0
    %3635 = vmatpush1.bf16.msra.mxu0 %v3549
    %3636 = vmatprep.subr.bf16.mxu0 0
    %3637 = vmatpush1.bf16.msra.mxu0 %v3550
    %3638 = vmatprep.subr.bf16.mxu0 0
    %3639 = vmatpush1.bf16.msra.mxu0 %v3551
    %3640 = vmatprep.subr.bf16.mxu0 0
    %3641 = vmatpush1.bf16.msra.mxu0 %v3552
    %3642 = vmatprep.subr.bf16.mxu0 0
    %3643 = vmatpush1.bf16.msra.mxu0 %v3553
    %3644 = vmatprep.subr.bf16.mxu0 0
    %3645 = vmatpush1.bf16.msra.mxu0 %v3554
    %3646 = vmatprep.mubr.bf16.mxu0 %v3391
    %3647 = vmatmul.mubr.bf16.gmra.mrb[0].mxu0 %v3390
    %v3648 = vpop.f32.mrb[0].mxu0
    %v3649 = vadd.f32 0.0, %v3648
    %v3650 = vpop.f32.mrb[0].mxu0
    %v3651 = vpop.f32.mrb[0].mxu0
    %v3652 = vadd.f32 0.0, %v3651
    %v3653 = vpop.f32.mrb[0].mxu0
    %3654 = vdwg.mxu0
    %3655 = vmatprep.subr.bf16.mxu0 0
    %3656 = vmatpush1.bf16.msra.mxu0 %v3555
    %3657 = vmatprep.subr.bf16.mxu0 0
    %3658 = vmatpush1.bf16.msra.mxu0 %v3556
    %3659 = vmatprep.subr.bf16.mxu0 0
    %3660 = vmatpush1.bf16.msra.mxu0 %v3557
    %3661 = vmatprep.subr.bf16.mxu0 0
    %3662 = vmatpush1.bf16.msra.mxu0 %v3558
    %3663 = vmatprep.subr.bf16.mxu0 0
    %3664 = vmatpush1.bf16.msra.mxu0 %v3559
    %3665 = vmatprep.subr.bf16.mxu0 0
    %3666 = vmatpush1.bf16.msra.mxu0 %v3560
    %3667 = vmatprep.subr.bf16.mxu0 0
    %3668 = vmatpush1.bf16.msra.mxu0 %v3561
    %3669 = vmatprep.subr.bf16.mxu0 0
    %3670 = vmatpush1.bf16.msra.mxu0 %v3562
    %3671 = vmatprep.subr.bf16.mxu0 0
    %3672 = vmatpush1.bf16.msra.mxu0 %v3563
    %3673 = vmatprep.subr.bf16.mxu0 0
    %3674 = vmatpush1.bf16.msra.mxu0 %v3564
    %3675 = vmatprep.subr.bf16.mxu0 0
    %3676 = vmatpush1.bf16.msra.mxu0 %v3565
    %3677 = vmatprep.subr.bf16.mxu0 0
    %3678 = vmatpush1.bf16.msra.mxu0 %v3566
    %3679 = vmatprep.subr.bf16.mxu0 0
    %3680 = vmatpush1.bf16.msra.mxu0 %v3567
    %3681 = vmatprep.subr.bf16.mxu0 0
    %3682 = vmatpush1.bf16.msra.mxu0 %v3568
    %3683 = vmatprep.subr.bf16.mxu0 0
    %3684 = vmatpush1.bf16.msra.mxu0 %v3569
    %3685 = vmatprep.subr.bf16.mxu0 0
    %3686 = vmatpush1.bf16.msra.mxu0 %v3570
    %3687 = vmatprep.mubr.bf16.mxu0 %v3393
    %3688 = vmatmul.mubr.bf16.gmra.mrb[0].mxu0 %v3392
    %v3689 = vpop.f32.mrb[0].mxu0
    %v3690 = vadd.f32 %v3649, %v3689
    %v3691 = vpop.f32.mrb[0].mxu0
    %v3692 = vpop.f32.mrb[0].mxu0
    %v3693 = vadd.f32 %v3652, %v3692
    %v3694 = vpop.f32.mrb[0].mxu0
    %3695 = vdwg.mxu0
    %3696 = vmatprep.subr.bf16.mxu0 0
    %3697 = vmatpush1.bf16.msra.mxu0 %v3571
    %3698 = vmatprep.subr.bf16.mxu0 0
    %3699 = vmatpush1.bf16.msra.mxu0 %v3572
    %3700 = vmatprep.subr.bf16.mxu0 0
    %3701 = vmatpush1.bf16.msra.mxu0 %v3573
    %3702 = vmatprep.subr.bf16.mxu0 0
    %3703 = vmatpush1.bf16.msra.mxu0 %v3574
    %3704 = vmatprep.subr.bf16.mxu0 0
    %3705 = vmatpush1.bf16.msra.mxu0 0
    %3706 = vmatprep.subr.bf16.mxu0 0
    %3707 = vmatpush1.bf16.msra.mxu0 0
    %3708 = vmatprep.subr.bf16.mxu0 0
    %3709 = vmatpush1.bf16.msra.mxu0 0
    %3710 = vmatprep.subr.bf16.mxu0 0
    %3711 = vmatpush1.bf16.msra.mxu0 0
    %3712 = vmatprep.subr.bf16.mxu0 0
    %3713 = vmatpush1.bf16.msra.mxu0 0
    %3714 = vmatprep.subr.bf16.mxu0 0
    %3715 = vmatpush1.bf16.msra.mxu0 0
    %3716 = vmatprep.subr.bf16.mxu0 0
    %3717 = vmatpush1.bf16.msra.mxu0 0
    %3718 = vmatprep.subr.bf16.mxu0 0
    %3719 = vmatpush1.bf16.msra.mxu0 0
    %3720 = vmatprep.subr.bf16.mxu0 0
    %3721 = vmatpush1.bf16.msra.mxu0 0
    %3722 = vmatprep.subr.bf16.mxu0 0
    %3723 = vmatpush1.bf16.msra.mxu0 0
    %3724 = vmatprep.subr.bf16.mxu0 0
    %3725 = vmatpush1.bf16.msra.mxu0 0
    %3726 = vmatprep.subr.bf16.mxu0 0
    %3727 = vmatpush1.bf16.msra.mxu0 0
    %3728 = vmatprep.mubr.bf16.mxu0 0
    %3729 = vmatmul.mubr.bf16.gmra.mrb[0].mxu0 %v3612
    %v3730 = vpop.f32.mrb[0].mxu0
    %v3731 = vadd.f32 %v3690, %v3730
    %v3732 = vpop.f32.mrb[0].mxu0
    %v3733 = vpop.f32.mrb[0].mxu0
    %v3734 = vadd.f32 %v3693, %v3733
    %v3735 = vpop.f32.mrb[0].mxu0
    %3736 = vdwg.mxu0
    %v3737 = vlaneseq
    %v3738 = vshrl.u32 %v3737, 7
    %v3739 = vsub.s32 2, %v3738
    %v3740 = vrot.slane %v2778, %v3739
    %v3741 = vmul.f32 %v3731, %v3740
    %v3742 = vmul.f32 %v3734, %v3740
    %v3743 = vlaneseq
    %v3744 = vshrl.u32 %v3743, 7
    %v3745 = vsub.s32 3, %v3744
    %v3746 = vrot.slane %v2778, %v3745
    %v3747 = vadd.f32 %v3741, %v3746
    %v3748 = vadd.f32 %v3742, %v3746
    %v3749 = vadd.f32 %v3747, %v2775
    %v3750 = vadd.f32 %v3748, %v2776
    %v3751 = vmax.f32 %v3749, 0.0
    %v3752 = vmax.f32 %v3750, 0.0
    %s3753 = scalar_lea.vmem %s8, 12
    %v3754 = vld [vmem:[%s3753] sm:$0xf]
    %s3755 = scalar_lea.vmem [#allocation7], 864
    %v3756 = vld [vmem:[%s3755] sm:$0xf]
    %v3757 = vld [vmem:[%s3755 + $0x4] sm:$0xf]
    %v3758 = vld [vmem:[%s3755 + $0x8] sm:$0xf]
    %v3759 = vld [vmem:[%s3755 + $0xc] sm:$0xf]
    %v3760 = vld [vmem:[%s3755 + $0x10] sm:$0xf]
    %v3761 = vld [vmem:[%s3755 + $0x14] sm:$0xf]
    %v3762 = vld [vmem:[%s3755 + $0x18] sm:$0xf]
    %v3763 = vld [vmem:[%s3755 + $0x1c] sm:$0xf]
    %v3764 = vld [vmem:[%s3755 + $0x20] sm:$0xf]
    %v3765 = vld [vmem:[%s3755 + $0x24] sm:$0xf]
    %v3766 = vld [vmem:[%s3755 + $0x28] sm:$0xf]
    %v3767 = vld [vmem:[%s3755 + $0x2c] sm:$0xf]
    %v3768 = vld [vmem:[%s3755 + $0x30] sm:$0xf]
    %v3769 = vld [vmem:[%s3755 + $0x34] sm:$0xf]
    %v3770 = vld [vmem:[%s3755 + $0x38] sm:$0xf]
    %v3771 = vld [vmem:[%s3755 + $0x3c] sm:$0xf]
    %v3772 = vld [vmem:[%s3755 + $0x40] sm:$0xf]
    %v3773 = vld [vmem:[%s3755 + $0x44] sm:$0xf]
    %v3774 = vld [vmem:[%s3755 + $0x48] sm:$0xf]
    %v3775 = vld [vmem:[%s3755 + $0x4c] sm:$0xf]
    %v3776 = vld [vmem:[%s3755 + $0x50] sm:$0xf]
    %v3777 = vld [vmem:[%s3755 + $0x54] sm:$0xf]
    %v3778 = vld [vmem:[%s3755 + $0x58] sm:$0xf]
    %v3779 = vld [vmem:[%s3755 + $0x5c] sm:$0xf]
    %v3780 = vld [vmem:[%s3755 + $0x60] sm:$0xf]
    %v3781 = vld [vmem:[%s3755 + $0x64] sm:$0xf]
    %v3782 = vld [vmem:[%s3755 + $0x68] sm:$0xf]
    %v3783 = vld [vmem:[%s3755 + $0x6c] sm:$0xf]
    %v3784 = vld [vmem:[%s3755 + $0x70] sm:$0xf]
    %v3785 = vld [vmem:[%s3755 + $0x74] sm:$0xf]
    %v3786 = vld [vmem:[%s3755 + $0x78] sm:$0xf]
    %v3787 = vld [vmem:[%s3755 + $0x7c] sm:$0xf]
    %v3788 = vld [vmem:[%s3755 + $0x80] sm:$0xf]
    %v3789 = vld [vmem:[%s3755 + $0x84] sm:$0xf]
    %v3790 = vld [vmem:[%s3755 + $0x88] sm:$0xf]
    %v3791 = vld [vmem:[%s3755 + $0x8c] sm:$0xf]
    %v3792 = vld [vmem:[%s3755 + $0x90] sm:$0xf]
    %v3793 = vld [vmem:[%s3755 + $0x94] sm:$0xf]
    %v3794 = vld [vmem:[%s3755 + $0x98] sm:$0xf]
    %v3795 = vld [vmem:[%s3755 + $0x9c] sm:$0xf]
    %v3796 = vld [vmem:[%s3755 + $0xa0] sm:$0xf]
    %v3797 = vld [vmem:[%s3755 + $0xa4] sm:$0xf]
    %v3798 = vld [vmem:[%s3755 + $0xa8] sm:$0xf]
    %v3799 = vld [vmem:[%s3755 + $0xac] sm:$0xf]
    %v3800 = vld [vmem:[%s3755 + $0xb0] sm:$0xf]
    %v3801 = vld [vmem:[%s3755 + $0xb4] sm:$0xf]
    %v3802 = vld [vmem:[%s3755 + $0xb8] sm:$0xf]
    %v3803 = vld [vmem:[%s3755 + $0xbc] sm:$0xf]
    %v3804 = vld [vmem:[%s3755 + $0xc0] sm:$0xf]
    %v3805 = vld [vmem:[%s3755 + $0xc4] sm:$0xf]
    %v3806 = vld [vmem:[%s3755 + $0xc8] sm:$0xf]
    %v3807 = vld [vmem:[%s3755 + $0xcc] sm:$0xf]
    %v3808 = vld [vmem:[%s3755 + $0xd0] sm:$0xf]
    %v3809 = vld [vmem:[%s3755 + $0xd4] sm:$0xf]
    %v3810 = vld [vmem:[%s3755 + $0xd8] sm:$0xf]
    %v3811 = vld [vmem:[%s3755 + $0xdc] sm:$0xf]
    %v3812 = vld [vmem:[%s3755 + $0xe0] sm:$0xf]
    %v3813 = vld [vmem:[%s3755 + $0xe4] sm:$0xf]
    %v3814 = vld [vmem:[%s3755 + $0xe8] sm:$0xf]
    %v3815 = vld [vmem:[%s3755 + $0xec] sm:$0xf]
    %v3816 = vld [vmem:[%s3755 + $0xf0] sm:$0xf]
    %v3817 = vld [vmem:[%s3755 + $0xf4] sm:$0xf]
    %v3818 = vld [vmem:[%s3755 + $0xf8] sm:$0xf]
    %v3819 = vld [vmem:[%s3755 + $0xfc] sm:$0xf]
    %v3820 = vld [vmem:[%s3755 + $0x100] sm:$0xf]
    %v3821 = vld [vmem:[%s3755 + $0x104] sm:$0xf]
    %v3822 = vld [vmem:[%s3755 + $0x108] sm:$0xf]
    %v3823 = vld [vmem:[%s3755 + $0x10c] sm:$0xf]
    %v3824 = vld [vmem:[%s3755 + $0x110] sm:$0xf]
    %v3825 = vld [vmem:[%s3755 + $0x114] sm:$0xf]
    %v3826 = vld [vmem:[%s3755 + $0x118] sm:$0xf]
    %v3827 = vld [vmem:[%s3755 + $0x11c] sm:$0xf]
    %v3830 = vrot.slane %v3751, 6
    %v3831 = vrot.slane %v3752, 6
    %v3832 = vsel %vm900, %v3830, %v3831
    %v3836 = vsel %vm900, %v3831, %v3830
    %v3837 = vrot.slane %v3752, 2
    %v3839 = vrot.slane %v3751, 2
    %v3840 = vsel %vm910, %v3839, %v3837
    %v3843 = vsel %vm910, %v3837, %v3839
    %3844 = vrot.lane.b32.xlu0 %v3752, 64
    %v3845 = vpop.permute.xlu0 %3844
    %3846 = vrot.lane.b32.xlu0 %v3751, 64
    %v3847 = vpop.permute.xlu0 %3846
    %3851 = vrot.lane.b32.xlu0 %v3836, 64
    %v3852 = vpop.permute.xlu0 %3851
    %3853 = vrot.lane.b32.xlu0 %v3832, 64
    %v3854 = vpop.permute.xlu0 %3853
    %3858 = vrot.lane.b32.xlu0 %v3840, 64
    %v3859 = vpop.permute.xlu0 %3858
    %3860 = vrot.lane.b32.xlu0 %v3843, 64
    %v3861 = vpop.permute.xlu0 %3860
    %v3864 = vsel %vm936, %v3832, %v3845
    %v3865 = vsel %vm936, %v3836, %v3847
    %v3866 = vsel %vm936, %v3843, %v3852
    %v3867 = vsel %vm936, %v3840, %v3854
    %v3868 = vsel %vm936, %v3751, %v3859
    %v3869 = vsel %vm936, %v3752, %v3861
    %v3870 = vmul.f32 %v3864, %v693
    %v3871 = vmul.f32 %v3866, %v694
    %v3872 = vmul.f32 %v3868, %v695
    %v3873 = vmul.f32 %v3864, %v696
    %v3874 = vmul.f32 %v3843, %v697
    %v3875 = vmul.f32 %v3865, %v698
    %v3876 = vmul.f32 %v3867, %v699
    %v3877 = vmul.f32 %v3869, %v700
    %v3878 = vmul.f32 %v3865, %v701
    %v3879 = vmul.f32 %v3840, %v702
    %v3880 = vpack.c.bf16 %v3875, %v3870
    %v3881 = vpack.c.bf16 %v3876, %v3871
    %v3882 = vpack.c.bf16 %v3877, %v3872
    %v3883 = vpack.c.bf16 %v3878, %v3873
    %v3884 = vpack.c.bf16 %v3879, %v3874
    %v3957 = vunpack.c.l.b16 %v3756
    %v3958 = vunpack.c.l.b16 %v3757
    %v3959 = vunpack.c.l.b16 %v3758
    %v3960 = vunpack.c.l.b16 %v3759
    %v3961 = vunpack.c.l.b16 %v3760
    %v3962 = vunpack.c.l.b16 %v3761
    %v3963 = vunpack.c.l.b16 %v3762
    %v3964 = vunpack.c.l.b16 %v3763
    %v3965 = vunpack.c.l.b16 %v3764
    %v3966 = vunpack.c.l.b16 %v3765
    %v3967 = vunpack.c.l.b16 %v3766
    %v3968 = vunpack.c.l.b16 %v3767
    %v3969 = vunpack.c.l.b16 %v3768
    %v3970 = vunpack.c.l.b16 %v3769
    %v3971 = vunpack.c.l.b16 %v3770
    %v3972 = vunpack.c.l.b16 %v3771
    %v3973 = vunpack.c.l.b16 %v3772
    %v3974 = vunpack.c.l.b16 %v3773
    %v3975 = vunpack.c.l.b16 %v3774
    %v3976 = vunpack.c.l.b16 %v3775
    %v3977 = vunpack.c.l.b16 %v3776
    %v3978 = vunpack.c.l.b16 %v3777
    %v3979 = vunpack.c.l.b16 %v3778
    %v3980 = vunpack.c.l.b16 %v3779
    %v3981 = vunpack.c.l.b16 %v3780
    %v3982 = vunpack.c.l.b16 %v3781
    %v3983 = vunpack.c.l.b16 %v3782
    %v3984 = vunpack.c.l.b16 %v3783
    %v3985 = vunpack.c.l.b16 %v3784
    %v3986 = vunpack.c.l.b16 %v3785
    %v3987 = vunpack.c.l.b16 %v3786
    %v3988 = vunpack.c.l.b16 %v3787
    %v3989 = vunpack.c.l.b16 %v3788
    %v3990 = vunpack.c.l.b16 %v3789
    %v3991 = vunpack.c.l.b16 %v3790
    %v3992 = vunpack.c.l.b16 %v3791
    %v3993 = vunpack.c.l.b16 %v3792
    %v3994 = vunpack.c.l.b16 %v3793
    %v3995 = vunpack.c.l.b16 %v3794
    %v3996 = vunpack.c.l.b16 %v3795
    %v3997 = vunpack.c.l.b16 %v3796
    %v3998 = vunpack.c.l.b16 %v3797
    %v3999 = vunpack.c.l.b16 %v3798
    %v4000 = vunpack.c.l.b16 %v3799
    %v4001 = vunpack.c.l.b16 %v3800
    %v4002 = vunpack.c.l.b16 %v3801
    %v4003 = vunpack.c.l.b16 %v3802
    %v4004 = vunpack.c.l.b16 %v3803
    %v4005 = vunpack.c.l.b16 %v3804
    %v4006 = vunpack.c.l.b16 %v3805
    %v4007 = vunpack.c.l.b16 %v3806
    %v4008 = vunpack.c.l.b16 %v3807
    %v4009 = vunpack.c.l.b16 %v3808
    %v4010 = vunpack.c.l.b16 %v3809
    %v4011 = vunpack.c.l.b16 %v3810
    %v4012 = vunpack.c.l.b16 %v3811
    %v4013 = vunpack.c.l.b16 %v3812
    %v4014 = vunpack.c.l.b16 %v3813
    %v4015 = vunpack.c.l.b16 %v3814
    %v4016 = vunpack.c.l.b16 %v3815
    %v4017 = vunpack.c.l.b16 %v3816
    %v4018 = vunpack.c.l.b16 %v3817
    %v4019 = vunpack.c.l.b16 %v3818
    %v4020 = vunpack.c.l.b16 %v3819
    %v4021 = vunpack.c.l.b16 %v3820
    %v4022 = vunpack.c.l.b16 %v3821
    %v4023 = vunpack.c.l.b16 %v3822
    %v4024 = vunpack.c.l.b16 %v3823
    %v4025 = vunpack.c.l.b16 %v3824
    %v4026 = vunpack.c.l.b16 %v3825
    %v4027 = vunpack.c.l.b16 %v3826
    %v4028 = vunpack.c.l.b16 %v3827
    %v4029 = vpack.c.b16 %v3958, %v3957
    %v4030 = vpack.c.b16 %v3960, %v3959
    %v4031 = vpack.c.b16 %v3962, %v3961
    %v4032 = vpack.c.b16 %v3964, %v3963
    %v4033 = vpack.c.b16 %v3966, %v3965
    %v4034 = vpack.c.b16 %v3968, %v3967
    %v4035 = vpack.c.b16 %v3970, %v3969
    %v4036 = vpack.c.b16 %v3972, %v3971
    %v4037 = vpack.c.b16 %v3974, %v3973
    %v4038 = vpack.c.b16 %v3976, %v3975
    %v4039 = vpack.c.b16 %v3978, %v3977
    %v4040 = vpack.c.b16 %v3980, %v3979
    %v4041 = vpack.c.b16 %v3982, %v3981
    %v4042 = vpack.c.b16 %v3984, %v3983
    %v4043 = vpack.c.b16 %v3986, %v3985
    %v4044 = vpack.c.b16 %v3988, %v3987
    %v4045 = vpack.c.b16 %v3990, %v3989
    %v4046 = vpack.c.b16 %v3992, %v3991
    %v4047 = vpack.c.b16 %v3994, %v3993
    %v4048 = vpack.c.b16 %v3996, %v3995
    %v4049 = vpack.c.b16 %v3998, %v3997
    %v4050 = vpack.c.b16 %v4000, %v3999
    %v4051 = vpack.c.b16 %v4002, %v4001
    %v4052 = vpack.c.b16 %v4004, %v4003
    %v4053 = vpack.c.b16 %v4006, %v4005
    %v4054 = vpack.c.b16 %v4008, %v4007
    %v4055 = vpack.c.b16 %v4010, %v4009
    %v4056 = vpack.c.b16 %v4012, %v4011
    %v4057 = vpack.c.b16 %v4014, %v4013
    %v4058 = vpack.c.b16 %v4016, %v4015
    %v4059 = vpack.c.b16 %v4018, %v4017
    %v4060 = vpack.c.b16 %v4020, %v4019
    %v4061 = vpack.c.b16 %v4022, %v4021
    %v4062 = vpack.c.b16 %v4024, %v4023
    %v4063 = vpack.c.b16 %v4026, %v4025
    %v4064 = vpack.c.b16 %v4028, %v4027
    %v4102 = vsel %vm936, %v3884, 0
    %4104 = vmatprep.subr.bf16.mxu0 0
    %4105 = vmatpush1.bf16.msra.mxu0 %v4029
    %4106 = vmatprep.subr.bf16.mxu0 0
    %4107 = vmatpush1.bf16.msra.mxu0 %v4030
    %4108 = vmatprep.subr.bf16.mxu0 0
    %4109 = vmatpush1.bf16.msra.mxu0 %v4031
    %4110 = vmatprep.subr.bf16.mxu0 0
    %4111 = vmatpush1.bf16.msra.mxu0 %v4032
    %4112 = vmatprep.subr.bf16.mxu0 0
    %4113 = vmatpush1.bf16.msra.mxu0 %v4033
    %4114 = vmatprep.subr.bf16.mxu0 0
    %4115 = vmatpush1.bf16.msra.mxu0 %v4034
    %4116 = vmatprep.subr.bf16.mxu0 0
    %4117 = vmatpush1.bf16.msra.mxu0 %v4035
    %4118 = vmatprep.subr.bf16.mxu0 0
    %4119 = vmatpush1.bf16.msra.mxu0 %v4036
    %4120 = vmatprep.subr.bf16.mxu0 0
    %4121 = vmatpush1.bf16.msra.mxu0 %v4037
    %4122 = vmatprep.subr.bf16.mxu0 0
    %4123 = vmatpush1.bf16.msra.mxu0 %v4038
    %4124 = vmatprep.subr.bf16.mxu0 0
    %4125 = vmatpush1.bf16.msra.mxu0 %v4039
    %4126 = vmatprep.subr.bf16.mxu0 0
    %4127 = vmatpush1.bf16.msra.mxu0 %v4040
    %4128 = vmatprep.subr.bf16.mxu0 0
    %4129 = vmatpush1.bf16.msra.mxu0 %v4041
    %4130 = vmatprep.subr.bf16.mxu0 0
    %4131 = vmatpush1.bf16.msra.mxu0 %v4042
    %4132 = vmatprep.subr.bf16.mxu0 0
    %4133 = vmatpush1.bf16.msra.mxu0 %v4043
    %4134 = vmatprep.subr.bf16.mxu0 0
    %4135 = vmatpush1.bf16.msra.mxu0 %v4044
    %4136 = vmatprep.mubr.bf16.mxu0 %v3881
    %4137 = vmatmul.mubr.bf16.gmra.mrb[0].mxu0 %v3880
    %v4138 = vpop.f32.mrb[0].mxu0
    %v4139 = vadd.f32 0.0, %v4138
    %v4140 = vpop.f32.mrb[0].mxu0
    %v4141 = vpop.f32.mrb[0].mxu0
    %v4142 = vadd.f32 0.0, %v4141
    %v4143 = vpop.f32.mrb[0].mxu0
    %4144 = vdwg.mxu0
    %4145 = vmatprep.subr.bf16.mxu0 0
    %4146 = vmatpush1.bf16.msra.mxu0 %v4045
    %4147 = vmatprep.subr.bf16.mxu0 0
    %4148 = vmatpush1.bf16.msra.mxu0 %v4046
    %4149 = vmatprep.subr.bf16.mxu0 0
    %4150 = vmatpush1.bf16.msra.mxu0 %v4047
    %4151 = vmatprep.subr.bf16.mxu0 0
    %4152 = vmatpush1.bf16.msra.mxu0 %v4048
    %4153 = vmatprep.subr.bf16.mxu0 0
    %4154 = vmatpush1.bf16.msra.mxu0 %v4049
    %4155 = vmatprep.subr.bf16.mxu0 0
    %4156 = vmatpush1.bf16.msra.mxu0 %v4050
    %4157 = vmatprep.subr.bf16.mxu0 0
    %4158 = vmatpush1.bf16.msra.mxu0 %v4051
    %4159 = vmatprep.subr.bf16.mxu0 0
    %4160 = vmatpush1.bf16.msra.mxu0 %v4052
    %4161 = vmatprep.subr.bf16.mxu0 0
    %4162 = vmatpush1.bf16.msra.mxu0 %v4053
    %4163 = vmatprep.subr.bf16.mxu0 0
    %4164 = vmatpush1.bf16.msra.mxu0 %v4054
    %4165 = vmatprep.subr.bf16.mxu0 0
    %4166 = vmatpush1.bf16.msra.mxu0 %v4055
    %4167 = vmatprep.subr.bf16.mxu0 0
    %4168 = vmatpush1.bf16.msra.mxu0 %v4056
    %4169 = vmatprep.subr.bf16.mxu0 0
    %4170 = vmatpush1.bf16.msra.mxu0 %v4057
    %4171 = vmatprep.subr.bf16.mxu0 0
    %4172 = vmatpush1.bf16.msra.mxu0 %v4058
    %4173 = vmatprep.subr.bf16.mxu0 0
    %4174 = vmatpush1.bf16.msra.mxu0 %v4059
    %4175 = vmatprep.subr.bf16.mxu0 0
    %4176 = vmatpush1.bf16.msra.mxu0 %v4060
    %4177 = vmatprep.mubr.bf16.mxu0 %v3883
    %4178 = vmatmul.mubr.bf16.gmra.mrb[0].mxu0 %v3882
    %v4179 = vpop.f32.mrb[0].mxu0
    %v4180 = vadd.f32 %v4139, %v4179
    %v4181 = vpop.f32.mrb[0].mxu0
    %v4182 = vpop.f32.mrb[0].mxu0
    %v4183 = vadd.f32 %v4142, %v4182
    %v4184 = vpop.f32.mrb[0].mxu0
    %4185 = vdwg.mxu0
    %4186 = vmatprep.subr.bf16.mxu0 0
    %4187 = vmatpush1.bf16.msra.mxu0 %v4061
    %4188 = vmatprep.subr.bf16.mxu0 0
    %4189 = vmatpush1.bf16.msra.mxu0 %v4062
    %4190 = vmatprep.subr.bf16.mxu0 0
    %4191 = vmatpush1.bf16.msra.mxu0 %v4063
    %4192 = vmatprep.subr.bf16.mxu0 0
    %4193 = vmatpush1.bf16.msra.mxu0 %v4064
    %4194 = vmatprep.subr.bf16.mxu0 0
    %4195 = vmatpush1.bf16.msra.mxu0 0
    %4196 = vmatprep.subr.bf16.mxu0 0
    %4197 = vmatpush1.bf16.msra.mxu0 0
    %4198 = vmatprep.subr.bf16.mxu0 0
    %4199 = vmatpush1.bf16.msra.mxu0 0
    %4200 = vmatprep.subr.bf16.mxu0 0
    %4201 = vmatpush1.bf16.msra.mxu0 0
    %4202 = vmatprep.subr.bf16.mxu0 0
    %4203 = vmatpush1.bf16.msra.mxu0 0
    %4204 = vmatprep.subr.bf16.mxu0 0
    %4205 = vmatpush1.bf16.msra.mxu0 0
    %4206 = vmatprep.subr.bf16.mxu0 0
    %4207 = vmatpush1.bf16.msra.mxu0 0
    %4208 = vmatprep.subr.bf16.mxu0 0
    %4209 = vmatpush1.bf16.msra.mxu0 0
    %4210 = vmatprep.subr.bf16.mxu0 0
    %4211 = vmatpush1.bf16.msra.mxu0 0
    %4212 = vmatprep.subr.bf16.mxu0 0
    %4213 = vmatpush1.bf16.msra.mxu0 0
    %4214 = vmatprep.subr.bf16.mxu0 0
    %4215 = vmatpush1.bf16.msra.mxu0 0
    %4216 = vmatprep.subr.bf16.mxu0 0
    %4217 = vmatpush1.bf16.msra.mxu0 0
    %4218 = vmatprep.mubr.bf16.mxu0 0
    %4219 = vmatmul.mubr.bf16.gmra.mrb[0].mxu0 %v4102
    %v4220 = vpop.f32.mrb[0].mxu0
    %v4221 = vadd.f32 %v4180, %v4220
    %v4222 = vpop.f32.mrb[0].mxu0
    %v4223 = vpop.f32.mrb[0].mxu0
    %v4224 = vadd.f32 %v4183, %v4223
    %v4225 = vpop.f32.mrb[0].mxu0
    %4226 = vdwg.mxu0
    %v4227 = vlaneseq
    %v4228 = vshrl.u32 %v4227, 7
    %v4229 = vsub.s32 0, %v4228
    %v4230 = vrot.slane %v3754, %v4229
    %v4231 = vmul.f32 %v4221, %v4230
    %v4232 = vmul.f32 %v4224, %v4230
    %v4233 = vlaneseq
    %v4234 = vshrl.u32 %v4233, 7
    %v4235 = vsub.s32 1, %v4234
    %v4236 = vrot.slane %v3754, %v4235
    %v4237 = vadd.f32 %v4231, %v4236
    %v4238 = vadd.f32 %v4232, %v4236
    %v4239 = vmax.f32 %v4237, 0.0
    %v4240 = vmax.f32 %v4238, 0.0
    %s4241 = scalar_lea.vmem %s7, 864
    %v4242 = vld [vmem:[%s4241] sm:$0xf]
    %v4243 = vld [vmem:[%s4241 + $0x4] sm:$0xf]
    %v4244 = vld [vmem:[%s4241 + $0x8] sm:$0xf]
    %v4245 = vld [vmem:[%s4241 + $0xc] sm:$0xf]
    %v4246 = vld [vmem:[%s4241 + $0x10] sm:$0xf]
    %v4247 = vld [vmem:[%s4241 + $0x14] sm:$0xf]
    %v4248 = vld [vmem:[%s4241 + $0x18] sm:$0xf]
    %v4249 = vld [vmem:[%s4241 + $0x1c] sm:$0xf]
    %v4250 = vld [vmem:[%s4241 + $0x20] sm:$0xf]
    %v4251 = vld [vmem:[%s4241 + $0x24] sm:$0xf]
    %v4252 = vld [vmem:[%s4241 + $0x28] sm:$0xf]
    %v4253 = vld [vmem:[%s4241 + $0x2c] sm:$0xf]
    %v4254 = vld [vmem:[%s4241 + $0x30] sm:$0xf]
    %v4255 = vld [vmem:[%s4241 + $0x34] sm:$0xf]
    %v4256 = vld [vmem:[%s4241 + $0x38] sm:$0xf]
    %v4257 = vld [vmem:[%s4241 + $0x3c] sm:$0xf]
    %v4258 = vld [vmem:[%s4241 + $0x40] sm:$0xf]
    %v4259 = vld [vmem:[%s4241 + $0x44] sm:$0xf]
    %v4260 = vld [vmem:[%s4241 + $0x48] sm:$0xf]
    %v4261 = vld [vmem:[%s4241 + $0x4c] sm:$0xf]
    %v4262 = vld [vmem:[%s4241 + $0x50] sm:$0xf]
    %v4263 = vld [vmem:[%s4241 + $0x54] sm:$0xf]
    %v4264 = vld [vmem:[%s4241 + $0x58] sm:$0xf]
    %v4265 = vld [vmem:[%s4241 + $0x5c] sm:$0xf]
    %v4266 = vld [vmem:[%s4241 + $0x60] sm:$0xf]
    %v4267 = vld [vmem:[%s4241 + $0x64] sm:$0xf]
    %v4268 = vld [vmem:[%s4241 + $0x68] sm:$0xf]
    %v4269 = vld [vmem:[%s4241 + $0x6c] sm:$0xf]
    %v4270 = vld [vmem:[%s4241 + $0x70] sm:$0xf]
    %v4271 = vld [vmem:[%s4241 + $0x74] sm:$0xf]
    %v4272 = vld [vmem:[%s4241 + $0x78] sm:$0xf]
    %v4273 = vld [vmem:[%s4241 + $0x7c] sm:$0xf]
    %v4274 = vld [vmem:[%s4241 + $0x80] sm:$0xf]
    %v4275 = vld [vmem:[%s4241 + $0x84] sm:$0xf]
    %v4276 = vld [vmem:[%s4241 + $0x88] sm:$0xf]
    %v4277 = vld [vmem:[%s4241 + $0x8c] sm:$0xf]
    %v4278 = vld [vmem:[%s4241 + $0x90] sm:$0xf]
    %v4279 = vld [vmem:[%s4241 + $0x94] sm:$0xf]
    %v4280 = vld [vmem:[%s4241 + $0x98] sm:$0xf]
    %v4281 = vld [vmem:[%s4241 + $0x9c] sm:$0xf]
    %v4282 = vld [vmem:[%s4241 + $0xa0] sm:$0xf]
    %v4283 = vld [vmem:[%s4241 + $0xa4] sm:$0xf]
    %v4284 = vld [vmem:[%s4241 + $0xa8] sm:$0xf]
    %v4285 = vld [vmem:[%s4241 + $0xac] sm:$0xf]
    %v4286 = vld [vmem:[%s4241 + $0xb0] sm:$0xf]
    %v4287 = vld [vmem:[%s4241 + $0xb4] sm:$0xf]
    %v4288 = vld [vmem:[%s4241 + $0xb8] sm:$0xf]
    %v4289 = vld [vmem:[%s4241 + $0xbc] sm:$0xf]
    %v4290 = vld [vmem:[%s4241 + $0xc0] sm:$0xf]
    %v4291 = vld [vmem:[%s4241 + $0xc4] sm:$0xf]
    %v4292 = vld [vmem:[%s4241 + $0xc8] sm:$0xf]
    %v4293 = vld [vmem:[%s4241 + $0xcc] sm:$0xf]
    %v4294 = vld [vmem:[%s4241 + $0xd0] sm:$0xf]
    %v4295 = vld [vmem:[%s4241 + $0xd4] sm:$0xf]
    %v4296 = vld [vmem:[%s4241 + $0xd8] sm:$0xf]
    %v4297 = vld [vmem:[%s4241 + $0xdc] sm:$0xf]
    %v4298 = vld [vmem:[%s4241 + $0xe0] sm:$0xf]
    %v4299 = vld [vmem:[%s4241 + $0xe4] sm:$0xf]
    %v4300 = vld [vmem:[%s4241 + $0xe8] sm:$0xf]
    %v4301 = vld [vmem:[%s4241 + $0xec] sm:$0xf]
    %v4302 = vld [vmem:[%s4241 + $0xf0] sm:$0xf]
    %v4303 = vld [vmem:[%s4241 + $0xf4] sm:$0xf]
    %v4304 = vld [vmem:[%s4241 + $0xf8] sm:$0xf]
    %v4305 = vld [vmem:[%s4241 + $0xfc] sm:$0xf]
    %v4306 = vld [vmem:[%s4241 + $0x100] sm:$0xf]
    %v4307 = vld [vmem:[%s4241 + $0x104] sm:$0xf]
    %v4308 = vld [vmem:[%s4241 + $0x108] sm:$0xf]
    %v4309 = vld [vmem:[%s4241 + $0x10c] sm:$0xf]
    %v4310 = vld [vmem:[%s4241 + $0x110] sm:$0xf]
    %v4311 = vld [vmem:[%s4241 + $0x114] sm:$0xf]
    %v4312 = vld [vmem:[%s4241 + $0x118] sm:$0xf]
    %v4313 = vld [vmem:[%s4241 + $0x11c] sm:$0xf]
    %v4316 = vrot.slane %v4239, 6
    %v4317 = vrot.slane %v4240, 6
    %v4318 = vsel %vm900, %v4316, %v4317
    %v4322 = vsel %vm900, %v4317, %v4316
    %v4323 = vrot.slane %v4240, 2
    %v4325 = vrot.slane %v4239, 2
    %v4326 = vsel %vm910, %v4325, %v4323
    %v4329 = vsel %vm910, %v4323, %v4325
    %4330 = vrot.lane.b32.xlu0 %v4240, 64
    %v4331 = vpop.permute.xlu0 %4330
    %4332 = vrot.lane.b32.xlu0 %v4239, 64
    %v4333 = vpop.permute.xlu0 %4332
    %4337 = vrot.lane.b32.xlu0 %v4322, 64
    %v4338 = vpop.permute.xlu0 %4337
    %4339 = vrot.lane.b32.xlu0 %v4318, 64
    %v4340 = vpop.permute.xlu0 %4339
    %4344 = vrot.lane.b32.xlu0 %v4326, 64
    %v4345 = vpop.permute.xlu0 %4344
    %4346 = vrot.lane.b32.xlu0 %v4329, 64
    %v4347 = vpop.permute.xlu0 %4346
    %v4350 = vsel %vm936, %v4318, %v4331
    %v4351 = vsel %vm936, %v4322, %v4333
    %v4352 = vsel %vm936, %v4329, %v4338
    %v4353 = vsel %vm936, %v4326, %v4340
    %v4354 = vsel %vm936, %v4239, %v4345
    %v4355 = vsel %vm936, %v4240, %v4347
    %v4356 = vmul.f32 %v4350, %v693
    %v4357 = vmul.f32 %v4352, %v694
    %v4358 = vmul.f32 %v4354, %v695
    %v4359 = vmul.f32 %v4350, %v696
    %v4360 = vmul.f32 %v4329, %v697
    %v4361 = vmul.f32 %v4351, %v698
    %v4362 = vmul.f32 %v4353, %v699
    %v4363 = vmul.f32 %v4355, %v700
    %v4364 = vmul.f32 %v4351, %v701
    %v4365 = vmul.f32 %v4326, %v702
    %v4366 = vpack.c.bf16 %v4361, %v4356
    %v4367 = vpack.c.bf16 %v4362, %v4357
    %v4368 = vpack.c.bf16 %v4363, %v4358
    %v4369 = vpack.c.bf16 %v4364, %v4359
    %v4370 = vpack.c.bf16 %v4365, %v4360
    %v4443 = vunpack.c.l.b16 %v4242
    %v4444 = vunpack.c.l.b16 %v4243
    %v4445 = vunpack.c.l.b16 %v4244
    %v4446 = vunpack.c.l.b16 %v4245
    %v4447 = vunpack.c.l.b16 %v4246
    %v4448 = vunpack.c.l.b16 %v4247
    %v4449 = vunpack.c.l.b16 %v4248
    %v4450 = vunpack.c.l.b16 %v4249
    %v4451 = vunpack.c.l.b16 %v4250
    %v4452 = vunpack.c.l.b16 %v4251
    %v4453 = vunpack.c.l.b16 %v4252
    %v4454 = vunpack.c.l.b16 %v4253
    %v4455 = vunpack.c.l.b16 %v4254
    %v4456 = vunpack.c.l.b16 %v4255
    %v4457 = vunpack.c.l.b16 %v4256
    %v4458 = vunpack.c.l.b16 %v4257
    %v4459 = vunpack.c.l.b16 %v4258
    %v4460 = vunpack.c.l.b16 %v4259
    %v4461 = vunpack.c.l.b16 %v4260
    %v4462 = vunpack.c.l.b16 %v4261
    %v4463 = vunpack.c.l.b16 %v4262
    %v4464 = vunpack.c.l.b16 %v4263
    %v4465 = vunpack.c.l.b16 %v4264
    %v4466 = vunpack.c.l.b16 %v4265
    %v4467 = vunpack.c.l.b16 %v4266
    %v4468 = vunpack.c.l.b16 %v4267
    %v4469 = vunpack.c.l.b16 %v4268
    %v4470 = vunpack.c.l.b16 %v4269
    %v4471 = vunpack.c.l.b16 %v4270
    %v4472 = vunpack.c.l.b16 %v4271
    %v4473 = vunpack.c.l.b16 %v4272
    %v4474 = vunpack.c.l.b16 %v4273
    %v4475 = vunpack.c.l.b16 %v4274
    %v4476 = vunpack.c.l.b16 %v4275
    %v4477 = vunpack.c.l.b16 %v4276
    %v4478 = vunpack.c.l.b16 %v4277
    %v4479 = vunpack.c.l.b16 %v4278
    %v4480 = vunpack.c.l.b16 %v4279
    %v4481 = vunpack.c.l.b16 %v4280
    %v4482 = vunpack.c.l.b16 %v4281
    %v4483 = vunpack.c.l.b16 %v4282
    %v4484 = vunpack.c.l.b16 %v4283
    %v4485 = vunpack.c.l.b16 %v4284
    %v4486 = vunpack.c.l.b16 %v4285
    %v4487 = vunpack.c.l.b16 %v4286
    %v4488 = vunpack.c.l.b16 %v4287
    %v4489 = vunpack.c.l.b16 %v4288
    %v4490 = vunpack.c.l.b16 %v4289
    %v4491 = vunpack.c.l.b16 %v4290
    %v4492 = vunpack.c.l.b16 %v4291
    %v4493 = vunpack.c.l.b16 %v4292
    %v4494 = vunpack.c.l.b16 %v4293
    %v4495 = vunpack.c.l.b16 %v4294
    %v4496 = vunpack.c.l.b16 %v4295
    %v4497 = vunpack.c.l.b16 %v4296
    %v4498 = vunpack.c.l.b16 %v4297
    %v4499 = vunpack.c.l.b16 %v4298
    %v4500 = vunpack.c.l.b16 %v4299
    %v4501 = vunpack.c.l.b16 %v4300
    %v4502 = vunpack.c.l.b16 %v4301
    %v4503 = vunpack.c.l.b16 %v4302
    %v4504 = vunpack.c.l.b16 %v4303
    %v4505 = vunpack.c.l.b16 %v4304
    %v4506 = vunpack.c.l.b16 %v4305
    %v4507 = vunpack.c.l.b16 %v4306
    %v4508 = vunpack.c.l.b16 %v4307
    %v4509 = vunpack.c.l.b16 %v4308
    %v4510 = vunpack.c.l.b16 %v4309
    %v4511 = vunpack.c.l.b16 %v4310
    %v4512 = vunpack.c.l.b16 %v4311
    %v4513 = vunpack.c.l.b16 %v4312
    %v4514 = vunpack.c.l.b16 %v4313
    %v4515 = vpack.c.b16 %v4444, %v4443
    %v4516 = vpack.c.b16 %v4446, %v4445
    %v4517 = vpack.c.b16 %v4448, %v4447
    %v4518 = vpack.c.b16 %v4450, %v4449
    %v4519 = vpack.c.b16 %v4452, %v4451
    %v4520 = vpack.c.b16 %v4454, %v4453
    %v4521 = vpack.c.b16 %v4456, %v4455
    %v4522 = vpack.c.b16 %v4458, %v4457
    %v4523 = vpack.c.b16 %v4460, %v4459
    %v4524 = vpack.c.b16 %v4462, %v4461
    %v4525 = vpack.c.b16 %v4464, %v4463
    %v4526 = vpack.c.b16 %v4466, %v4465
    %v4527 = vpack.c.b16 %v4468, %v4467
    %v4528 = vpack.c.b16 %v4470, %v4469
    %v4529 = vpack.c.b16 %v4472, %v4471
    %v4530 = vpack.c.b16 %v4474, %v4473
    %v4531 = vpack.c.b16 %v4476, %v4475
    %v4532 = vpack.c.b16 %v4478, %v4477
    %v4533 = vpack.c.b16 %v4480, %v4479
    %v4534 = vpack.c.b16 %v4482, %v4481
    %v4535 = vpack.c.b16 %v4484, %v4483
    %v4536 = vpack.c.b16 %v4486, %v4485
    %v4537 = vpack.c.b16 %v4488, %v4487
    %v4538 = vpack.c.b16 %v4490, %v4489
    %v4539 = vpack.c.b16 %v4492, %v4491
    %v4540 = vpack.c.b16 %v4494, %v4493
    %v4541 = vpack.c.b16 %v4496, %v4495
    %v4542 = vpack.c.b16 %v4498, %v4497
    %v4543 = vpack.c.b16 %v4500, %v4499
    %v4544 = vpack.c.b16 %v4502, %v4501
    %v4545 = vpack.c.b16 %v4504, %v4503
    %v4546 = vpack.c.b16 %v4506, %v4505
    %v4547 = vpack.c.b16 %v4508, %v4507
    %v4548 = vpack.c.b16 %v4510, %v4509
    %v4549 = vpack.c.b16 %v4512, %v4511
    %v4550 = vpack.c.b16 %v4514, %v4513
    %v4588 = vsel %vm936, %v4370, 0
    %4590 = vmatprep.subr.bf16.mxu0 0
    %4591 = vmatpush1.bf16.msra.mxu0 %v4515
    %4592 = vmatprep.subr.bf16.mxu0 0
    %4593 = vmatpush1.bf16.msra.mxu0 %v4516
    %4594 = vmatprep.subr.bf16.mxu0 0
    %4595 = vmatpush1.bf16.msra.mxu0 %v4517
    %4596 = vmatprep.subr.bf16.mxu0 0
    %4597 = vmatpush1.bf16.msra.mxu0 %v4518
    %4598 = vmatprep.subr.bf16.mxu0 0
    %4599 = vmatpush1.bf16.msra.mxu0 %v4519
    %4600 = vmatprep.subr.bf16.mxu0 0
    %4601 = vmatpush1.bf16.msra.mxu0 %v4520
    %4602 = vmatprep.subr.bf16.mxu0 0
    %4603 = vmatpush1.bf16.msra.mxu0 %v4521
    %4604 = vmatprep.subr.bf16.mxu0 0
    %4605 = vmatpush1.bf16.msra.mxu0 %v4522
    %4606 = vmatprep.subr.bf16.mxu0 0
    %4607 = vmatpush1.bf16.msra.mxu0 %v4523
    %4608 = vmatprep.subr.bf16.mxu0 0
    %4609 = vmatpush1.bf16.msra.mxu0 %v4524
    %4610 = vmatprep.subr.bf16.mxu0 0
    %4611 = vmatpush1.bf16.msra.mxu0 %v4525
    %4612 = vmatprep.subr.bf16.mxu0 0
    %4613 = vmatpush1.bf16.msra.mxu0 %v4526
    %4614 = vmatprep.subr.bf16.mxu0 0
    %4615 = vmatpush1.bf16.msra.mxu0 %v4527
    %4616 = vmatprep.subr.bf16.mxu0 0
    %4617 = vmatpush1.bf16.msra.mxu0 %v4528
    %4618 = vmatprep.subr.bf16.mxu0 0
    %4619 = vmatpush1.bf16.msra.mxu0 %v4529
    %4620 = vmatprep.subr.bf16.mxu0 0
    %4621 = vmatpush1.bf16.msra.mxu0 %v4530
    %4622 = vmatprep.mubr.bf16.mxu0 %v4367
    %4623 = vmatmul.mubr.bf16.gmra.mrb[0].mxu0 %v4366
    %v4624 = vpop.f32.mrb[0].mxu0
    %v4625 = vadd.f32 0.0, %v4624
    %v4626 = vpop.f32.mrb[0].mxu0
    %v4627 = vpop.f32.mrb[0].mxu0
    %v4628 = vadd.f32 0.0, %v4627
    %v4629 = vpop.f32.mrb[0].mxu0
    %4630 = vdwg.mxu0
    %4631 = vmatprep.subr.bf16.mxu0 0
    %4632 = vmatpush1.bf16.msra.mxu0 %v4531
    %4633 = vmatprep.subr.bf16.mxu0 0
    %4634 = vmatpush1.bf16.msra.mxu0 %v4532
    %4635 = vmatprep.subr.bf16.mxu0 0
    %4636 = vmatpush1.bf16.msra.mxu0 %v4533
    %4637 = vmatprep.subr.bf16.mxu0 0
    %4638 = vmatpush1.bf16.msra.mxu0 %v4534
    %4639 = vmatprep.subr.bf16.mxu0 0
    %4640 = vmatpush1.bf16.msra.mxu0 %v4535
    %4641 = vmatprep.subr.bf16.mxu0 0
    %4642 = vmatpush1.bf16.msra.mxu0 %v4536
    %4643 = vmatprep.subr.bf16.mxu0 0
    %4644 = vmatpush1.bf16.msra.mxu0 %v4537
    %4645 = vmatprep.subr.bf16.mxu0 0
    %4646 = vmatpush1.bf16.msra.mxu0 %v4538
    %4647 = vmatprep.subr.bf16.mxu0 0
    %4648 = vmatpush1.bf16.msra.mxu0 %v4539
    %4649 = vmatprep.subr.bf16.mxu0 0
    %4650 = vmatpush1.bf16.msra.mxu0 %v4540
    %4651 = vmatprep.subr.bf16.mxu0 0
    %4652 = vmatpush1.bf16.msra.mxu0 %v4541
    %4653 = vmatprep.subr.bf16.mxu0 0
    %4654 = vmatpush1.bf16.msra.mxu0 %v4542
    %4655 = vmatprep.subr.bf16.mxu0 0
    %4656 = vmatpush1.bf16.msra.mxu0 %v4543
    %4657 = vmatprep.subr.bf16.mxu0 0
    %4658 = vmatpush1.bf16.msra.mxu0 %v4544
    %4659 = vmatprep.subr.bf16.mxu0 0
    %4660 = vmatpush1.bf16.msra.mxu0 %v4545
    %4661 = vmatprep.subr.bf16.mxu0 0
    %4662 = vmatpush1.bf16.msra.mxu0 %v4546
    %4663 = vmatprep.mubr.bf16.mxu0 %v4369
    %4664 = vmatmul.mubr.bf16.gmra.mrb[0].mxu0 %v4368
    %v4665 = vpop.f32.mrb[0].mxu0
    %v4666 = vadd.f32 %v4625, %v4665
    %v4667 = vpop.f32.mrb[0].mxu0
    %v4668 = vpop.f32.mrb[0].mxu0
    %v4669 = vadd.f32 %v4628, %v4668
    %v4670 = vpop.f32.mrb[0].mxu0
    %4671 = vdwg.mxu0
    %4672 = vmatprep.subr.bf16.mxu0 0
    %4673 = vmatpush1.bf16.msra.mxu0 %v4547
    %4674 = vmatprep.subr.bf16.mxu0 0
    %4675 = vmatpush1.bf16.msra.mxu0 %v4548
    %4676 = vmatprep.subr.bf16.mxu0 0
    %4677 = vmatpush1.bf16.msra.mxu0 %v4549
    %4678 = vmatprep.subr.bf16.mxu0 0
    %4679 = vmatpush1.bf16.msra.mxu0 %v4550
    %4680 = vmatprep.subr.bf16.mxu0 0
    %4681 = vmatpush1.bf16.msra.mxu0 0
    %4682 = vmatprep.subr.bf16.mxu0 0
    %4683 = vmatpush1.bf16.msra.mxu0 0
    %4684 = vmatprep.subr.bf16.mxu0 0
    %4685 = vmatpush1.bf16.msra.mxu0 0
    %4686 = vmatprep.subr.bf16.mxu0 0
    %4687 = vmatpush1.bf16.msra.mxu0 0
    %4688 = vmatprep.subr.bf16.mxu0 0
    %4689 = vmatpush1.bf16.msra.mxu0 0
    %4690 = vmatprep.subr.bf16.mxu0 0
    %4691 = vmatpush1.bf16.msra.mxu0 0
    %4692 = vmatprep.subr.bf16.mxu0 0
    %4693 = vmatpush1.bf16.msra.mxu0 0
    %4694 = vmatprep.subr.bf16.mxu0 0
    %4695 = vmatpush1.bf16.msra.mxu0 0
    %4696 = vmatprep.subr.bf16.mxu0 0
    %4697 = vmatpush1.bf16.msra.mxu0 0
    %4698 = vmatprep.subr.bf16.mxu0 0
    %4699 = vmatpush1.bf16.msra.mxu0 0
    %4700 = vmatprep.subr.bf16.mxu0 0
    %4701 = vmatpush1.bf16.msra.mxu0 0
    %4702 = vmatprep.subr.bf16.mxu0 0
    %4703 = vmatpush1.bf16.msra.mxu0 0
    %4704 = vmatprep.mubr.bf16.mxu0 0
    %4705 = vmatmul.mubr.bf16.gmra.mrb[0].mxu0 %v4588
    %v4706 = vpop.f32.mrb[0].mxu0
    %v4707 = vadd.f32 %v4666, %v4706
    %v4708 = vpop.f32.mrb[0].mxu0
    %v4709 = vpop.f32.mrb[0].mxu0
    %v4710 = vadd.f32 %v4669, %v4709
    %v4711 = vpop.f32.mrb[0].mxu0
    %4712 = vdwg.mxu0
    %v4713 = vlaneseq
    %v4714 = vshrl.u32 %v4713, 7
    %v4715 = vsub.s32 2, %v4714
    %v4716 = vrot.slane %v3754, %v4715
    %v4717 = vmul.f32 %v4707, %v4716
    %v4718 = vmul.f32 %v4710, %v4716
    %v4719 = vlaneseq
    %v4720 = vshrl.u32 %v4719, 7
    %v4721 = vsub.s32 3, %v4720
    %v4722 = vrot.slane %v3754, %v4721
    %v4723 = vadd.f32 %v4717, %v4722
    %v4724 = vadd.f32 %v4718, %v4722
    %v4725 = vadd.f32 %v4723, %v3751
    %v4726 = vadd.f32 %v4724, %v3752
    %v4727 = vmax.f32 %v4725, 0.0
    %v4728 = vmax.f32 %v4726, 0.0
    %s4729 = scalar_lea.vmem %s8, 16
    %v4730 = vld [vmem:[%s4729] sm:$0xf]
    %s4731 = scalar_lea.vmem [#allocation7], 1152
    %v4732 = vld [vmem:[%s4731] sm:$0xf]
    %v4733 = vld [vmem:[%s4731 + $0x4] sm:$0xf]
    %v4734 = vld [vmem:[%s4731 + $0x8] sm:$0xf]
    %v4735 = vld [vmem:[%s4731 + $0xc] sm:$0xf]
    %v4736 = vld [vmem:[%s4731 + $0x10] sm:$0xf]
    %v4737 = vld [vmem:[%s4731 + $0x14] sm:$0xf]
    %v4738 = vld [vmem:[%s4731 + $0x18] sm:$0xf]
    %v4739 = vld [vmem:[%s4731 + $0x1c] sm:$0xf]
    %v4740 = vld [vmem:[%s4731 + $0x20] sm:$0xf]
    %v4741 = vld [vmem:[%s4731 + $0x24] sm:$0xf]
    %v4742 = vld [vmem:[%s4731 + $0x28] sm:$0xf]
    %v4743 = vld [vmem:[%s4731 + $0x2c] sm:$0xf]
    %v4744 = vld [vmem:[%s4731 + $0x30] sm:$0xf]
    %v4745 = vld [vmem:[%s4731 + $0x34] sm:$0xf]
    %v4746 = vld [vmem:[%s4731 + $0x38] sm:$0xf]
    %v4747 = vld [vmem:[%s4731 + $0x3c] sm:$0xf]
    %v4748 = vld [vmem:[%s4731 + $0x40] sm:$0xf]
    %v4749 = vld [vmem:[%s4731 + $0x44] sm:$0xf]
    %v4750 = vld [vmem:[%s4731 + $0x48] sm:$0xf]
    %v4751 = vld [vmem:[%s4731 + $0x4c] sm:$0xf]
    %v4752 = vld [vmem:[%s4731 + $0x50] sm:$0xf]
    %v4753 = vld [vmem:[%s4731 + $0x54] sm:$0xf]
    %v4754 = vld [vmem:[%s4731 + $0x58] sm:$0xf]
    %v4755 = vld [vmem:[%s4731 + $0x5c] sm:$0xf]
    %v4756 = vld [vmem:[%s4731 + $0x60] sm:$0xf]
    %v4757 = vld [vmem:[%s4731 + $0x64] sm:$0xf]
    %v4758 = vld [vmem:[%s4731 + $0x68] sm:$0xf]
    %v4759 = vld [vmem:[%s4731 + $0x6c] sm:$0xf]
    %v4760 = vld [vmem:[%s4731 + $0x70] sm:$0xf]
    %v4761 = vld [vmem:[%s4731 + $0x74] sm:$0xf]
    %v4762 = vld [vmem:[%s4731 + $0x78] sm:$0xf]
    %v4763 = vld [vmem:[%s4731 + $0x7c] sm:$0xf]
    %v4764 = vld [vmem:[%s4731 + $0x80] sm:$0xf]
    %v4765 = vld [vmem:[%s4731 + $0x84] sm:$0xf]
    %v4766 = vld [vmem:[%s4731 + $0x88] sm:$0xf]
    %v4767 = vld [vmem:[%s4731 + $0x8c] sm:$0xf]
    %v4768 = vld [vmem:[%s4731 + $0x90] sm:$0xf]
    %v4769 = vld [vmem:[%s4731 + $0x94] sm:$0xf]
    %v4770 = vld [vmem:[%s4731 + $0x98] sm:$0xf]
    %v4771 = vld [vmem:[%s4731 + $0x9c] sm:$0xf]
    %v4772 = vld [vmem:[%s4731 + $0xa0] sm:$0xf]
    %v4773 = vld [vmem:[%s4731 + $0xa4] sm:$0xf]
    %v4774 = vld [vmem:[%s4731 + $0xa8] sm:$0xf]
    %v4775 = vld [vmem:[%s4731 + $0xac] sm:$0xf]
    %v4776 = vld [vmem:[%s4731 + $0xb0] sm:$0xf]
    %v4777 = vld [vmem:[%s4731 + $0xb4] sm:$0xf]
    %v4778 = vld [vmem:[%s4731 + $0xb8] sm:$0xf]
    %v4779 = vld [vmem:[%s4731 + $0xbc] sm:$0xf]
    %v4780 = vld [vmem:[%s4731 + $0xc0] sm:$0xf]
    %v4781 = vld [vmem:[%s4731 + $0xc4] sm:$0xf]
    %v4782 = vld [vmem:[%s4731 + $0xc8] sm:$0xf]
    %v4783 = vld [vmem:[%s4731 + $0xcc] sm:$0xf]
    %v4784 = vld [vmem:[%s4731 + $0xd0] sm:$0xf]
    %v4785 = vld [vmem:[%s4731 + $0xd4] sm:$0xf]
    %v4786 = vld [vmem:[%s4731 + $0xd8] sm:$0xf]
    %v4787 = vld [vmem:[%s4731 + $0xdc] sm:$0xf]
    %v4788 = vld [vmem:[%s4731 + $0xe0] sm:$0xf]
    %v4789 = vld [vmem:[%s4731 + $0xe4] sm:$0xf]
    %v4790 = vld [vmem:[%s4731 + $0xe8] sm:$0xf]
    %v4791 = vld [vmem:[%s4731 + $0xec] sm:$0xf]
    %v4792 = vld [vmem:[%s4731 + $0xf0] sm:$0xf]
    %v4793 = vld [vmem:[%s4731 + $0xf4] sm:$0xf]
    %v4794 = vld [vmem:[%s4731 + $0xf8] sm:$0xf]
    %v4795 = vld [vmem:[%s4731 + $0xfc] sm:$0xf]
    %v4796 = vld [vmem:[%s4731 + $0x100] sm:$0xf]
    %v4797 = vld [vmem:[%s4731 + $0x104] sm:$0xf]
    %v4798 = vld [vmem:[%s4731 + $0x108] sm:$0xf]
    %v4799 = vld [vmem:[%s4731 + $0x10c] sm:$0xf]
    %v4800 = vld [vmem:[%s4731 + $0x110] sm:$0xf]
    %v4801 = vld [vmem:[%s4731 + $0x114] sm:$0xf]
    %v4802 = vld [vmem:[%s4731 + $0x118] sm:$0xf]
    %v4803 = vld [vmem:[%s4731 + $0x11c] sm:$0xf]
    %v4806 = vrot.slane %v4727, 6
    %v4807 = vrot.slane %v4728, 6
    %v4808 = vsel %vm900, %v4806, %v4807
    %v4812 = vsel %vm900, %v4807, %v4806
    %v4813 = vrot.slane %v4728, 2
    %v4815 = vrot.slane %v4727, 2
    %v4816 = vsel %vm910, %v4815, %v4813
    %v4819 = vsel %vm910, %v4813, %v4815
    %4820 = vrot.lane.b32.xlu0 %v4728, 64
    %v4821 = vpop.permute.xlu0 %4820
    %4822 = vrot.lane.b32.xlu0 %v4727, 64
    %v4823 = vpop.permute.xlu0 %4822
    %4827 = vrot.lane.b32.xlu0 %v4812, 64
    %v4828 = vpop.permute.xlu0 %4827
    %4829 = vrot.lane.b32.xlu0 %v4808, 64
    %v4830 = vpop.permute.xlu0 %4829
    %4834 = vrot.lane.b32.xlu0 %v4816, 64
    %v4835 = vpop.permute.xlu0 %4834
    %4836 = vrot.lane.b32.xlu0 %v4819, 64
    %v4837 = vpop.permute.xlu0 %4836
    %v4840 = vsel %vm936, %v4808, %v4821
    %v4841 = vsel %vm936, %v4812, %v4823
    %v4842 = vsel %vm936, %v4819, %v4828
    %v4843 = vsel %vm936, %v4816, %v4830
    %v4844 = vsel %vm936, %v4727, %v4835
    %v4845 = vsel %vm936, %v4728, %v4837
    %v4846 = vmul.f32 %v4840, %v693
    %v4847 = vmul.f32 %v4842, %v694
    %v4848 = vmul.f32 %v4844, %v695
    %v4849 = vmul.f32 %v4840, %v696
    %v4850 = vmul.f32 %v4819, %v697
    %v4851 = vmul.f32 %v4841, %v698
    %v4852 = vmul.f32 %v4843, %v699
    %v4853 = vmul.f32 %v4845, %v700
    %v4854 = vmul.f32 %v4841, %v701
    %v4855 = vmul.f32 %v4816, %v702
    %v4856 = vpack.c.bf16 %v4851, %v4846
    %v4857 = vpack.c.bf16 %v4852, %v4847
    %v4858 = vpack.c.bf16 %v4853, %v4848
    %v4859 = vpack.c.bf16 %v4854, %v4849
    %v4860 = vpack.c.bf16 %v4855, %v4850
    %v4933 = vunpack.c.l.b16 %v4732
    %v4934 = vunpack.c.l.b16 %v4733
    %v4935 = vunpack.c.l.b16 %v4734
    %v4936 = vunpack.c.l.b16 %v4735
    %v4937 = vunpack.c.l.b16 %v4736
    %v4938 = vunpack.c.l.b16 %v4737
    %v4939 = vunpack.c.l.b16 %v4738
    %v4940 = vunpack.c.l.b16 %v4739
    %v4941 = vunpack.c.l.b16 %v4740
    %v4942 = vunpack.c.l.b16 %v4741
    %v4943 = vunpack.c.l.b16 %v4742
    %v4944 = vunpack.c.l.b16 %v4743
    %v4945 = vunpack.c.l.b16 %v4744
    %v4946 = vunpack.c.l.b16 %v4745
    %v4947 = vunpack.c.l.b16 %v4746
    %v4948 = vunpack.c.l.b16 %v4747
    %v4949 = vunpack.c.l.b16 %v4748
    %v4950 = vunpack.c.l.b16 %v4749
    %v4951 = vunpack.c.l.b16 %v4750
    %v4952 = vunpack.c.l.b16 %v4751
    %v4953 = vunpack.c.l.b16 %v4752
    %v4954 = vunpack.c.l.b16 %v4753
    %v4955 = vunpack.c.l.b16 %v4754
    %v4956 = vunpack.c.l.b16 %v4755
    %v4957 = vunpack.c.l.b16 %v4756
    %v4958 = vunpack.c.l.b16 %v4757
    %v4959 = vunpack.c.l.b16 %v4758
    %v4960 = vunpack.c.l.b16 %v4759
    %v4961 = vunpack.c.l.b16 %v4760
    %v4962 = vunpack.c.l.b16 %v4761
    %v4963 = vunpack.c.l.b16 %v4762
    %v4964 = vunpack.c.l.b16 %v4763
    %v4965 = vunpack.c.l.b16 %v4764
    %v4966 = vunpack.c.l.b16 %v4765
    %v4967 = vunpack.c.l.b16 %v4766
    %v4968 = vunpack.c.l.b16 %v4767
    %v4969 = vunpack.c.l.b16 %v4768
    %v4970 = vunpack.c.l.b16 %v4769
    %v4971 = vunpack.c.l.b16 %v4770
    %v4972 = vunpack.c.l.b16 %v4771
    %v4973 = vunpack.c.l.b16 %v4772
    %v4974 = vunpack.c.l.b16 %v4773
    %v4975 = vunpack.c.l.b16 %v4774
    %v4976 = vunpack.c.l.b16 %v4775
    %v4977 = vunpack.c.l.b16 %v4776
    %v4978 = vunpack.c.l.b16 %v4777
    %v4979 = vunpack.c.l.b16 %v4778
    %v4980 = vunpack.c.l.b16 %v4779
    %v4981 = vunpack.c.l.b16 %v4780
    %v4982 = vunpack.c.l.b16 %v4781
    %v4983 = vunpack.c.l.b16 %v4782
    %v4984 = vunpack.c.l.b16 %v4783
    %v4985 = vunpack.c.l.b16 %v4784
    %v4986 = vunpack.c.l.b16 %v4785
    %v4987 = vunpack.c.l.b16 %v4786
    %v4988 = vunpack.c.l.b16 %v4787
    %v4989 = vunpack.c.l.b16 %v4788
    %v4990 = vunpack.c.l.b16 %v4789
    %v4991 = vunpack.c.l.b16 %v4790
    %v4992 = vunpack.c.l.b16 %v4791
    %v4993 = vunpack.c.l.b16 %v4792
    %v4994 = vunpack.c.l.b16 %v4793
    %v4995 = vunpack.c.l.b16 %v4794
    %v4996 = vunpack.c.l.b16 %v4795
    %v4997 = vunpack.c.l.b16 %v4796
    %v4998 = vunpack.c.l.b16 %v4797
    %v4999 = vunpack.c.l.b16 %v4798
    %v5000 = vunpack.c.l.b16 %v4799
    %v5001 = vunpack.c.l.b16 %v4800
    %v5002 = vunpack.c.l.b16 %v4801
    %v5003 = vunpack.c.l.b16 %v4802
    %v5004 = vunpack.c.l.b16 %v4803
    %v5005 = vpack.c.b16 %v4934, %v4933
    %v5006 = vpack.c.b16 %v4936, %v4935
    %v5007 = vpack.c.b16 %v4938, %v4937
    %v5008 = vpack.c.b16 %v4940, %v4939
    %v5009 = vpack.c.b16 %v4942, %v4941
    %v5010 = vpack.c.b16 %v4944, %v4943
    %v5011 = vpack.c.b16 %v4946, %v4945
    %v5012 = vpack.c.b16 %v4948, %v4947
    %v5013 = vpack.c.b16 %v4950, %v4949
    %v5014 = vpack.c.b16 %v4952, %v4951
    %v5015 = vpack.c.b16 %v4954, %v4953
    %v5016 = vpack.c.b16 %v4956, %v4955
    %v5017 = vpack.c.b16 %v4958, %v4957
    %v5018 = vpack.c.b16 %v4960, %v4959
    %v5019 = vpack.c.b16 %v4962, %v4961
    %v5020 = vpack.c.b16 %v4964, %v4963
    %v5021 = vpack.c.b16 %v4966, %v4965
    %v5022 = vpack.c.b16 %v4968, %v4967
    %v5023 = vpack.c.b16 %v4970, %v4969
    %v5024 = vpack.c.b16 %v4972, %v4971
    %v5025 = vpack.c.b16 %v4974, %v4973
    %v5026 = vpack.c.b16 %v4976, %v4975
    %v5027 = vpack.c.b16 %v4978, %v4977
    %v5028 = vpack.c.b16 %v4980, %v4979
    %v5029 = vpack.c.b16 %v4982, %v4981
    %v5030 = vpack.c.b16 %v4984, %v4983
    %v5031 = vpack.c.b16 %v4986, %v4985
    %v5032 = vpack.c.b16 %v4988, %v4987
    %v5033 = vpack.c.b16 %v4990, %v4989
    %v5034 = vpack.c.b16 %v4992, %v4991
    %v5035 = vpack.c.b16 %v4994, %v4993
    %v5036 = vpack.c.b16 %v4996, %v4995
    %v5037 = vpack.c.b16 %v4998, %v4997
    %v5038 = vpack.c.b16 %v5000, %v4999
    %v5039 = vpack.c.b16 %v5002, %v5001
    %v5040 = vpack.c.b16 %v5004, %v5003
    %v5078 = vsel %vm936, %v4860, 0
    %5080 = vmatprep.subr.bf16.mxu0 0
    %5081 = vmatpush1.bf16.msra.mxu0 %v5005
    %5082 = vmatprep.subr.bf16.mxu0 0
    %5083 = vmatpush1.bf16.msra.mxu0 %v5006
    %5084 = vmatprep.subr.bf16.mxu0 0
    %5085 = vmatpush1.bf16.msra.mxu0 %v5007
    %5086 = vmatprep.subr.bf16.mxu0 0
    %5087 = vmatpush1.bf16.msra.mxu0 %v5008
    %5088 = vmatprep.subr.bf16.mxu0 0
    %5089 = vmatpush1.bf16.msra.mxu0 %v5009
    %5090 = vmatprep.subr.bf16.mxu0 0
    %5091 = vmatpush1.bf16.msra.mxu0 %v5010
    %5092 = vmatprep.subr.bf16.mxu0 0
    %5093 = vmatpush1.bf16.msra.mxu0 %v5011
    %5094 = vmatprep.subr.bf16.mxu0 0
    %5095 = vmatpush1.bf16.msra.mxu0 %v5012
    %5096 = vmatprep.subr.bf16.mxu0 0
    %5097 = vmatpush1.bf16.msra.mxu0 %v5013
    %5098 = vmatprep.subr.bf16.mxu0 0
    %5099 = vmatpush1.bf16.msra.mxu0 %v5014
    %5100 = vmatprep.subr.bf16.mxu0 0
    %5101 = vmatpush1.bf16.msra.mxu0 %v5015
    %5102 = vmatprep.subr.bf16.mxu0 0
    %5103 = vmatpush1.bf16.msra.mxu0 %v5016
    %5104 = vmatprep.subr.bf16.mxu0 0
    %5105 = vmatpush1.bf16.msra.mxu0 %v5017
    %5106 = vmatprep.subr.bf16.mxu0 0
    %5107 = vmatpush1.bf16.msra.mxu0 %v5018
    %5108 = vmatprep.subr.bf16.mxu0 0
    %5109 = vmatpush1.bf16.msra.mxu0 %v5019
    %5110 = vmatprep.subr.bf16.mxu0 0
    %5111 = vmatpush1.bf16.msra.mxu0 %v5020
    %5112 = vmatprep.mubr.bf16.mxu0 %v4857
    %5113 = vmatmul.mubr.bf16.gmra.mrb[0].mxu0 %v4856
    %v5114 = vpop.f32.mrb[0].mxu0
    %v5115 = vadd.f32 0.0, %v5114
    %v5116 = vpop.f32.mrb[0].mxu0
    %v5117 = vpop.f32.mrb[0].mxu0
    %v5118 = vadd.f32 0.0, %v5117
    %v5119 = vpop.f32.mrb[0].mxu0
    %5120 = vdwg.mxu0
    %5121 = vmatprep.subr.bf16.mxu0 0
    %5122 = vmatpush1.bf16.msra.mxu0 %v5021
    %5123 = vmatprep.subr.bf16.mxu0 0
    %5124 = vmatpush1.bf16.msra.mxu0 %v5022
    %5125 = vmatprep.subr.bf16.mxu0 0
    %5126 = vmatpush1.bf16.msra.mxu0 %v5023
    %5127 = vmatprep.subr.bf16.mxu0 0
    %5128 = vmatpush1.bf16.msra.mxu0 %v5024
    %5129 = vmatprep.subr.bf16.mxu0 0
    %5130 = vmatpush1.bf16.msra.mxu0 %v5025
    %5131 = vmatprep.subr.bf16.mxu0 0
    %5132 = vmatpush1.bf16.msra.mxu0 %v5026
    %5133 = vmatprep.subr.bf16.mxu0 0
    %5134 = vmatpush1.bf16.msra.mxu0 %v5027
    %5135 = vmatprep.subr.bf16.mxu0 0
    %5136 = vmatpush1.bf16.msra.mxu0 %v5028
    %5137 = vmatprep.subr.bf16.mxu0 0
    %5138 = vmatpush1.bf16.msra.mxu0 %v5029
    %5139 = vmatprep.subr.bf16.mxu0 0
    %5140 = vmatpush1.bf16.msra.mxu0 %v5030
    %5141 = vmatprep.subr.bf16.mxu0 0
    %5142 = vmatpush1.bf16.msra.mxu0 %v5031
    %5143 = vmatprep.subr.bf16.mxu0 0
    %5144 = vmatpush1.bf16.msra.mxu0 %v5032
    %5145 = vmatprep.subr.bf16.mxu0 0
    %5146 = vmatpush1.bf16.msra.mxu0 %v5033
    %5147 = vmatprep.subr.bf16.mxu0 0
    %5148 = vmatpush1.bf16.msra.mxu0 %v5034
    %5149 = vmatprep.subr.bf16.mxu0 0
    %5150 = vmatpush1.bf16.msra.mxu0 %v5035
    %5151 = vmatprep.subr.bf16.mxu0 0
    %5152 = vmatpush1.bf16.msra.mxu0 %v5036
    %5153 = vmatprep.mubr.bf16.mxu0 %v4859
    %5154 = vmatmul.mubr.bf16.gmra.mrb[0].mxu0 %v4858
    %v5155 = vpop.f32.mrb[0].mxu0
    %v5156 = vadd.f32 %v5115, %v5155
    %v5157 = vpop.f32.mrb[0].mxu0
    %v5158 = vpop.f32.mrb[0].mxu0
    %v5159 = vadd.f32 %v5118, %v5158
    %v5160 = vpop.f32.mrb[0].mxu0
    %5161 = vdwg.mxu0
    %5162 = vmatprep.subr.bf16.mxu0 0
    %5163 = vmatpush1.bf16.msra.mxu0 %v5037
    %5164 = vmatprep.subr.bf16.mxu0 0
    %5165 = vmatpush1.bf16.msra.mxu0 %v5038
    %5166 = vmatprep.subr.bf16.mxu0 0
    %5167 = vmatpush1.bf16.msra.mxu0 %v5039
    %5168 = vmatprep.subr.bf16.mxu0 0
    %5169 = vmatpush1.bf16.msra.mxu0 %v5040
    %5170 = vmatprep.subr.bf16.mxu0 0
    %5171 = vmatpush1.bf16.msra.mxu0 0
    %5172 = vmatprep.subr.bf16.mxu0 0
    %5173 = vmatpush1.bf16.msra.mxu0 0
    %5174 = vmatprep.subr.bf16.mxu0 0
    %5175 = vmatpush1.bf16.msra.mxu0 0
    %5176 = vmatprep.subr.bf16.mxu0 0
    %5177 = vmatpush1.bf16.msra.mxu0 0
    %5178 = vmatprep.subr.bf16.mxu0 0
    %5179 = vmatpush1.bf16.msra.mxu0 0
    %5180 = vmatprep.subr.bf16.mxu0 0
    %5181 = vmatpush1.bf16.msra.mxu0 0
    %5182 = vmatprep.subr.bf16.mxu0 0
    %5183 = vmatpush1.bf16.msra.mxu0 0
    %5184 = vmatprep.subr.bf16.mxu0 0
    %5185 = vmatpush1.bf16.msra.mxu0 0
    %5186 = vmatprep.subr.bf16.mxu0 0
    %5187 = vmatpush1.bf16.msra.mxu0 0
    %5188 = vmatprep.subr.bf16.mxu0 0
    %5189 = vmatpush1.bf16.msra.mxu0 0
    %5190 = vmatprep.subr.bf16.mxu0 0
    %5191 = vmatpush1.bf16.msra.mxu0 0
    %5192 = vmatprep.subr.bf16.mxu0 0
    %5193 = vmatpush1.bf16.msra.mxu0 0
    %5194 = vmatprep.mubr.bf16.mxu0 0
    %5195 = vmatmul.mubr.bf16.gmra.mrb[0].mxu0 %v5078
    %v5196 = vpop.f32.mrb[0].mxu0
    %v5197 = vadd.f32 %v5156, %v5196
    %v5198 = vpop.f32.mrb[0].mxu0
    %v5199 = vpop.f32.mrb[0].mxu0
    %v5200 = vadd.f32 %v5159, %v5199
    %v5201 = vpop.f32.mrb[0].mxu0
    %5202 = vdwg.mxu0
    %v5203 = vlaneseq
    %v5204 = vshrl.u32 %v5203, 7
    %v5205 = vsub.s32 0, %v5204
    %v5206 = vrot.slane %v4730, %v5205
    %v5207 = vmul.f32 %v5197, %v5206
    %v5208 = vmul.f32 %v5200, %v5206
    %v5209 = vlaneseq
    %v5210 = vshrl.u32 %v5209, 7
    %v5211 = vsub.s32 1, %v5210
    %v5212 = vrot.slane %v4730, %v5211
    %v5213 = vadd.f32 %v5207, %v5212
    %v5214 = vadd.f32 %v5208, %v5212
    %v5215 = vmax.f32 %v5213, 0.0
    %v5216 = vmax.f32 %v5214, 0.0
    %s5217 = scalar_lea.vmem %s7, 1152
    %v5218 = vld [vmem:[%s5217] sm:$0xf]
    %v5219 = vld [vmem:[%s5217 + $0x4] sm:$0xf]
    %v5220 = vld [vmem:[%s5217 + $0x8] sm:$0xf]
    %v5221 = vld [vmem:[%s5217 + $0xc] sm:$0xf]
    %v5222 = vld [vmem:[%s5217 + $0x10] sm:$0xf]
    %v5223 = vld [vmem:[%s5217 + $0x14] sm:$0xf]
    %v5224 = vld [vmem:[%s5217 + $0x18] sm:$0xf]
    %v5225 = vld [vmem:[%s5217 + $0x1c] sm:$0xf]
    %v5226 = vld [vmem:[%s5217 + $0x20] sm:$0xf]
    %v5227 = vld [vmem:[%s5217 + $0x24] sm:$0xf]
    %v5228 = vld [vmem:[%s5217 + $0x28] sm:$0xf]
    %v5229 = vld [vmem:[%s5217 + $0x2c] sm:$0xf]
    %v5230 = vld [vmem:[%s5217 + $0x30] sm:$0xf]
    %v5231 = vld [vmem:[%s5217 + $0x34] sm:$0xf]
    %v5232 = vld [vmem:[%s5217 + $0x38] sm:$0xf]
    %v5233 = vld [vmem:[%s5217 + $0x3c] sm:$0xf]
    %v5234 = vld [vmem:[%s5217 + $0x40] sm:$0xf]
    %v5235 = vld [vmem:[%s5217 + $0x44] sm:$0xf]
    %v5236 = vld [vmem:[%s5217 + $0x48] sm:$0xf]
    %v5237 = vld [vmem:[%s5217 + $0x4c] sm:$0xf]
    %v5238 = vld [vmem:[%s5217 + $0x50] sm:$0xf]
    %v5239 = vld [vmem:[%s5217 + $0x54] sm:$0xf]
    %v5240 = vld [vmem:[%s5217 + $0x58] sm:$0xf]
    %v5241 = vld [vmem:[%s5217 + $0x5c] sm:$0xf]
    %v5242 = vld [vmem:[%s5217 + $0x60] sm:$0xf]
    %v5243 = vld [vmem:[%s5217 + $0x64] sm:$0xf]
    %v5244 = vld [vmem:[%s5217 + $0x68] sm:$0xf]
    %v5245 = vld [vmem:[%s5217 + $0x6c] sm:$0xf]
    %v5246 = vld [vmem:[%s5217 + $0x70] sm:$0xf]
    %v5247 = vld [vmem:[%s5217 + $0x74] sm:$0xf]
    %v5248 = vld [vmem:[%s5217 + $0x78] sm:$0xf]
    %v5249 = vld [vmem:[%s5217 + $0x7c] sm:$0xf]
    %v5250 = vld [vmem:[%s5217 + $0x80] sm:$0xf]
    %v5251 = vld [vmem:[%s5217 + $0x84] sm:$0xf]
    %v5252 = vld [vmem:[%s5217 + $0x88] sm:$0xf]
    %v5253 = vld [vmem:[%s5217 + $0x8c] sm:$0xf]
    %v5254 = vld [vmem:[%s5217 + $0x90] sm:$0xf]
    %v5255 = vld [vmem:[%s5217 + $0x94] sm:$0xf]
    %v5256 = vld [vmem:[%s5217 + $0x98] sm:$0xf]
    %v5257 = vld [vmem:[%s5217 + $0x9c] sm:$0xf]
    %v5258 = vld [vmem:[%s5217 + $0xa0] sm:$0xf]
    %v5259 = vld [vmem:[%s5217 + $0xa4] sm:$0xf]
    %v5260 = vld [vmem:[%s5217 + $0xa8] sm:$0xf]
    %v5261 = vld [vmem:[%s5217 + $0xac] sm:$0xf]
    %v5262 = vld [vmem:[%s5217 + $0xb0] sm:$0xf]
    %v5263 = vld [vmem:[%s5217 + $0xb4] sm:$0xf]
    %v5264 = vld [vmem:[%s5217 + $0xb8] sm:$0xf]
    %v5265 = vld [vmem:[%s5217 + $0xbc] sm:$0xf]
    %v5266 = vld [vmem:[%s5217 + $0xc0] sm:$0xf]
    %v5267 = vld [vmem:[%s5217 + $0xc4] sm:$0xf]
    %v5268 = vld [vmem:[%s5217 + $0xc8] sm:$0xf]
    %v5269 = vld [vmem:[%s5217 + $0xcc] sm:$0xf]
    %v5270 = vld [vmem:[%s5217 + $0xd0] sm:$0xf]
    %v5271 = vld [vmem:[%s5217 + $0xd4] sm:$0xf]
    %v5272 = vld [vmem:[%s5217 + $0xd8] sm:$0xf]
    %v5273 = vld [vmem:[%s5217 + $0xdc] sm:$0xf]
    %v5274 = vld [vmem:[%s5217 + $0xe0] sm:$0xf]
    %v5275 = vld [vmem:[%s5217 + $0xe4] sm:$0xf]
    %v5276 = vld [vmem:[%s5217 + $0xe8] sm:$0xf]
    %v5277 = vld [vmem:[%s5217 + $0xec] sm:$0xf]
    %v5278 = vld [vmem:[%s5217 + $0xf0] sm:$0xf]
    %v5279 = vld [vmem:[%s5217 + $0xf4] sm:$0xf]
    %v5280 = vld [vmem:[%s5217 + $0xf8] sm:$0xf]
    %v5281 = vld [vmem:[%s5217 + $0xfc] sm:$0xf]
    %v5282 = vld [vmem:[%s5217 + $0x100] sm:$0xf]
    %v5283 = vld [vmem:[%s5217 + $0x104] sm:$0xf]
    %v5284 = vld [vmem:[%s5217 + $0x108] sm:$0xf]
    %v5285 = vld [vmem:[%s5217 + $0x10c] sm:$0xf]
    %v5286 = vld [vmem:[%s5217 + $0x110] sm:$0xf]
    %v5287 = vld [vmem:[%s5217 + $0x114] sm:$0xf]
    %v5288 = vld [vmem:[%s5217 + $0x118] sm:$0xf]
    %v5289 = vld [vmem:[%s5217 + $0x11c] sm:$0xf]
    %v5292 = vrot.slane %v5215, 6
    %v5293 = vrot.slane %v5216, 6
    %v5294 = vsel %vm900, %v5292, %v5293
    %v5298 = vsel %vm900, %v5293, %v5292
    %v5299 = vrot.slane %v5216, 2
    %v5301 = vrot.slane %v5215, 2
    %v5302 = vsel %vm910, %v5301, %v5299
    %v5305 = vsel %vm910, %v5299, %v5301
    %5306 = vrot.lane.b32.xlu0 %v5216, 64
    %v5307 = vpop.permute.xlu0 %5306
    %5308 = vrot.lane.b32.xlu0 %v5215, 64
    %v5309 = vpop.permute.xlu0 %5308
    %5313 = vrot.lane.b32.xlu0 %v5298, 64
    %v5314 = vpop.permute.xlu0 %5313
    %5315 = vrot.lane.b32.xlu0 %v5294, 64
    %v5316 = vpop.permute.xlu0 %5315
    %5320 = vrot.lane.b32.xlu0 %v5302, 64
    %v5321 = vpop.permute.xlu0 %5320
    %5322 = vrot.lane.b32.xlu0 %v5305, 64
    %v5323 = vpop.permute.xlu0 %5322
    %v5326 = vsel %vm936, %v5294, %v5307
    %v5327 = vsel %vm936, %v5298, %v5309
    %v5328 = vsel %vm936, %v5305, %v5314
    %v5329 = vsel %vm936, %v5302, %v5316
    %v5330 = vsel %vm936, %v5215, %v5321
    %v5331 = vsel %vm936, %v5216, %v5323
    %v5332 = vmul.f32 %v5326, %v693
    %v5333 = vmul.f32 %v5328, %v694
    %v5334 = vmul.f32 %v5330, %v695
    %v5335 = vmul.f32 %v5326, %v696
    %v5336 = vmul.f32 %v5305, %v697
    %v5337 = vmul.f32 %v5327, %v698
    %v5338 = vmul.f32 %v5329, %v699
    %v5339 = vmul.f32 %v5331, %v700
    %v5340 = vmul.f32 %v5327, %v701
    %v5341 = vmul.f32 %v5302, %v702
    %v5342 = vpack.c.bf16 %v5337, %v5332
    %v5343 = vpack.c.bf16 %v5338, %v5333
    %v5344 = vpack.c.bf16 %v5339, %v5334
    %v5345 = vpack.c.bf16 %v5340, %v5335
    %v5346 = vpack.c.bf16 %v5341, %v5336
    %v5419 = vunpack.c.l.b16 %v5218
    %v5420 = vunpack.c.l.b16 %v5219
    %v5421 = vunpack.c.l.b16 %v5220
    %v5422 = vunpack.c.l.b16 %v5221
    %v5423 = vunpack.c.l.b16 %v5222
    %v5424 = vunpack.c.l.b16 %v5223
    %v5425 = vunpack.c.l.b16 %v5224
    %v5426 = vunpack.c.l.b16 %v5225
    %v5427 = vunpack.c.l.b16 %v5226
    %v5428 = vunpack.c.l.b16 %v5227
    %v5429 = vunpack.c.l.b16 %v5228
    %v5430 = vunpack.c.l.b16 %v5229
    %v5431 = vunpack.c.l.b16 %v5230
    %v5432 = vunpack.c.l.b16 %v5231
    %v5433 = vunpack.c.l.b16 %v5232
    %v5434 = vunpack.c.l.b16 %v5233
    %v5435 = vunpack.c.l.b16 %v5234
    %v5436 = vunpack.c.l.b16 %v5235
    %v5437 = vunpack.c.l.b16 %v5236
    %v5438 = vunpack.c.l.b16 %v5237
    %v5439 = vunpack.c.l.b16 %v5238
    %v5440 = vunpack.c.l.b16 %v5239
    %v5441 = vunpack.c.l.b16 %v5240
    %v5442 = vunpack.c.l.b16 %v5241
    %v5443 = vunpack.c.l.b16 %v5242
    %v5444 = vunpack.c.l.b16 %v5243
    %v5445 = vunpack.c.l.b16 %v5244
    %v5446 = vunpack.c.l.b16 %v5245
    %v5447 = vunpack.c.l.b16 %v5246
    %v5448 = vunpack.c.l.b16 %v5247
    %v5449 = vunpack.c.l.b16 %v5248
    %v5450 = vunpack.c.l.b16 %v5249
    %v5451 = vunpack.c.l.b16 %v5250
    %v5452 = vunpack.c.l.b16 %v5251
    %v5453 = vunpack.c.l.b16 %v5252
    %v5454 = vunpack.c.l.b16 %v5253
    %v5455 = vunpack.c.l.b16 %v5254
    %v5456 = vunpack.c.l.b16 %v5255
    %v5457 = vunpack.c.l.b16 %v5256
    %v5458 = vunpack.c.l.b16 %v5257
    %v5459 = vunpack.c.l.b16 %v5258
    %v5460 = vunpack.c.l.b16 %v5259
    %v5461 = vunpack.c.l.b16 %v5260
    %v5462 = vunpack.c.l.b16 %v5261
    %v5463 = vunpack.c.l.b16 %v5262
    %v5464 = vunpack.c.l.b16 %v5263
    %v5465 = vunpack.c.l.b16 %v5264
    %v5466 = vunpack.c.l.b16 %v5265
    %v5467 = vunpack.c.l.b16 %v5266
    %v5468 = vunpack.c.l.b16 %v5267
    %v5469 = vunpack.c.l.b16 %v5268
    %v5470 = vunpack.c.l.b16 %v5269
    %v5471 = vunpack.c.l.b16 %v5270
    %v5472 = vunpack.c.l.b16 %v5271
    %v5473 = vunpack.c.l.b16 %v5272
    %v5474 = vunpack.c.l.b16 %v5273
    %v5475 = vunpack.c.l.b16 %v5274
    %v5476 = vunpack.c.l.b16 %v5275
    %v5477 = vunpack.c.l.b16 %v5276
    %v5478 = vunpack.c.l.b16 %v5277
    %v5479 = vunpack.c.l.b16 %v5278
    %v5480 = vunpack.c.l.b16 %v5279
    %v5481 = vunpack.c.l.b16 %v5280
    %v5482 = vunpack.c.l.b16 %v5281
    %v5483 = vunpack.c.l.b16 %v5282
    %v5484 = vunpack.c.l.b16 %v5283
    %v5485 = vunpack.c.l.b16 %v5284
    %v5486 = vunpack.c.l.b16 %v5285
    %v5487 = vunpack.c.l.b16 %v5286
    %v5488 = vunpack.c.l.b16 %v5287
    %v5489 = vunpack.c.l.b16 %v5288
    %v5490 = vunpack.c.l.b16 %v5289
    %v5491 = vpack.c.b16 %v5420, %v5419
    %v5492 = vpack.c.b16 %v5422, %v5421
    %v5493 = vpack.c.b16 %v5424, %v5423
    %v5494 = vpack.c.b16 %v5426, %v5425
    %v5495 = vpack.c.b16 %v5428, %v5427
    %v5496 = vpack.c.b16 %v5430, %v5429
    %v5497 = vpack.c.b16 %v5432, %v5431
    %v5498 = vpack.c.b16 %v5434, %v5433
    %v5499 = vpack.c.b16 %v5436, %v5435
    %v5500 = vpack.c.b16 %v5438, %v5437
    %v5501 = vpack.c.b16 %v5440, %v5439
    %v5502 = vpack.c.b16 %v5442, %v5441
    %v5503 = vpack.c.b16 %v5444, %v5443
    %v5504 = vpack.c.b16 %v5446, %v5445
    %v5505 = vpack.c.b16 %v5448, %v5447
    %v5506 = vpack.c.b16 %v5450, %v5449
    %v5507 = vpack.c.b16 %v5452, %v5451
    %v5508 = vpack.c.b16 %v5454, %v5453
    %v5509 = vpack.c.b16 %v5456, %v5455
    %v5510 = vpack.c.b16 %v5458, %v5457
    %v5511 = vpack.c.b16 %v5460, %v5459
    %v5512 = vpack.c.b16 %v5462, %v5461
    %v5513 = vpack.c.b16 %v5464, %v5463
    %v5514 = vpack.c.b16 %v5466, %v5465
    %v5515 = vpack.c.b16 %v5468, %v5467
    %v5516 = vpack.c.b16 %v5470, %v5469
    %v5517 = vpack.c.b16 %v5472, %v5471
    %v5518 = vpack.c.b16 %v5474, %v5473
    %v5519 = vpack.c.b16 %v5476, %v5475
    %v5520 = vpack.c.b16 %v5478, %v5477
    %v5521 = vpack.c.b16 %v5480, %v5479
    %v5522 = vpack.c.b16 %v5482, %v5481
    %v5523 = vpack.c.b16 %v5484, %v5483
    %v5524 = vpack.c.b16 %v5486, %v5485
    %v5525 = vpack.c.b16 %v5488, %v5487
    %v5526 = vpack.c.b16 %v5490, %v5489
    %v5564 = vsel %vm936, %v5346, 0
    %5566 = vmatprep.subr.bf16.mxu0 0
    %5567 = vmatpush1.bf16.msra.mxu0 %v5491
    %5568 = vmatprep.subr.bf16.mxu0 0
    %5569 = vmatpush1.bf16.msra.mxu0 %v5492
    %5570 = vmatprep.subr.bf16.mxu0 0
    %5571 = vmatpush1.bf16.msra.mxu0 %v5493
    %5572 = vmatprep.subr.bf16.mxu0 0
    %5573 = vmatpush1.bf16.msra.mxu0 %v5494
    %5574 = vmatprep.subr.bf16.mxu0 0
    %5575 = vmatpush1.bf16.msra.mxu0 %v5495
    %5576 = vmatprep.subr.bf16.mxu0 0
    %5577 = vmatpush1.bf16.msra.mxu0 %v5496
    %5578 = vmatprep.subr.bf16.mxu0 0
    %5579 = vmatpush1.bf16.msra.mxu0 %v5497
    %5580 = vmatprep.subr.bf16.mxu0 0
    %5581 = vmatpush1.bf16.msra.mxu0 %v5498
    %5582 = vmatprep.subr.bf16.mxu0 0
    %5583 = vmatpush1.bf16.msra.mxu0 %v5499
    %5584 = vmatprep.subr.bf16.mxu0 0
    %5585 = vmatpush1.bf16.msra.mxu0 %v5500
    %5586 = vmatprep.subr.bf16.mxu0 0
    %5587 = vmatpush1.bf16.msra.mxu0 %v5501
    %5588 = vmatprep.subr.bf16.mxu0 0
    %5589 = vmatpush1.bf16.msra.mxu0 %v5502
    %5590 = vmatprep.subr.bf16.mxu0 0
    %5591 = vmatpush1.bf16.msra.mxu0 %v5503
    %5592 = vmatprep.subr.bf16.mxu0 0
    %5593 = vmatpush1.bf16.msra.mxu0 %v5504
    %5594 = vmatprep.subr.bf16.mxu0 0
    %5595 = vmatpush1.bf16.msra.mxu0 %v5505
    %5596 = vmatprep.subr.bf16.mxu0 0
    %5597 = vmatpush1.bf16.msra.mxu0 %v5506
    %5598 = vmatprep.mubr.bf16.mxu0 %v5343
    %5599 = vmatmul.mubr.bf16.gmra.mrb[0].mxu0 %v5342
    %v5600 = vpop.f32.mrb[0].mxu0
    %v5601 = vadd.f32 0.0, %v5600
    %v5602 = vpop.f32.mrb[0].mxu0
    %v5603 = vpop.f32.mrb[0].mxu0
    %v5604 = vadd.f32 0.0, %v5603
    %v5605 = vpop.f32.mrb[0].mxu0
    %5606 = vdwg.mxu0
    %5607 = vmatprep.subr.bf16.mxu0 0
    %5608 = vmatpush1.bf16.msra.mxu0 %v5507
    %5609 = vmatprep.subr.bf16.mxu0 0
    %5610 = vmatpush1.bf16.msra.mxu0 %v5508
    %5611 = vmatprep.subr.bf16.mxu0 0
    %5612 = vmatpush1.bf16.msra.mxu0 %v5509
    %5613 = vmatprep.subr.bf16.mxu0 0
    %5614 = vmatpush1.bf16.msra.mxu0 %v5510
    %5615 = vmatprep.subr.bf16.mxu0 0
    %5616 = vmatpush1.bf16.msra.mxu0 %v5511
    %5617 = vmatprep.subr.bf16.mxu0 0
    %5618 = vmatpush1.bf16.msra.mxu0 %v5512
    %5619 = vmatprep.subr.bf16.mxu0 0
    %5620 = vmatpush1.bf16.msra.mxu0 %v5513
    %5621 = vmatprep.subr.bf16.mxu0 0
    %5622 = vmatpush1.bf16.msra.mxu0 %v5514
    %5623 = vmatprep.subr.bf16.mxu0 0
    %5624 = vmatpush1.bf16.msra.mxu0 %v5515
    %5625 = vmatprep.subr.bf16.mxu0 0
    %5626 = vmatpush1.bf16.msra.mxu0 %v5516
    %5627 = vmatprep.subr.bf16.mxu0 0
    %5628 = vmatpush1.bf16.msra.mxu0 %v5517
    %5629 = vmatprep.subr.bf16.mxu0 0
    %5630 = vmatpush1.bf16.msra.mxu0 %v5518
    %5631 = vmatprep.subr.bf16.mxu0 0
    %5632 = vmatpush1.bf16.msra.mxu0 %v5519
    %5633 = vmatprep.subr.bf16.mxu0 0
    %5634 = vmatpush1.bf16.msra.mxu0 %v5520
    %5635 = vmatprep.subr.bf16.mxu0 0
    %5636 = vmatpush1.bf16.msra.mxu0 %v5521
    %5637 = vmatprep.subr.bf16.mxu0 0
    %5638 = vmatpush1.bf16.msra.mxu0 %v5522
    %5639 = vmatprep.mubr.bf16.mxu0 %v5345
    %5640 = vmatmul.mubr.bf16.gmra.mrb[0].mxu0 %v5344
    %v5641 = vpop.f32.mrb[0].mxu0
    %v5642 = vadd.f32 %v5601, %v5641
    %v5643 = vpop.f32.mrb[0].mxu0
    %v5644 = vpop.f32.mrb[0].mxu0
    %v5645 = vadd.f32 %v5604, %v5644
    %v5646 = vpop.f32.mrb[0].mxu0
    %5647 = vdwg.mxu0
    %5648 = vmatprep.subr.bf16.mxu0 0
    %5649 = vmatpush1.bf16.msra.mxu0 %v5523
    %5650 = vmatprep.subr.bf16.mxu0 0
    %5651 = vmatpush1.bf16.msra.mxu0 %v5524
    %5652 = vmatprep.subr.bf16.mxu0 0
    %5653 = vmatpush1.bf16.msra.mxu0 %v5525
    %5654 = vmatprep.subr.bf16.mxu0 0
    %5655 = vmatpush1.bf16.msra.mxu0 %v5526
    %5656 = vmatprep.subr.bf16.mxu0 0
    %5657 = vmatpush1.bf16.msra.mxu0 0
    %5658 = vmatprep.subr.bf16.mxu0 0
    %5659 = vmatpush1.bf16.msra.mxu0 0
    %5660 = vmatprep.subr.bf16.mxu0 0
    %5661 = vmatpush1.bf16.msra.mxu0 0
    %5662 = vmatprep.subr.bf16.mxu0 0
    %5663 = vmatpush1.bf16.msra.mxu0 0
    %5664 = vmatprep.subr.bf16.mxu0 0
    %5665 = vmatpush1.bf16.msra.mxu0 0
    %5666 = vmatprep.subr.bf16.mxu0 0
    %5667 = vmatpush1.bf16.msra.mxu0 0
    %5668 = vmatprep.subr.bf16.mxu0 0
    %5669 = vmatpush1.bf16.msra.mxu0 0
    %5670 = vmatprep.subr.bf16.mxu0 0
    %5671 = vmatpush1.bf16.msra.mxu0 0
    %5672 = vmatprep.subr.bf16.mxu0 0
    %5673 = vmatpush1.bf16.msra.mxu0 0
    %5674 = vmatprep.subr.bf16.mxu0 0
    %5675 = vmatpush1.bf16.msra.mxu0 0
    %5676 = vmatprep.subr.bf16.mxu0 0
    %5677 = vmatpush1.bf16.msra.mxu0 0
    %5678 = vmatprep.subr.bf16.mxu0 0
    %5679 = vmatpush1.bf16.msra.mxu0 0
    %5680 = vmatprep.mubr.bf16.mxu0 0
    %5681 = vmatmul.mubr.bf16.gmra.mrb[0].mxu0 %v5564
    %v5682 = vpop.f32.mrb[0].mxu0
    %v5683 = vadd.f32 %v5642, %v5682
    %v5684 = vpop.f32.mrb[0].mxu0
    %v5685 = vpop.f32.mrb[0].mxu0
    %v5686 = vadd.f32 %v5645, %v5685
    %v5687 = vpop.f32.mrb[0].mxu0
    %5688 = vdwg.mxu0
    %v5689 = vlaneseq
    %v5690 = vshrl.u32 %v5689, 7
    %v5691 = vsub.s32 2, %v5690
    %v5692 = vrot.slane %v4730, %v5691
    %v5693 = vmul.f32 %v5683, %v5692
    %v5694 = vmul.f32 %v5686, %v5692
    %v5695 = vlaneseq
    %v5696 = vshrl.u32 %v5695, 7
    %v5697 = vsub.s32 3, %v5696
    %v5698 = vrot.slane %v4730, %v5697
    %v5699 = vadd.f32 %v5693, %v5698
    %v5700 = vadd.f32 %v5694, %v5698
    %v5701 = vadd.f32 %v5699, %v4727
    %v5702 = vadd.f32 %v5700, %v4728
    %v5703 = vmax.f32 %v5701, 0.0
    %v5704 = vmax.f32 %v5702, 0.0
    %v5705 = vld [vmem:[%s1] sm:$0x1]
    %v5706 = vld [vmem:[%s9] sm:$0xf]
    %v5707 = vld [vmem:[%s9 + $0x4] sm:$0x3]
    %v5708 = vld [vmem:[#allocation9] sm:$0x1]
    %v5710 = vlaneseq
    %v5711 = vshrl.u32 %v5710, 7
    %v5712 = vsub.s32 0, %v5711
    %v5713 = vrot.slane %v5708, %v5712
    %v5717 = vunpack.c.l.b16 %v5706
    %v5718 = vunpack.c.l.b16 %v5707
    %v5719 = vpack.c.b16 %v5718, %v5717
    %vm5720 = vcmask 89088
    %v5722 = vsel %vm5720, %v5705, 0
    %vm5724 = vcmask 1044480
    %v5725 = vsel %vm5724, 4294967295, 65535
    %v5726 = vsel %vm910, %v5725, 0
    %v5728 = vand.u32 %v5719, %v5726
    %5730 = vmatprep.subr.bf16.mxu0 0
    %5731 = vmatpush1.bf16.msra.mxu0 %v5728
    %5732 = vmatprep.subr.bf16.mxu0 0
    %5733 = vmatpush1.bf16.msra.mxu0 0
    %5734 = vmatprep.subr.bf16.mxu0 0
    %5735 = vmatpush1.bf16.msra.mxu0 0
    %5736 = vmatprep.subr.bf16.mxu0 0
    %5737 = vmatpush1.bf16.msra.mxu0 0
    %5738 = vmatprep.subr.bf16.mxu0 0
    %5739 = vmatpush1.bf16.msra.mxu0 0
    %5740 = vmatprep.subr.bf16.mxu0 0
    %5741 = vmatpush1.bf16.msra.mxu0 0
    %5742 = vmatprep.subr.bf16.mxu0 0
    %5743 = vmatpush1.bf16.msra.mxu0 0
    %5744 = vmatprep.subr.bf16.mxu0 0
    %5745 = vmatpush1.bf16.msra.mxu0 0
    %5746 = vmatprep.subr.bf16.mxu0 0
    %5747 = vmatpush1.bf16.msra.mxu0 0
    %5748 = vmatprep.subr.bf16.mxu0 0
    %5749 = vmatpush1.bf16.msra.mxu0 0
    %5750 = vmatprep.subr.bf16.mxu0 0
    %5751 = vmatpush1.bf16.msra.mxu0 0
    %5752 = vmatprep.subr.bf16.mxu0 0
    %5753 = vmatpush1.bf16.msra.mxu0 0
    %5754 = vmatprep.subr.bf16.mxu0 0
    %5755 = vmatpush1.bf16.msra.mxu0 0
    %5756 = vmatprep.subr.bf16.mxu0 0
    %5757 = vmatpush1.bf16.msra.mxu0 0
    %5758 = vmatprep.subr.bf16.mxu0 0
    %5759 = vmatpush1.bf16.msra.mxu0 0
    %5760 = vmatprep.subr.bf16.mxu0 0
    %5761 = vmatpush1.bf16.msra.mxu0 0
    %5762 = vmatprep.mubr.bf16.mxu0 0
    %5763 = vmatmul.mubr.bf16.gmra.mrb[0].mxu0 %v5722
    %v5764 = vpop.f32.mrb[0].mxu0
    %v5765 = vadd.f32 %v5713, %v5764
    %v5766 = vpop.f32.mrb[0].mxu0
    %v5767 = vpop.f32.mrb[0].mxu0
    %v5768 = vpop.f32.mrb[0].mxu0
    %5769 = vdwg.mxu0
    %v5770 = vmax.f32 %v5765, 0.0
    %v5771 = vpack.c.bf16 %v5770, %v5770
    %v5772 = vld [vmem:[#allocation10] sm:$0xf]
    %v5773 = vld [vmem:[#allocation10 + $0x4] sm:$0xf]
    %v5774 = vld [vmem:[#allocation10 + $0x8] sm:$0xf]
    %v5775 = vld [vmem:[#allocation10 + $0xc] sm:$0xf]
    %v5776 = vld [vmem:[#allocation10 + $0x10] sm:$0xf]
    %v5777 = vld [vmem:[#allocation10 + $0x14] sm:$0xf]
    %v5778 = vld [vmem:[#allocation10 + $0x18] sm:$0xf]
    %v5779 = vld [vmem:[#allocation10 + $0x1c] sm:$0xf]
    %v5780 = vld [vmem:[#allocation12] sm:$0x1]
    %v5782 = vlaneseq
    %v5783 = vshrl.u32 %v5782, 7
    %v5784 = vsub.s32 0, %v5783
    %v5785 = vrot.slane %v5780, %v5784
    %v5795 = vunpack.c.l.b16 %v5772
    %v5796 = vunpack.c.l.b16 %v5773
    %v5797 = vunpack.c.l.b16 %v5774
    %v5798 = vunpack.c.l.b16 %v5775
    %v5799 = vunpack.c.l.b16 %v5776
    %v5800 = vunpack.c.l.b16 %v5777
    %v5801 = vunpack.c.l.b16 %v5778
    %v5802 = vunpack.c.l.b16 %v5779
    %v5803 = vpack.c.b16 %v5796, %v5795
    %v5804 = vpack.c.b16 %v5798, %v5797
    %v5805 = vpack.c.b16 %v5800, %v5799
    %v5806 = vpack.c.b16 %v5802, %v5801
    %v5812 = vsel %vm936, %v5771, 0
    %5814 = vmatprep.subr.bf16.mxu0 0
    %5815 = vmatpush1.bf16.msra.mxu0 %v5803
    %5816 = vmatprep.subr.bf16.mxu0 0
    %5817 = vmatpush1.bf16.msra.mxu0 %v5804
    %5818 = vmatprep.subr.bf16.mxu0 0
    %5819 = vmatpush1.bf16.msra.mxu0 %v5805
    %5820 = vmatprep.subr.bf16.mxu0 0
    %5821 = vmatpush1.bf16.msra.mxu0 %v5806
    %5822 = vmatprep.subr.bf16.mxu0 0
    %5823 = vmatpush1.bf16.msra.mxu0 0
    %5824 = vmatprep.subr.bf16.mxu0 0
    %5825 = vmatpush1.bf16.msra.mxu0 0
    %5826 = vmatprep.subr.bf16.mxu0 0
    %5827 = vmatpush1.bf16.msra.mxu0 0
    %5828 = vmatprep.subr.bf16.mxu0 0
    %5829 = vmatpush1.bf16.msra.mxu0 0
    %5830 = vmatprep.subr.bf16.mxu0 0
    %5831 = vmatpush1.bf16.msra.mxu0 0
    %5832 = vmatprep.subr.bf16.mxu0 0
    %5833 = vmatpush1.bf16.msra.mxu0 0
    %5834 = vmatprep.subr.bf16.mxu0 0
    %5835 = vmatpush1.bf16.msra.mxu0 0
    %5836 = vmatprep.subr.bf16.mxu0 0
    %5837 = vmatpush1.bf16.msra.mxu0 0
    %5838 = vmatprep.subr.bf16.mxu0 0
    %5839 = vmatpush1.bf16.msra.mxu0 0
    %5840 = vmatprep.subr.bf16.mxu0 0
    %5841 = vmatpush1.bf16.msra.mxu0 0
    %5842 = vmatprep.subr.bf16.mxu0 0
    %5843 = vmatpush1.bf16.msra.mxu0 0
    %5844 = vmatprep.subr.bf16.mxu0 0
    %5845 = vmatpush1.bf16.msra.mxu0 0
    %5846 = vmatprep.mubr.bf16.mxu0 0
    %5847 = vmatmul.mubr.bf16.gmra.mrb[0].mxu0 %v5812
    %v5848 = vpop.f32.mrb[0].mxu0
    %v5849 = vadd.f32 %v5785, %v5848
    %v5850 = vpop.f32.mrb[0].mxu0
    %v5851 = vpop.f32.mrb[0].mxu0
    %v5852 = vpop.f32.mrb[0].mxu0
    %5853 = vdwg.mxu0
    %v5854 = vmax.f32 %v5849, 0.0
    %v5856 = vrot.slane %v5703, 2
    %5857 = vrot.lane.b32.xlu0 %v5856, 64
    %v5858 = vpop.permute.xlu0 %5857
    %v5860 = vrot.slane %v5703, 4
    %v5862 = vrot.slane %v5703, 6
    %5863 = vrot.lane.b32.xlu0 %v5862, 64
    %v5864 = vpop.permute.xlu0 %5863
    %v5867 = vrot.slane %v5704, 2
    %5868 = vrot.lane.b32.xlu0 %v5867, 64
    %v5869 = vpop.permute.xlu0 %5868
    %v5871 = vrot.slane %v5704, 4
    %v5873 = vrot.slane %v5704, 6
    %5874 = vrot.lane.b32.xlu0 %v5873, 64
    %v5875 = vpop.permute.xlu0 %5874
    %v5877 = vsel %vm936, %v5703, %v5858
    %v5878 = vsel %vm936, %v5860, %v5864
    %v5879 = vsel %vm936, %v5704, %v5869
    %v5880 = vsel %vm936, %v5871, %v5875
    %s5881 = smul.u32 4, 64
    %s5882 = smul.u32 %s5881, 2
    %s5883 = sshll.u32 %s5882, 4
    %5884 = dma.done [#allocation3], %s5883
    %v5885 = vpack.c.bf16 %v5877, %v5877
    %v5886 = vpack.c.bf16 %v5878, %v5878
    %v5887 = vpack.c.bf16 %v5879, %v5879
    %v5888 = vpack.c.bf16 %v5880, %v5880
    %v5889 = vld [vmem:[#allocation2] sm:$0xff]
    %v5890 = vld [vmem:[#allocation2 + $0x8] sm:$0xff]
    %v5891 = vld [vmem:[#allocation2 + $0x10] sm:$0xff]
    %v5892 = vld [vmem:[#allocation2 + $0x18] sm:$0xff]
    %v5893 = vld [vmem:[#allocation2 + $0x20] sm:$0xff]
    %v5894 = vld [vmem:[#allocation2 + $0x28] sm:$0xff]
    %v5895 = vld [vmem:[#allocation2 + $0x30] sm:$0xff]
    %v5896 = vld [vmem:[#allocation2 + $0x38] sm:$0xff]
    %v5897 = vld [vmem:[#allocation2 + $0x40] sm:$0xff]
    %v5898 = vld [vmem:[#allocation2 + $0x48] sm:$0xff]
    %v5899 = vld [vmem:[#allocation2 + $0x50] sm:$0xff]
    %v5900 = vld [vmem:[#allocation2 + $0x58] sm:$0xff]
    %v5901 = vld [vmem:[#allocation2 + $0x60] sm:$0xff]
    %v5902 = vld [vmem:[#allocation2 + $0x68] sm:$0xff]
    %v5903 = vld [vmem:[#allocation2 + $0x70] sm:$0xff]
    %v5904 = vld [vmem:[#allocation2 + $0x78] sm:$0xff]
    %v5905 = vld [vmem:[#allocation2 + $0x80] sm:$0xff]
    %v5906 = vld [vmem:[#allocation2 + $0x88] sm:$0xff]
    %v5907 = vld [vmem:[#allocation2 + $0x90] sm:$0xff]
    %v5908 = vld [vmem:[#allocation2 + $0x98] sm:$0xff]
    %v5909 = vld [vmem:[#allocation2 + $0xa0] sm:$0xff]
    %v5910 = vld [vmem:[#allocation2 + $0xa8] sm:$0xff]
    %v5911 = vld [vmem:[#allocation2 + $0xb0] sm:$0xff]
    %v5912 = vld [vmem:[#allocation2 + $0xb8] sm:$0xff]
    %v5913 = vld [vmem:[#allocation2 + $0xc0] sm:$0xff]
    %v5914 = vld [vmem:[#allocation2 + $0xc8] sm:$0xff]
    %v5915 = vld [vmem:[#allocation2 + $0xd0] sm:$0xff]
    %v5916 = vld [vmem:[#allocation2 + $0xd8] sm:$0xff]
    %v5917 = vld [vmem:[#allocation2 + $0xe0] sm:$0xff]
    %v5918 = vld [vmem:[#allocation2 + $0xe8] sm:$0xff]
    %v5919 = vld [vmem:[#allocation2 + $0xf0] sm:$0xff]
    %v5920 = vld [vmem:[#allocation2 + $0xf8] sm:$0xff]
    %v5921 = vld [vmem:[#allocation2 + $0x100] sm:$0xff]
    %v5922 = vld [vmem:[#allocation2 + $0x108] sm:$0xff]
    %v5923 = vld [vmem:[#allocation2 + $0x110] sm:$0xff]
    %v5924 = vld [vmem:[#allocation2 + $0x118] sm:$0xff]
    %v5925 = vld [vmem:[#allocation2 + $0x120] sm:$0xff]
    %v5926 = vld [vmem:[#allocation2 + $0x128] sm:$0xff]
    %v5927 = vld [vmem:[#allocation2 + $0x130] sm:$0xff]
    %v5928 = vld [vmem:[#allocation2 + $0x138] sm:$0xff]
    %v5929 = vld [vmem:[#allocation2 + $0x140] sm:$0xff]
    %v5930 = vld [vmem:[#allocation2 + $0x148] sm:$0xff]
    %v5931 = vld [vmem:[#allocation2 + $0x150] sm:$0xff]
    %v5932 = vld [vmem:[#allocation2 + $0x158] sm:$0xff]
    %v5933 = vld [vmem:[#allocation2 + $0x160] sm:$0xff]
    %v5934 = vld [vmem:[#allocation2 + $0x168] sm:$0xff]
    %v5935 = vld [vmem:[#allocation2 + $0x170] sm:$0xff]
    %v5936 = vld [vmem:[#allocation2 + $0x178] sm:$0xff]
    %v5937 = vld [vmem:[#allocation2 + $0x180] sm:$0xff]
    %v5938 = vld [vmem:[#allocation2 + $0x188] sm:$0xff]
    %v5939 = vld [vmem:[#allocation2 + $0x190] sm:$0xff]
    %v5940 = vld [vmem:[#allocation2 + $0x198] sm:$0xff]
    %v5941 = vld [vmem:[#allocation2 + $0x1a0] sm:$0xff]
    %v5942 = vld [vmem:[#allocation2 + $0x1a8] sm:$0xff]
    %v5943 = vld [vmem:[#allocation2 + $0x1b0] sm:$0xff]
    %v5944 = vld [vmem:[#allocation2 + $0x1b8] sm:$0xff]
    %v5945 = vld [vmem:[#allocation2 + $0x1c0] sm:$0xff]
    %v5946 = vld [vmem:[#allocation2 + $0x1c8] sm:$0xff]
    %v5947 = vld [vmem:[#allocation2 + $0x1d0] sm:$0xff]
    %v5948 = vld [vmem:[#allocation2 + $0x1d8] sm:$0xff]
    %v5949 = vld [vmem:[#allocation2 + $0x1e0] sm:$0xff]
    %v5950 = vld [vmem:[#allocation2 + $0x1e8] sm:$0xff]
    %v5951 = vld [vmem:[#allocation2 + $0x1f0] sm:$0xff]
    %v5952 = vld [vmem:[#allocation2 + $0x1f8] sm:$0xff]
    %v5953 = vpack.c.bf16 %v5854, %v5854
    %v5954 = vld [vmem:[%s14] sm:$0xff]
    %v5955 = vld [vmem:[%s14 + $0x8] sm:$0xff]
    %v5956 = vld [vmem:[%s14 + $0x10] sm:$0xff]
    %v5957 = vld [vmem:[%s14 + $0x18] sm:$0xff]
    %v5958 = vld [vmem:[%s14 + $0x20] sm:$0xff]
    %v5959 = vld [vmem:[%s14 + $0x28] sm:$0xff]
    %v5960 = vld [vmem:[%s14 + $0x30] sm:$0xff]
    %v5961 = vld [vmem:[%s14 + $0x38] sm:$0xff]
    %v5970 = vunpack.c.l.b16 %v5954
    %v5971 = vunpack.c.h.b16 %v5954
    %v5972 = vunpack.c.l.b16 %v5955
    %v5973 = vunpack.c.h.b16 %v5955
    %v5974 = vunpack.c.l.b16 %v5956
    %v5975 = vunpack.c.h.b16 %v5956
    %v5976 = vunpack.c.l.b16 %v5957
    %v5977 = vunpack.c.h.b16 %v5957
    %v5978 = vunpack.c.l.b16 %v5958
    %v5979 = vunpack.c.h.b16 %v5958
    %v5980 = vunpack.c.l.b16 %v5959
    %v5981 = vunpack.c.h.b16 %v5959
    %v5982 = vunpack.c.l.b16 %v5960
    %v5983 = vunpack.c.h.b16 %v5960
    %v5984 = vunpack.c.l.b16 %v5961
    %v5985 = vunpack.c.h.b16 %v5961
    %v5986 = vpack.c.b16 %v5972, %v5970
    %v5987 = vpack.c.b16 %v5973, %v5971
    %v5988 = vpack.c.b16 %v5976, %v5974
    %v5989 = vpack.c.b16 %v5977, %v5975
    %v5990 = vpack.c.b16 %v5980, %v5978
    %v5991 = vpack.c.b16 %v5981, %v5979
    %v5992 = vpack.c.b16 %v5984, %v5982
    %v5993 = vpack.c.b16 %v5985, %v5983
    %v6003 = vsel %vm936, %v5953, 0
    %6005 = vmatprep.subr.bf16.mxu0 %v5987
    %6006 = vmatpush1.bf16.msra.mxu0 %v5986
    %6007 = vmatprep.subr.bf16.mxu0 %v5989
    %6008 = vmatpush1.bf16.msra.mxu0 %v5988
    %6009 = vmatprep.subr.bf16.mxu0 %v5991
    %6010 = vmatpush1.bf16.msra.mxu0 %v5990
    %6011 = vmatprep.subr.bf16.mxu0 %v5993
    %6012 = vmatpush1.bf16.msra.mxu0 %v5992
    %6013 = vmatprep.subr.bf16.mxu0 0
    %6014 = vmatpush1.bf16.msra.mxu0 0
    %6015 = vmatprep.subr.bf16.mxu0 0
    %6016 = vmatpush1.bf16.msra.mxu0 0
    %6017 = vmatprep.subr.bf16.mxu0 0
    %6018 = vmatpush1.bf16.msra.mxu0 0
    %6019 = vmatprep.subr.bf16.mxu0 0
    %6020 = vmatpush1.bf16.msra.mxu0 0
    %6021 = vmatprep.subr.bf16.mxu0 0
    %6022 = vmatpush1.bf16.msra.mxu0 0
    %6023 = vmatprep.subr.bf16.mxu0 0
    %6024 = vmatpush1.bf16.msra.mxu0 0
    %6025 = vmatprep.subr.bf16.mxu0 0
    %6026 = vmatpush1.bf16.msra.mxu0 0
    %6027 = vmatprep.subr.bf16.mxu0 0
    %6028 = vmatpush1.bf16.msra.mxu0 0
    %6029 = vmatprep.subr.bf16.mxu0 0
    %6030 = vmatpush1.bf16.msra.mxu0 0
    %6031 = vmatprep.subr.bf16.mxu0 0
    %6032 = vmatpush1.bf16.msra.mxu0 0
    %6033 = vmatprep.subr.bf16.mxu0 0
    %6034 = vmatpush1.bf16.msra.mxu0 0
    %6035 = vmatprep.subr.bf16.mxu0 0
    %6036 = vmatpush1.bf16.msra.mxu0 0
    %6037 = vmatprep.mubr.bf16.mxu0 0
    %6038 = vmatmul.mubr.bf16.gmra.mrb[0].mxu0 %v6003
    %v6039 = vpop.f32.mrb[0].mxu0
    %v6040 = vadd.f32 0.0, %v6039
    %v6041 = vpop.f32.mrb[0].mxu0
    %v6042 = vadd.f32 0.0, %v6041
    %v6043 = vpop.f32.mrb[0].mxu0
    %v6044 = vpop.f32.mrb[0].mxu0
    %6045 = vdwg.mxu0
    %6046 = vmatprep.subr.bf16.mxu0 %v5890
    %6047 = vmatpush1.bf16.msra.mxu0 %v5889
    %6048 = vmatprep.subr.bf16.mxu0 %v5892
    %6049 = vmatpush1.bf16.msra.mxu0 %v5891
    %6050 = vmatprep.subr.bf16.mxu0 %v5894
    %6051 = vmatpush1.bf16.msra.mxu0 %v5893
    %6052 = vmatprep.subr.bf16.mxu0 %v5896
    %6053 = vmatpush1.bf16.msra.mxu0 %v5895
    %6054 = vmatprep.subr.bf16.mxu0 %v5898
    %6055 = vmatpush1.bf16.msra.mxu0 %v5897
    %6056 = vmatprep.subr.bf16.mxu0 %v5900
    %6057 = vmatpush1.bf16.msra.mxu0 %v5899
    %6058 = vmatprep.subr.bf16.mxu0 %v5902
    %6059 = vmatpush1.bf16.msra.mxu0 %v5901
    %6060 = vmatprep.subr.bf16.mxu0 %v5904
    %6061 = vmatpush1.bf16.msra.mxu0 %v5903
    %6062 = vmatprep.subr.bf16.mxu0 %v5906
    %6063 = vmatpush1.bf16.msra.mxu0 %v5905
    %6064 = vmatprep.subr.bf16.mxu0 %v5908
    %6065 = vmatpush1.bf16.msra.mxu0 %v5907
    %6066 = vmatprep.subr.bf16.mxu0 %v5910
    %6067 = vmatpush1.bf16.msra.mxu0 %v5909
    %6068 = vmatprep.subr.bf16.mxu0 %v5912
    %6069 = vmatpush1.bf16.msra.mxu0 %v5911
    %6070 = vmatprep.subr.bf16.mxu0 %v5914
    %6071 = vmatpush1.bf16.msra.mxu0 %v5913
    %6072 = vmatprep.subr.bf16.mxu0 %v5916
    %6073 = vmatpush1.bf16.msra.mxu0 %v5915
    %6074 = vmatprep.subr.bf16.mxu0 %v5918
    %6075 = vmatpush1.bf16.msra.mxu0 %v5917
    %6076 = vmatprep.subr.bf16.mxu0 %v5920
    %6077 = vmatpush1.bf16.msra.mxu0 %v5919
    %6078 = vmatprep.mubr.bf16.mxu0 %v5886
    %6079 = vmatmul.mubr.bf16.gmra.mrb[0].mxu0 %v5885
    %v6080 = vpop.f32.mrb[0].mxu0
    %v6081 = vadd.f32 %v6040, %v6080
    %v6082 = vpop.f32.mrb[0].mxu0
    %v6083 = vadd.f32 %v6042, %v6082
    %v6084 = vpop.f32.mrb[0].mxu0
    %v6085 = vpop.f32.mrb[0].mxu0
    %6086 = vdwg.mxu0
    %6087 = vmatprep.subr.bf16.mxu0 %v5922
    %6088 = vmatpush1.bf16.msra.mxu0 %v5921
    %6089 = vmatprep.subr.bf16.mxu0 %v5924
    %6090 = vmatpush1.bf16.msra.mxu0 %v5923
    %6091 = vmatprep.subr.bf16.mxu0 %v5926
    %6092 = vmatpush1.bf16.msra.mxu0 %v5925
    %6093 = vmatprep.subr.bf16.mxu0 %v5928
    %6094 = vmatpush1.bf16.msra.mxu0 %v5927
    %6095 = vmatprep.subr.bf16.mxu0 %v5930
    %6096 = vmatpush1.bf16.msra.mxu0 %v5929
    %6097 = vmatprep.subr.bf16.mxu0 %v5932
    %6098 = vmatpush1.bf16.msra.mxu0 %v5931
    %6099 = vmatprep.subr.bf16.mxu0 %v5934
    %6100 = vmatpush1.bf16.msra.mxu0 %v5933
    %6101 = vmatprep.subr.bf16.mxu0 %v5936
    %6102 = vmatpush1.bf16.msra.mxu0 %v5935
    %6103 = vmatprep.subr.bf16.mxu0 %v5938
    %6104 = vmatpush1.bf16.msra.mxu0 %v5937
    %6105 = vmatprep.subr.bf16.mxu0 %v5940
    %6106 = vmatpush1.bf16.msra.mxu0 %v5939
    %6107 = vmatprep.subr.bf16.mxu0 %v5942
    %6108 = vmatpush1.bf16.msra.mxu0 %v5941
    %6109 = vmatprep.subr.bf16.mxu0 %v5944
    %6110 = vmatpush1.bf16.msra.mxu0 %v5943
    %6111 = vmatprep.subr.bf16.mxu0 %v5946
    %6112 = vmatpush1.bf16.msra.mxu0 %v5945
    %6113 = vmatprep.subr.bf16.mxu0 %v5948
    %6114 = vmatpush1.bf16.msra.mxu0 %v5947
    %6115 = vmatprep.subr.bf16.mxu0 %v5950
    %6116 = vmatpush1.bf16.msra.mxu0 %v5949
    %6117 = vmatprep.subr.bf16.mxu0 %v5952
    %6118 = vmatpush1.bf16.msra.mxu0 %v5951
    %6119 = vmatprep.mubr.bf16.mxu0 %v5888
    %6120 = vmatmul.mubr.bf16.gmra.mrb[0].mxu0 %v5887
    %v6121 = vpop.f32.mrb[0].mxu0
    %v6122 = vadd.f32 %v6081, %v6121
    %v6123 = vpop.f32.mrb[0].mxu0
    %v6124 = vadd.f32 %v6083, %v6123
    %v6125 = vpop.f32.mrb[0].mxu0
    %v6126 = vpop.f32.mrb[0].mxu0
    %6127 = vdwg.mxu0
    %v6128 = vld [vmem:[%s15] sm:$0x3]
    %v6130 = vlaneseq
    %v6131 = vshrl.u32 %v6130, 7
    %v6132 = vsub.s32 0, %v6131
    %v6133 = vrot.slane %v6128, %v6132
    %v6134 = vlaneseq
    %v6135 = vshrl.u32 %v6134, 7
    %v6136 = vsub.s32 1, %v6135
    %v6137 = vrot.slane %v6128, %v6136
    %v6140 = vadd.f32 %v6122, %v6133
    %v6141 = vadd.f32 %v6124, %v6137
    %v6142 = vmax.f32 %v6140, 0.0
    %v6143 = vmax.f32 %v6141, 0.0
    %v6144 = vpack.c.bf16 %v6142, %v6142
    %v6145 = vpack.c.bf16 %v6143, %v6143
    %v6146 = vld [vmem:[%s16] sm:$0xf]
    %v6147 = vld [vmem:[%s16 + $0x4] sm:$0xf]
    %v6148 = vld [vmem:[%s16 + $0x8] sm:$0xf]
    %v6149 = vld [vmem:[%s16 + $0xc] sm:$0xf]
    %v6150 = vld [vmem:[%s16 + $0x10] sm:$0xf]
    %v6151 = vld [vmem:[%s16 + $0x14] sm:$0xf]
    %v6152 = vld [vmem:[%s16 + $0x18] sm:$0xf]
    %v6153 = vld [vmem:[%s16 + $0x1c] sm:$0xf]
    %v6154 = vld [vmem:[%s16 + $0x20] sm:$0xf]
    %v6155 = vld [vmem:[%s16 + $0x24] sm:$0xf]
    %v6156 = vld [vmem:[%s16 + $0x28] sm:$0xf]
    %v6157 = vld [vmem:[%s16 + $0x2c] sm:$0xf]
    %v6158 = vld [vmem:[%s16 + $0x30] sm:$0xf]
    %v6159 = vld [vmem:[%s16 + $0x34] sm:$0xf]
    %v6160 = vld [vmem:[%s16 + $0x38] sm:$0xf]
    %v6161 = vld [vmem:[%s16 + $0x3c] sm:$0xf]
    %v6162 = vld [vmem:[%s16 + $0x40] sm:$0xf]
    %v6163 = vld [vmem:[%s16 + $0x44] sm:$0xf]
    %v6164 = vld [vmem:[%s16 + $0x48] sm:$0xf]
    %v6165 = vld [vmem:[%s16 + $0x4c] sm:$0xf]
    %v6166 = vld [vmem:[%s16 + $0x50] sm:$0xf]
    %v6167 = vld [vmem:[%s16 + $0x54] sm:$0xf]
    %v6168 = vld [vmem:[%s16 + $0x58] sm:$0xf]
    %v6169 = vld [vmem:[%s16 + $0x5c] sm:$0xf]
    %v6170 = vld [vmem:[%s16 + $0x60] sm:$0xf]
    %v6171 = vld [vmem:[%s16 + $0x64] sm:$0xf]
    %v6172 = vld [vmem:[%s16 + $0x68] sm:$0xf]
    %v6173 = vld [vmem:[%s16 + $0x6c] sm:$0xf]
    %v6174 = vld [vmem:[%s16 + $0x70] sm:$0xf]
    %v6175 = vld [vmem:[%s16 + $0x74] sm:$0xf]
    %v6176 = vld [vmem:[%s16 + $0x78] sm:$0xf]
    %v6177 = vld [vmem:[%s16 + $0x7c] sm:$0xf]
    %v6178 = vld [vmem:[#allocation13] sm:$0x1]
    %v6180 = vlaneseq
    %v6181 = vshrl.u32 %v6180, 7
    %v6182 = vsub.s32 0, %v6181
    %v6183 = vrot.slane %v6178, %v6182
    %v6217 = vunpack.c.l.b16 %v6146
    %v6218 = vunpack.c.l.b16 %v6147
    %v6219 = vunpack.c.l.b16 %v6148
    %v6220 = vunpack.c.l.b16 %v6149
    %v6221 = vunpack.c.l.b16 %v6150
    %v6222 = vunpack.c.l.b16 %v6151
    %v6223 = vunpack.c.l.b16 %v6152
    %v6224 = vunpack.c.l.b16 %v6153
    %v6225 = vunpack.c.l.b16 %v6154
    %v6226 = vunpack.c.l.b16 %v6155
    %v6227 = vunpack.c.l.b16 %v6156
    %v6228 = vunpack.c.l.b16 %v6157
    %v6229 = vunpack.c.l.b16 %v6158
    %v6230 = vunpack.c.l.b16 %v6159
    %v6231 = vunpack.c.l.b16 %v6160
    %v6232 = vunpack.c.l.b16 %v6161
    %v6233 = vunpack.c.l.b16 %v6162
    %v6234 = vunpack.c.l.b16 %v6163
    %v6235 = vunpack.c.l.b16 %v6164
    %v6236 = vunpack.c.l.b16 %v6165
    %v6237 = vunpack.c.l.b16 %v6166
    %v6238 = vunpack.c.l.b16 %v6167
    %v6239 = vunpack.c.l.b16 %v6168
    %v6240 = vunpack.c.l.b16 %v6169
    %v6241 = vunpack.c.l.b16 %v6170
    %v6242 = vunpack.c.l.b16 %v6171
    %v6243 = vunpack.c.l.b16 %v6172
    %v6244 = vunpack.c.l.b16 %v6173
    %v6245 = vunpack.c.l.b16 %v6174
    %v6246 = vunpack.c.l.b16 %v6175
    %v6247 = vunpack.c.l.b16 %v6176
    %v6248 = vunpack.c.l.b16 %v6177
    %v6249 = vpack.c.b16 %v6218, %v6217
    %v6250 = vpack.c.b16 %v6220, %v6219
    %v6251 = vpack.c.b16 %v6222, %v6221
    %v6252 = vpack.c.b16 %v6224, %v6223
    %v6253 = vpack.c.b16 %v6226, %v6225
    %v6254 = vpack.c.b16 %v6228, %v6227
    %v6255 = vpack.c.b16 %v6230, %v6229
    %v6256 = vpack.c.b16 %v6232, %v6231
    %v6257 = vpack.c.b16 %v6234, %v6233
    %v6258 = vpack.c.b16 %v6236, %v6235
    %v6259 = vpack.c.b16 %v6238, %v6237
    %v6260 = vpack.c.b16 %v6240, %v6239
    %v6261 = vpack.c.b16 %v6242, %v6241
    %v6262 = vpack.c.b16 %v6244, %v6243
    %v6263 = vpack.c.b16 %v6246, %v6245
    %v6264 = vpack.c.b16 %v6248, %v6247
    %6281 = vmatprep.subr.bf16.mxu0 0
    %6282 = vmatpush1.bf16.msra.mxu0 %v6249
    %6283 = vmatprep.subr.bf16.mxu0 0
    %6284 = vmatpush1.bf16.msra.mxu0 %v6250
    %6285 = vmatprep.subr.bf16.mxu0 0
    %6286 = vmatpush1.bf16.msra.mxu0 %v6251
    %6287 = vmatprep.subr.bf16.mxu0 0
    %6288 = vmatpush1.bf16.msra.mxu0 %v6252
    %6289 = vmatprep.subr.bf16.mxu0 0
    %6290 = vmatpush1.bf16.msra.mxu0 %v6253
    %6291 = vmatprep.subr.bf16.mxu0 0
    %6292 = vmatpush1.bf16.msra.mxu0 %v6254
    %6293 = vmatprep.subr.bf16.mxu0 0
    %6294 = vmatpush1.bf16.msra.mxu0 %v6255
    %6295 = vmatprep.subr.bf16.mxu0 0
    %6296 = vmatpush1.bf16.msra.mxu0 %v6256
    %6297 = vmatprep.subr.bf16.mxu0 0
    %6298 = vmatpush1.bf16.msra.mxu0 %v6257
    %6299 = vmatprep.subr.bf16.mxu0 0
    %6300 = vmatpush1.bf16.msra.mxu0 %v6258
    %6301 = vmatprep.subr.bf16.mxu0 0
    %6302 = vmatpush1.bf16.msra.mxu0 %v6259
    %6303 = vmatprep.subr.bf16.mxu0 0
    %6304 = vmatpush1.bf16.msra.mxu0 %v6260
    %6305 = vmatprep.subr.bf16.mxu0 0
    %6306 = vmatpush1.bf16.msra.mxu0 %v6261
    %6307 = vmatprep.subr.bf16.mxu0 0
    %6308 = vmatpush1.bf16.msra.mxu0 %v6262
    %6309 = vmatprep.subr.bf16.mxu0 0
    %6310 = vmatpush1.bf16.msra.mxu0 %v6263
    %6311 = vmatprep.subr.bf16.mxu0 0
    %6312 = vmatpush1.bf16.msra.mxu0 %v6264
    %6313 = vmatprep.mubr.bf16.mxu0 %v6145
    %6314 = vmatmul.mubr.bf16.gmra.mrb[0].mxu0 %v6144
    %v6315 = vpop.f32.mrb[0].mxu0
    %v6316 = vadd.f32 %v6183, %v6315
    %v6317 = vpop.f32.mrb[0].mxu0
    %v6318 = vpop.f32.mrb[0].mxu0
    %v6319 = vpop.f32.mrb[0].mxu0
    %6320 = vdwg.mxu0
    %vm6321 = vcmask 320512
    %6322 = vst.msk [vmem:[#allocation15] sm:$0x3] %vm6321, %v6316
    // Predicated region
    $region131: #{_lambda_.1} parent=1 // pred_check
      _
    $region132: #{_lambda_.1} parent=1 // pred_check_branch
      %6324 = sbr.rel (0) target = $region134
    $region133: #{_lambda_.1} parent=1 // pred_region
      %s6326 = ssub.s32 32, 32
      %6327 = vsyncadd [#allocation6], %s6326
      %s6329 = sshll.u32 [#allocation15], 4
      %s6330 = int_to_ptr.vmem [resolvable:$true] %s6329
      %6332 = dma.vmem_to_hbm [thread:$0]  %s6330, 32, %s18, [#allocation6]
    $region134: #{_lambda_.1} parent=1 // pred_fallthru
      _
    // Predicated region
    $region135: #{_lambda_.1} parent=1 // pred_check
      _
    $region136: #{_lambda_.1} parent=1 // pred_check_branch
      %6334 = sbr.rel (0) target = $region138
    $region137: #{_lambda_.1} parent=1 // pred_region
      %6335 = dma.done [#allocation6], 32
    $region138: #{_lambda_.1} parent=1 // pred_fallthru
      _
    %6336 = vsyncpa [#allocation5], 1
    %6337 = vsyncpa [#allocation8], 1
    %6338 = vsyncpa [#allocation11], 1
    %6339 = vsyncpa [#allocation14], 1
    %6340 = vsyncpa [#allocation6], 1
  %6341 = vsyncmov [#allocation3]
  %s6342 = vpop.sfrf %6341
  %p6343 = scmp.eq.s32.totalorder %s6342, 0
  %p6344 = pneg %p6343
  %6346 = shalt.err (%p6344)

</llo_original>
